<compile_context>
chip_gen: v6e
topology: v6e:2x2x1
jax: 0.10.0
libtpu: 0.0.40
codegen_flags: <defaults>
</compile_context>

<pallas_src>
import functools

import jax
import jax.numpy as jnp
from jax.experimental import pallas as pl
from jax.experimental.pallas import tpu as pltpu

BN_EPS = 1e-5
OUT_PAD = 128            # pad head outputs to a lane-dense 128-wide slab


def _round_up(x, m):
    return ((x + m - 1) // m) * m


def fold_bn(w, b, gamma, beta, mean, var, eps=BN_EPS):
    """Fold eval-mode BatchNorm1d into a preceding (x @ w + b) layer."""
    s = gamma / jnp.sqrt(var + eps)
    return w * s[None, :], (b - mean) * s + beta


def _default_tile_n():
    # v7x: 64 MiB physical VMEM -> keep the (tile, 1024) f32 activation ~2 MiB.
    # v5e/v6e: 128 MiB VMEM -> bigger tiles amortize the ~0.35us per-step cost.
    try:
        vmem = pltpu.get_tpu_info().vmem_capacity_bytes
        return 1024 if vmem >= 96 * 1024 * 1024 else 512
    except Exception:
        return 512


# ---------------------------------------------------------------------------
# Fused kernel: per-point MLP (3->64->128->1024) + global max-pool over N
# tiles + dense head (1024->512->256->OUT_PAD), all in one pallas_call.
# ---------------------------------------------------------------------------
def _mlp_pool_head(x, w1, b1_ref, w2_ref, b2_ref, w3_ref, b3_ref,
                   fw1_ref, fb1_ref, fw2_ref, fb2_ref, fw3_ref, fb3_ref,
                   o_ref, pool_ref, *, n_valid, tile_n):
    n = pl.program_id(1)

    @pl.when(n == 0)
    def _():
        pool_ref[...] = jnp.full_like(pool_ref, -jnp.inf)

    # Per-point MLP (Conv1d k=1 stack, eval-mode BN folded).  The 64->128 and
    # dominant 128->1024 layers run in bf16 on the MXU with f32 accumulation;
    # the tiny 3->64 layer stays f32 (K=3, negligible cost, full precision).
    h = jnp.maximum(
        jnp.dot(x, w1, preferred_element_type=jnp.float32) + b1_ref[...], 0.0)
    h = jnp.maximum(
        jnp.dot(h.astype(jnp.bfloat16), w2_ref[...],
                preferred_element_type=jnp.float32) + b2_ref[...], 0.0)
    h = jnp.maximum(
        jnp.dot(h.astype(jnp.bfloat16), w3_ref[...],
                preferred_element_type=jnp.float32) + b3_ref[...], 0.0)

    if n_valid % tile_n != 0:
        # Mask padded rows with -inf so they never win the global max.
        row = n * tile_n + jax.lax.broadcasted_iota(jnp.int32, (tile_n, 1), 0)
        h = jnp.where(row < n_valid, h, -jnp.inf)

    pool_ref[...] = jnp.maximum(pool_ref[...],
                                jnp.max(h, axis=0, keepdims=True))

    # Dense head fused into the same kernel: run once, on the last N tile.
    @pl.when(n == pl.num_programs(1) - 1)
    def _():
        g = pool_ref[...]                                        # (1, 1024) f32
        z = jnp.maximum(
            jnp.dot(g.astype(jnp.bfloat16), fw1_ref[...],
                    preferred_element_type=jnp.float32) + fb1_ref[...], 0.0)
        z = jnp.maximum(
            jnp.dot(z.astype(jnp.bfloat16), fw2_ref[...],
                    preferred_element_type=jnp.float32) + fb2_ref[...], 0.0)
        z = jnp.dot(z.astype(jnp.bfloat16), fw3_ref[...],
                    preferred_element_type=jnp.float32) + fb3_ref[...]
        o_ref[0] = z                                             # (1, OUT_PAD)


def _tnet_branch_kernel(x_ref, w1_ref, b1_ref, w2_ref, b2_ref, w3_ref, b3_ref,
                        fw1_ref, fb1_ref, fw2_ref, fb2_ref, fw3_ref, fb3_ref,
                        o_ref, pool_ref, *, n_valid, tile_n):
    # Transform-free variant (TNet input is the raw cloud; no identity bmm).
    _mlp_pool_head(x_ref[0], w1_ref[...], b1_ref, w2_ref, b2_ref, w3_ref,
                   b3_ref, fw1_ref, fb1_ref, fw2_ref, fb2_ref, fw3_ref,
                   fb3_ref, o_ref, pool_ref, n_valid=n_valid, tile_n=tile_n)


def _enc_branch_kernel(x_ref, t_ref, w1_ref, b1_ref, w2_ref, b2_ref, w3_ref,
                       b3_ref, fw1_ref, fb1_ref, fw2_ref, fb2_ref, fw3_ref,
                       fb3_ref, o_ref, pool_ref, *, n_valid, tile_n):
    # Fold the 3x3 point transform into the first layer's weights:
    #   (x @ T^T) @ W1 == x @ (T^T @ W1)    (t_ref already holds T^T)
    w1_eff = jnp.dot(t_ref[0], w1_ref[...], preferred_element_type=jnp.float32)
    _mlp_pool_head(x_ref[0], w1_eff, b1_ref, w2_ref, b2_ref, w3_ref, b3_ref,
                   fw1_ref, fb1_ref, fw2_ref, fb2_ref, fw3_ref, fb3_ref,
                   o_ref, pool_ref, n_valid=n_valid, tile_n=tile_n)


def fused_branch(x, conv_layers, fc_layers, trans_t=None, *, tile_n=None):
    """One pallas_call: point MLP + max-pool + dense head for one branch.

    x: (B, N, 3) f32.  trans_t: optional (B, 3, 3) f32 holding T^T.
    Returns (B, 1, OUT_PAD) f32; caller slices the valid output lanes.
    """
    B, N, _ = x.shape
    (w1, b1), (w2, b2), (w3, b3) = conv_layers
    (fw1, fb1), (fw2, fb2), (fw3, fb3) = fc_layers

    if tile_n is None:
        tile_n = _default_tile_n()
    tn = min(tile_n, _round_up(N, 8))
    n_pad = _round_up(N, tn)
    if n_pad != N:
        x = jnp.pad(x, ((0, 0), (0, n_pad - N), (0, 0)))
    grid = (B, n_pad // tn)

    const = lambda b, n: (0, 0)
    weight_specs = [
        pl.BlockSpec(w1.shape, const), pl.BlockSpec(b1.shape, const),
        pl.BlockSpec(w2.shape, const), pl.BlockSpec(b2.shape, const),
        pl.BlockSpec(w3.shape, const), pl.BlockSpec(b3.shape, const),
        pl.BlockSpec(fw1.shape, const), pl.BlockSpec(fb1.shape, const),
        pl.BlockSpec(fw2.shape, const), pl.BlockSpec(fb2.shape, const),
        pl.BlockSpec(fw3.shape, const), pl.BlockSpec(fb3.shape, const),
    ]
    x_spec = pl.BlockSpec((1, tn, 3), lambda b, n: (b, n, 0))

    if trans_t is None:
        kernel = functools.partial(_tnet_branch_kernel, n_valid=N, tile_n=tn)
        in_specs = [x_spec] + weight_specs
        args = (x, w1, b1, w2, b2, w3, b3, fw1, fb1, fw2, fb2, fw3, fb3)
    else:
        kernel = functools.partial(_enc_branch_kernel, n_valid=N, tile_n=tn)
        t_spec = pl.BlockSpec((1, 3, 3), lambda b, n: (b, 0, 0))
        in_specs = [x_spec, t_spec] + weight_specs
        args = (x, trans_t, w1, b1, w2, b2, w3, b3,
                fw1, fb1, fw2, fb2, fw3, fb3)

    return pl.pallas_call(
        kernel,
        out_shape=jax.ShapeDtypeStruct((B, 1, OUT_PAD), jnp.float32),
        grid=grid,
        in_specs=in_specs,
        out_specs=pl.BlockSpec((1, 1, OUT_PAD), lambda b, n: (b, 0, 0)),
        scratch_shapes=[pltpu.VMEM((1, 1024), jnp.float32)],
        compiler_params=pltpu.CompilerParams(
            dimension_semantics=("parallel", "arbitrary"),
            vmem_limit_bytes=32 * 1024 * 1024),
    )(*args)


# ---------------------------------------------------------------------------
# Deterministic parameter construction (synthetic weights, fresh BN stats).
# ---------------------------------------------------------------------------
def init_params(key, num_classes=9, k=3):
    keys = iter(jax.random.split(key, 16))

    def rand_w(cin, cout, scale=0.1):
        return jax.random.normal(next(keys), (cin, cout), jnp.float32) * scale

    def bn_ident(c):
        return (jnp.ones((c,), jnp.float32), jnp.zeros((c,), jnp.float32),
                jnp.zeros((c,), jnp.float32), jnp.ones((c,), jnp.float32))

    def layer_bn(cin, cout, dtype=jnp.float32):
        w = rand_w(cin, cout)
        b = jnp.zeros((cout,), jnp.float32)
        wf, bf = fold_bn(w, b, *bn_ident(cout))
        return wf.astype(dtype), bf.reshape(1, cout)

    def conv_stack():
        # Heavy 64->128 / 128->1024 weights in bf16 (halves DMA, single MXU
        # pass); the tiny 3->64 first layer stays f32 (negligible traffic,
        # preserves precision where the point transform is folded in).
        return [layer_bn(3, 64), layer_bn(64, 128, dtype=jnp.bfloat16),
                layer_bn(128, 1024, dtype=jnp.bfloat16)]

    def pad_out(w, b, out_dim):
        wp = jnp.zeros((w.shape[0], OUT_PAD), w.dtype).at[:, :out_dim].set(w)
        bp = jnp.zeros((1, OUT_PAD), jnp.float32).at[:, :out_dim].set(b)
        return wp, bp

    params = {}
    # TNet(3): conv 3->64->128->1024 (+BN), fc 1024->512->256->9
    params["tnet_conv"] = conv_stack()
    # TNet fc3: weight = 0, bias = eye(k).flatten()   (nn.init.zeros_/eye_)
    t_w3, t_b3 = pad_out(jnp.zeros((256, k * k), jnp.bfloat16),
                         jnp.eye(k, dtype=jnp.float32).reshape(1, k * k),
                         k * k)
    params["tnet_fc"] = [layer_bn(1024, 512, dtype=jnp.bfloat16),
                         layer_bn(512, 256, dtype=jnp.bfloat16),
                         (t_w3, t_b3)]
    # Encoder conv 3->64->128->1024 (+BN)
    params["enc_conv"] = conv_stack()
    # Classifier head 1024->512->256->num_classes (dropout identity in eval)
    h_w3 = rand_w(256, num_classes).astype(jnp.bfloat16)
    h_b3 = jnp.zeros((1, num_classes), jnp.float32)
    h_w3p, h_b3p = pad_out(h_w3, h_b3, num_classes)
    params["head_fc"] = [layer_bn(1024, 512, dtype=jnp.bfloat16),
                         layer_bn(512, 256, dtype=jnp.bfloat16),
                         (h_w3p, h_b3p)]
    return params


@functools.partial(jax.jit, static_argnames=("num_classes",))
def pointnet_forward(x, params, num_classes=9):
    """x: (B, N, 3) point cloud -> (B, num_classes) logits."""
    B = x.shape[0]
    # TNet branch: shared MLP + max-pool + regressor head, one pallas_call.
    tnet_out = fused_branch(x, params["tnet_conv"], params["tnet_fc"])
    trans = tnet_out[:, 0, :9].reshape(B, 3, 3)
    # Encoder + classifier branch: transform folded into W1 inside the kernel.
    trans_t = jnp.swapaxes(trans, 1, 2)                          # pass T^T
    head_out = fused_branch(x, params["enc_conv"], params["head_fc"],
                            trans_t=trans_t)
    return head_out[:, 0, :num_classes]


if __name__ == "__main__":
    key = jax.random.PRNGKey(0)
    pkey, xkey = jax.random.split(key)
    params = init_params(pkey, num_classes=9, k=3)

    B, N = 2, 16                       # small shapes: 2 clouds of 16 points
    x = jax.random.normal(xkey, (B, N, 3), jnp.float32)

    logits = pointnet_forward(x, params)
    jax.block_until_ready(logits)
    assert logits.shape == (B, 9) and logits.dtype == jnp.float32
    assert bool(jnp.all(jnp.isfinite(logits)))
    print("KERNEL_OK")
</pallas_src>

<mosaic_0001>
module attributes {stable_mosaic.version = 11 : i64} {
  func.func @_tnet_branch_kernel(%arg0: i32, %arg1: i32, %arg2: memref<1x16x3xf32, #tpu.memory_space<vmem>>, %arg3: memref<3x64xf32, #tpu.memory_space<vmem>>, %arg4: memref<1x64xf32, #tpu.memory_space<vmem>>, %arg5: memref<64x128xbf16, #tpu.memory_space<vmem>>, %arg6: memref<1x128xf32, #tpu.memory_space<vmem>>, %arg7: memref<128x1024xbf16, #tpu.memory_space<vmem>>, %arg8: memref<1x1024xf32, #tpu.memory_space<vmem>>, %arg9: memref<1024x512xbf16, #tpu.memory_space<vmem>>, %arg10: memref<1x512xf32, #tpu.memory_space<vmem>>, %arg11: memref<512x256xbf16, #tpu.memory_space<vmem>>, %arg12: memref<1x256xf32, #tpu.memory_space<vmem>>, %arg13: memref<256x128xbf16, #tpu.memory_space<vmem>>, %arg14: memref<1x128xf32, #tpu.memory_space<vmem>>, %arg15: memref<1x1x128xf32, #tpu.memory_space<vmem>>, %arg16: memref<1x1024xf32, #tpu.memory_space<vmem>>) attributes {dimension_semantics = [#tpu.dimension_semantics<parallel>, #tpu.dimension_semantics<arbitrary>], iteration_bounds = array<i64: 2, 1>, scalar_prefetch = 0 : i64, scratch_operands = 1 : i64, tpu.core_type = #tpu.core_type<tc>, window_params = [{transform_indices = @transform_0, window_bounds = array<i64: 1, 16, 3>}, {pipeline_mode = #tpu.pipeline_mode<synchronous>, transform_indices = @transform_1, window_bounds = array<i64: 3, 64>}, {pipeline_mode = #tpu.pipeline_mode<synchronous>, transform_indices = @transform_2, window_bounds = array<i64: 1, 64>}, {pipeline_mode = #tpu.pipeline_mode<synchronous>, transform_indices = @transform_3, window_bounds = array<i64: 64, 128>}, {pipeline_mode = #tpu.pipeline_mode<synchronous>, transform_indices = @transform_4, window_bounds = array<i64: 1, 128>}, {pipeline_mode = #tpu.pipeline_mode<synchronous>, transform_indices = @transform_5, window_bounds = array<i64: 128, 1024>}, {pipeline_mode = #tpu.pipeline_mode<synchronous>, transform_indices = @transform_6, window_bounds = array<i64: 1, 1024>}, {pipeline_mode = #tpu.pipeline_mode<synchronous>, transform_indices = @transform_7, window_bounds = array<i64: 1024, 512>}, {pipeline_mode = #tpu.pipeline_mode<synchronous>, transform_indices = @transform_8, window_bounds = array<i64: 1, 512>}, {pipeline_mode = #tpu.pipeline_mode<synchronous>, transform_indices = @transform_9, window_bounds = array<i64: 512, 256>}, {pipeline_mode = #tpu.pipeline_mode<synchronous>, transform_indices = @transform_10, window_bounds = array<i64: 1, 256>}, {pipeline_mode = #tpu.pipeline_mode<synchronous>, transform_indices = @transform_11, window_bounds = array<i64: 256, 128>}, {pipeline_mode = #tpu.pipeline_mode<synchronous>, transform_indices = @transform_12, window_bounds = array<i64: 1, 128>}, {transform_indices = @transform_13, window_bounds = array<i64: 1, 1, 128>}]} {
    %c0 = arith.constant 0 : index
    %c0_0 = arith.constant 0 : index
    %c0_1 = arith.constant 0 : index
    %0 = vector.load %arg2[%c0, %c0_0, %c0_1] : memref<1x16x3xf32, #tpu.memory_space<vmem>>, vector<1x16x3xf32>
    %1 = vector.shape_cast %0 : vector<1x16x3xf32> to vector<16x3xf32>
    %c0_2 = arith.constant 0 : index
    %c0_3 = arith.constant 0 : index
    %2 = vector.load %arg3[%c0_2, %c0_3] : memref<3x64xf32, #tpu.memory_space<vmem>>, vector<3x64xf32>
    %c0_i32 = arith.constant 0 : i32
    %3 = arith.cmpi eq, %arg1, %c0_i32 : i32
    %4 = arith.extui %3 : i1 to i32
    %c0_i32_4 = arith.constant 0 : i32
    %5 = arith.cmpi ne, %4, %c0_i32_4 : i32
    scf.if %5 {
      %cst_27 = arith.constant 0xFF800000 : f32
      %36 = vector.broadcast %cst_27 : f32 to vector<1x1024xf32>
      %c0_28 = arith.constant 0 : index
      %c0_29 = arith.constant 0 : index
      %37 = vector.load %arg16[%c0_28, %c0_29] : memref<1x1024xf32, #tpu.memory_space<vmem>>, vector<1x1024xf32>
      tpu.vector_store %arg16[%c0_28, %c0_29], %36 {strides = array<i32>} : memref<1x1024xf32, #tpu.memory_space<vmem>>, vector<1x1024xf32>,
    } else {
    }
    %cst = arith.constant dense<0.000000e+00> : vector<16x64xf32>
    %6 = tpu.matmul %1, %2, %cst {dimension_numbers = #tpu.dot_dimension_numbers<[1], [0], [0], [1], [0, 0, 1, 1], [], []>} : vector<16x3xf32>, vector<3x64xf32>, vector<16x64xf32> -> vector<16x64xf32>
    %c0_5 = arith.constant 0 : index
    %c0_6 = arith.constant 0 : index
    %7 = vector.load %arg4[%c0_5, %c0_6] : memref<1x64xf32, #tpu.memory_space<vmem>>, vector<1x64xf32>
    %8 = vector.broadcast %7 : vector<1x64xf32> to vector<16x64xf32>
    %9 = arith.addf %6, %8 : vector<16x64xf32>
    %cst_7 = arith.constant 0.000000e+00 : f32
    %10 = vector.broadcast %cst_7 : f32 to vector<16x64xf32>
    %11 = arith.maximumf %9, %10 : vector<16x64xf32>
    %12 = arith.truncf %11 : vector<16x64xf32> to vector<16x64xbf16>
    %c0_8 = arith.constant 0 : index
    %c0_9 = arith.constant 0 : index
    %13 = vector.load %arg5[%c0_8, %c0_9] : memref<64x128xbf16, #tpu.memory_space<vmem>>, vector<64x128xbf16>
    %cst_10 = arith.constant dense<0.000000e+00> : vector<16x128xf32>
    %14 = tpu.matmul %12, %13, %cst_10 {dimension_numbers = #tpu.dot_dimension_numbers<[1], [0], [0], [1], [0, 0, 1, 1], [], []>} : vector<16x64xbf16>, vector<64x128xbf16>, vector<16x128xf32> -> vector<16x128xf32>
    %c0_11 = arith.constant 0 : index
    %c0_12 = arith.constant 0 : index
    %15 = vector.load %arg6[%c0_11, %c0_12] : memref<1x128xf32, #tpu.memory_space<vmem>>, vector<1x128xf32>
    %16 = vector.broadcast %15 : vector<1x128xf32> to vector<16x128xf32>
    %17 = arith.addf %14, %16 : vector<16x128xf32>
    %cst_13 = arith.constant 0.000000e+00 : f32
    %18 = vector.broadcast %cst_13 : f32 to vector<16x128xf32>
    %19 = arith.maximumf %17, %18 : vector<16x128xf32>
    %20 = arith.truncf %19 : vector<16x128xf32> to vector<16x128xbf16>
    %c0_14 = arith.constant 0 : index
    %c0_15 = arith.constant 0 : index
    %21 = vector.load %arg7[%c0_14, %c0_15] : memref<128x1024xbf16, #tpu.memory_space<vmem>>, vector<128x1024xbf16>
    %cst_16 = arith.constant dense<0.000000e+00> : vector<16x1024xf32>
    %22 = tpu.matmul %20, %21, %cst_16 {dimension_numbers = #tpu.dot_dimension_numbers<[1], [0], [0], [1], [0, 0, 1, 1], [], []>} : vector<16x128xbf16>, vector<128x1024xbf16>, vector<16x1024xf32> -> vector<16x1024xf32>
    %c0_17 = arith.constant 0 : index
    %c0_18 = arith.constant 0 : index
    %23 = vector.load %arg8[%c0_17, %c0_18] : memref<1x1024xf32, #tpu.memory_space<vmem>>, vector<1x1024xf32>
    %24 = vector.broadcast %23 : vector<1x1024xf32> to vector<16x1024xf32>
    %25 = arith.addf %22, %24 : vector<16x1024xf32>
    %cst_19 = arith.constant 0.000000e+00 : f32
    %26 = vector.broadcast %cst_19 : f32 to vector<16x1024xf32>
    %27 = arith.maximumf %25, %26 : vector<16x1024xf32>
    %c0_20 = arith.constant 0 : index
    %c0_21 = arith.constant 0 : index
    %28 = vector.load %arg16[%c0_20, %c0_21] : memref<1x1024xf32, #tpu.memory_space<vmem>>, vector<1x1024xf32>
    %cst_22 = arith.constant dense<0xFF800000> : vector<1024xf32>
    %29 = vector.multi_reduction <maximumf>, %27, %cst_22 [0] : vector<16x1024xf32> to vector<1024xf32>
    %30 = vector.shape_cast %29 : vector<1024xf32> to vector<1x1024xf32>
    %31 = arith.maximumf %28, %30 : vector<1x1024xf32>
    %c0_23 = arith.constant 0 : index
    %c0_24 = arith.constant 0 : index
    %32 = vector.load %arg16[%c0_23, %c0_24] : memref<1x1024xf32, #tpu.memory_space<vmem>>, vector<1x1024xf32>
    tpu.vector_store %arg16[%c0_23, %c0_24], %31 {strides = array<i32>} : memref<1x1024xf32, #tpu.memory_space<vmem>>, vector<1x1024xf32>,
    %c0_i32_25 = arith.constant 0 : i32
    %33 = arith.cmpi eq, %arg1, %c0_i32_25 : i32
    %34 = arith.extui %33 : i1 to i32
    %c0_i32_26 = arith.constant 0 : i32
    %35 = arith.cmpi ne, %34, %c0_i32_26 : i32
    scf.if %35 {
      %c0_27 = arith.constant 0 : index
      %c0_28 = arith.constant 0 : index
      %36 = vector.load %arg16[%c0_27, %c0_28] : memref<1x1024xf32, #tpu.memory_space<vmem>>, vector<1x1024xf32>
      %37 = arith.truncf %36 : vector<1x1024xf32> to vector<1x1024xbf16>
      %c0_29 = arith.constant 0 : index
      %c0_30 = arith.constant 0 : index
      %38 = vector.load %arg9[%c0_29, %c0_30] : memref<1024x512xbf16, #tpu.memory_space<vmem>>, vector<1024x512xbf16>
      %cst_31 = arith.constant dense<0.000000e+00> : vector<1x512xf32>
      %39 = tpu.matmul %37, %38, %cst_31 {dimension_numbers = #tpu.dot_dimension_numbers<[1], [0], [0], [1], [0, 0, 1, 1], [], []>} : vector<1x1024xbf16>, vector<1024x512xbf16>, vector<1x512xf32> -> vector<1x512xf32>
      %c0_32 = arith.constant 0 : index
      %c0_33 = arith.constant 0 : index
      %40 = vector.load %arg10[%c0_32, %c0_33] : memref<1x512xf32, #tpu.memory_space<vmem>>, vector<1x512xf32>
      %41 = arith.addf %39, %40 : vector<1x512xf32>
      %cst_34 = arith.constant 0.000000e+00 : f32
      %42 = vector.broadcast %cst_34 : f32 to vector<1x512xf32>
      %43 = arith.maximumf %41, %42 : vector<1x512xf32>
      %44 = arith.truncf %43 : vector<1x512xf32> to vector<1x512xbf16>
      %c0_35 = arith.constant 0 : index
      %c0_36 = arith.constant 0 : index
      %45 = vector.load %arg11[%c0_35, %c0_36] : memref<512x256xbf16, #tpu.memory_space<vmem>>, vector<512x256xbf16>
      %cst_37 = arith.constant dense<0.000000e+00> : vector<1x256xf32>
      %46 = tpu.matmul %44, %45, %cst_37 {dimension_numbers = #tpu.dot_dimension_numbers<[1], [0], [0], [1], [0, 0, 1, 1], [], []>} : vector<1x512xbf16>, vector<512x256xbf16>, vector<1x256xf32> -> vector<1x256xf32>
      %c0_38 = arith.constant 0 : index
      %c0_39 = arith.constant 0 : index
      %47 = vector.load %arg12[%c0_38, %c0_39] : memref<1x256xf32, #tpu.memory_space<vmem>>, vector<1x256xf32>
      %48 = arith.addf %46, %47 : vector<1x256xf32>
      %cst_40 = arith.constant 0.000000e+00 : f32
      %49 = vector.broadcast %cst_40 : f32 to vector<1x256xf32>
      %50 = arith.maximumf %48, %49 : vector<1x256xf32>
      %51 = arith.truncf %50 : vector<1x256xf32> to vector<1x256xbf16>
      %c0_41 = arith.constant 0 : index
      %c0_42 = arith.constant 0 : index
      %52 = vector.load %arg13[%c0_41, %c0_42] : memref<256x128xbf16, #tpu.memory_space<vmem>>, vector<256x128xbf16>
      %cst_43 = arith.constant dense<0.000000e+00> : vector<1x128xf32>
      %53 = tpu.matmul %51, %52, %cst_43 {dimension_numbers = #tpu.dot_dimension_numbers<[1], [0], [0], [1], [0, 0, 1, 1], [], []>} : vector<1x256xbf16>, vector<256x128xbf16>, vector<1x128xf32> -> vector<1x128xf32>
      %c0_44 = arith.constant 0 : index
      %c0_45 = arith.constant 0 : index
      %54 = vector.load %arg14[%c0_44, %c0_45] : memref<1x128xf32, #tpu.memory_space<vmem>>, vector<1x128xf32>
      %55 = arith.addf %53, %54 : vector<1x128xf32>
      %c0_46 = arith.constant 0 : index
      %c0_47 = arith.constant 0 : index
      %c0_48 = arith.constant 0 : index
      %56 = vector.load %arg15[%c0_46, %c0_47, %c0_48] : memref<1x1x128xf32, #tpu.memory_space<vmem>>, vector<1x1x128xf32>
      %57 = vector.shape_cast %56 : vector<1x1x128xf32> to vector<1x128xf32>
      %58 = vector.shape_cast %55 : vector<1x128xf32> to vector<1x1x128xf32>
      tpu.vector_store %arg15[%c0_46, %c0_47, %c0_48], %58 {strides = array<i32>} : memref<1x1x128xf32, #tpu.memory_space<vmem>>, vector<1x1x128xf32>,
    } else {
    }
    return
  }
  func.func @transform_0(%arg0: i32, %arg1: i32) -> (i32, i32, i32) {
    %c0_i32 = arith.constant 0 : i32
    %c0_i32_0 = arith.constant 0 : i32
    return %arg0, %arg1, %c0_i32 : i32, i32, i32
  }
  func.func @transform_1(%arg0: i32, %arg1: i32) -> (i32, i32) {
    %c0_i32 = arith.constant 0 : i32
    %c0_i32_0 = arith.constant 0 : i32
    %c0_i32_1 = arith.constant 0 : i32
    return %c0_i32, %c0_i32_0 : i32, i32
  }
  func.func @transform_2(%arg0: i32, %arg1: i32) -> (i32, i32) {
    %c0_i32 = arith.constant 0 : i32
    %c0_i32_0 = arith.constant 0 : i32
    %c0_i32_1 = arith.constant 0 : i32
    return %c0_i32, %c0_i32_0 : i32, i32
  }
  func.func @transform_3(%arg0: i32, %arg1: i32) -> (i32, i32) {
    %c0_i32 = arith.constant 0 : i32
    %c0_i32_0 = arith.constant 0 : i32
    %c0_i32_1 = arith.constant 0 : i32
    return %c0_i32, %c0_i32_0 : i32, i32
  }
  func.func @transform_4(%arg0: i32, %arg1: i32) -> (i32, i32) {
    %c0_i32 = arith.constant 0 : i32
    %c0_i32_0 = arith.constant 0 : i32
    %c0_i32_1 = arith.constant 0 : i32
    return %c0_i32, %c0_i32_0 : i32, i32
  }
  func.func @transform_5(%arg0: i32, %arg1: i32) -> (i32, i32) {
    %c0_i32 = arith.constant 0 : i32
    %c0_i32_0 = arith.constant 0 : i32
    %c0_i32_1 = arith.constant 0 : i32
    return %c0_i32, %c0_i32_0 : i32, i32
  }
  func.func @transform_6(%arg0: i32, %arg1: i32) -> (i32, i32) {
    %c0_i32 = arith.constant 0 : i32
    %c0_i32_0 = arith.constant 0 : i32
    %c0_i32_1 = arith.constant 0 : i32
    return %c0_i32, %c0_i32_0 : i32, i32
  }
  func.func @transform_7(%arg0: i32, %arg1: i32) -> (i32, i32) {
    %c0_i32 = arith.constant 0 : i32
    %c0_i32_0 = arith.constant 0 : i32
    %c0_i32_1 = arith.constant 0 : i32
    return %c0_i32, %c0_i32_0 : i32, i32
  }
  func.func @transform_8(%arg0: i32, %arg1: i32) -> (i32, i32) {
    %c0_i32 = arith.constant 0 : i32
    %c0_i32_0 = arith.constant 0 : i32
    %c0_i32_1 = arith.constant 0 : i32
    return %c0_i32, %c0_i32_0 : i32, i32
  }
  func.func @transform_9(%arg0: i32, %arg1: i32) -> (i32, i32) {
    %c0_i32 = arith.constant 0 : i32
    %c0_i32_0 = arith.constant 0 : i32
    %c0_i32_1 = arith.constant 0 : i32
    return %c0_i32, %c0_i32_0 : i32, i32
  }
  func.func @transform_10(%arg0: i32, %arg1: i32) -> (i32, i32) {
    %c0_i32 = arith.constant 0 : i32
    %c0_i32_0 = arith.constant 0 : i32
    %c0_i32_1 = arith.constant 0 : i32
    return %c0_i32, %c0_i32_0 : i32, i32
  }
  func.func @transform_11(%arg0: i32, %arg1: i32) -> (i32, i32) {
    %c0_i32 = arith.constant 0 : i32
    %c0_i32_0 = arith.constant 0 : i32
    %c0_i32_1 = arith.constant 0 : i32
    return %c0_i32, %c0_i32_0 : i32, i32
  }
  func.func @transform_12(%arg0: i32, %arg1: i32) -> (i32, i32) {
    %c0_i32 = arith.constant 0 : i32
    %c0_i32_0 = arith.constant 0 : i32
    %c0_i32_1 = arith.constant 0 : i32
    return %c0_i32, %c0_i32_0 : i32, i32
  }
  func.func @transform_13(%arg0: i32, %arg1: i32) -> (i32, i32, i32) {
    %c0_i32 = arith.constant 0 : i32
    %c0_i32_0 = arith.constant 0 : i32
    %c0_i32_1 = arith.constant 0 : i32
    return %arg0, %c0_i32, %c0_i32_0 : i32, i32, i32
  }
}

module attributes {stable_mosaic.version = 11 : i64} {
  func.func @_enc_branch_kernel(%arg0: i32, %arg1: i32, %arg2: memref<1x16x3xf32, #tpu.memory_space<vmem>>, %arg3: memref<1x3x3xf32, #tpu.memory_space<vmem>>, %arg4: memref<3x64xf32, #tpu.memory_space<vmem>>, %arg5: memref<1x64xf32, #tpu.memory_space<vmem>>, %arg6: memref<64x128xbf16, #tpu.memory_space<vmem>>, %arg7: memref<1x128xf32, #tpu.memory_space<vmem>>, %arg8: memref<128x1024xbf16, #tpu.memory_space<vmem>>, %arg9: memref<1x1024xf32, #tpu.memory_space<vmem>>, %arg10: memref<1024x512xbf16, #tpu.memory_space<vmem>>, %arg11: memref<1x512xf32, #tpu.memory_space<vmem>>, %arg12: memref<512x256xbf16, #tpu.memory_space<vmem>>, %arg13: memref<1x256xf32, #tpu.memory_space<vmem>>, %arg14: memref<256x128xbf16, #tpu.memory_space<vmem>>, %arg15: memref<1x128xf32, #tpu.memory_space<vmem>>, %arg16: memref<1x1x128xf32, #tpu.memory_space<vmem>>, %arg17: memref<1x1024xf32, #tpu.memory_space<vmem>>) attributes {dimension_semantics = [#tpu.dimension_semantics<parallel>, #tpu.dimension_semantics<arbitrary>], iteration_bounds = array<i64: 2, 1>, scalar_prefetch = 0 : i64, scratch_operands = 1 : i64, tpu.core_type = #tpu.core_type<tc>, window_params = [{transform_indices = @transform_0, window_bounds = array<i64: 1, 16, 3>}, {transform_indices = @transform_1, window_bounds = array<i64: 1, 3, 3>}, {pipeline_mode = #tpu.pipeline_mode<synchronous>, transform_indices = @transform_2, window_bounds = array<i64: 3, 64>}, {pipeline_mode = #tpu.pipeline_mode<synchronous>, transform_indices = @transform_3, window_bounds = array<i64: 1, 64>}, {pipeline_mode = #tpu.pipeline_mode<synchronous>, transform_indices = @transform_4, window_bounds = array<i64: 64, 128>}, {pipeline_mode = #tpu.pipeline_mode<synchronous>, transform_indices = @transform_5, window_bounds = array<i64: 1, 128>}, {pipeline_mode = #tpu.pipeline_mode<synchronous>, transform_indices = @transform_6, window_bounds = array<i64: 128, 1024>}, {pipeline_mode = #tpu.pipeline_mode<synchronous>, transform_indices = @transform_7, window_bounds = array<i64: 1, 1024>}, {pipeline_mode = #tpu.pipeline_mode<synchronous>, transform_indices = @transform_8, window_bounds = array<i64: 1024, 512>}, {pipeline_mode = #tpu.pipeline_mode<synchronous>, transform_indices = @transform_9, window_bounds = array<i64: 1, 512>}, {pipeline_mode = #tpu.pipeline_mode<synchronous>, transform_indices = @transform_10, window_bounds = array<i64: 512, 256>}, {pipeline_mode = #tpu.pipeline_mode<synchronous>, transform_indices = @transform_11, window_bounds = array<i64: 1, 256>}, {pipeline_mode = #tpu.pipeline_mode<synchronous>, transform_indices = @transform_12, window_bounds = array<i64: 256, 128>}, {pipeline_mode = #tpu.pipeline_mode<synchronous>, transform_indices = @transform_13, window_bounds = array<i64: 1, 128>}, {transform_indices = @transform_14, window_bounds = array<i64: 1, 1, 128>}]} {
    %c0 = arith.constant 0 : index
    %c0_0 = arith.constant 0 : index
    %c0_1 = arith.constant 0 : index
    %0 = vector.load %arg3[%c0, %c0_0, %c0_1] : memref<1x3x3xf32, #tpu.memory_space<vmem>>, vector<1x3x3xf32>
    %1 = vector.shape_cast %0 : vector<1x3x3xf32> to vector<3x3xf32>
    %c0_2 = arith.constant 0 : index
    %c0_3 = arith.constant 0 : index
    %2 = vector.load %arg4[%c0_2, %c0_3] : memref<3x64xf32, #tpu.memory_space<vmem>>, vector<3x64xf32>
    %cst = arith.constant dense<0.000000e+00> : vector<3x64xf32>
    %3 = tpu.matmul %1, %2, %cst {dimension_numbers = #tpu.dot_dimension_numbers<[1], [0], [0], [1], [0, 0, 1, 1], [], []>} : vector<3x3xf32>, vector<3x64xf32>, vector<3x64xf32> -> vector<3x64xf32>
    %c0_4 = arith.constant 0 : index
    %c0_5 = arith.constant 0 : index
    %c0_6 = arith.constant 0 : index
    %4 = vector.load %arg2[%c0_4, %c0_5, %c0_6] : memref<1x16x3xf32, #tpu.memory_space<vmem>>, vector<1x16x3xf32>
    %5 = vector.shape_cast %4 : vector<1x16x3xf32> to vector<16x3xf32>
    %c0_i32 = arith.constant 0 : i32
    %6 = arith.cmpi eq, %arg1, %c0_i32 : i32
    %7 = arith.extui %6 : i1 to i32
    %c0_i32_7 = arith.constant 0 : i32
    %8 = arith.cmpi ne, %7, %c0_i32_7 : i32
    scf.if %8 {
      %cst_31 = arith.constant 0xFF800000 : f32
      %39 = vector.broadcast %cst_31 : f32 to vector<1x1024xf32>
      %c0_32 = arith.constant 0 : index
      %c0_33 = arith.constant 0 : index
      %40 = vector.load %arg17[%c0_32, %c0_33] : memref<1x1024xf32, #tpu.memory_space<vmem>>, vector<1x1024xf32>
      tpu.vector_store %arg17[%c0_32, %c0_33], %39 {strides = array<i32>} : memref<1x1024xf32, #tpu.memory_space<vmem>>, vector<1x1024xf32>,
    } else {
    }
    %cst_8 = arith.constant dense<0.000000e+00> : vector<16x64xf32>
    %9 = tpu.matmul %5, %3, %cst_8 {dimension_numbers = #tpu.dot_dimension_numbers<[1], [0], [0], [1], [0, 0, 1, 1], [], []>} : vector<16x3xf32>, vector<3x64xf32>, vector<16x64xf32> -> vector<16x64xf32>
    %c0_9 = arith.constant 0 : index
    %c0_10 = arith.constant 0 : index
    %10 = vector.load %arg5[%c0_9, %c0_10] : memref<1x64xf32, #tpu.memory_space<vmem>>, vector<1x64xf32>
    %11 = vector.broadcast %10 : vector<1x64xf32> to vector<16x64xf32>
    %12 = arith.addf %9, %11 : vector<16x64xf32>
    %cst_11 = arith.constant 0.000000e+00 : f32
    %13 = vector.broadcast %cst_11 : f32 to vector<16x64xf32>
    %14 = arith.maximumf %12, %13 : vector<16x64xf32>
    %15 = arith.truncf %14 : vector<16x64xf32> to vector<16x64xbf16>
    %c0_12 = arith.constant 0 : index
    %c0_13 = arith.constant 0 : index
    %16 = vector.load %arg6[%c0_12, %c0_13] : memref<64x128xbf16, #tpu.memory_space<vmem>>, vector<64x128xbf16>
    %cst_14 = arith.constant dense<0.000000e+00> : vector<16x128xf32>
    %17 = tpu.matmul %15, %16, %cst_14 {dimension_numbers = #tpu.dot_dimension_numbers<[1], [0], [0], [1], [0, 0, 1, 1], [], []>} : vector<16x64xbf16>, vector<64x128xbf16>, vector<16x128xf32> -> vector<16x128xf32>
    %c0_15 = arith.constant 0 : index
    %c0_16 = arith.constant 0 : index
    %18 = vector.load %arg7[%c0_15, %c0_16] : memref<1x128xf32, #tpu.memory_space<vmem>>, vector<1x128xf32>
    %19 = vector.broadcast %18 : vector<1x128xf32> to vector<16x128xf32>
    %20 = arith.addf %17, %19 : vector<16x128xf32>
    %cst_17 = arith.constant 0.000000e+00 : f32
    %21 = vector.broadcast %cst_17 : f32 to vector<16x128xf32>
    %22 = arith.maximumf %20, %21 : vector<16x128xf32>
    %23 = arith.truncf %22 : vector<16x128xf32> to vector<16x128xbf16>
    %c0_18 = arith.constant 0 : index
    %c0_19 = arith.constant 0 : index
    %24 = vector.load %arg8[%c0_18, %c0_19] : memref<128x1024xbf16, #tpu.memory_space<vmem>>, vector<128x1024xbf16>
    %cst_20 = arith.constant dense<0.000000e+00> : vector<16x1024xf32>
    %25 = tpu.matmul %23, %24, %cst_20 {dimension_numbers = #tpu.dot_dimension_numbers<[1], [0], [0], [1], [0, 0, 1, 1], [], []>} : vector<16x128xbf16>, vector<128x1024xbf16>, vector<16x1024xf32> -> vector<16x1024xf32>
    %c0_21 = arith.constant 0 : index
    %c0_22 = arith.constant 0 : index
    %26 = vector.load %arg9[%c0_21, %c0_22] : memref<1x1024xf32, #tpu.memory_space<vmem>>, vector<1x1024xf32>
    %27 = vector.broadcast %26 : vector<1x1024xf32> to vector<16x1024xf32>
    %28 = arith.addf %25, %27 : vector<16x1024xf32>
    %cst_23 = arith.constant 0.000000e+00 : f32
    %29 = vector.broadcast %cst_23 : f32 to vector<16x1024xf32>
    %30 = arith.maximumf %28, %29 : vector<16x1024xf32>
    %c0_24 = arith.constant 0 : index
    %c0_25 = arith.constant 0 : index
    %31 = vector.load %arg17[%c0_24, %c0_25] : memref<1x1024xf32, #tpu.memory_space<vmem>>, vector<1x1024xf32>
    %cst_26 = arith.constant dense<0xFF800000> : vector<1024xf32>
    %32 = vector.multi_reduction <maximumf>, %30, %cst_26 [0] : vector<16x1024xf32> to vector<1024xf32>
    %33 = vector.shape_cast %32 : vector<1024xf32> to vector<1x1024xf32>
    %34 = arith.maximumf %31, %33 : vector<1x1024xf32>
    %c0_27 = arith.constant 0 : index
    %c0_28 = arith.constant 0 : index
    %35 = vector.load %arg17[%c0_27, %c0_28] : memref<1x1024xf32, #tpu.memory_space<vmem>>, vector<1x1024xf32>
    tpu.vector_store %arg17[%c0_27, %c0_28], %34 {strides = array<i32>} : memref<1x1024xf32, #tpu.memory_space<vmem>>, vector<1x1024xf32>,
    %c0_i32_29 = arith.constant 0 : i32
    %36 = arith.cmpi eq, %arg1, %c0_i32_29 : i32
    %37 = arith.extui %36 : i1 to i32
    %c0_i32_30 = arith.constant 0 : i32
    %38 = arith.cmpi ne, %37, %c0_i32_30 : i32
    scf.if %38 {
      %c0_31 = arith.constant 0 : index
      %c0_32 = arith.constant 0 : index
      %39 = vector.load %arg17[%c0_31, %c0_32] : memref<1x1024xf32, #tpu.memory_space<vmem>>, vector<1x1024xf32>
      %40 = arith.truncf %39 : vector<1x1024xf32> to vector<1x1024xbf16>
      %c0_33 = arith.constant 0 : index
      %c0_34 = arith.constant 0 : index
      %41 = vector.load %arg10[%c0_33, %c0_34] : memref<1024x512xbf16, #tpu.memory_space<vmem>>, vector<1024x512xbf16>
      %cst_35 = arith.constant dense<0.000000e+00> : vector<1x512xf32>
      %42 = tpu.matmul %40, %41, %cst_35 {dimension_numbers = #tpu.dot_dimension_numbers<[1], [0], [0], [1], [0, 0, 1, 1], [], []>} : vector<1x1024xbf16>, vector<1024x512xbf16>, vector<1x512xf32> -> vector<1x512xf32>
      %c0_36 = arith.constant 0 : index
      %c0_37 = arith.constant 0 : index
      %43 = vector.load %arg11[%c0_36, %c0_37] : memref<1x512xf32, #tpu.memory_space<vmem>>, vector<1x512xf32>
      %44 = arith.addf %42, %43 : vector<1x512xf32>
      %cst_38 = arith.constant 0.000000e+00 : f32
      %45 = vector.broadcast %cst_38 : f32 to vector<1x512xf32>
      %46 = arith.maximumf %44, %45 : vector<1x512xf32>
      %47 = arith.truncf %46 : vector<1x512xf32> to vector<1x512xbf16>
      %c0_39 = arith.constant 0 : index
      %c0_40 = arith.constant 0 : index
      %48 = vector.load %arg12[%c0_39, %c0_40] : memref<512x256xbf16, #tpu.memory_space<vmem>>, vector<512x256xbf16>
      %cst_41 = arith.constant dense<0.000000e+00> : vector<1x256xf32>
      %49 = tpu.matmul %47, %48, %cst_41 {dimension_numbers = #tpu.dot_dimension_numbers<[1], [0], [0], [1], [0, 0, 1, 1], [], []>} : vector<1x512xbf16>, vector<512x256xbf16>, vector<1x256xf32> -> vector<1x256xf32>
      %c0_42 = arith.constant 0 : index
      %c0_43 = arith.constant 0 : index
      %50 = vector.load %arg13[%c0_42, %c0_43] : memref<1x256xf32, #tpu.memory_space<vmem>>, vector<1x256xf32>
      %51 = arith.addf %49, %50 : vector<1x256xf32>
      %cst_44 = arith.constant 0.000000e+00 : f32
      %52 = vector.broadcast %cst_44 : f32 to vector<1x256xf32>
      %53 = arith.maximumf %51, %52 : vector<1x256xf32>
      %54 = arith.truncf %53 : vector<1x256xf32> to vector<1x256xbf16>
      %c0_45 = arith.constant 0 : index
      %c0_46 = arith.constant 0 : index
      %55 = vector.load %arg14[%c0_45, %c0_46] : memref<256x128xbf16, #tpu.memory_space<vmem>>, vector<256x128xbf16>
      %cst_47 = arith.constant dense<0.000000e+00> : vector<1x128xf32>
      %56 = tpu.matmul %54, %55, %cst_47 {dimension_numbers = #tpu.dot_dimension_numbers<[1], [0], [0], [1], [0, 0, 1, 1], [], []>} : vector<1x256xbf16>, vector<256x128xbf16>, vector<1x128xf32> -> vector<1x128xf32>
      %c0_48 = arith.constant 0 : index
      %c0_49 = arith.constant 0 : index
      %57 = vector.load %arg15[%c0_48, %c0_49] : memref<1x128xf32, #tpu.memory_space<vmem>>, vector<1x128xf32>
      %58 = arith.addf %56, %57 : vector<1x128xf32>
      %c0_50 = arith.constant 0 : index
      %c0_51 = arith.constant 0 : index
      %c0_52 = arith.constant 0 : index
      %59 = vector.load %arg16[%c0_50, %c0_51, %c0_52] : memref<1x1x128xf32, #tpu.memory_space<vmem>>, vector<1x1x128xf32>
      %60 = vector.shape_cast %59 : vector<1x1x128xf32> to vector<1x128xf32>
      %61 = vector.shape_cast %58 : vector<1x128xf32> to vector<1x1x128xf32>
      tpu.vector_store %arg16[%c0_50, %c0_51, %c0_52], %61 {strides = array<i32>} : memref<1x1x128xf32, #tpu.memory_space<vmem>>, vector<1x1x128xf32>,
    } else {
    }
    return
  }
  func.func @transform_0(%arg0: i32, %arg1: i32) -> (i32, i32, i32) {
    %c0_i32 = arith.constant 0 : i32
    %c0_i32_0 = arith.constant 0 : i32
    return %arg0, %arg1, %c0_i32 : i32, i32, i32
  }
  func.func @transform_1(%arg0: i32, %arg1: i32) -> (i32, i32, i32) {
    %c0_i32 = arith.constant 0 : i32
    %c0_i32_0 = arith.constant 0 : i32
    %c0_i32_1 = arith.constant 0 : i32
    return %arg0, %c0_i32, %c0_i32_0 : i32, i32, i32
  }
  func.func @transform_2(%arg0: i32, %arg1: i32) -> (i32, i32) {
    %c0_i32 = arith.constant 0 : i32
    %c0_i32_0 = arith.constant 0 : i32
    %c0_i32_1 = arith.constant 0 : i32
    return %c0_i32, %c0_i32_0 : i32, i32
  }
  func.func @transform_3(%arg0: i32, %arg1: i32) -> (i32, i32) {
    %c0_i32 = arith.constant 0 : i32
    %c0_i32_0 = arith.constant 0 : i32
    %c0_i32_1 = arith.constant 0 : i32
    return %c0_i32, %c0_i32_0 : i32, i32
  }
  func.func @transform_4(%arg0: i32, %arg1: i32) -> (i32, i32) {
    %c0_i32 = arith.constant 0 : i32
    %c0_i32_0 = arith.constant 0 : i32
    %c0_i32_1 = arith.constant 0 : i32
    return %c0_i32, %c0_i32_0 : i32, i32
  }
  func.func @transform_5(%arg0: i32, %arg1: i32) -> (i32, i32) {
    %c0_i32 = arith.constant 0 : i32
    %c0_i32_0 = arith.constant 0 : i32
    %c0_i32_1 = arith.constant 0 : i32
    return %c0_i32, %c0_i32_0 : i32, i32
  }
  func.func @transform_6(%arg0: i32, %arg1: i32) -> (i32, i32) {
    %c0_i32 = arith.constant 0 : i32
    %c0_i32_0 = arith.constant 0 : i32
    %c0_i32_1 = arith.constant 0 : i32
    return %c0_i32, %c0_i32_0 : i32, i32
  }
  func.func @transform_7(%arg0: i32, %arg1: i32) -> (i32, i32) {
    %c0_i32 = arith.constant 0 : i32
    %c0_i32_0 = arith.constant 0 : i32
    %c0_i32_1 = arith.constant 0 : i32
    return %c0_i32, %c0_i32_0 : i32, i32
  }
  func.func @transform_8(%arg0: i32, %arg1: i32) -> (i32, i32) {
    %c0_i32 = arith.constant 0 : i32
    %c0_i32_0 = arith.constant 0 : i32
    %c0_i32_1 = arith.constant 0 : i32
    return %c0_i32, %c0_i32_0 : i32, i32
  }
  func.func @transform_9(%arg0: i32, %arg1: i32) -> (i32, i32) {
    %c0_i32 = arith.constant 0 : i32
    %c0_i32_0 = arith.constant 0 : i32
    %c0_i32_1 = arith.constant 0 : i32
    return %c0_i32, %c0_i32_0 : i32, i32
  }
  func.func @transform_10(%arg0: i32, %arg1: i32) -> (i32, i32) {
    %c0_i32 = arith.constant 0 : i32
    %c0_i32_0 = arith.constant 0 : i32
    %c0_i32_1 = arith.constant 0 : i32
    return %c0_i32, %c0_i32_0 : i32, i32
  }
  func.func @transform_11(%arg0: i32, %arg1: i32) -> (i32, i32) {
    %c0_i32 = arith.constant 0 : i32
    %c0_i32_0 = arith.constant 0 : i32
    %c0_i32_1 = arith.constant 0 : i32
    return %c0_i32, %c0_i32_0 : i32, i32
  }
  func.func @transform_12(%arg0: i32, %arg1: i32) -> (i32, i32) {
    %c0_i32 = arith.constant 0 : i32
    %c0_i32_0 = arith.constant 0 : i32
    %c0_i32_1 = arith.constant 0 : i32
    return %c0_i32, %c0_i32_0 : i32, i32
  }
  func.func @transform_13(%arg0: i32, %arg1: i32) -> (i32, i32) {
    %c0_i32 = arith.constant 0 : i32
    %c0_i32_0 = arith.constant 0 : i32
    %c0_i32_1 = arith.constant 0 : i32
    return %c0_i32, %c0_i32_0 : i32, i32
  }
  func.func @transform_14(%arg0: i32, %arg1: i32) -> (i32, i32, i32) {
    %c0_i32 = arith.constant 0 : i32
    %c0_i32_0 = arith.constant 0 : i32
    %c0_i32_1 = arith.constant 0 : i32
    return %arg0, %c0_i32, %c0_i32_0 : i32, i32, i32
  }
}

</mosaic_0001>

<llo_original>
// kernel: squeeze.2
$region0: #{squeeze.2}
  %s0 = inlined_call_operand.vmem [shape: f32[2,9], index: 0, kind: input, shape index: {}]
  %s1 = inlined_call_operand.vmem [shape: f32[2,3,3], index: 1, kind: output, shape index: {}]
  $region1: #{squeeze.2} parent=0
    #allocation0 [shape = 'u8[8192]{0}', space=vmem, size = 0x2000, scoped, tag = 'scoped mem for output reshape']
    #allocation1 [shape = 'u8[4096]{0}', space=vmem, size = 0x1000, scoped, tag = 'scoped mem for input reshape']
    %s3 = sshll.u32 1, 2
    %s4 = ssub.s32 %s3, 1
    %v5 = vld [vmem:[%s0] sm:%s4]
    %6 = vst [vmem:[#allocation1] sm:%s4] %v5
    %v7 = vld [vmem:[#allocation1] sm:$0x3]
    %vm8 = vcmask 23552
    %9 = vst.msk [vmem:[#allocation0] ss:$8 sm:$0x3] %vm8, %v7
    %v10 = vld [vmem:[#allocation1] sm:$0x3]
    %11 = vrot.lane.b32.xlu0 %v10, 125
    %v12 = vpop.permute.xlu0 %11
    %vm13 = vcmask 23552
    %s14 = scalar_lea.vmem [#allocation0], 1
    %15 = vst.msk [vmem:[%s14] ss:$8 sm:$0x3] %vm13, %v12
    %v16 = vld [vmem:[#allocation1] sm:$0x3]
    %17 = vrot.lane.b32.xlu0 %v16, 122
    %v18 = vpop.permute.xlu0 %17
    %vm19 = vcmask 23552
    %s20 = scalar_lea.vmem [#allocation0], 2
    %21 = vst.msk [vmem:[%s20] ss:$8 sm:$0x3] %vm19, %v18
    %s23 = sshll.u32 1, 4
    %s24 = ssub.s32 %s23, 1
    %v26 = vld [vmem:[#allocation0] sm:%s24]
    %s27 = sshll.u32 1, 4
    %s28 = ssub.s32 %s27, 1
    %29 = vst [vmem:[%s1] sm:%s28] %v26
    %s30 = scalar_lea.vmem [#allocation0], 8
    %v31 = vld [vmem:[%s30] sm:%s24]
    %s32 = sshll.u32 1, 4
    %s33 = ssub.s32 %s32, 1
    %s34 = scalar_lea.vmem %s1, 4
    %35 = vst [vmem:[%s34] sm:%s33] %v31

// kernel: pointnet_forward.2
$region0: #{pointnet_forward.2}
  #allocation0 [shape = 'u32[]', space=smem, size = 0x4, offset = 0x4, fixed_abs, tag = 'smem constant byte address 0x4 - core index']
  #allocation1 [shape = 'u32[144,128]{1,0:T(1,128)}', space=vmem, size = 0x12000, scoped, tag = 'internal scratch']
  #allocation2 [shape = 'f32[1,1024]{1,0:T(1,128)}', space=vmem, size = 0x1000, scoped, tag = 'scratch operand']
  %s0 = inlined_call_operand.vmem [shape: f32[2,16,3], index: 0, kind: input, shape index: {}]
  %s1 = inlined_call_operand.vmem [shape: f32[3,64], index: 1, kind: input, shape index: {}]
  %s2 = inlined_call_operand.vmem [shape: f32[1,64], index: 2, kind: input, shape index: {}]
  %s3 = inlined_call_operand.vmem [shape: bf16[64,128], index: 3, kind: input, shape index: {}]
  %s4 = inlined_call_operand.vmem [shape: f32[1,128], index: 4, kind: input, shape index: {}]
  %s5 = inlined_call_operand.hbm [shape: bf16[128,1024], index: 5, kind: input, shape index: {}]
  %s6 = inlined_call_operand.vmem [shape: f32[1,1024], index: 6, kind: input, shape index: {}]
  %s7 = inlined_call_operand.hbm [shape: bf16[1024,512], index: 7, kind: input, shape index: {}]
  %s8 = inlined_call_operand.vmem [shape: f32[1,512], index: 8, kind: input, shape index: {}]
  %s9 = inlined_call_operand.hbm [shape: bf16[512,256], index: 9, kind: input, shape index: {}]
  %s10 = inlined_call_operand.vmem [shape: f32[1,256], index: 10, kind: input, shape index: {}]
  %s11 = inlined_call_operand.hbm [shape: bf16[256,128], index: 11, kind: input, shape index: {}]
  %s12 = inlined_call_operand.vmem [shape: f32[1,128], index: 12, kind: input, shape index: {}]
  %s13 = inlined_call_operand.vmem [shape: f32[2,1,128], index: 13, kind: output, shape index: {}]
  %s14 = sld [smem:[#allocation0]]
  $region109: #{pointnet_forward.2} parent=0
    _
  %s16 = ssub.s32 1, %s14
  %s17 = scalar_select 0, %s16, %s14
  $region1: #{pointnet_forward.2} parent=0
    #allocation3 [shape = 'u8[262144]{0}', space=vmem, size = 0x40000, scoped, tag = 'input window, operand 5, single buffered']
    #allocation4 [shape = 's32[2]{0}', space=sflag, size = 0x8, scoped, tag = 'scoped memory for pointnet_forward.2']
    #allocation5 [shape = 'u8[1048576]{0}', space=vmem, size = 0x100000, scoped, tag = 'input window, operand 7, single buffered']
    #allocation6 [shape = 's32[1]{0}', space=sflag, size = 0x4, scoped, tag = 'scoped memory for pointnet_forward.2']
    #allocation7 [shape = 'u8[262144]{0}', space=vmem, size = 0x40000, scoped, tag = 'input window, operand 9, single buffered']
    #allocation8 [shape = 'u8[65536]{0}', space=vmem, size = 0x10000, scoped, tag = 'input window, operand 11, single buffered']
    #allocation9 [shape = 's32[1]{0}', space=sflag, size = 0x4, scoped, tag = 'scoped memory for pointnet_forward.2']
    %18 = vsyncpa [#allocation4], 0
    %19 = vsyncpa [#allocation6], 0
    %20 = vsyncpa [#allocation9], 0
    loop: start=0, step=1, limit=4
    $region2: #{pointnet_forward.2} parent=1 // loop_pre_header
      _
    $region3: #{pointnet_forward.2} parent=1 // loop_header
      %s22 = sphi 0, %s26
      %p23 = scmp.ge.s32.totalorder %s22, 4
      %s29 = sphi 0, %s41
      %s30 = sphi 0, %s37
      %s31 = sphi 0, %s29
      %s32 = sphi 0, %s30
      %s33 = sphi 0, %s31
      %s34 = sphi 0, %s32
      %s46 = sphi 0, %s48
      %s49 = sphi 0, %s46
      %s50 = sphi 0, %s49
      %s66 = sphi 0, %s50
      %s70 = sphi 0, %s70
      %s72 = sphi 0, %s70
      %s73 = sphi 0, %s72
      %s87 = sphi 0, %s73
      %s91 = sphi 0, %s91
      %s93 = sphi 0, %s91
      %s94 = sphi 0, %s93
      %s108 = sphi 0, %s94
      %s112 = sphi 0, %s112
      %s114 = sphi 0, %s112
      %s115 = sphi 0, %s114
      %s129 = sphi 0, %s115
      %s133 = sphi 0, %s133
      %s135 = sphi 0, %s133
      %s136 = sphi 0, %s135
      %s150 = sphi 0, %s136
      %s154 = sphi 0, %s154
      %s156 = sphi 0, %s154
      %s157 = sphi 0, %s156
      %s171 = sphi 0, %s157
      %s175 = sphi 0, %s175
      %s177 = sphi 0, %s175
      %s178 = sphi 0, %s177
      %s192 = sphi 0, %s178
      %s196 = sphi 0, %s196
      %s198 = sphi 0, %s196
      %s199 = sphi 0, %s198
      %s213 = sphi 0, %s199
      %s217 = sphi 0, %s217
      %s219 = sphi 0, %s217
      %s220 = sphi 0, %s219
      %s234 = sphi 0, %s220
      %s238 = sphi 0, %s238
      %s240 = sphi 0, %s238
      %s241 = sphi 0, %s240
      %s255 = sphi 0, %s241
      %s259 = sphi 0, %s259
      %s261 = sphi 0, %s259
      %s262 = sphi 0, %s261
      %s276 = sphi 0, %s262
      %s280 = sphi 0, %s280
      %s282 = sphi 0, %s280
      %s283 = sphi 0, %s282
      %s297 = sphi 0, %s283
      %s301 = sphi 0, %s301
      %s303 = sphi 0, %s301
      %s304 = sphi 0, %s303
      %s318 = sphi 0, %s304
      %s324 = sphi 0, %s326
      %s327 = sphi 0, %s324
      %s328 = sphi 0, %s327
      %s344 = sphi 0, %s328
    $region4: #{pointnet_forward.2} parent=1 // loop_header_branch
      %25 = sbr.rel (%p23) target = $region8
    $region5: #{pointnet_forward.2} parent=1 // loop_body
      %s27 = ssub.s32 %s22, 1
      %s28 = ssub.s32 %s22, 2
      %s35 = sadd.s32 1, %s30
      %p36 = scmp.ge.s32.totalorder %s35, 1
      %s37 = scalar_select %p36, 0, %s35
      %s38 = sadd.s32 1, %s29
      %s39 = scalar_select %p36, %s38, %s29
      %p40 = scmp.ge.s32.totalorder %s39, 2
      %s41 = scalar_select %p40, 0, %s39
      %s42 = ssub.s32 %s29, %s41
      %s43 = ssub.s32 %s30, %s37
      %s44 = sor.u32 %s42, %s43
      %p45 = scmp.eq.s32.totalorder %s44, 0
      %s47 = sadd.s32 %s46, 1
      %s48 = scalar_select %p45, %s46, %s47
      %p51 = pneg %p45
      %p52 = scmp.eq.s32.totalorder %s22, 1
      %p53 = por %p51, %p52
      %p54 = scmp.ne.s32.totalorder %s46, %s49
      %p55 = scmp.eq.s32.totalorder %s22, 0
      %p56 = por %p54, %p55
      %p57 = scmp.ne.s32.totalorder %s46, %s49
      %p58 = scmp.eq.s32.totalorder %s27, 1
      %p59 = por %p57, %p58
      %p60 = scmp.ne.s32.totalorder %s49, %s50
      %p61 = scmp.eq.s32.totalorder %s27, 0
      %p62 = por %p60, %p61
      %p63 = scmp.ne.s32.totalorder %s49, %s50
      %p64 = scmp.eq.s32.totalorder %s28, 1
      %p65 = por %p63, %p64
      %p67 = scmp.ne.s32.totalorder %s50, %s66
      %p68 = scmp.eq.s32.totalorder %s28, 0
      %p69 = por %p67, %p68
      %s71 = sadd.s32 %s70, 1
      %p74 = scmp.eq.s32.totalorder %s22, 1
      %p75 = scmp.ne.s32.totalorder %s70, %s72
      %p76 = scmp.eq.s32.totalorder %s22, 0
      %p77 = por %p75, %p76
      %p78 = scmp.ne.s32.totalorder %s70, %s72
      %p79 = scmp.eq.s32.totalorder %s27, 1
      %p80 = por %p78, %p79
      %p81 = scmp.ne.s32.totalorder %s72, %s73
      %p82 = scmp.eq.s32.totalorder %s27, 0
      %p83 = por %p81, %p82
      %p84 = scmp.ne.s32.totalorder %s72, %s73
      %p85 = scmp.eq.s32.totalorder %s28, 1
      %p86 = por %p84, %p85
      %p88 = scmp.ne.s32.totalorder %s73, %s87
      %p89 = scmp.eq.s32.totalorder %s28, 0
      %p90 = por %p88, %p89
      %s92 = sadd.s32 %s91, 1
      %p95 = scmp.eq.s32.totalorder %s22, 1
      %p96 = scmp.ne.s32.totalorder %s91, %s93
      %p97 = scmp.eq.s32.totalorder %s22, 0
      %p98 = por %p96, %p97
      %p99 = scmp.ne.s32.totalorder %s91, %s93
      %p100 = scmp.eq.s32.totalorder %s27, 1
      %p101 = por %p99, %p100
      %p102 = scmp.ne.s32.totalorder %s93, %s94
      %p103 = scmp.eq.s32.totalorder %s27, 0
      %p104 = por %p102, %p103
      %p105 = scmp.ne.s32.totalorder %s93, %s94
      %p106 = scmp.eq.s32.totalorder %s28, 1
      %p107 = por %p105, %p106
      %p109 = scmp.ne.s32.totalorder %s94, %s108
      %p110 = scmp.eq.s32.totalorder %s28, 0
      %p111 = por %p109, %p110
      %s113 = sadd.s32 %s112, 1
      %p116 = scmp.eq.s32.totalorder %s22, 1
      %p117 = scmp.ne.s32.totalorder %s112, %s114
      %p118 = scmp.eq.s32.totalorder %s22, 0
      %p119 = por %p117, %p118
      %p120 = scmp.ne.s32.totalorder %s112, %s114
      %p121 = scmp.eq.s32.totalorder %s27, 1
      %p122 = por %p120, %p121
      %p123 = scmp.ne.s32.totalorder %s114, %s115
      %p124 = scmp.eq.s32.totalorder %s27, 0
      %p125 = por %p123, %p124
      %p126 = scmp.ne.s32.totalorder %s114, %s115
      %p127 = scmp.eq.s32.totalorder %s28, 1
      %p128 = por %p126, %p127
      %p130 = scmp.ne.s32.totalorder %s115, %s129
      %p131 = scmp.eq.s32.totalorder %s28, 0
      %p132 = por %p130, %p131
      %s134 = sadd.s32 %s133, 1
      %p137 = scmp.eq.s32.totalorder %s22, 1
      %p138 = scmp.ne.s32.totalorder %s133, %s135
      %p139 = scmp.eq.s32.totalorder %s22, 0
      %p140 = por %p138, %p139
      %p141 = scmp.ne.s32.totalorder %s133, %s135
      %p142 = scmp.eq.s32.totalorder %s27, 1
      %p143 = por %p141, %p142
      %p144 = scmp.ne.s32.totalorder %s135, %s136
      %p145 = scmp.eq.s32.totalorder %s27, 0
      %p146 = por %p144, %p145
      %p147 = scmp.ne.s32.totalorder %s135, %s136
      %p148 = scmp.eq.s32.totalorder %s28, 1
      %p149 = por %p147, %p148
      %p151 = scmp.ne.s32.totalorder %s136, %s150
      %p152 = scmp.eq.s32.totalorder %s28, 0
      %p153 = por %p151, %p152
      %s155 = sadd.s32 %s154, 1
      %p158 = scmp.eq.s32.totalorder %s22, 1
      %p159 = scmp.ne.s32.totalorder %s154, %s156
      %p160 = scmp.eq.s32.totalorder %s22, 0
      %p161 = por %p159, %p160
      %p162 = scmp.ne.s32.totalorder %s154, %s156
      %p163 = scmp.eq.s32.totalorder %s27, 1
      %p164 = por %p162, %p163
      %p165 = scmp.ne.s32.totalorder %s156, %s157
      %p166 = scmp.eq.s32.totalorder %s27, 0
      %p167 = por %p165, %p166
      %p168 = scmp.ne.s32.totalorder %s156, %s157
      %p169 = scmp.eq.s32.totalorder %s28, 1
      %p170 = por %p168, %p169
      %p172 = scmp.ne.s32.totalorder %s157, %s171
      %p173 = scmp.eq.s32.totalorder %s28, 0
      %p174 = por %p172, %p173
      %s176 = sadd.s32 %s175, 1
      %p179 = scmp.eq.s32.totalorder %s22, 1
      %p180 = scmp.ne.s32.totalorder %s175, %s177
      %p181 = scmp.eq.s32.totalorder %s22, 0
      %p182 = por %p180, %p181
      %p183 = scmp.ne.s32.totalorder %s175, %s177
      %p184 = scmp.eq.s32.totalorder %s27, 1
      %p185 = por %p183, %p184
      %p186 = scmp.ne.s32.totalorder %s177, %s178
      %p187 = scmp.eq.s32.totalorder %s27, 0
      %p188 = por %p186, %p187
      %p189 = scmp.ne.s32.totalorder %s177, %s178
      %p190 = scmp.eq.s32.totalorder %s28, 1
      %p191 = por %p189, %p190
      %p193 = scmp.ne.s32.totalorder %s178, %s192
      %p194 = scmp.eq.s32.totalorder %s28, 0
      %p195 = por %p193, %p194
      %s197 = sadd.s32 %s196, 1
      %p200 = scmp.eq.s32.totalorder %s22, 1
      %p201 = scmp.ne.s32.totalorder %s196, %s198
      %p202 = scmp.eq.s32.totalorder %s22, 0
      %p203 = por %p201, %p202
      %p204 = scmp.ne.s32.totalorder %s196, %s198
      %p205 = scmp.eq.s32.totalorder %s27, 1
      %p206 = por %p204, %p205
      %p207 = scmp.ne.s32.totalorder %s198, %s199
      %p208 = scmp.eq.s32.totalorder %s27, 0
      %p209 = por %p207, %p208
      %p210 = scmp.ne.s32.totalorder %s198, %s199
      %p211 = scmp.eq.s32.totalorder %s28, 1
      %p212 = por %p210, %p211
      %p214 = scmp.ne.s32.totalorder %s199, %s213
      %p215 = scmp.eq.s32.totalorder %s28, 0
      %p216 = por %p214, %p215
      %s218 = sadd.s32 %s217, 1
      %p221 = scmp.eq.s32.totalorder %s22, 1
      %p222 = scmp.ne.s32.totalorder %s217, %s219
      %p223 = scmp.eq.s32.totalorder %s22, 0
      %p224 = por %p222, %p223
      %p225 = scmp.ne.s32.totalorder %s217, %s219
      %p226 = scmp.eq.s32.totalorder %s27, 1
      %p227 = por %p225, %p226
      %p228 = scmp.ne.s32.totalorder %s219, %s220
      %p229 = scmp.eq.s32.totalorder %s27, 0
      %p230 = por %p228, %p229
      %p231 = scmp.ne.s32.totalorder %s219, %s220
      %p232 = scmp.eq.s32.totalorder %s28, 1
      %p233 = por %p231, %p232
      %p235 = scmp.ne.s32.totalorder %s220, %s234
      %p236 = scmp.eq.s32.totalorder %s28, 0
      %p237 = por %p235, %p236
      %s239 = sadd.s32 %s238, 1
      %p242 = scmp.eq.s32.totalorder %s22, 1
      %p243 = scmp.ne.s32.totalorder %s238, %s240
      %p244 = scmp.eq.s32.totalorder %s22, 0
      %p245 = por %p243, %p244
      %p246 = scmp.ne.s32.totalorder %s238, %s240
      %p247 = scmp.eq.s32.totalorder %s27, 1
      %p248 = por %p246, %p247
      %p249 = scmp.ne.s32.totalorder %s240, %s241
      %p250 = scmp.eq.s32.totalorder %s27, 0
      %p251 = por %p249, %p250
      %p252 = scmp.ne.s32.totalorder %s240, %s241
      %p253 = scmp.eq.s32.totalorder %s28, 1
      %p254 = por %p252, %p253
      %p256 = scmp.ne.s32.totalorder %s241, %s255
      %p257 = scmp.eq.s32.totalorder %s28, 0
      %p258 = por %p256, %p257
      %s260 = sadd.s32 %s259, 1
      %p263 = scmp.eq.s32.totalorder %s22, 1
      %p264 = scmp.ne.s32.totalorder %s259, %s261
      %p265 = scmp.eq.s32.totalorder %s22, 0
      %p266 = por %p264, %p265
      %p267 = scmp.ne.s32.totalorder %s259, %s261
      %p268 = scmp.eq.s32.totalorder %s27, 1
      %p269 = por %p267, %p268
      %p270 = scmp.ne.s32.totalorder %s261, %s262
      %p271 = scmp.eq.s32.totalorder %s27, 0
      %p272 = por %p270, %p271
      %p273 = scmp.ne.s32.totalorder %s261, %s262
      %p274 = scmp.eq.s32.totalorder %s28, 1
      %p275 = por %p273, %p274
      %p277 = scmp.ne.s32.totalorder %s262, %s276
      %p278 = scmp.eq.s32.totalorder %s28, 0
      %p279 = por %p277, %p278
      %s281 = sadd.s32 %s280, 1
      %p284 = scmp.eq.s32.totalorder %s22, 1
      %p285 = scmp.ne.s32.totalorder %s280, %s282
      %p286 = scmp.eq.s32.totalorder %s22, 0
      %p287 = por %p285, %p286
      %p288 = scmp.ne.s32.totalorder %s280, %s282
      %p289 = scmp.eq.s32.totalorder %s27, 1
      %p290 = por %p288, %p289
      %p291 = scmp.ne.s32.totalorder %s282, %s283
      %p292 = scmp.eq.s32.totalorder %s27, 0
      %p293 = por %p291, %p292
      %p294 = scmp.ne.s32.totalorder %s282, %s283
      %p295 = scmp.eq.s32.totalorder %s28, 1
      %p296 = por %p294, %p295
      %p298 = scmp.ne.s32.totalorder %s283, %s297
      %p299 = scmp.eq.s32.totalorder %s28, 0
      %p300 = por %p298, %p299
      %s302 = sadd.s32 %s301, 1
      %p305 = scmp.eq.s32.totalorder %s22, 1
      %p306 = scmp.ne.s32.totalorder %s301, %s303
      %p307 = scmp.eq.s32.totalorder %s22, 0
      %p308 = por %p306, %p307
      %p309 = scmp.ne.s32.totalorder %s301, %s303
      %p310 = scmp.eq.s32.totalorder %s27, 1
      %p311 = por %p309, %p310
      %p312 = scmp.ne.s32.totalorder %s303, %s304
      %p313 = scmp.eq.s32.totalorder %s27, 0
      %p314 = por %p312, %p313
      %p315 = scmp.ne.s32.totalorder %s303, %s304
      %p316 = scmp.eq.s32.totalorder %s28, 1
      %p317 = por %p315, %p316
      %p319 = scmp.ne.s32.totalorder %s304, %s318
      %p320 = scmp.eq.s32.totalorder %s28, 0
      %p321 = por %p319, %p320
      %s322 = ssub.s32 %s29, %s41
      %p323 = scmp.eq.s32.totalorder %s322, 0
      %s325 = sadd.s32 %s324, 1
      %s326 = scalar_select %p323, %s324, %s325
      %p329 = pneg %p323
      %p330 = scmp.eq.s32.totalorder %s22, 1
      %p331 = por %p329, %p330
      %p332 = scmp.ne.s32.totalorder %s324, %s327
      %p333 = scmp.eq.s32.totalorder %s22, 0
      %p334 = por %p332, %p333
      %p335 = scmp.ne.s32.totalorder %s324, %s327
      %p336 = scmp.eq.s32.totalorder %s27, 1
      %p337 = por %p335, %p336
      %p338 = scmp.ne.s32.totalorder %s327, %s328
      %p339 = scmp.eq.s32.totalorder %s27, 0
      %p340 = por %p338, %p339
      %p341 = scmp.ne.s32.totalorder %s327, %s328
      %p342 = scmp.eq.s32.totalorder %s28, 1
      %p343 = por %p341, %p342
      %p345 = scmp.ne.s32.totalorder %s328, %s344
      %p346 = scmp.eq.s32.totalorder %s28, 0
      %p347 = por %p345, %p346
      %p348 = scmp.le.s32.totalorder 1, %s22
      %p349 = scmp.lt.s32.totalorder %s22, 3
      %p350 = pnand %p348, %p349
      %p351 = pneg %p350
      // Predicated region
      $region9: #{pointnet_forward.2} parent=5 // pred_check
        _
      $region10: #{pointnet_forward.2} parent=5 // pred_check_branch
        %353 = sbr.rel (%p350) target = $region12
      $region11: #{pointnet_forward.2} parent=5 // pred_region
        %s354 = ssub.s32 %s22, 1
        // Predicated region
        $region13: #{pointnet_forward.2} parent=11 // pred_check
          %p355 = pneg %p83
        $region14: #{pointnet_forward.2} parent=11 // pred_check_branch
          %357 = sbr.rel (%p355) target = $region16
        $region15: #{pointnet_forward.2} parent=11 // pred_region
          _
        $region16: #{pointnet_forward.2} parent=11 // pred_fallthru
          _
        // Predicated region
        $region17: #{pointnet_forward.2} parent=11 // pred_check
          %p358 = pneg %p104
        $region18: #{pointnet_forward.2} parent=11 // pred_check_branch
          %360 = sbr.rel (%p358) target = $region20
        $region19: #{pointnet_forward.2} parent=11 // pred_region
          _
        $region20: #{pointnet_forward.2} parent=11 // pred_fallthru
          _
        // Predicated region
        $region21: #{pointnet_forward.2} parent=11 // pred_check
          %p361 = pneg %p125
        $region22: #{pointnet_forward.2} parent=11 // pred_check_branch
          %363 = sbr.rel (%p361) target = $region24
        $region23: #{pointnet_forward.2} parent=11 // pred_region
          _
        $region24: #{pointnet_forward.2} parent=11 // pred_fallthru
          _
        // Predicated region
        $region25: #{pointnet_forward.2} parent=11 // pred_check
          %p364 = pneg %p146
        $region26: #{pointnet_forward.2} parent=11 // pred_check_branch
          %366 = sbr.rel (%p364) target = $region28
        $region27: #{pointnet_forward.2} parent=11 // pred_region
          _
        $region28: #{pointnet_forward.2} parent=11 // pred_fallthru
          _
        // Predicated region
        $region29: #{pointnet_forward.2} parent=11 // pred_check
          %p367 = pneg %p167
        $region30: #{pointnet_forward.2} parent=11 // pred_check_branch
          %369 = sbr.rel (%p367) target = $region32
        $region31: #{pointnet_forward.2} parent=11 // pred_region
          %s371 = ssub.s32 8192, 8192
          %372 = vsyncadd [#allocation4], %s371
          %s373 = sshll.u32 [#allocation3], 4
          %s374 = int_to_ptr.vmem [resolvable:$true] %s373
          %379 = dma.hbm_to_vmem [thread:$0]  %s5, 8192, %s374, [#allocation4], 512, 512, 32
        $region32: #{pointnet_forward.2} parent=11 // pred_fallthru
          _
        // Predicated region
        $region33: #{pointnet_forward.2} parent=11 // pred_check
          %p380 = pneg %p188
        $region34: #{pointnet_forward.2} parent=11 // pred_check_branch
          %382 = sbr.rel (%p380) target = $region36
        $region35: #{pointnet_forward.2} parent=11 // pred_region
          _
        $region36: #{pointnet_forward.2} parent=11 // pred_fallthru
          _
        // Predicated region
        $region37: #{pointnet_forward.2} parent=11 // pred_check
          %p383 = pneg %p209
        $region38: #{pointnet_forward.2} parent=11 // pred_check_branch
          %385 = sbr.rel (%p383) target = $region40
        $region39: #{pointnet_forward.2} parent=11 // pred_region
          %s387 = ssub.s32 32768, 32768
          %388 = vsyncadd [#allocation6], %s387
          %s389 = sshll.u32 [#allocation5], 4
          %s390 = int_to_ptr.vmem [resolvable:$true] %s389
          %395 = dma.hbm_to_vmem [thread:$0]  %s7, 32768, %s390, [#allocation6], 256, 256, 16
        $region40: #{pointnet_forward.2} parent=11 // pred_fallthru
          _
        // Predicated region
        $region41: #{pointnet_forward.2} parent=11 // pred_check
          %p396 = pneg %p230
        $region42: #{pointnet_forward.2} parent=11 // pred_check_branch
          %398 = sbr.rel (%p396) target = $region44
        $region43: #{pointnet_forward.2} parent=11 // pred_region
          _
        $region44: #{pointnet_forward.2} parent=11 // pred_fallthru
          _
        // Predicated region
        $region45: #{pointnet_forward.2} parent=11 // pred_check
          %p399 = pneg %p251
        $region46: #{pointnet_forward.2} parent=11 // pred_check_branch
          %401 = sbr.rel (%p399) target = $region48
        $region47: #{pointnet_forward.2} parent=11 // pred_region
          %s403 = ssub.s32 8192, 8192
          %404 = vsyncadd [#allocation6], %s403
          %s405 = sshll.u32 [#allocation7], 4
          %s406 = int_to_ptr.vmem [resolvable:$true] %s405
          %411 = dma.hbm_to_vmem [thread:$0]  %s9, 8192, %s406, [#allocation6], 128, 128, 8
        $region48: #{pointnet_forward.2} parent=11 // pred_fallthru
          _
        // Predicated region
        $region49: #{pointnet_forward.2} parent=11 // pred_check
          %p412 = pneg %p272
        $region50: #{pointnet_forward.2} parent=11 // pred_check_branch
          %414 = sbr.rel (%p412) target = $region52
        $region51: #{pointnet_forward.2} parent=11 // pred_region
          _
        $region52: #{pointnet_forward.2} parent=11 // pred_fallthru
          _
        // Predicated region
        $region53: #{pointnet_forward.2} parent=11 // pred_check
          %p415 = pneg %p293
        $region54: #{pointnet_forward.2} parent=11 // pred_check_branch
          %417 = sbr.rel (%p415) target = $region56
        $region55: #{pointnet_forward.2} parent=11 // pred_region
          %s419 = ssub.s32 2048, 2048
          %420 = vsyncadd [#allocation9], %s419
          %s421 = sshll.u32 [#allocation8], 4
          %s422 = int_to_ptr.vmem [resolvable:$true] %s421
          %427 = dma.hbm_to_vmem [thread:$0]  %s11, 2048, %s422, [#allocation9], 64, 64, 4
        $region56: #{pointnet_forward.2} parent=11 // pred_fallthru
          _
        // Predicated region
        $region57: #{pointnet_forward.2} parent=11 // pred_check
          %p428 = pneg %p314
        $region58: #{pointnet_forward.2} parent=11 // pred_check_branch
          %430 = sbr.rel (%p428) target = $region60
        $region59: #{pointnet_forward.2} parent=11 // pred_region
          _
        $region60: #{pointnet_forward.2} parent=11 // pred_fallthru
          _
      $region12: #{pointnet_forward.2} parent=5 // pred_fallthru
        _
      %p431 = scmp.lt.s32.totalorder %s22, 2
      // Predicated region
      $region61: #{pointnet_forward.2} parent=5 // pred_check
        %p432 = pneg %p431
      $region62: #{pointnet_forward.2} parent=5 // pred_check_branch
        %434 = sbr.rel (%p432) target = $region64
      $region63: #{pointnet_forward.2} parent=5 // pred_region
        // Predicated region
        $region65: #{pointnet_forward.2} parent=63 // pred_check
          %p435 = pneg %p56
        $region66: #{pointnet_forward.2} parent=63 // pred_check_branch
          %437 = sbr.rel (%p435) target = $region68
        $region67: #{pointnet_forward.2} parent=63 // pred_region
          %s438 = smul.u32 2, %s30
          %p439 = scmp.lt.s32.totalorder %s29, 1
          %s440 = scalar_select %p439, %s29, 1
          %p441 = scmp.lt.s32.totalorder %s438, 1
          %s442 = scalar_select %p441, %s438, 1
          %s443 = smul.addr %s440, 2
          %s444 = sadd.s32 %s442, %s443
          %s445 = smul.addr %s444, 8
          %s446 = scalar_lea.vmem %s0, %s445
          %s447 = smul.u32 2, %s30
        $region68: #{pointnet_forward.2} parent=63 // pred_fallthru
          _
      $region64: #{pointnet_forward.2} parent=5 // pred_fallthru
        _
      %p448 = scmp.le.s32.totalorder 1, %s22
      %p449 = scmp.lt.s32.totalorder %s22, 3
      %p450 = pnand %p448, %p449
      %p451 = pneg %p450
      // Predicated region
      $region69: #{pointnet_forward.2} parent=5 // pred_check
        _
      $region70: #{pointnet_forward.2} parent=5 // pred_check_branch
        %453 = sbr.rel (%p450) target = $region72
      $region71: #{pointnet_forward.2} parent=5 // pred_region
        %s454 = ssub.s32 %s22, 1
        // Predicated region
        $region73: #{pointnet_forward.2} parent=71 // pred_check
          %p455 = pneg %p167
        $region74: #{pointnet_forward.2} parent=71 // pred_check_branch
          %457 = sbr.rel (%p455) target = $region76
        $region75: #{pointnet_forward.2} parent=71 // pred_region
          %458 = dma.done [#allocation4], 8192
        $region76: #{pointnet_forward.2} parent=71 // pred_fallthru
          _
        // Predicated region
        $region77: #{pointnet_forward.2} parent=71 // pred_check
          %p459 = pneg %p209
        $region78: #{pointnet_forward.2} parent=71 // pred_check_branch
          %461 = sbr.rel (%p459) target = $region80
        $region79: #{pointnet_forward.2} parent=71 // pred_region
          %462 = dma.done [#allocation6], 32768
        $region80: #{pointnet_forward.2} parent=71 // pred_fallthru
          _
        // Predicated region
        $region81: #{pointnet_forward.2} parent=71 // pred_check
          %p463 = pneg %p251
        $region82: #{pointnet_forward.2} parent=71 // pred_check_branch
          %465 = sbr.rel (%p463) target = $region84
        $region83: #{pointnet_forward.2} parent=71 // pred_region
          %466 = dma.done [#allocation6], 8192
        $region84: #{pointnet_forward.2} parent=71 // pred_fallthru
          _
        // Predicated region
        $region85: #{pointnet_forward.2} parent=71 // pred_check
          %p467 = pneg %p293
        $region86: #{pointnet_forward.2} parent=71 // pred_check_branch
          %469 = sbr.rel (%p467) target = $region88
        $region87: #{pointnet_forward.2} parent=71 // pred_region
          %470 = dma.done [#allocation9], 2048
        $region88: #{pointnet_forward.2} parent=71 // pred_fallthru
          _
        %s471 = smul.u32 2, %s32
        %p472 = scmp.lt.s32.totalorder %s31, 1
        %s473 = scalar_select %p472, %s31, 1
        %p474 = scmp.lt.s32.totalorder %s471, 1
        %s475 = scalar_select %p474, %s471, 1
        %s476 = smul.addr %s473, 2
        %s477 = sadd.s32 %s475, %s476
        %s478 = smul.addr %s477, 8
        %s479 = scalar_lea.vmem %s0, %s478
        %p480 = pneg %p62
        %p481 = pneg %p59
        %p482 = pneg %p83
        %p483 = pneg %p80
        %p484 = pneg %p104
        %p485 = pneg %p101
        %p486 = pneg %p125
        %p487 = pneg %p122
        %p488 = pneg %p146
        %p489 = pneg %p143
        %p490 = pneg %p167
        %p491 = pneg %p164
        %p492 = pneg %p188
        %p493 = pneg %p185
        %p494 = pneg %p209
        %p495 = pneg %p206
        %p496 = pneg %p230
        %p497 = pneg %p227
        %p498 = pneg %p251
        %p499 = pneg %p248
        %p500 = pneg %p272
        %p501 = pneg %p269
        %p502 = pneg %p293
        %p503 = pneg %p290
        %p504 = pneg %p314
        %p505 = pneg %p311
        %p506 = pneg %p340
        %p507 = pneg %p337
        %p508 = scmp.lt.s32.totalorder %s31, 1
        %s509 = scalar_select %p508, %s31, 1
        %s510 = scalar_lea.vmem %s13, %s509
        %s511 = smul.u32 2, %s32
        %p512 = scmp.lt.s32.totalorder %s31, 1
        %s513 = scalar_select %p512, %s31, 1
        %p514 = scmp.lt.s32.totalorder %s511, 1
        %s515 = scalar_select %p514, %s511, 1
        %s516 = smul.addr %s513, 2
        %s517 = sadd.s32 %s515, %s516
        %s518 = smul.addr %s517, 8
        %s519 = scalar_lea.vmem %s0, %s518
        %s520 = smul.u32 2, %s32
        %p521 = scmp.lt.s32.totalorder %s31, 1
        %s522 = scalar_select %p521, %s31, 1
        %s523 = scalar_lea.vmem %s13, %s522
        %v525 = vld [vmem:[%s519] sm:$0xff]
        %v526 = vld [vmem:[%s519 + $0x8] sm:$0xff]
        %v527 = vld [vmem:[%s1] sm:$0x7]
        %p528 = scmp.eq.s32.totalorder %s32, 0
        // Predicated region
        $region89: #{pointnet_forward.2} parent=71 // pred_check
          %p529 = pneg %p528
        $region90: #{pointnet_forward.2} parent=71 // pred_check_branch
          %531 = sbr.rel (%p529) target = $region92
        $region91: #{pointnet_forward.2} parent=71 // pred_region
          %532 = vst [vmem:[#allocation2] sm:$0xff] -inf
        $region92: #{pointnet_forward.2} parent=71 // pred_fallthru
          _
        %v533 = vld [vmem:[%s2] sm:$0x1]
        %v535 = vlaneseq
        %v536 = vshrl.u32 %v535, 7
        %v537 = vsub.s32 0, %v536
        %v538 = vrot.slane %v533, %v537
        %vm540 = vcmask 23552
        %v542 = vsel %vm540, %v525, 0
        %v545 = vsel %vm540, %v526, 0
        %vm547 = vcmask 1042432
        %v549 = vsel %vm547, %v527, 0
        %551 = vmatprep.subr.mxu0 0.0
        %552 = vmatpush1.msra.mxu0 0.0
        %553 = vmatprep.subr.mxu0 0.0
        %554 = vmatpush1.msra.mxu0 0.0
        %555 = vmatprep.subr.mxu0 0.0
        %556 = vmatpush1.msra.mxu0 0.0
        %557 = vmatprep.subr.mxu0 0.0
        %558 = vmatpush1.msra.mxu0 0.0
        %559 = vmatprep.subr.mxu0 0.0
        %560 = vmatpush1.msra.mxu0 0.0
        %561 = vmatprep.subr.mxu0 0.0
        %562 = vmatpush1.msra.mxu0 0.0
        %563 = vmatprep.subr.mxu0 0.0
        %564 = vmatpush1.msra.mxu0 0.0
        %565 = vmatprep.subr.mxu0 0.0
        %566 = vmatpush1.msra.mxu0 0.0
        %567 = vmatprep.subr.mxu0 0.0
        %568 = vmatpush1.msra.mxu0 0.0
        %569 = vmatprep.subr.mxu0 0.0
        %570 = vmatpush1.msra.mxu0 0.0
        %571 = vmatprep.subr.mxu0 0.0
        %572 = vmatpush1.msra.mxu0 0.0
        %573 = vmatprep.subr.mxu0 0.0
        %574 = vmatpush1.msra.mxu0 0.0
        %575 = vmatprep.subr.mxu0 0.0
        %576 = vmatpush1.msra.mxu0 0.0
        %577 = vmatprep.subr.mxu0 0.0
        %578 = vmatpush1.msra.mxu0 0.0
        %579 = vmatprep.subr.mxu0 0.0
        %580 = vmatpush1.msra.mxu0 0.0
        %581 = vmatprep.subr.mxu0 0.0
        %582 = vmatpush1.msra.mxu0 %v549
        %583 = vmatprep.subr.mxu0 0.0
        %584 = vmatpush2.msra.mxu0 0.0
        %585 = vmatprep.subr.mxu0 0.0
        %586 = vmatpush2.msra.mxu0 0.0
        %587 = vmatprep.subr.mxu0 0.0
        %588 = vmatpush2.msra.mxu0 0.0
        %589 = vmatprep.subr.mxu0 0.0
        %590 = vmatpush2.msra.mxu0 0.0
        %591 = vmatprep.subr.mxu0 0.0
        %592 = vmatpush2.msra.mxu0 0.0
        %593 = vmatprep.subr.mxu0 0.0
        %594 = vmatpush2.msra.mxu0 0.0
        %595 = vmatprep.subr.mxu0 0.0
        %596 = vmatpush2.msra.mxu0 0.0
        %597 = vmatprep.subr.mxu0 0.0
        %598 = vmatpush2.msra.mxu0 0.0
        %599 = vmatprep.subr.mxu0 0.0
        %600 = vmatpush2.msra.mxu0 0.0
        %601 = vmatprep.subr.mxu0 0.0
        %602 = vmatpush2.msra.mxu0 0.0
        %603 = vmatprep.subr.mxu0 0.0
        %604 = vmatpush2.msra.mxu0 0.0
        %605 = vmatprep.subr.mxu0 0.0
        %606 = vmatpush2.msra.mxu0 0.0
        %607 = vmatprep.subr.mxu0 0.0
        %608 = vmatpush2.msra.mxu0 0.0
        %609 = vmatprep.subr.mxu0 0.0
        %610 = vmatpush2.msra.mxu0 0.0
        %611 = vmatprep.subr.mxu0 0.0
        %612 = vmatpush2.msra.mxu0 0.0
        %613 = vmatprep.subr.mxu0 0.0
        %614 = vmatpush2.msra.mxu0 0.0
        %615 = vmatprep.mubr.f32.mxu0 0.0
        %616 = vmatmul.mubr.f32.gmra.mxu0 %v542
        %v617 = vpop.f32.mrf.mxu0
        %v618 = vadd.f32 %v538, %v617
        %v619 = vpop.f32.mrf.mxu0
        %620 = vmatprep.mubr.f32.mxu0 0.0
        %621 = vmatmul.mubr.f32.gmra.mxu0 %v545
        %v622 = vpop.f32.mrf.mxu0
        %v623 = vadd.f32 %v538, %v622
        %v624 = vpop.f32.mrf.mxu0
        %625 = vdwg.mxu0
        %v626 = vmax.f32 %v618, 0.0
        %v627 = vmax.f32 %v623, 0.0
        %v628 = vpack.c.bf16 %v627, %v626
        %v629 = vld [vmem:[%s3] sm:$0xf]
        %v630 = vld [vmem:[%s3 + $0x4] sm:$0xf]
        %v631 = vld [vmem:[%s3 + $0x8] sm:$0xf]
        %v632 = vld [vmem:[%s3 + $0xc] sm:$0xf]
        %v633 = vld [vmem:[%s3 + $0x10] sm:$0xf]
        %v634 = vld [vmem:[%s3 + $0x14] sm:$0xf]
        %v635 = vld [vmem:[%s3 + $0x18] sm:$0xf]
        %v636 = vld [vmem:[%s3 + $0x1c] sm:$0xf]
        %v637 = vld [vmem:[%s4] sm:$0x1]
        %v639 = vlaneseq
        %v640 = vshrl.u32 %v639, 7
        %v641 = vsub.s32 0, %v640
        %v642 = vrot.slane %v637, %v641
        %v652 = vunpack.c.l.b16 %v629
        %v653 = vunpack.c.l.b16 %v630
        %v654 = vunpack.c.l.b16 %v631
        %v655 = vunpack.c.l.b16 %v632
        %v656 = vunpack.c.l.b16 %v633
        %v657 = vunpack.c.l.b16 %v634
        %v658 = vunpack.c.l.b16 %v635
        %v659 = vunpack.c.l.b16 %v636
        %v660 = vpack.c.b16 %v653, %v652
        %v661 = vpack.c.b16 %v655, %v654
        %v662 = vpack.c.b16 %v657, %v656
        %v663 = vpack.c.b16 %v659, %v658
        %vm668 = vcmask 523264
        %v670 = vsel %vm668, %v628, 0
        %672 = vmatprep.subr.bf16.mxu0 0
        %673 = vmatpush1.bf16.msra.mxu0 0
        %674 = vmatprep.subr.bf16.mxu0 0
        %675 = vmatpush1.bf16.msra.mxu0 0
        %676 = vmatprep.subr.bf16.mxu0 0
        %677 = vmatpush1.bf16.msra.mxu0 0
        %678 = vmatprep.subr.bf16.mxu0 0
        %679 = vmatpush1.bf16.msra.mxu0 0
        %680 = vmatprep.subr.bf16.mxu0 0
        %681 = vmatpush1.bf16.msra.mxu0 %v663
        %682 = vmatprep.subr.bf16.mxu0 0
        %683 = vmatpush1.bf16.msra.mxu0 %v662
        %684 = vmatprep.subr.bf16.mxu0 0
        %685 = vmatpush1.bf16.msra.mxu0 %v661
        %686 = vmatprep.subr.bf16.mxu0 0
        %687 = vmatpush1.bf16.msra.mxu0 %v660
        %688 = vmatprep.subr.bf16.mxu0 0
        %689 = vmatpush2.bf16.msra.mxu0 0
        %690 = vmatprep.subr.bf16.mxu0 0
        %691 = vmatpush2.bf16.msra.mxu0 0
        %692 = vmatprep.subr.bf16.mxu0 0
        %693 = vmatpush2.bf16.msra.mxu0 0
        %694 = vmatprep.subr.bf16.mxu0 0
        %695 = vmatpush2.bf16.msra.mxu0 0
        %696 = vmatprep.subr.bf16.mxu0 0
        %697 = vmatpush2.bf16.msra.mxu0 0
        %698 = vmatprep.subr.bf16.mxu0 0
        %699 = vmatpush2.bf16.msra.mxu0 0
        %700 = vmatprep.subr.bf16.mxu0 0
        %701 = vmatpush2.bf16.msra.mxu0 0
        %702 = vmatprep.subr.bf16.mxu0 0
        %703 = vmatpush2.bf16.msra.mxu0 0
        %704 = vmatprep.mubr.bf16.mxu0 0
        %705 = vmatmul.mubr.bf16.gmra.mxu0 %v670
        %v706 = vpop.f32.mrf.mxu0
        %v707 = vadd.f32 %v642, %v706
        %v708 = vpop.f32.mrf.mxu0
        %v709 = vpop.f32.mrf.mxu0
        %v710 = vadd.f32 %v642, %v709
        %v711 = vpop.f32.mrf.mxu0
        %712 = vdwg.mxu0
        %v713 = vmax.f32 %v707, 0.0
        %v714 = vmax.f32 %v710, 0.0
        %v715 = vpack.c.bf16 %v714, %v713
        %v716 = vld [vmem:[#allocation3] sm:$0xff]
        %v717 = vld [vmem:[#allocation3 + $0x8] sm:$0xff]
        %v718 = vld [vmem:[#allocation3 + $0x10] sm:$0xff]
        %v719 = vld [vmem:[#allocation3 + $0x18] sm:$0xff]
        %v720 = vld [vmem:[#allocation3 + $0x20] sm:$0xff]
        %v721 = vld [vmem:[#allocation3 + $0x28] sm:$0xff]
        %v722 = vld [vmem:[#allocation3 + $0x30] sm:$0xff]
        %v723 = vld [vmem:[#allocation3 + $0x38] sm:$0xff]
        %v724 = vld [vmem:[#allocation3 + $0x40] sm:$0xff]
        %v725 = vld [vmem:[#allocation3 + $0x48] sm:$0xff]
        %v726 = vld [vmem:[#allocation3 + $0x50] sm:$0xff]
        %v727 = vld [vmem:[#allocation3 + $0x58] sm:$0xff]
        %v728 = vld [vmem:[#allocation3 + $0x60] sm:$0xff]
        %v729 = vld [vmem:[#allocation3 + $0x68] sm:$0xff]
        %v730 = vld [vmem:[#allocation3 + $0x70] sm:$0xff]
        %v731 = vld [vmem:[#allocation3 + $0x78] sm:$0xff]
        %v732 = vld [vmem:[#allocation3 + $0x80] sm:$0xff]
        %v733 = vld [vmem:[#allocation3 + $0x88] sm:$0xff]
        %v734 = vld [vmem:[#allocation3 + $0x90] sm:$0xff]
        %v735 = vld [vmem:[#allocation3 + $0x98] sm:$0xff]
        %v736 = vld [vmem:[#allocation3 + $0xa0] sm:$0xff]
        %v737 = vld [vmem:[#allocation3 + $0xa8] sm:$0xff]
        %v738 = vld [vmem:[#allocation3 + $0xb0] sm:$0xff]
        %v739 = vld [vmem:[#allocation3 + $0xb8] sm:$0xff]
        %v740 = vld [vmem:[#allocation3 + $0xc0] sm:$0xff]
        %v741 = vld [vmem:[#allocation3 + $0xc8] sm:$0xff]
        %v742 = vld [vmem:[#allocation3 + $0xd0] sm:$0xff]
        %v743 = vld [vmem:[#allocation3 + $0xd8] sm:$0xff]
        %v744 = vld [vmem:[#allocation3 + $0xe0] sm:$0xff]
        %v745 = vld [vmem:[#allocation3 + $0xe8] sm:$0xff]
        %v746 = vld [vmem:[#allocation3 + $0xf0] sm:$0xff]
        %v747 = vld [vmem:[#allocation3 + $0xf8] sm:$0xff]
        %v748 = vld [vmem:[#allocation3 + $0x100] sm:$0xff]
        %v749 = vld [vmem:[#allocation3 + $0x108] sm:$0xff]
        %v750 = vld [vmem:[#allocation3 + $0x110] sm:$0xff]
        %v751 = vld [vmem:[#allocation3 + $0x118] sm:$0xff]
        %v752 = vld [vmem:[#allocation3 + $0x120] sm:$0xff]
        %v753 = vld [vmem:[#allocation3 + $0x128] sm:$0xff]
        %v754 = vld [vmem:[#allocation3 + $0x130] sm:$0xff]
        %v755 = vld [vmem:[#allocation3 + $0x138] sm:$0xff]
        %v756 = vld [vmem:[#allocation3 + $0x140] sm:$0xff]
        %v757 = vld [vmem:[#allocation3 + $0x148] sm:$0xff]
        %v758 = vld [vmem:[#allocation3 + $0x150] sm:$0xff]
        %v759 = vld [vmem:[#allocation3 + $0x158] sm:$0xff]
        %v760 = vld [vmem:[#allocation3 + $0x160] sm:$0xff]
        %v761 = vld [vmem:[#allocation3 + $0x168] sm:$0xff]
        %v762 = vld [vmem:[#allocation3 + $0x170] sm:$0xff]
        %v763 = vld [vmem:[#allocation3 + $0x178] sm:$0xff]
        %v764 = vld [vmem:[#allocation3 + $0x180] sm:$0xff]
        %v765 = vld [vmem:[#allocation3 + $0x188] sm:$0xff]
        %v766 = vld [vmem:[#allocation3 + $0x190] sm:$0xff]
        %v767 = vld [vmem:[#allocation3 + $0x198] sm:$0xff]
        %v768 = vld [vmem:[#allocation3 + $0x1a0] sm:$0xff]
        %v769 = vld [vmem:[#allocation3 + $0x1a8] sm:$0xff]
        %v770 = vld [vmem:[#allocation3 + $0x1b0] sm:$0xff]
        %v771 = vld [vmem:[#allocation3 + $0x1b8] sm:$0xff]
        %v772 = vld [vmem:[#allocation3 + $0x1c0] sm:$0xff]
        %v773 = vld [vmem:[#allocation3 + $0x1c8] sm:$0xff]
        %v774 = vld [vmem:[#allocation3 + $0x1d0] sm:$0xff]
        %v775 = vld [vmem:[#allocation3 + $0x1d8] sm:$0xff]
        %v776 = vld [vmem:[#allocation3 + $0x1e0] sm:$0xff]
        %v777 = vld [vmem:[#allocation3 + $0x1e8] sm:$0xff]
        %v778 = vld [vmem:[#allocation3 + $0x1f0] sm:$0xff]
        %v779 = vld [vmem:[#allocation3 + $0x1f8] sm:$0xff]
        %v780 = vld [vmem:[%s6] sm:$0xff]
        %v782 = vlaneseq
        %v783 = vshrl.u32 %v782, 7
        %v784 = vsub.s32 0, %v783
        %v785 = vrot.slane %v780, %v784
        %v786 = vlaneseq
        %v787 = vshrl.u32 %v786, 7
        %v788 = vsub.s32 1, %v787
        %v789 = vrot.slane %v780, %v788
        %v790 = vlaneseq
        %v791 = vshrl.u32 %v790, 7
        %v792 = vsub.s32 2, %v791
        %v793 = vrot.slane %v780, %v792
        %v794 = vlaneseq
        %v795 = vshrl.u32 %v794, 7
        %v796 = vsub.s32 3, %v795
        %v797 = vrot.slane %v780, %v796
        %v798 = vlaneseq
        %v799 = vshrl.u32 %v798, 7
        %v800 = vsub.s32 4, %v799
        %v801 = vrot.slane %v780, %v800
        %v802 = vlaneseq
        %v803 = vshrl.u32 %v802, 7
        %v804 = vsub.s32 5, %v803
        %v805 = vrot.slane %v780, %v804
        %v806 = vlaneseq
        %v807 = vshrl.u32 %v806, 7
        %v808 = vsub.s32 6, %v807
        %v809 = vrot.slane %v780, %v808
        %v810 = vlaneseq
        %v811 = vshrl.u32 %v810, 7
        %v812 = vsub.s32 7, %v811
        %v813 = vrot.slane %v780, %v812
        %v886 = vunpack.c.l.b16 %v716
        %v887 = vunpack.c.h.b16 %v716
        %v888 = vunpack.c.l.b16 %v717
        %v889 = vunpack.c.h.b16 %v717
        %v890 = vunpack.c.l.b16 %v718
        %v891 = vunpack.c.h.b16 %v718
        %v892 = vunpack.c.l.b16 %v719
        %v893 = vunpack.c.h.b16 %v719
        %v894 = vunpack.c.l.b16 %v720
        %v895 = vunpack.c.h.b16 %v720
        %v896 = vunpack.c.l.b16 %v721
        %v897 = vunpack.c.h.b16 %v721
        %v898 = vunpack.c.l.b16 %v722
        %v899 = vunpack.c.h.b16 %v722
        %v900 = vunpack.c.l.b16 %v723
        %v901 = vunpack.c.h.b16 %v723
        %v902 = vunpack.c.l.b16 %v724
        %v903 = vunpack.c.h.b16 %v724
        %v904 = vunpack.c.l.b16 %v725
        %v905 = vunpack.c.h.b16 %v725
        %v906 = vunpack.c.l.b16 %v726
        %v907 = vunpack.c.h.b16 %v726
        %v908 = vunpack.c.l.b16 %v727
        %v909 = vunpack.c.h.b16 %v727
        %v910 = vunpack.c.l.b16 %v728
        %v911 = vunpack.c.h.b16 %v728
        %v912 = vunpack.c.l.b16 %v729
        %v913 = vunpack.c.h.b16 %v729
        %v914 = vunpack.c.l.b16 %v730
        %v915 = vunpack.c.h.b16 %v730
        %v916 = vunpack.c.l.b16 %v731
        %v917 = vunpack.c.h.b16 %v731
        %v918 = vunpack.c.l.b16 %v732
        %v919 = vunpack.c.h.b16 %v732
        %v920 = vunpack.c.l.b16 %v733
        %v921 = vunpack.c.h.b16 %v733
        %v922 = vunpack.c.l.b16 %v734
        %v923 = vunpack.c.h.b16 %v734
        %v924 = vunpack.c.l.b16 %v735
        %v925 = vunpack.c.h.b16 %v735
        %v926 = vunpack.c.l.b16 %v736
        %v927 = vunpack.c.h.b16 %v736
        %v928 = vunpack.c.l.b16 %v737
        %v929 = vunpack.c.h.b16 %v737
        %v930 = vunpack.c.l.b16 %v738
        %v931 = vunpack.c.h.b16 %v738
        %v932 = vunpack.c.l.b16 %v739
        %v933 = vunpack.c.h.b16 %v739
        %v934 = vunpack.c.l.b16 %v740
        %v935 = vunpack.c.h.b16 %v740
        %v936 = vunpack.c.l.b16 %v741
        %v937 = vunpack.c.h.b16 %v741
        %v938 = vunpack.c.l.b16 %v742
        %v939 = vunpack.c.h.b16 %v742
        %v940 = vunpack.c.l.b16 %v743
        %v941 = vunpack.c.h.b16 %v743
        %v942 = vunpack.c.l.b16 %v744
        %v943 = vunpack.c.h.b16 %v744
        %v944 = vunpack.c.l.b16 %v745
        %v945 = vunpack.c.h.b16 %v745
        %v946 = vunpack.c.l.b16 %v746
        %v947 = vunpack.c.h.b16 %v746
        %v948 = vunpack.c.l.b16 %v747
        %v949 = vunpack.c.h.b16 %v747
        %v950 = vunpack.c.l.b16 %v748
        %v951 = vunpack.c.h.b16 %v748
        %v952 = vunpack.c.l.b16 %v749
        %v953 = vunpack.c.h.b16 %v749
        %v954 = vunpack.c.l.b16 %v750
        %v955 = vunpack.c.h.b16 %v750
        %v956 = vunpack.c.l.b16 %v751
        %v957 = vunpack.c.h.b16 %v751
        %v958 = vunpack.c.l.b16 %v752
        %v959 = vunpack.c.h.b16 %v752
        %v960 = vunpack.c.l.b16 %v753
        %v961 = vunpack.c.h.b16 %v753
        %v962 = vunpack.c.l.b16 %v754
        %v963 = vunpack.c.h.b16 %v754
        %v964 = vunpack.c.l.b16 %v755
        %v965 = vunpack.c.h.b16 %v755
        %v966 = vunpack.c.l.b16 %v756
        %v967 = vunpack.c.h.b16 %v756
        %v968 = vunpack.c.l.b16 %v757
        %v969 = vunpack.c.h.b16 %v757
        %v970 = vunpack.c.l.b16 %v758
        %v971 = vunpack.c.h.b16 %v758
        %v972 = vunpack.c.l.b16 %v759
        %v973 = vunpack.c.h.b16 %v759
        %v974 = vunpack.c.l.b16 %v760
        %v975 = vunpack.c.h.b16 %v760
        %v976 = vunpack.c.l.b16 %v761
        %v977 = vunpack.c.h.b16 %v761
        %v978 = vunpack.c.l.b16 %v762
        %v979 = vunpack.c.h.b16 %v762
        %v980 = vunpack.c.l.b16 %v763
        %v981 = vunpack.c.h.b16 %v763
        %v982 = vunpack.c.l.b16 %v764
        %v983 = vunpack.c.h.b16 %v764
        %v984 = vunpack.c.l.b16 %v765
        %v985 = vunpack.c.h.b16 %v765
        %v986 = vunpack.c.l.b16 %v766
        %v987 = vunpack.c.h.b16 %v766
        %v988 = vunpack.c.l.b16 %v767
        %v989 = vunpack.c.h.b16 %v767
        %v990 = vunpack.c.l.b16 %v768
        %v991 = vunpack.c.h.b16 %v768
        %v992 = vunpack.c.l.b16 %v769
        %v993 = vunpack.c.h.b16 %v769
        %v994 = vunpack.c.l.b16 %v770
        %v995 = vunpack.c.h.b16 %v770
        %v996 = vunpack.c.l.b16 %v771
        %v997 = vunpack.c.h.b16 %v771
        %v998 = vunpack.c.l.b16 %v772
        %v999 = vunpack.c.h.b16 %v772
        %v1000 = vunpack.c.l.b16 %v773
        %v1001 = vunpack.c.h.b16 %v773
        %v1002 = vunpack.c.l.b16 %v774
        %v1003 = vunpack.c.h.b16 %v774
        %v1004 = vunpack.c.l.b16 %v775
        %v1005 = vunpack.c.h.b16 %v775
        %v1006 = vunpack.c.l.b16 %v776
        %v1007 = vunpack.c.h.b16 %v776
        %v1008 = vunpack.c.l.b16 %v777
        %v1009 = vunpack.c.h.b16 %v777
        %v1010 = vunpack.c.l.b16 %v778
        %v1011 = vunpack.c.h.b16 %v778
        %v1012 = vunpack.c.l.b16 %v779
        %v1013 = vunpack.c.h.b16 %v779
        %v1014 = vpack.c.b16 %v894, %v886
        %v1015 = vpack.c.b16 %v895, %v887
        %v1016 = vpack.c.b16 %v896, %v888
        %v1017 = vpack.c.b16 %v897, %v889
        %v1018 = vpack.c.b16 %v898, %v890
        %v1019 = vpack.c.b16 %v899, %v891
        %v1020 = vpack.c.b16 %v900, %v892
        %v1021 = vpack.c.b16 %v901, %v893
        %v1022 = vpack.c.b16 %v910, %v902
        %v1023 = vpack.c.b16 %v911, %v903
        %v1024 = vpack.c.b16 %v912, %v904
        %v1025 = vpack.c.b16 %v913, %v905
        %v1026 = vpack.c.b16 %v914, %v906
        %v1027 = vpack.c.b16 %v915, %v907
        %v1028 = vpack.c.b16 %v916, %v908
        %v1029 = vpack.c.b16 %v917, %v909
        %v1030 = vpack.c.b16 %v926, %v918
        %v1031 = vpack.c.b16 %v927, %v919
        %v1032 = vpack.c.b16 %v928, %v920
        %v1033 = vpack.c.b16 %v929, %v921
        %v1034 = vpack.c.b16 %v930, %v922
        %v1035 = vpack.c.b16 %v931, %v923
        %v1036 = vpack.c.b16 %v932, %v924
        %v1037 = vpack.c.b16 %v933, %v925
        %v1038 = vpack.c.b16 %v942, %v934
        %v1039 = vpack.c.b16 %v943, %v935
        %v1040 = vpack.c.b16 %v944, %v936
        %v1041 = vpack.c.b16 %v945, %v937
        %v1042 = vpack.c.b16 %v946, %v938
        %v1043 = vpack.c.b16 %v947, %v939
        %v1044 = vpack.c.b16 %v948, %v940
        %v1045 = vpack.c.b16 %v949, %v941
        %v1046 = vpack.c.b16 %v958, %v950
        %v1047 = vpack.c.b16 %v959, %v951
        %v1048 = vpack.c.b16 %v960, %v952
        %v1049 = vpack.c.b16 %v961, %v953
        %v1050 = vpack.c.b16 %v962, %v954
        %v1051 = vpack.c.b16 %v963, %v955
        %v1052 = vpack.c.b16 %v964, %v956
        %v1053 = vpack.c.b16 %v965, %v957
        %v1054 = vpack.c.b16 %v974, %v966
        %v1055 = vpack.c.b16 %v975, %v967
        %v1056 = vpack.c.b16 %v976, %v968
        %v1057 = vpack.c.b16 %v977, %v969
        %v1058 = vpack.c.b16 %v978, %v970
        %v1059 = vpack.c.b16 %v979, %v971
        %v1060 = vpack.c.b16 %v980, %v972
        %v1061 = vpack.c.b16 %v981, %v973
        %v1062 = vpack.c.b16 %v990, %v982
        %v1063 = vpack.c.b16 %v991, %v983
        %v1064 = vpack.c.b16 %v992, %v984
        %v1065 = vpack.c.b16 %v993, %v985
        %v1066 = vpack.c.b16 %v994, %v986
        %v1067 = vpack.c.b16 %v995, %v987
        %v1068 = vpack.c.b16 %v996, %v988
        %v1069 = vpack.c.b16 %v997, %v989
        %v1070 = vpack.c.b16 %v1006, %v998
        %v1071 = vpack.c.b16 %v1007, %v999
        %v1072 = vpack.c.b16 %v1008, %v1000
        %v1073 = vpack.c.b16 %v1009, %v1001
        %v1074 = vpack.c.b16 %v1010, %v1002
        %v1075 = vpack.c.b16 %v1011, %v1003
        %v1076 = vpack.c.b16 %v1012, %v1004
        %v1077 = vpack.c.b16 %v1013, %v1005
        %1142 = vmatprep.subr.bf16.mxu0 %v1071
        %1143 = vmatpush1.bf16.msra.mxu0 %v1070
        %1144 = vmatprep.subr.bf16.mxu0 %v1063
        %1145 = vmatpush1.bf16.msra.mxu0 %v1062
        %1146 = vmatprep.subr.bf16.mxu0 %v1055
        %1147 = vmatpush1.bf16.msra.mxu0 %v1054
        %1148 = vmatprep.subr.bf16.mxu0 %v1047
        %1149 = vmatpush1.bf16.msra.mxu0 %v1046
        %1150 = vmatprep.subr.bf16.mxu0 %v1039
        %1151 = vmatpush1.bf16.msra.mxu0 %v1038
        %1152 = vmatprep.subr.bf16.mxu0 %v1031
        %1153 = vmatpush1.bf16.msra.mxu0 %v1030
        %1154 = vmatprep.subr.bf16.mxu0 %v1023
        %1155 = vmatpush1.bf16.msra.mxu0 %v1022
        %1156 = vmatprep.subr.bf16.mxu0 %v1015
        %1157 = vmatpush1.bf16.msra.mxu0 %v1014
        %1158 = vmatprep.subr.bf16.mxu0 0
        %1159 = vmatpush2.bf16.msra.mxu0 0
        %1160 = vmatprep.subr.bf16.mxu0 0
        %1161 = vmatpush2.bf16.msra.mxu0 0
        %1162 = vmatprep.subr.bf16.mxu0 0
        %1163 = vmatpush2.bf16.msra.mxu0 0
        %1164 = vmatprep.subr.bf16.mxu0 0
        %1165 = vmatpush2.bf16.msra.mxu0 0
        %1166 = vmatprep.subr.bf16.mxu0 0
        %1167 = vmatpush2.bf16.msra.mxu0 0
        %1168 = vmatprep.subr.bf16.mxu0 0
        %1169 = vmatpush2.bf16.msra.mxu0 0
        %1170 = vmatprep.subr.bf16.mxu0 0
        %1171 = vmatpush2.bf16.msra.mxu0 0
        %1172 = vmatprep.subr.bf16.mxu0 0
        %1173 = vmatpush2.bf16.msra.mxu0 0
        %1174 = vmatprep.mubr.bf16.mxu0 0
        %1175 = vmatmul.mubr.bf16.gmra.mxu0 %v715
        %v1176 = vpop.f32.mrf.mxu0
        %v1177 = vadd.f32 %v785, %v1176
        %v1178 = vpop.f32.mrf.mxu0
        %v1179 = vadd.f32 %v789, %v1178
        %v1180 = vpop.f32.mrf.mxu0
        %v1181 = vadd.f32 %v785, %v1180
        %v1182 = vpop.f32.mrf.mxu0
        %v1183 = vadd.f32 %v789, %v1182
        %1184 = vdwg.mxu0
        %1185 = vmatprep.subr.bf16.mxu0 %v1073
        %1186 = vmatpush1.bf16.msra.mxu0 %v1072
        %1187 = vmatprep.subr.bf16.mxu0 %v1065
        %1188 = vmatpush1.bf16.msra.mxu0 %v1064
        %1189 = vmatprep.subr.bf16.mxu0 %v1057
        %1190 = vmatpush1.bf16.msra.mxu0 %v1056
        %1191 = vmatprep.subr.bf16.mxu0 %v1049
        %1192 = vmatpush1.bf16.msra.mxu0 %v1048
        %1193 = vmatprep.subr.bf16.mxu0 %v1041
        %1194 = vmatpush1.bf16.msra.mxu0 %v1040
        %1195 = vmatprep.subr.bf16.mxu0 %v1033
        %1196 = vmatpush1.bf16.msra.mxu0 %v1032
        %1197 = vmatprep.subr.bf16.mxu0 %v1025
        %1198 = vmatpush1.bf16.msra.mxu0 %v1024
        %1199 = vmatprep.subr.bf16.mxu0 %v1017
        %1200 = vmatpush1.bf16.msra.mxu0 %v1016
        %1201 = vmatprep.subr.bf16.mxu0 0
        %1202 = vmatpush2.bf16.msra.mxu0 0
        %1203 = vmatprep.subr.bf16.mxu0 0
        %1204 = vmatpush2.bf16.msra.mxu0 0
        %1205 = vmatprep.subr.bf16.mxu0 0
        %1206 = vmatpush2.bf16.msra.mxu0 0
        %1207 = vmatprep.subr.bf16.mxu0 0
        %1208 = vmatpush2.bf16.msra.mxu0 0
        %1209 = vmatprep.subr.bf16.mxu0 0
        %1210 = vmatpush2.bf16.msra.mxu0 0
        %1211 = vmatprep.subr.bf16.mxu0 0
        %1212 = vmatpush2.bf16.msra.mxu0 0
        %1213 = vmatprep.subr.bf16.mxu0 0
        %1214 = vmatpush2.bf16.msra.mxu0 0
        %1215 = vmatprep.subr.bf16.mxu0 0
        %1216 = vmatpush2.bf16.msra.mxu0 0
        %1217 = vmatprep.mubr.bf16.mxu0 0
        %1218 = vmatmul.mubr.bf16.gmra.mxu0 %v715
        %v1219 = vpop.f32.mrf.mxu0
        %v1220 = vadd.f32 %v793, %v1219
        %v1221 = vpop.f32.mrf.mxu0
        %v1222 = vadd.f32 %v797, %v1221
        %v1223 = vpop.f32.mrf.mxu0
        %v1224 = vadd.f32 %v793, %v1223
        %v1225 = vpop.f32.mrf.mxu0
        %v1226 = vadd.f32 %v797, %v1225
        %1227 = vdwg.mxu0
        %1228 = vmatprep.subr.bf16.mxu0 %v1075
        %1229 = vmatpush1.bf16.msra.mxu0 %v1074
        %1230 = vmatprep.subr.bf16.mxu0 %v1067
        %1231 = vmatpush1.bf16.msra.mxu0 %v1066
        %1232 = vmatprep.subr.bf16.mxu0 %v1059
        %1233 = vmatpush1.bf16.msra.mxu0 %v1058
        %1234 = vmatprep.subr.bf16.mxu0 %v1051
        %1235 = vmatpush1.bf16.msra.mxu0 %v1050
        %1236 = vmatprep.subr.bf16.mxu0 %v1043
        %1237 = vmatpush1.bf16.msra.mxu0 %v1042
        %1238 = vmatprep.subr.bf16.mxu0 %v1035
        %1239 = vmatpush1.bf16.msra.mxu0 %v1034
        %1240 = vmatprep.subr.bf16.mxu0 %v1027
        %1241 = vmatpush1.bf16.msra.mxu0 %v1026
        %1242 = vmatprep.subr.bf16.mxu0 %v1019
        %1243 = vmatpush1.bf16.msra.mxu0 %v1018
        %1244 = vmatprep.subr.bf16.mxu0 0
        %1245 = vmatpush2.bf16.msra.mxu0 0
        %1246 = vmatprep.subr.bf16.mxu0 0
        %1247 = vmatpush2.bf16.msra.mxu0 0
        %1248 = vmatprep.subr.bf16.mxu0 0
        %1249 = vmatpush2.bf16.msra.mxu0 0
        %1250 = vmatprep.subr.bf16.mxu0 0
        %1251 = vmatpush2.bf16.msra.mxu0 0
        %1252 = vmatprep.subr.bf16.mxu0 0
        %1253 = vmatpush2.bf16.msra.mxu0 0
        %1254 = vmatprep.subr.bf16.mxu0 0
        %1255 = vmatpush2.bf16.msra.mxu0 0
        %1256 = vmatprep.subr.bf16.mxu0 0
        %1257 = vmatpush2.bf16.msra.mxu0 0
        %1258 = vmatprep.subr.bf16.mxu0 0
        %1259 = vmatpush2.bf16.msra.mxu0 0
        %1260 = vmatprep.mubr.bf16.mxu0 0
        %1261 = vmatmul.mubr.bf16.gmra.mxu0 %v715
        %v1262 = vpop.f32.mrf.mxu0
        %v1263 = vadd.f32 %v801, %v1262
        %v1264 = vpop.f32.mrf.mxu0
        %v1265 = vadd.f32 %v805, %v1264
        %v1266 = vpop.f32.mrf.mxu0
        %v1267 = vadd.f32 %v801, %v1266
        %v1268 = vpop.f32.mrf.mxu0
        %v1269 = vadd.f32 %v805, %v1268
        %1270 = vdwg.mxu0
        %1271 = vmatprep.subr.bf16.mxu0 %v1077
        %1272 = vmatpush1.bf16.msra.mxu0 %v1076
        %1273 = vmatprep.subr.bf16.mxu0 %v1069
        %1274 = vmatpush1.bf16.msra.mxu0 %v1068
        %1275 = vmatprep.subr.bf16.mxu0 %v1061
        %1276 = vmatpush1.bf16.msra.mxu0 %v1060
        %1277 = vmatprep.subr.bf16.mxu0 %v1053
        %1278 = vmatpush1.bf16.msra.mxu0 %v1052
        %1279 = vmatprep.subr.bf16.mxu0 %v1045
        %1280 = vmatpush1.bf16.msra.mxu0 %v1044
        %1281 = vmatprep.subr.bf16.mxu0 %v1037
        %1282 = vmatpush1.bf16.msra.mxu0 %v1036
        %1283 = vmatprep.subr.bf16.mxu0 %v1029
        %1284 = vmatpush1.bf16.msra.mxu0 %v1028
        %1285 = vmatprep.subr.bf16.mxu0 %v1021
        %1286 = vmatpush1.bf16.msra.mxu0 %v1020
        %1287 = vmatprep.subr.bf16.mxu0 0
        %1288 = vmatpush2.bf16.msra.mxu0 0
        %1289 = vmatprep.subr.bf16.mxu0 0
        %1290 = vmatpush2.bf16.msra.mxu0 0
        %1291 = vmatprep.subr.bf16.mxu0 0
        %1292 = vmatpush2.bf16.msra.mxu0 0
        %1293 = vmatprep.subr.bf16.mxu0 0
        %1294 = vmatpush2.bf16.msra.mxu0 0
        %1295 = vmatprep.subr.bf16.mxu0 0
        %1296 = vmatpush2.bf16.msra.mxu0 0
        %1297 = vmatprep.subr.bf16.mxu0 0
        %1298 = vmatpush2.bf16.msra.mxu0 0
        %1299 = vmatprep.subr.bf16.mxu0 0
        %1300 = vmatpush2.bf16.msra.mxu0 0
        %1301 = vmatprep.subr.bf16.mxu0 0
        %1302 = vmatpush2.bf16.msra.mxu0 0
        %1303 = vmatprep.mubr.bf16.mxu0 0
        %1304 = vmatmul.mubr.bf16.gmra.mxu0 %v715
        %v1305 = vpop.f32.mrf.mxu0
        %v1306 = vadd.f32 %v809, %v1305
        %v1307 = vpop.f32.mrf.mxu0
        %v1308 = vadd.f32 %v813, %v1307
        %v1309 = vpop.f32.mrf.mxu0
        %v1310 = vadd.f32 %v809, %v1309
        %v1311 = vpop.f32.mrf.mxu0
        %v1312 = vadd.f32 %v813, %v1311
        %1313 = vdwg.mxu0
        %v1314 = vmax.f32 %v1177, 0.0
        %v1315 = vmax.f32 %v1179, 0.0
        %v1316 = vmax.f32 %v1220, 0.0
        %v1317 = vmax.f32 %v1222, 0.0
        %v1318 = vmax.f32 %v1263, 0.0
        %v1319 = vmax.f32 %v1265, 0.0
        %v1320 = vmax.f32 %v1306, 0.0
        %v1321 = vmax.f32 %v1308, 0.0
        %v1322 = vmax.f32 %v1181, 0.0
        %v1323 = vmax.f32 %v1183, 0.0
        %v1324 = vmax.f32 %v1224, 0.0
        %v1325 = vmax.f32 %v1226, 0.0
        %v1326 = vmax.f32 %v1267, 0.0
        %v1327 = vmax.f32 %v1269, 0.0
        %v1328 = vmax.f32 %v1310, 0.0
        %v1329 = vmax.f32 %v1312, 0.0
        %v1330 = vld [vmem:[#allocation2] sm:$0xff]
        %v1331 = vmax.f32 %v1314, %v1322
        %v1332 = vrot.slane %v1331, 4
        %v1333 = vmax.f32 %v1331, %v1332
        %v1334 = vrot.slane %v1333, 2
        %v1335 = vmax.f32 %v1333, %v1334
        %v1336 = vrot.slane %v1335, 1
        %v1337 = vmax.f32 %v1335, %v1336
        %v1338 = vmax.f32 %v1315, %v1323
        %v1339 = vrot.slane %v1338, 4
        %v1340 = vmax.f32 %v1338, %v1339
        %v1341 = vrot.slane %v1340, 2
        %v1342 = vmax.f32 %v1340, %v1341
        %v1343 = vrot.slane %v1342, 1
        %v1344 = vmax.f32 %v1342, %v1343
        %v1345 = vmax.f32 %v1316, %v1324
        %v1346 = vrot.slane %v1345, 4
        %v1347 = vmax.f32 %v1345, %v1346
        %v1348 = vrot.slane %v1347, 2
        %v1349 = vmax.f32 %v1347, %v1348
        %v1350 = vrot.slane %v1349, 1
        %v1351 = vmax.f32 %v1349, %v1350
        %v1352 = vmax.f32 %v1317, %v1325
        %v1353 = vrot.slane %v1352, 4
        %v1354 = vmax.f32 %v1352, %v1353
        %v1355 = vrot.slane %v1354, 2
        %v1356 = vmax.f32 %v1354, %v1355
        %v1357 = vrot.slane %v1356, 1
        %v1358 = vmax.f32 %v1356, %v1357
        %v1359 = vmax.f32 %v1318, %v1326
        %v1360 = vrot.slane %v1359, 4
        %v1361 = vmax.f32 %v1359, %v1360
        %v1362 = vrot.slane %v1361, 2
        %v1363 = vmax.f32 %v1361, %v1362
        %v1364 = vrot.slane %v1363, 1
        %v1365 = vmax.f32 %v1363, %v1364
        %v1366 = vmax.f32 %v1319, %v1327
        %v1367 = vrot.slane %v1366, 4
        %v1368 = vmax.f32 %v1366, %v1367
        %v1369 = vrot.slane %v1368, 2
        %v1370 = vmax.f32 %v1368, %v1369
        %v1371 = vrot.slane %v1370, 1
        %v1372 = vmax.f32 %v1370, %v1371
        %v1373 = vmax.f32 %v1320, %v1328
        %v1374 = vrot.slane %v1373, 4
        %v1375 = vmax.f32 %v1373, %v1374
        %v1376 = vrot.slane %v1375, 2
        %v1377 = vmax.f32 %v1375, %v1376
        %v1378 = vrot.slane %v1377, 1
        %v1379 = vmax.f32 %v1377, %v1378
        %v1380 = vmax.f32 %v1321, %v1329
        %v1381 = vrot.slane %v1380, 4
        %v1382 = vmax.f32 %v1380, %v1381
        %v1383 = vrot.slane %v1382, 2
        %v1384 = vmax.f32 %v1382, %v1383
        %v1385 = vrot.slane %v1384, 1
        %v1386 = vmax.f32 %v1384, %v1385
        %v1395 = vcombine.low %v1337, %v1344
        %v1396 = vcombine.low %v1351, %v1358
        %v1397 = vcombine.low %v1365, %v1372
        %v1398 = vcombine.low %v1379, %v1386
        %v1400 = vunpack.c.l.s4 1966171168
        %v1401 = vunpack.c.0.s8 %v1400
        %v1402 = vlaneseq
        %v1403 = vshrl.u32 %v1402, 7
        %v1404 = vsub.s32 %v1401, %v1403
        %v1405 = vrot.slane %v1395, %v1404
        %v1407 = vunpack.c.l.s4 1966171168
        %v1408 = vunpack.c.0.s8 %v1407
        %v1409 = vlaneseq
        %v1410 = vshrl.u32 %v1409, 7
        %v1411 = vsub.s32 %v1408, %v1410
        %v1412 = vrot.slane %v1396, %v1411
        %v1414 = vunpack.c.l.s4 1966171168
        %v1415 = vunpack.c.0.s8 %v1414
        %v1416 = vlaneseq
        %v1417 = vshrl.u32 %v1416, 7
        %v1418 = vsub.s32 %v1415, %v1417
        %v1419 = vrot.slane %v1397, %v1418
        %v1421 = vunpack.c.l.s4 1966171168
        %v1422 = vunpack.c.0.s8 %v1421
        %v1423 = vlaneseq
        %v1424 = vshrl.u32 %v1423, 7
        %v1425 = vsub.s32 %v1422, %v1424
        %v1426 = vrot.slane %v1398, %v1425
        %v1427 = vcombine.low %v1405, %v1412
        %v1428 = vcombine.low %v1419, %v1426
        %v1430 = vunpack.c.l.s4 1966171168
        %v1431 = vunpack.c.0.s8 %v1430
        %v1432 = vlaneseq
        %v1433 = vshrl.u32 %v1432, 7
        %v1434 = vsub.s32 %v1431, %v1433
        %v1435 = vrot.slane %v1427, %v1434
        %v1437 = vunpack.c.l.s4 1966171168
        %v1438 = vunpack.c.0.s8 %v1437
        %v1439 = vlaneseq
        %v1440 = vshrl.u32 %v1439, 7
        %v1441 = vsub.s32 %v1438, %v1440
        %v1442 = vrot.slane %v1428, %v1441
        %v1443 = vcombine.low %v1435, %v1442
        %v1445 = vmax.f32 %v1330, %v1443
        %1446 = vst [vmem:[#allocation2] sm:$0xff] %v1445
        // Predicated region
        $region93: #{pointnet_forward.2} parent=71 // pred_check
          %p1447 = pneg %p528
        $region94: #{pointnet_forward.2} parent=71 // pred_check_branch
          %1449 = sbr.rel (%p1447) target = $region96
        $region95: #{pointnet_forward.2} parent=71 // pred_region
          %v1450 = vld [vmem:[#allocation2] sm:$0xff]
          %v1452 = vlaneseq
          %v1453 = vshrl.u32 %v1452, 7
          %v1454 = vsub.s32 0, %v1453
          %v1455 = vrot.slane %v1450, %v1454
          %v1456 = vlaneseq
          %v1457 = vshrl.u32 %v1456, 7
          %v1458 = vsub.s32 1, %v1457
          %v1459 = vrot.slane %v1450, %v1458
          %v1460 = vlaneseq
          %v1461 = vshrl.u32 %v1460, 7
          %v1462 = vsub.s32 2, %v1461
          %v1463 = vrot.slane %v1450, %v1462
          %v1464 = vlaneseq
          %v1465 = vshrl.u32 %v1464, 7
          %v1466 = vsub.s32 3, %v1465
          %v1467 = vrot.slane %v1450, %v1466
          %v1468 = vlaneseq
          %v1469 = vshrl.u32 %v1468, 7
          %v1470 = vsub.s32 4, %v1469
          %v1471 = vrot.slane %v1450, %v1470
          %v1472 = vlaneseq
          %v1473 = vshrl.u32 %v1472, 7
          %v1474 = vsub.s32 5, %v1473
          %v1475 = vrot.slane %v1450, %v1474
          %v1476 = vlaneseq
          %v1477 = vshrl.u32 %v1476, 7
          %v1478 = vsub.s32 6, %v1477
          %v1479 = vrot.slane %v1450, %v1478
          %v1480 = vlaneseq
          %v1481 = vshrl.u32 %v1480, 7
          %v1482 = vsub.s32 7, %v1481
          %v1483 = vrot.slane %v1450, %v1482
          %v1492 = vpack.c.bf16 %v1455, %v1455
          %v1493 = vpack.c.bf16 %v1459, %v1459
          %v1494 = vpack.c.bf16 %v1463, %v1463
          %v1495 = vpack.c.bf16 %v1467, %v1467
          %v1496 = vpack.c.bf16 %v1471, %v1471
          %v1497 = vpack.c.bf16 %v1475, %v1475
          %v1498 = vpack.c.bf16 %v1479, %v1479
          %v1499 = vpack.c.bf16 %v1483, %v1483
          %v1500 = vld [vmem:[#allocation5] sm:$0xff]
          %v1501 = vld [vmem:[#allocation5 + $0x8] sm:$0xff]
          %v1502 = vld [vmem:[#allocation5 + $0x10] sm:$0xff]
          %v1503 = vld [vmem:[#allocation5 + $0x18] sm:$0xff]
          %v1504 = vld [vmem:[#allocation5 + $0x20] sm:$0xff]
          %v1505 = vld [vmem:[#allocation5 + $0x28] sm:$0xff]
          %v1506 = vld [vmem:[#allocation5 + $0x30] sm:$0xff]
          %v1507 = vld [vmem:[#allocation5 + $0x38] sm:$0xff]
          %v1508 = vld [vmem:[#allocation5 + $0x40] sm:$0xff]
          %v1509 = vld [vmem:[#allocation5 + $0x48] sm:$0xff]
          %v1510 = vld [vmem:[#allocation5 + $0x50] sm:$0xff]
          %v1511 = vld [vmem:[#allocation5 + $0x58] sm:$0xff]
          %v1512 = vld [vmem:[#allocation5 + $0x60] sm:$0xff]
          %v1513 = vld [vmem:[#allocation5 + $0x68] sm:$0xff]
          %v1514 = vld [vmem:[#allocation5 + $0x70] sm:$0xff]
          %v1515 = vld [vmem:[#allocation5 + $0x78] sm:$0xff]
          %v1516 = vld [vmem:[#allocation5 + $0x80] sm:$0xff]
          %v1517 = vld [vmem:[#allocation5 + $0x88] sm:$0xff]
          %v1518 = vld [vmem:[#allocation5 + $0x90] sm:$0xff]
          %v1519 = vld [vmem:[#allocation5 + $0x98] sm:$0xff]
          %v1520 = vld [vmem:[#allocation5 + $0xa0] sm:$0xff]
          %v1521 = vld [vmem:[#allocation5 + $0xa8] sm:$0xff]
          %v1522 = vld [vmem:[#allocation5 + $0xb0] sm:$0xff]
          %v1523 = vld [vmem:[#allocation5 + $0xb8] sm:$0xff]
          %v1524 = vld [vmem:[#allocation5 + $0xc0] sm:$0xff]
          %v1525 = vld [vmem:[#allocation5 + $0xc8] sm:$0xff]
          %v1526 = vld [vmem:[#allocation5 + $0xd0] sm:$0xff]
          %v1527 = vld [vmem:[#allocation5 + $0xd8] sm:$0xff]
          %v1528 = vld [vmem:[#allocation5 + $0xe0] sm:$0xff]
          %v1529 = vld [vmem:[#allocation5 + $0xe8] sm:$0xff]
          %v1530 = vld [vmem:[#allocation5 + $0xf0] sm:$0xff]
          %v1531 = vld [vmem:[#allocation5 + $0xf8] sm:$0xff]
          %v1532 = vld [vmem:[#allocation5 + $0x100] sm:$0xff]
          %v1533 = vld [vmem:[#allocation5 + $0x108] sm:$0xff]
          %v1534 = vld [vmem:[#allocation5 + $0x110] sm:$0xff]
          %v1535 = vld [vmem:[#allocation5 + $0x118] sm:$0xff]
          %v1536 = vld [vmem:[#allocation5 + $0x120] sm:$0xff]
          %v1537 = vld [vmem:[#allocation5 + $0x128] sm:$0xff]
          %v1538 = vld [vmem:[#allocation5 + $0x130] sm:$0xff]
          %v1539 = vld [vmem:[#allocation5 + $0x138] sm:$0xff]
          %v1540 = vld [vmem:[#allocation5 + $0x140] sm:$0xff]
          %v1541 = vld [vmem:[#allocation5 + $0x148] sm:$0xff]
          %v1542 = vld [vmem:[#allocation5 + $0x150] sm:$0xff]
          %v1543 = vld [vmem:[#allocation5 + $0x158] sm:$0xff]
          %v1544 = vld [vmem:[#allocation5 + $0x160] sm:$0xff]
          %v1545 = vld [vmem:[#allocation5 + $0x168] sm:$0xff]
          %v1546 = vld [vmem:[#allocation5 + $0x170] sm:$0xff]
          %v1547 = vld [vmem:[#allocation5 + $0x178] sm:$0xff]
          %v1548 = vld [vmem:[#allocation5 + $0x180] sm:$0xff]
          %v1549 = vld [vmem:[#allocation5 + $0x188] sm:$0xff]
          %v1550 = vld [vmem:[#allocation5 + $0x190] sm:$0xff]
          %v1551 = vld [vmem:[#allocation5 + $0x198] sm:$0xff]
          %v1552 = vld [vmem:[#allocation5 + $0x1a0] sm:$0xff]
          %v1553 = vld [vmem:[#allocation5 + $0x1a8] sm:$0xff]
          %v1554 = vld [vmem:[#allocation5 + $0x1b0] sm:$0xff]
          %v1555 = vld [vmem:[#allocation5 + $0x1b8] sm:$0xff]
          %v1556 = vld [vmem:[#allocation5 + $0x1c0] sm:$0xff]
          %v1557 = vld [vmem:[#allocation5 + $0x1c8] sm:$0xff]
          %v1558 = vld [vmem:[#allocation5 + $0x1d0] sm:$0xff]
          %v1559 = vld [vmem:[#allocation5 + $0x1d8] sm:$0xff]
          %v1560 = vld [vmem:[#allocation5 + $0x1e0] sm:$0xff]
          %v1561 = vld [vmem:[#allocation5 + $0x1e8] sm:$0xff]
          %v1562 = vld [vmem:[#allocation5 + $0x1f0] sm:$0xff]
          %v1563 = vld [vmem:[#allocation5 + $0x1f8] sm:$0xff]
          %v1564 = vld [vmem:[#allocation5 + $0x200] sm:$0xff]
          %v1565 = vld [vmem:[#allocation5 + $0x208] sm:$0xff]
          %v1566 = vld [vmem:[#allocation5 + $0x210] sm:$0xff]
          %v1567 = vld [vmem:[#allocation5 + $0x218] sm:$0xff]
          %v1568 = vld [vmem:[#allocation5 + $0x220] sm:$0xff]
          %v1569 = vld [vmem:[#allocation5 + $0x228] sm:$0xff]
          %v1570 = vld [vmem:[#allocation5 + $0x230] sm:$0xff]
          %v1571 = vld [vmem:[#allocation5 + $0x238] sm:$0xff]
          %v1572 = vld [vmem:[#allocation5 + $0x240] sm:$0xff]
          %v1573 = vld [vmem:[#allocation5 + $0x248] sm:$0xff]
          %v1574 = vld [vmem:[#allocation5 + $0x250] sm:$0xff]
          %v1575 = vld [vmem:[#allocation5 + $0x258] sm:$0xff]
          %v1576 = vld [vmem:[#allocation5 + $0x260] sm:$0xff]
          %v1577 = vld [vmem:[#allocation5 + $0x268] sm:$0xff]
          %v1578 = vld [vmem:[#allocation5 + $0x270] sm:$0xff]
          %v1579 = vld [vmem:[#allocation5 + $0x278] sm:$0xff]
          %v1580 = vld [vmem:[#allocation5 + $0x280] sm:$0xff]
          %v1581 = vld [vmem:[#allocation5 + $0x288] sm:$0xff]
          %v1582 = vld [vmem:[#allocation5 + $0x290] sm:$0xff]
          %v1583 = vld [vmem:[#allocation5 + $0x298] sm:$0xff]
          %v1584 = vld [vmem:[#allocation5 + $0x2a0] sm:$0xff]
          %v1585 = vld [vmem:[#allocation5 + $0x2a8] sm:$0xff]
          %v1586 = vld [vmem:[#allocation5 + $0x2b0] sm:$0xff]
          %v1587 = vld [vmem:[#allocation5 + $0x2b8] sm:$0xff]
          %v1588 = vld [vmem:[#allocation5 + $0x2c0] sm:$0xff]
          %v1589 = vld [vmem:[#allocation5 + $0x2c8] sm:$0xff]
          %v1590 = vld [vmem:[#allocation5 + $0x2d0] sm:$0xff]
          %v1591 = vld [vmem:[#allocation5 + $0x2d8] sm:$0xff]
          %v1592 = vld [vmem:[#allocation5 + $0x2e0] sm:$0xff]
          %v1593 = vld [vmem:[#allocation5 + $0x2e8] sm:$0xff]
          %v1594 = vld [vmem:[#allocation5 + $0x2f0] sm:$0xff]
          %v1595 = vld [vmem:[#allocation5 + $0x2f8] sm:$0xff]
          %v1596 = vld [vmem:[#allocation5 + $0x300] sm:$0xff]
          %v1597 = vld [vmem:[#allocation5 + $0x308] sm:$0xff]
          %v1598 = vld [vmem:[#allocation5 + $0x310] sm:$0xff]
          %v1599 = vld [vmem:[#allocation5 + $0x318] sm:$0xff]
          %v1600 = vld [vmem:[#allocation5 + $0x320] sm:$0xff]
          %v1601 = vld [vmem:[#allocation5 + $0x328] sm:$0xff]
          %v1602 = vld [vmem:[#allocation5 + $0x330] sm:$0xff]
          %v1603 = vld [vmem:[#allocation5 + $0x338] sm:$0xff]
          %v1604 = vld [vmem:[#allocation5 + $0x340] sm:$0xff]
          %v1605 = vld [vmem:[#allocation5 + $0x348] sm:$0xff]
          %v1606 = vld [vmem:[#allocation5 + $0x350] sm:$0xff]
          %v1607 = vld [vmem:[#allocation5 + $0x358] sm:$0xff]
          %v1608 = vld [vmem:[#allocation5 + $0x360] sm:$0xff]
          %v1609 = vld [vmem:[#allocation5 + $0x368] sm:$0xff]
          %v1610 = vld [vmem:[#allocation5 + $0x370] sm:$0xff]
          %v1611 = vld [vmem:[#allocation5 + $0x378] sm:$0xff]
          %v1612 = vld [vmem:[#allocation5 + $0x380] sm:$0xff]
          %v1613 = vld [vmem:[#allocation5 + $0x388] sm:$0xff]
          %v1614 = vld [vmem:[#allocation5 + $0x390] sm:$0xff]
          %v1615 = vld [vmem:[#allocation5 + $0x398] sm:$0xff]
          %v1616 = vld [vmem:[#allocation5 + $0x3a0] sm:$0xff]
          %v1617 = vld [vmem:[#allocation5 + $0x3a8] sm:$0xff]
          %v1618 = vld [vmem:[#allocation5 + $0x3b0] sm:$0xff]
          %v1619 = vld [vmem:[#allocation5 + $0x3b8] sm:$0xff]
          %v1620 = vld [vmem:[#allocation5 + $0x3c0] sm:$0xff]
          %v1621 = vld [vmem:[#allocation5 + $0x3c8] sm:$0xff]
          %v1622 = vld [vmem:[#allocation5 + $0x3d0] sm:$0xff]
          %v1623 = vld [vmem:[#allocation5 + $0x3d8] sm:$0xff]
          %v1624 = vld [vmem:[#allocation5 + $0x3e0] sm:$0xff]
          %v1625 = vld [vmem:[#allocation5 + $0x3e8] sm:$0xff]
          %v1626 = vld [vmem:[#allocation5 + $0x3f0] sm:$0xff]
          %v1627 = vld [vmem:[#allocation5 + $0x3f8] sm:$0xff]
          %v1628 = vld [vmem:[#allocation5 + $0x400] sm:$0xff]
          %v1629 = vld [vmem:[#allocation5 + $0x408] sm:$0xff]
          %v1630 = vld [vmem:[#allocation5 + $0x410] sm:$0xff]
          %v1631 = vld [vmem:[#allocation5 + $0x418] sm:$0xff]
          %v1632 = vld [vmem:[#allocation5 + $0x420] sm:$0xff]
          %v1633 = vld [vmem:[#allocation5 + $0x428] sm:$0xff]
          %v1634 = vld [vmem:[#allocation5 + $0x430] sm:$0xff]
          %v1635 = vld [vmem:[#allocation5 + $0x438] sm:$0xff]
          %v1636 = vld [vmem:[#allocation5 + $0x440] sm:$0xff]
          %v1637 = vld [vmem:[#allocation5 + $0x448] sm:$0xff]
          %v1638 = vld [vmem:[#allocation5 + $0x450] sm:$0xff]
          %v1639 = vld [vmem:[#allocation5 + $0x458] sm:$0xff]
          %v1640 = vld [vmem:[#allocation5 + $0x460] sm:$0xff]
          %v1641 = vld [vmem:[#allocation5 + $0x468] sm:$0xff]
          %v1642 = vld [vmem:[#allocation5 + $0x470] sm:$0xff]
          %v1643 = vld [vmem:[#allocation5 + $0x478] sm:$0xff]
          %v1644 = vld [vmem:[#allocation5 + $0x480] sm:$0xff]
          %v1645 = vld [vmem:[#allocation5 + $0x488] sm:$0xff]
          %v1646 = vld [vmem:[#allocation5 + $0x490] sm:$0xff]
          %v1647 = vld [vmem:[#allocation5 + $0x498] sm:$0xff]
          %v1648 = vld [vmem:[#allocation5 + $0x4a0] sm:$0xff]
          %v1649 = vld [vmem:[#allocation5 + $0x4a8] sm:$0xff]
          %v1650 = vld [vmem:[#allocation5 + $0x4b0] sm:$0xff]
          %v1651 = vld [vmem:[#allocation5 + $0x4b8] sm:$0xff]
          %v1652 = vld [vmem:[#allocation5 + $0x4c0] sm:$0xff]
          %v1653 = vld [vmem:[#allocation5 + $0x4c8] sm:$0xff]
          %v1654 = vld [vmem:[#allocation5 + $0x4d0] sm:$0xff]
          %v1655 = vld [vmem:[#allocation5 + $0x4d8] sm:$0xff]
          %v1656 = vld [vmem:[#allocation5 + $0x4e0] sm:$0xff]
          %v1657 = vld [vmem:[#allocation5 + $0x4e8] sm:$0xff]
          %v1658 = vld [vmem:[#allocation5 + $0x4f0] sm:$0xff]
          %v1659 = vld [vmem:[#allocation5 + $0x4f8] sm:$0xff]
          %v1660 = vld [vmem:[#allocation5 + $0x500] sm:$0xff]
          %v1661 = vld [vmem:[#allocation5 + $0x508] sm:$0xff]
          %v1662 = vld [vmem:[#allocation5 + $0x510] sm:$0xff]
          %v1663 = vld [vmem:[#allocation5 + $0x518] sm:$0xff]
          %v1664 = vld [vmem:[#allocation5 + $0x520] sm:$0xff]
          %v1665 = vld [vmem:[#allocation5 + $0x528] sm:$0xff]
          %v1666 = vld [vmem:[#allocation5 + $0x530] sm:$0xff]
          %v1667 = vld [vmem:[#allocation5 + $0x538] sm:$0xff]
          %v1668 = vld [vmem:[#allocation5 + $0x540] sm:$0xff]
          %v1669 = vld [vmem:[#allocation5 + $0x548] sm:$0xff]
          %v1670 = vld [vmem:[#allocation5 + $0x550] sm:$0xff]
          %v1671 = vld [vmem:[#allocation5 + $0x558] sm:$0xff]
          %v1672 = vld [vmem:[#allocation5 + $0x560] sm:$0xff]
          %v1673 = vld [vmem:[#allocation5 + $0x568] sm:$0xff]
          %v1674 = vld [vmem:[#allocation5 + $0x570] sm:$0xff]
          %v1675 = vld [vmem:[#allocation5 + $0x578] sm:$0xff]
          %v1676 = vld [vmem:[#allocation5 + $0x580] sm:$0xff]
          %v1677 = vld [vmem:[#allocation5 + $0x588] sm:$0xff]
          %v1678 = vld [vmem:[#allocation5 + $0x590] sm:$0xff]
          %v1679 = vld [vmem:[#allocation5 + $0x598] sm:$0xff]
          %v1680 = vld [vmem:[#allocation5 + $0x5a0] sm:$0xff]
          %v1681 = vld [vmem:[#allocation5 + $0x5a8] sm:$0xff]
          %v1682 = vld [vmem:[#allocation5 + $0x5b0] sm:$0xff]
          %v1683 = vld [vmem:[#allocation5 + $0x5b8] sm:$0xff]
          %v1684 = vld [vmem:[#allocation5 + $0x5c0] sm:$0xff]
          %v1685 = vld [vmem:[#allocation5 + $0x5c8] sm:$0xff]
          %v1686 = vld [vmem:[#allocation5 + $0x5d0] sm:$0xff]
          %v1687 = vld [vmem:[#allocation5 + $0x5d8] sm:$0xff]
          %v1688 = vld [vmem:[#allocation5 + $0x5e0] sm:$0xff]
          %v1689 = vld [vmem:[#allocation5 + $0x5e8] sm:$0xff]
          %v1690 = vld [vmem:[#allocation5 + $0x5f0] sm:$0xff]
          %v1691 = vld [vmem:[#allocation5 + $0x5f8] sm:$0xff]
          %v1692 = vld [vmem:[#allocation5 + $0x600] sm:$0xff]
          %v1693 = vld [vmem:[#allocation5 + $0x608] sm:$0xff]
          %v1694 = vld [vmem:[#allocation5 + $0x610] sm:$0xff]
          %v1695 = vld [vmem:[#allocation5 + $0x618] sm:$0xff]
          %v1696 = vld [vmem:[#allocation5 + $0x620] sm:$0xff]
          %v1697 = vld [vmem:[#allocation5 + $0x628] sm:$0xff]
          %v1698 = vld [vmem:[#allocation5 + $0x630] sm:$0xff]
          %v1699 = vld [vmem:[#allocation5 + $0x638] sm:$0xff]
          %v1700 = vld [vmem:[#allocation5 + $0x640] sm:$0xff]
          %v1701 = vld [vmem:[#allocation5 + $0x648] sm:$0xff]
          %v1702 = vld [vmem:[#allocation5 + $0x650] sm:$0xff]
          %v1703 = vld [vmem:[#allocation5 + $0x658] sm:$0xff]
          %v1704 = vld [vmem:[#allocation5 + $0x660] sm:$0xff]
          %v1705 = vld [vmem:[#allocation5 + $0x668] sm:$0xff]
          %v1706 = vld [vmem:[#allocation5 + $0x670] sm:$0xff]
          %v1707 = vld [vmem:[#allocation5 + $0x678] sm:$0xff]
          %v1708 = vld [vmem:[#allocation5 + $0x680] sm:$0xff]
          %v1709 = vld [vmem:[#allocation5 + $0x688] sm:$0xff]
          %v1710 = vld [vmem:[#allocation5 + $0x690] sm:$0xff]
          %v1711 = vld [vmem:[#allocation5 + $0x698] sm:$0xff]
          %v1712 = vld [vmem:[#allocation5 + $0x6a0] sm:$0xff]
          %v1713 = vld [vmem:[#allocation5 + $0x6a8] sm:$0xff]
          %v1714 = vld [vmem:[#allocation5 + $0x6b0] sm:$0xff]
          %v1715 = vld [vmem:[#allocation5 + $0x6b8] sm:$0xff]
          %v1716 = vld [vmem:[#allocation5 + $0x6c0] sm:$0xff]
          %v1717 = vld [vmem:[#allocation5 + $0x6c8] sm:$0xff]
          %v1718 = vld [vmem:[#allocation5 + $0x6d0] sm:$0xff]
          %v1719 = vld [vmem:[#allocation5 + $0x6d8] sm:$0xff]
          %v1720 = vld [vmem:[#allocation5 + $0x6e0] sm:$0xff]
          %v1721 = vld [vmem:[#allocation5 + $0x6e8] sm:$0xff]
          %v1722 = vld [vmem:[#allocation5 + $0x6f0] sm:$0xff]
          %v1723 = vld [vmem:[#allocation5 + $0x6f8] sm:$0xff]
          %v1724 = vld [vmem:[#allocation5 + $0x700] sm:$0xff]
          %v1725 = vld [vmem:[#allocation5 + $0x708] sm:$0xff]
          %v1726 = vld [vmem:[#allocation5 + $0x710] sm:$0xff]
          %v1727 = vld [vmem:[#allocation5 + $0x718] sm:$0xff]
          %v1728 = vld [vmem:[#allocation5 + $0x720] sm:$0xff]
          %v1729 = vld [vmem:[#allocation5 + $0x728] sm:$0xff]
          %v1730 = vld [vmem:[#allocation5 + $0x730] sm:$0xff]
          %v1731 = vld [vmem:[#allocation5 + $0x738] sm:$0xff]
          %v1732 = vld [vmem:[#allocation5 + $0x740] sm:$0xff]
          %v1733 = vld [vmem:[#allocation5 + $0x748] sm:$0xff]
          %v1734 = vld [vmem:[#allocation5 + $0x750] sm:$0xff]
          %v1735 = vld [vmem:[#allocation5 + $0x758] sm:$0xff]
          %v1736 = vld [vmem:[#allocation5 + $0x760] sm:$0xff]
          %v1737 = vld [vmem:[#allocation5 + $0x768] sm:$0xff]
          %v1738 = vld [vmem:[#allocation5 + $0x770] sm:$0xff]
          %v1739 = vld [vmem:[#allocation5 + $0x778] sm:$0xff]
          %v1740 = vld [vmem:[#allocation5 + $0x780] sm:$0xff]
          %v1741 = vld [vmem:[#allocation5 + $0x788] sm:$0xff]
          %v1742 = vld [vmem:[#allocation5 + $0x790] sm:$0xff]
          %v1743 = vld [vmem:[#allocation5 + $0x798] sm:$0xff]
          %v1744 = vld [vmem:[#allocation5 + $0x7a0] sm:$0xff]
          %v1745 = vld [vmem:[#allocation5 + $0x7a8] sm:$0xff]
          %v1746 = vld [vmem:[#allocation5 + $0x7b0] sm:$0xff]
          %v1747 = vld [vmem:[#allocation5 + $0x7b8] sm:$0xff]
          %v1748 = vld [vmem:[#allocation5 + $0x7c0] sm:$0xff]
          %v1749 = vld [vmem:[#allocation5 + $0x7c8] sm:$0xff]
          %v1750 = vld [vmem:[#allocation5 + $0x7d0] sm:$0xff]
          %v1751 = vld [vmem:[#allocation5 + $0x7d8] sm:$0xff]
          %v1752 = vld [vmem:[#allocation5 + $0x7e0] sm:$0xff]
          %v1753 = vld [vmem:[#allocation5 + $0x7e8] sm:$0xff]
          %v1754 = vld [vmem:[#allocation5 + $0x7f0] sm:$0xff]
          %v1755 = vld [vmem:[#allocation5 + $0x7f8] sm:$0xff]
          %v1756 = vld [vmem:[%s8] sm:$0xf]
          %v2013 = vunpack.c.l.b16 %v1500
          %v2014 = vunpack.c.h.b16 %v1500
          %v2015 = vunpack.c.l.b16 %v1501
          %v2016 = vunpack.c.h.b16 %v1501
          %v2017 = vunpack.c.l.b16 %v1502
          %v2018 = vunpack.c.h.b16 %v1502
          %v2019 = vunpack.c.l.b16 %v1503
          %v2020 = vunpack.c.h.b16 %v1503
          %v2021 = vunpack.c.l.b16 %v1504
          %v2022 = vunpack.c.h.b16 %v1504
          %v2023 = vunpack.c.l.b16 %v1505
          %v2024 = vunpack.c.h.b16 %v1505
          %v2025 = vunpack.c.l.b16 %v1506
          %v2026 = vunpack.c.h.b16 %v1506
          %v2027 = vunpack.c.l.b16 %v1507
          %v2028 = vunpack.c.h.b16 %v1507
          %v2029 = vunpack.c.l.b16 %v1508
          %v2030 = vunpack.c.h.b16 %v1508
          %v2031 = vunpack.c.l.b16 %v1509
          %v2032 = vunpack.c.h.b16 %v1509
          %v2033 = vunpack.c.l.b16 %v1510
          %v2034 = vunpack.c.h.b16 %v1510
          %v2035 = vunpack.c.l.b16 %v1511
          %v2036 = vunpack.c.h.b16 %v1511
          %v2037 = vunpack.c.l.b16 %v1512
          %v2038 = vunpack.c.h.b16 %v1512
          %v2039 = vunpack.c.l.b16 %v1513
          %v2040 = vunpack.c.h.b16 %v1513
          %v2041 = vunpack.c.l.b16 %v1514
          %v2042 = vunpack.c.h.b16 %v1514
          %v2043 = vunpack.c.l.b16 %v1515
          %v2044 = vunpack.c.h.b16 %v1515
          %v2045 = vunpack.c.l.b16 %v1516
          %v2046 = vunpack.c.h.b16 %v1516
          %v2047 = vunpack.c.l.b16 %v1517
          %v2048 = vunpack.c.h.b16 %v1517
          %v2049 = vunpack.c.l.b16 %v1518
          %v2050 = vunpack.c.h.b16 %v1518
          %v2051 = vunpack.c.l.b16 %v1519
          %v2052 = vunpack.c.h.b16 %v1519
          %v2053 = vunpack.c.l.b16 %v1520
          %v2054 = vunpack.c.h.b16 %v1520
          %v2055 = vunpack.c.l.b16 %v1521
          %v2056 = vunpack.c.h.b16 %v1521
          %v2057 = vunpack.c.l.b16 %v1522
          %v2058 = vunpack.c.h.b16 %v1522
          %v2059 = vunpack.c.l.b16 %v1523
          %v2060 = vunpack.c.h.b16 %v1523
          %v2061 = vunpack.c.l.b16 %v1524
          %v2062 = vunpack.c.h.b16 %v1524
          %v2063 = vunpack.c.l.b16 %v1525
          %v2064 = vunpack.c.h.b16 %v1525
          %v2065 = vunpack.c.l.b16 %v1526
          %v2066 = vunpack.c.h.b16 %v1526
          %v2067 = vunpack.c.l.b16 %v1527
          %v2068 = vunpack.c.h.b16 %v1527
          %v2069 = vunpack.c.l.b16 %v1528
          %v2070 = vunpack.c.h.b16 %v1528
          %v2071 = vunpack.c.l.b16 %v1529
          %v2072 = vunpack.c.h.b16 %v1529
          %v2073 = vunpack.c.l.b16 %v1530
          %v2074 = vunpack.c.h.b16 %v1530
          %v2075 = vunpack.c.l.b16 %v1531
          %v2076 = vunpack.c.h.b16 %v1531
          %v2077 = vunpack.c.l.b16 %v1532
          %v2078 = vunpack.c.h.b16 %v1532
          %v2079 = vunpack.c.l.b16 %v1533
          %v2080 = vunpack.c.h.b16 %v1533
          %v2081 = vunpack.c.l.b16 %v1534
          %v2082 = vunpack.c.h.b16 %v1534
          %v2083 = vunpack.c.l.b16 %v1535
          %v2084 = vunpack.c.h.b16 %v1535
          %v2085 = vunpack.c.l.b16 %v1536
          %v2086 = vunpack.c.h.b16 %v1536
          %v2087 = vunpack.c.l.b16 %v1537
          %v2088 = vunpack.c.h.b16 %v1537
          %v2089 = vunpack.c.l.b16 %v1538
          %v2090 = vunpack.c.h.b16 %v1538
          %v2091 = vunpack.c.l.b16 %v1539
          %v2092 = vunpack.c.h.b16 %v1539
          %v2093 = vunpack.c.l.b16 %v1540
          %v2094 = vunpack.c.h.b16 %v1540
          %v2095 = vunpack.c.l.b16 %v1541
          %v2096 = vunpack.c.h.b16 %v1541
          %v2097 = vunpack.c.l.b16 %v1542
          %v2098 = vunpack.c.h.b16 %v1542
          %v2099 = vunpack.c.l.b16 %v1543
          %v2100 = vunpack.c.h.b16 %v1543
          %v2101 = vunpack.c.l.b16 %v1544
          %v2102 = vunpack.c.h.b16 %v1544
          %v2103 = vunpack.c.l.b16 %v1545
          %v2104 = vunpack.c.h.b16 %v1545
          %v2105 = vunpack.c.l.b16 %v1546
          %v2106 = vunpack.c.h.b16 %v1546
          %v2107 = vunpack.c.l.b16 %v1547
          %v2108 = vunpack.c.h.b16 %v1547
          %v2109 = vunpack.c.l.b16 %v1548
          %v2110 = vunpack.c.h.b16 %v1548
          %v2111 = vunpack.c.l.b16 %v1549
          %v2112 = vunpack.c.h.b16 %v1549
          %v2113 = vunpack.c.l.b16 %v1550
          %v2114 = vunpack.c.h.b16 %v1550
          %v2115 = vunpack.c.l.b16 %v1551
          %v2116 = vunpack.c.h.b16 %v1551
          %v2117 = vunpack.c.l.b16 %v1552
          %v2118 = vunpack.c.h.b16 %v1552
          %v2119 = vunpack.c.l.b16 %v1553
          %v2120 = vunpack.c.h.b16 %v1553
          %v2121 = vunpack.c.l.b16 %v1554
          %v2122 = vunpack.c.h.b16 %v1554
          %v2123 = vunpack.c.l.b16 %v1555
          %v2124 = vunpack.c.h.b16 %v1555
          %v2125 = vunpack.c.l.b16 %v1556
          %v2126 = vunpack.c.h.b16 %v1556
          %v2127 = vunpack.c.l.b16 %v1557
          %v2128 = vunpack.c.h.b16 %v1557
          %v2129 = vunpack.c.l.b16 %v1558
          %v2130 = vunpack.c.h.b16 %v1558
          %v2131 = vunpack.c.l.b16 %v1559
          %v2132 = vunpack.c.h.b16 %v1559
          %v2133 = vunpack.c.l.b16 %v1560
          %v2134 = vunpack.c.h.b16 %v1560
          %v2135 = vunpack.c.l.b16 %v1561
          %v2136 = vunpack.c.h.b16 %v1561
          %v2137 = vunpack.c.l.b16 %v1562
          %v2138 = vunpack.c.h.b16 %v1562
          %v2139 = vunpack.c.l.b16 %v1563
          %v2140 = vunpack.c.h.b16 %v1563
          %v2141 = vunpack.c.l.b16 %v1564
          %v2142 = vunpack.c.h.b16 %v1564
          %v2143 = vunpack.c.l.b16 %v1565
          %v2144 = vunpack.c.h.b16 %v1565
          %v2145 = vunpack.c.l.b16 %v1566
          %v2146 = vunpack.c.h.b16 %v1566
          %v2147 = vunpack.c.l.b16 %v1567
          %v2148 = vunpack.c.h.b16 %v1567
          %v2149 = vunpack.c.l.b16 %v1568
          %v2150 = vunpack.c.h.b16 %v1568
          %v2151 = vunpack.c.l.b16 %v1569
          %v2152 = vunpack.c.h.b16 %v1569
          %v2153 = vunpack.c.l.b16 %v1570
          %v2154 = vunpack.c.h.b16 %v1570
          %v2155 = vunpack.c.l.b16 %v1571
          %v2156 = vunpack.c.h.b16 %v1571
          %v2157 = vunpack.c.l.b16 %v1572
          %v2158 = vunpack.c.h.b16 %v1572
          %v2159 = vunpack.c.l.b16 %v1573
          %v2160 = vunpack.c.h.b16 %v1573
          %v2161 = vunpack.c.l.b16 %v1574
          %v2162 = vunpack.c.h.b16 %v1574
          %v2163 = vunpack.c.l.b16 %v1575
          %v2164 = vunpack.c.h.b16 %v1575
          %v2165 = vunpack.c.l.b16 %v1576
          %v2166 = vunpack.c.h.b16 %v1576
          %v2167 = vunpack.c.l.b16 %v1577
          %v2168 = vunpack.c.h.b16 %v1577
          %v2169 = vunpack.c.l.b16 %v1578
          %v2170 = vunpack.c.h.b16 %v1578
          %v2171 = vunpack.c.l.b16 %v1579
          %v2172 = vunpack.c.h.b16 %v1579
          %v2173 = vunpack.c.l.b16 %v1580
          %v2174 = vunpack.c.h.b16 %v1580
          %v2175 = vunpack.c.l.b16 %v1581
          %v2176 = vunpack.c.h.b16 %v1581
          %v2177 = vunpack.c.l.b16 %v1582
          %v2178 = vunpack.c.h.b16 %v1582
          %v2179 = vunpack.c.l.b16 %v1583
          %v2180 = vunpack.c.h.b16 %v1583
          %v2181 = vunpack.c.l.b16 %v1584
          %v2182 = vunpack.c.h.b16 %v1584
          %v2183 = vunpack.c.l.b16 %v1585
          %v2184 = vunpack.c.h.b16 %v1585
          %v2185 = vunpack.c.l.b16 %v1586
          %v2186 = vunpack.c.h.b16 %v1586
          %v2187 = vunpack.c.l.b16 %v1587
          %v2188 = vunpack.c.h.b16 %v1587
          %v2189 = vunpack.c.l.b16 %v1588
          %v2190 = vunpack.c.h.b16 %v1588
          %v2191 = vunpack.c.l.b16 %v1589
          %v2192 = vunpack.c.h.b16 %v1589
          %v2193 = vunpack.c.l.b16 %v1590
          %v2194 = vunpack.c.h.b16 %v1590
          %v2195 = vunpack.c.l.b16 %v1591
          %v2196 = vunpack.c.h.b16 %v1591
          %v2197 = vunpack.c.l.b16 %v1592
          %v2198 = vunpack.c.h.b16 %v1592
          %v2199 = vunpack.c.l.b16 %v1593
          %v2200 = vunpack.c.h.b16 %v1593
          %v2201 = vunpack.c.l.b16 %v1594
          %v2202 = vunpack.c.h.b16 %v1594
          %v2203 = vunpack.c.l.b16 %v1595
          %v2204 = vunpack.c.h.b16 %v1595
          %v2205 = vunpack.c.l.b16 %v1596
          %v2206 = vunpack.c.h.b16 %v1596
          %v2207 = vunpack.c.l.b16 %v1597
          %v2208 = vunpack.c.h.b16 %v1597
          %v2209 = vunpack.c.l.b16 %v1598
          %v2210 = vunpack.c.h.b16 %v1598
          %v2211 = vunpack.c.l.b16 %v1599
          %v2212 = vunpack.c.h.b16 %v1599
          %v2213 = vunpack.c.l.b16 %v1600
          %v2214 = vunpack.c.h.b16 %v1600
          %v2215 = vunpack.c.l.b16 %v1601
          %v2216 = vunpack.c.h.b16 %v1601
          %v2217 = vunpack.c.l.b16 %v1602
          %v2218 = vunpack.c.h.b16 %v1602
          %v2219 = vunpack.c.l.b16 %v1603
          %v2220 = vunpack.c.h.b16 %v1603
          %v2221 = vunpack.c.l.b16 %v1604
          %v2222 = vunpack.c.h.b16 %v1604
          %v2223 = vunpack.c.l.b16 %v1605
          %v2224 = vunpack.c.h.b16 %v1605
          %v2225 = vunpack.c.l.b16 %v1606
          %v2226 = vunpack.c.h.b16 %v1606
          %v2227 = vunpack.c.l.b16 %v1607
          %v2228 = vunpack.c.h.b16 %v1607
          %v2229 = vunpack.c.l.b16 %v1608
          %v2230 = vunpack.c.h.b16 %v1608
          %v2231 = vunpack.c.l.b16 %v1609
          %v2232 = vunpack.c.h.b16 %v1609
          %v2233 = vunpack.c.l.b16 %v1610
          %v2234 = vunpack.c.h.b16 %v1610
          %v2235 = vunpack.c.l.b16 %v1611
          %v2236 = vunpack.c.h.b16 %v1611
          %v2237 = vunpack.c.l.b16 %v1612
          %v2238 = vunpack.c.h.b16 %v1612
          %v2239 = vunpack.c.l.b16 %v1613
          %v2240 = vunpack.c.h.b16 %v1613
          %v2241 = vunpack.c.l.b16 %v1614
          %v2242 = vunpack.c.h.b16 %v1614
          %v2243 = vunpack.c.l.b16 %v1615
          %v2244 = vunpack.c.h.b16 %v1615
          %v2245 = vunpack.c.l.b16 %v1616
          %v2246 = vunpack.c.h.b16 %v1616
          %v2247 = vunpack.c.l.b16 %v1617
          %v2248 = vunpack.c.h.b16 %v1617
          %v2249 = vunpack.c.l.b16 %v1618
          %v2250 = vunpack.c.h.b16 %v1618
          %v2251 = vunpack.c.l.b16 %v1619
          %v2252 = vunpack.c.h.b16 %v1619
          %v2253 = vunpack.c.l.b16 %v1620
          %v2254 = vunpack.c.h.b16 %v1620
          %v2255 = vunpack.c.l.b16 %v1621
          %v2256 = vunpack.c.h.b16 %v1621
          %v2257 = vunpack.c.l.b16 %v1622
          %v2258 = vunpack.c.h.b16 %v1622
          %v2259 = vunpack.c.l.b16 %v1623
          %v2260 = vunpack.c.h.b16 %v1623
          %v2261 = vunpack.c.l.b16 %v1624
          %v2262 = vunpack.c.h.b16 %v1624
          %v2263 = vunpack.c.l.b16 %v1625
          %v2264 = vunpack.c.h.b16 %v1625
          %v2265 = vunpack.c.l.b16 %v1626
          %v2266 = vunpack.c.h.b16 %v1626
          %v2267 = vunpack.c.l.b16 %v1627
          %v2268 = vunpack.c.h.b16 %v1627
          %v2269 = vunpack.c.l.b16 %v1628
          %v2270 = vunpack.c.h.b16 %v1628
          %v2271 = vunpack.c.l.b16 %v1629
          %v2272 = vunpack.c.h.b16 %v1629
          %v2273 = vunpack.c.l.b16 %v1630
          %v2274 = vunpack.c.h.b16 %v1630
          %v2275 = vunpack.c.l.b16 %v1631
          %v2276 = vunpack.c.h.b16 %v1631
          %v2277 = vunpack.c.l.b16 %v1632
          %v2278 = vunpack.c.h.b16 %v1632
          %v2279 = vunpack.c.l.b16 %v1633
          %v2280 = vunpack.c.h.b16 %v1633
          %v2281 = vunpack.c.l.b16 %v1634
          %v2282 = vunpack.c.h.b16 %v1634
          %v2283 = vunpack.c.l.b16 %v1635
          %v2284 = vunpack.c.h.b16 %v1635
          %v2285 = vunpack.c.l.b16 %v1636
          %v2286 = vunpack.c.h.b16 %v1636
          %v2287 = vunpack.c.l.b16 %v1637
          %v2288 = vunpack.c.h.b16 %v1637
          %v2289 = vunpack.c.l.b16 %v1638
          %v2290 = vunpack.c.h.b16 %v1638
          %v2291 = vunpack.c.l.b16 %v1639
          %v2292 = vunpack.c.h.b16 %v1639
          %v2293 = vunpack.c.l.b16 %v1640
          %v2294 = vunpack.c.h.b16 %v1640
          %v2295 = vunpack.c.l.b16 %v1641
          %v2296 = vunpack.c.h.b16 %v1641
          %v2297 = vunpack.c.l.b16 %v1642
          %v2298 = vunpack.c.h.b16 %v1642
          %v2299 = vunpack.c.l.b16 %v1643
          %v2300 = vunpack.c.h.b16 %v1643
          %v2301 = vunpack.c.l.b16 %v1644
          %v2302 = vunpack.c.h.b16 %v1644
          %v2303 = vunpack.c.l.b16 %v1645
          %v2304 = vunpack.c.h.b16 %v1645
          %v2305 = vunpack.c.l.b16 %v1646
          %v2306 = vunpack.c.h.b16 %v1646
          %v2307 = vunpack.c.l.b16 %v1647
          %v2308 = vunpack.c.h.b16 %v1647
          %v2309 = vunpack.c.l.b16 %v1648
          %v2310 = vunpack.c.h.b16 %v1648
          %v2311 = vunpack.c.l.b16 %v1649
          %v2312 = vunpack.c.h.b16 %v1649
          %v2313 = vunpack.c.l.b16 %v1650
          %v2314 = vunpack.c.h.b16 %v1650
          %v2315 = vunpack.c.l.b16 %v1651
          %v2316 = vunpack.c.h.b16 %v1651
          %v2317 = vunpack.c.l.b16 %v1652
          %v2318 = vunpack.c.h.b16 %v1652
          %v2319 = vunpack.c.l.b16 %v1653
          %v2320 = vunpack.c.h.b16 %v1653
          %v2321 = vunpack.c.l.b16 %v1654
          %v2322 = vunpack.c.h.b16 %v1654
          %v2323 = vunpack.c.l.b16 %v1655
          %v2324 = vunpack.c.h.b16 %v1655
          %v2325 = vunpack.c.l.b16 %v1656
          %v2326 = vunpack.c.h.b16 %v1656
          %v2327 = vunpack.c.l.b16 %v1657
          %v2328 = vunpack.c.h.b16 %v1657
          %v2329 = vunpack.c.l.b16 %v1658
          %v2330 = vunpack.c.h.b16 %v1658
          %v2331 = vunpack.c.l.b16 %v1659
          %v2332 = vunpack.c.h.b16 %v1659
          %v2333 = vunpack.c.l.b16 %v1660
          %v2334 = vunpack.c.h.b16 %v1660
          %v2335 = vunpack.c.l.b16 %v1661
          %v2336 = vunpack.c.h.b16 %v1661
          %v2337 = vunpack.c.l.b16 %v1662
          %v2338 = vunpack.c.h.b16 %v1662
          %v2339 = vunpack.c.l.b16 %v1663
          %v2340 = vunpack.c.h.b16 %v1663
          %v2341 = vunpack.c.l.b16 %v1664
          %v2342 = vunpack.c.h.b16 %v1664
          %v2343 = vunpack.c.l.b16 %v1665
          %v2344 = vunpack.c.h.b16 %v1665
          %v2345 = vunpack.c.l.b16 %v1666
          %v2346 = vunpack.c.h.b16 %v1666
          %v2347 = vunpack.c.l.b16 %v1667
          %v2348 = vunpack.c.h.b16 %v1667
          %v2349 = vunpack.c.l.b16 %v1668
          %v2350 = vunpack.c.h.b16 %v1668
          %v2351 = vunpack.c.l.b16 %v1669
          %v2352 = vunpack.c.h.b16 %v1669
          %v2353 = vunpack.c.l.b16 %v1670
          %v2354 = vunpack.c.h.b16 %v1670
          %v2355 = vunpack.c.l.b16 %v1671
          %v2356 = vunpack.c.h.b16 %v1671
          %v2357 = vunpack.c.l.b16 %v1672
          %v2358 = vunpack.c.h.b16 %v1672
          %v2359 = vunpack.c.l.b16 %v1673
          %v2360 = vunpack.c.h.b16 %v1673
          %v2361 = vunpack.c.l.b16 %v1674
          %v2362 = vunpack.c.h.b16 %v1674
          %v2363 = vunpack.c.l.b16 %v1675
          %v2364 = vunpack.c.h.b16 %v1675
          %v2365 = vunpack.c.l.b16 %v1676
          %v2366 = vunpack.c.h.b16 %v1676
          %v2367 = vunpack.c.l.b16 %v1677
          %v2368 = vunpack.c.h.b16 %v1677
          %v2369 = vunpack.c.l.b16 %v1678
          %v2370 = vunpack.c.h.b16 %v1678
          %v2371 = vunpack.c.l.b16 %v1679
          %v2372 = vunpack.c.h.b16 %v1679
          %v2373 = vunpack.c.l.b16 %v1680
          %v2374 = vunpack.c.h.b16 %v1680
          %v2375 = vunpack.c.l.b16 %v1681
          %v2376 = vunpack.c.h.b16 %v1681
          %v2377 = vunpack.c.l.b16 %v1682
          %v2378 = vunpack.c.h.b16 %v1682
          %v2379 = vunpack.c.l.b16 %v1683
          %v2380 = vunpack.c.h.b16 %v1683
          %v2381 = vunpack.c.l.b16 %v1684
          %v2382 = vunpack.c.h.b16 %v1684
          %v2383 = vunpack.c.l.b16 %v1685
          %v2384 = vunpack.c.h.b16 %v1685
          %v2385 = vunpack.c.l.b16 %v1686
          %v2386 = vunpack.c.h.b16 %v1686
          %v2387 = vunpack.c.l.b16 %v1687
          %v2388 = vunpack.c.h.b16 %v1687
          %v2389 = vunpack.c.l.b16 %v1688
          %v2390 = vunpack.c.h.b16 %v1688
          %v2391 = vunpack.c.l.b16 %v1689
          %v2392 = vunpack.c.h.b16 %v1689
          %v2393 = vunpack.c.l.b16 %v1690
          %v2394 = vunpack.c.h.b16 %v1690
          %v2395 = vunpack.c.l.b16 %v1691
          %v2396 = vunpack.c.h.b16 %v1691
          %v2397 = vunpack.c.l.b16 %v1692
          %v2398 = vunpack.c.h.b16 %v1692
          %v2399 = vunpack.c.l.b16 %v1693
          %v2400 = vunpack.c.h.b16 %v1693
          %v2401 = vunpack.c.l.b16 %v1694
          %v2402 = vunpack.c.h.b16 %v1694
          %v2403 = vunpack.c.l.b16 %v1695
          %v2404 = vunpack.c.h.b16 %v1695
          %v2405 = vunpack.c.l.b16 %v1696
          %v2406 = vunpack.c.h.b16 %v1696
          %v2407 = vunpack.c.l.b16 %v1697
          %v2408 = vunpack.c.h.b16 %v1697
          %v2409 = vunpack.c.l.b16 %v1698
          %v2410 = vunpack.c.h.b16 %v1698
          %v2411 = vunpack.c.l.b16 %v1699
          %v2412 = vunpack.c.h.b16 %v1699
          %v2413 = vunpack.c.l.b16 %v1700
          %v2414 = vunpack.c.h.b16 %v1700
          %v2415 = vunpack.c.l.b16 %v1701
          %v2416 = vunpack.c.h.b16 %v1701
          %v2417 = vunpack.c.l.b16 %v1702
          %v2418 = vunpack.c.h.b16 %v1702
          %v2419 = vunpack.c.l.b16 %v1703
          %v2420 = vunpack.c.h.b16 %v1703
          %v2421 = vunpack.c.l.b16 %v1704
          %v2422 = vunpack.c.h.b16 %v1704
          %v2423 = vunpack.c.l.b16 %v1705
          %v2424 = vunpack.c.h.b16 %v1705
          %v2425 = vunpack.c.l.b16 %v1706
          %v2426 = vunpack.c.h.b16 %v1706
          %v2427 = vunpack.c.l.b16 %v1707
          %v2428 = vunpack.c.h.b16 %v1707
          %v2429 = vunpack.c.l.b16 %v1708
          %v2430 = vunpack.c.h.b16 %v1708
          %v2431 = vunpack.c.l.b16 %v1709
          %v2432 = vunpack.c.h.b16 %v1709
          %v2433 = vunpack.c.l.b16 %v1710
          %v2434 = vunpack.c.h.b16 %v1710
          %v2435 = vunpack.c.l.b16 %v1711
          %v2436 = vunpack.c.h.b16 %v1711
          %v2437 = vunpack.c.l.b16 %v1712
          %v2438 = vunpack.c.h.b16 %v1712
          %v2439 = vunpack.c.l.b16 %v1713
          %v2440 = vunpack.c.h.b16 %v1713
          %v2441 = vunpack.c.l.b16 %v1714
          %v2442 = vunpack.c.h.b16 %v1714
          %v2443 = vunpack.c.l.b16 %v1715
          %v2444 = vunpack.c.h.b16 %v1715
          %v2445 = vunpack.c.l.b16 %v1716
          %v2446 = vunpack.c.h.b16 %v1716
          %v2447 = vunpack.c.l.b16 %v1717
          %v2448 = vunpack.c.h.b16 %v1717
          %v2449 = vunpack.c.l.b16 %v1718
          %v2450 = vunpack.c.h.b16 %v1718
          %v2451 = vunpack.c.l.b16 %v1719
          %v2452 = vunpack.c.h.b16 %v1719
          %v2453 = vunpack.c.l.b16 %v1720
          %v2454 = vunpack.c.h.b16 %v1720
          %v2455 = vunpack.c.l.b16 %v1721
          %v2456 = vunpack.c.h.b16 %v1721
          %v2457 = vunpack.c.l.b16 %v1722
          %v2458 = vunpack.c.h.b16 %v1722
          %v2459 = vunpack.c.l.b16 %v1723
          %v2460 = vunpack.c.h.b16 %v1723
          %v2461 = vunpack.c.l.b16 %v1724
          %v2462 = vunpack.c.h.b16 %v1724
          %v2463 = vunpack.c.l.b16 %v1725
          %v2464 = vunpack.c.h.b16 %v1725
          %v2465 = vunpack.c.l.b16 %v1726
          %v2466 = vunpack.c.h.b16 %v1726
          %v2467 = vunpack.c.l.b16 %v1727
          %v2468 = vunpack.c.h.b16 %v1727
          %v2469 = vunpack.c.l.b16 %v1728
          %v2470 = vunpack.c.h.b16 %v1728
          %v2471 = vunpack.c.l.b16 %v1729
          %v2472 = vunpack.c.h.b16 %v1729
          %v2473 = vunpack.c.l.b16 %v1730
          %v2474 = vunpack.c.h.b16 %v1730
          %v2475 = vunpack.c.l.b16 %v1731
          %v2476 = vunpack.c.h.b16 %v1731
          %v2477 = vunpack.c.l.b16 %v1732
          %v2478 = vunpack.c.h.b16 %v1732
          %v2479 = vunpack.c.l.b16 %v1733
          %v2480 = vunpack.c.h.b16 %v1733
          %v2481 = vunpack.c.l.b16 %v1734
          %v2482 = vunpack.c.h.b16 %v1734
          %v2483 = vunpack.c.l.b16 %v1735
          %v2484 = vunpack.c.h.b16 %v1735
          %v2485 = vunpack.c.l.b16 %v1736
          %v2486 = vunpack.c.h.b16 %v1736
          %v2487 = vunpack.c.l.b16 %v1737
          %v2488 = vunpack.c.h.b16 %v1737
          %v2489 = vunpack.c.l.b16 %v1738
          %v2490 = vunpack.c.h.b16 %v1738
          %v2491 = vunpack.c.l.b16 %v1739
          %v2492 = vunpack.c.h.b16 %v1739
          %v2493 = vunpack.c.l.b16 %v1740
          %v2494 = vunpack.c.h.b16 %v1740
          %v2495 = vunpack.c.l.b16 %v1741
          %v2496 = vunpack.c.h.b16 %v1741
          %v2497 = vunpack.c.l.b16 %v1742
          %v2498 = vunpack.c.h.b16 %v1742
          %v2499 = vunpack.c.l.b16 %v1743
          %v2500 = vunpack.c.h.b16 %v1743
          %v2501 = vunpack.c.l.b16 %v1744
          %v2502 = vunpack.c.h.b16 %v1744
          %v2503 = vunpack.c.l.b16 %v1745
          %v2504 = vunpack.c.h.b16 %v1745
          %v2505 = vunpack.c.l.b16 %v1746
          %v2506 = vunpack.c.h.b16 %v1746
          %v2507 = vunpack.c.l.b16 %v1747
          %v2508 = vunpack.c.h.b16 %v1747
          %v2509 = vunpack.c.l.b16 %v1748
          %v2510 = vunpack.c.h.b16 %v1748
          %v2511 = vunpack.c.l.b16 %v1749
          %v2512 = vunpack.c.h.b16 %v1749
          %v2513 = vunpack.c.l.b16 %v1750
          %v2514 = vunpack.c.h.b16 %v1750
          %v2515 = vunpack.c.l.b16 %v1751
          %v2516 = vunpack.c.h.b16 %v1751
          %v2517 = vunpack.c.l.b16 %v1752
          %v2518 = vunpack.c.h.b16 %v1752
          %v2519 = vunpack.c.l.b16 %v1753
          %v2520 = vunpack.c.h.b16 %v1753
          %v2521 = vunpack.c.l.b16 %v1754
          %v2522 = vunpack.c.h.b16 %v1754
          %v2523 = vunpack.c.l.b16 %v1755
          %v2524 = vunpack.c.h.b16 %v1755
          %v2525 = vpack.c.b16 %v2017, %v2013
          %v2526 = vpack.c.b16 %v2018, %v2014
          %v2527 = vpack.c.b16 %v2019, %v2015
          %v2528 = vpack.c.b16 %v2020, %v2016
          %v2529 = vpack.c.b16 %v2025, %v2021
          %v2530 = vpack.c.b16 %v2026, %v2022
          %v2531 = vpack.c.b16 %v2027, %v2023
          %v2532 = vpack.c.b16 %v2028, %v2024
          %v2533 = vpack.c.b16 %v2033, %v2029
          %v2534 = vpack.c.b16 %v2034, %v2030
          %v2535 = vpack.c.b16 %v2035, %v2031
          %v2536 = vpack.c.b16 %v2036, %v2032
          %v2537 = vpack.c.b16 %v2041, %v2037
          %v2538 = vpack.c.b16 %v2042, %v2038
          %v2539 = vpack.c.b16 %v2043, %v2039
          %v2540 = vpack.c.b16 %v2044, %v2040
          %v2541 = vpack.c.b16 %v2049, %v2045
          %v2542 = vpack.c.b16 %v2050, %v2046
          %v2543 = vpack.c.b16 %v2051, %v2047
          %v2544 = vpack.c.b16 %v2052, %v2048
          %v2545 = vpack.c.b16 %v2057, %v2053
          %v2546 = vpack.c.b16 %v2058, %v2054
          %v2547 = vpack.c.b16 %v2059, %v2055
          %v2548 = vpack.c.b16 %v2060, %v2056
          %v2549 = vpack.c.b16 %v2065, %v2061
          %v2550 = vpack.c.b16 %v2066, %v2062
          %v2551 = vpack.c.b16 %v2067, %v2063
          %v2552 = vpack.c.b16 %v2068, %v2064
          %v2553 = vpack.c.b16 %v2073, %v2069
          %v2554 = vpack.c.b16 %v2074, %v2070
          %v2555 = vpack.c.b16 %v2075, %v2071
          %v2556 = vpack.c.b16 %v2076, %v2072
          %v2557 = vpack.c.b16 %v2081, %v2077
          %v2558 = vpack.c.b16 %v2082, %v2078
          %v2559 = vpack.c.b16 %v2083, %v2079
          %v2560 = vpack.c.b16 %v2084, %v2080
          %v2561 = vpack.c.b16 %v2089, %v2085
          %v2562 = vpack.c.b16 %v2090, %v2086
          %v2563 = vpack.c.b16 %v2091, %v2087
          %v2564 = vpack.c.b16 %v2092, %v2088
          %v2565 = vpack.c.b16 %v2097, %v2093
          %v2566 = vpack.c.b16 %v2098, %v2094
          %v2567 = vpack.c.b16 %v2099, %v2095
          %v2568 = vpack.c.b16 %v2100, %v2096
          %v2569 = vpack.c.b16 %v2105, %v2101
          %v2570 = vpack.c.b16 %v2106, %v2102
          %v2571 = vpack.c.b16 %v2107, %v2103
          %v2572 = vpack.c.b16 %v2108, %v2104
          %v2573 = vpack.c.b16 %v2113, %v2109
          %v2574 = vpack.c.b16 %v2114, %v2110
          %v2575 = vpack.c.b16 %v2115, %v2111
          %v2576 = vpack.c.b16 %v2116, %v2112
          %v2577 = vpack.c.b16 %v2121, %v2117
          %v2578 = vpack.c.b16 %v2122, %v2118
          %v2579 = vpack.c.b16 %v2123, %v2119
          %v2580 = vpack.c.b16 %v2124, %v2120
          %v2581 = vpack.c.b16 %v2129, %v2125
          %v2582 = vpack.c.b16 %v2130, %v2126
          %v2583 = vpack.c.b16 %v2131, %v2127
          %v2584 = vpack.c.b16 %v2132, %v2128
          %v2585 = vpack.c.b16 %v2137, %v2133
          %v2586 = vpack.c.b16 %v2138, %v2134
          %v2587 = vpack.c.b16 %v2139, %v2135
          %v2588 = vpack.c.b16 %v2140, %v2136
          %v2589 = vpack.c.b16 %v2145, %v2141
          %v2590 = vpack.c.b16 %v2146, %v2142
          %v2591 = vpack.c.b16 %v2147, %v2143
          %v2592 = vpack.c.b16 %v2148, %v2144
          %v2593 = vpack.c.b16 %v2153, %v2149
          %v2594 = vpack.c.b16 %v2154, %v2150
          %v2595 = vpack.c.b16 %v2155, %v2151
          %v2596 = vpack.c.b16 %v2156, %v2152
          %v2597 = vpack.c.b16 %v2161, %v2157
          %v2598 = vpack.c.b16 %v2162, %v2158
          %v2599 = vpack.c.b16 %v2163, %v2159
          %v2600 = vpack.c.b16 %v2164, %v2160
          %v2601 = vpack.c.b16 %v2169, %v2165
          %v2602 = vpack.c.b16 %v2170, %v2166
          %v2603 = vpack.c.b16 %v2171, %v2167
          %v2604 = vpack.c.b16 %v2172, %v2168
          %v2605 = vpack.c.b16 %v2177, %v2173
          %v2606 = vpack.c.b16 %v2178, %v2174
          %v2607 = vpack.c.b16 %v2179, %v2175
          %v2608 = vpack.c.b16 %v2180, %v2176
          %v2609 = vpack.c.b16 %v2185, %v2181
          %v2610 = vpack.c.b16 %v2186, %v2182
          %v2611 = vpack.c.b16 %v2187, %v2183
          %v2612 = vpack.c.b16 %v2188, %v2184
          %v2613 = vpack.c.b16 %v2193, %v2189
          %v2614 = vpack.c.b16 %v2194, %v2190
          %v2615 = vpack.c.b16 %v2195, %v2191
          %v2616 = vpack.c.b16 %v2196, %v2192
          %v2617 = vpack.c.b16 %v2201, %v2197
          %v2618 = vpack.c.b16 %v2202, %v2198
          %v2619 = vpack.c.b16 %v2203, %v2199
          %v2620 = vpack.c.b16 %v2204, %v2200
          %v2621 = vpack.c.b16 %v2209, %v2205
          %v2622 = vpack.c.b16 %v2210, %v2206
          %v2623 = vpack.c.b16 %v2211, %v2207
          %v2624 = vpack.c.b16 %v2212, %v2208
          %v2625 = vpack.c.b16 %v2217, %v2213
          %v2626 = vpack.c.b16 %v2218, %v2214
          %v2627 = vpack.c.b16 %v2219, %v2215
          %v2628 = vpack.c.b16 %v2220, %v2216
          %v2629 = vpack.c.b16 %v2225, %v2221
          %v2630 = vpack.c.b16 %v2226, %v2222
          %v2631 = vpack.c.b16 %v2227, %v2223
          %v2632 = vpack.c.b16 %v2228, %v2224
          %v2633 = vpack.c.b16 %v2233, %v2229
          %v2634 = vpack.c.b16 %v2234, %v2230
          %v2635 = vpack.c.b16 %v2235, %v2231
          %v2636 = vpack.c.b16 %v2236, %v2232
          %v2637 = vpack.c.b16 %v2241, %v2237
          %v2638 = vpack.c.b16 %v2242, %v2238
          %v2639 = vpack.c.b16 %v2243, %v2239
          %v2640 = vpack.c.b16 %v2244, %v2240
          %v2641 = vpack.c.b16 %v2249, %v2245
          %v2642 = vpack.c.b16 %v2250, %v2246
          %v2643 = vpack.c.b16 %v2251, %v2247
          %v2644 = vpack.c.b16 %v2252, %v2248
          %v2645 = vpack.c.b16 %v2257, %v2253
          %v2646 = vpack.c.b16 %v2258, %v2254
          %v2647 = vpack.c.b16 %v2259, %v2255
          %v2648 = vpack.c.b16 %v2260, %v2256
          %v2649 = vpack.c.b16 %v2265, %v2261
          %v2650 = vpack.c.b16 %v2266, %v2262
          %v2651 = vpack.c.b16 %v2267, %v2263
          %v2652 = vpack.c.b16 %v2268, %v2264
          %v2653 = vpack.c.b16 %v2273, %v2269
          %v2654 = vpack.c.b16 %v2274, %v2270
          %v2655 = vpack.c.b16 %v2275, %v2271
          %v2656 = vpack.c.b16 %v2276, %v2272
          %v2657 = vpack.c.b16 %v2281, %v2277
          %v2658 = vpack.c.b16 %v2282, %v2278
          %v2659 = vpack.c.b16 %v2283, %v2279
          %v2660 = vpack.c.b16 %v2284, %v2280
          %v2661 = vpack.c.b16 %v2289, %v2285
          %v2662 = vpack.c.b16 %v2290, %v2286
          %v2663 = vpack.c.b16 %v2291, %v2287
          %v2664 = vpack.c.b16 %v2292, %v2288
          %v2665 = vpack.c.b16 %v2297, %v2293
          %v2666 = vpack.c.b16 %v2298, %v2294
          %v2667 = vpack.c.b16 %v2299, %v2295
          %v2668 = vpack.c.b16 %v2300, %v2296
          %v2669 = vpack.c.b16 %v2305, %v2301
          %v2670 = vpack.c.b16 %v2306, %v2302
          %v2671 = vpack.c.b16 %v2307, %v2303
          %v2672 = vpack.c.b16 %v2308, %v2304
          %v2673 = vpack.c.b16 %v2313, %v2309
          %v2674 = vpack.c.b16 %v2314, %v2310
          %v2675 = vpack.c.b16 %v2315, %v2311
          %v2676 = vpack.c.b16 %v2316, %v2312
          %v2677 = vpack.c.b16 %v2321, %v2317
          %v2678 = vpack.c.b16 %v2322, %v2318
          %v2679 = vpack.c.b16 %v2323, %v2319
          %v2680 = vpack.c.b16 %v2324, %v2320
          %v2681 = vpack.c.b16 %v2329, %v2325
          %v2682 = vpack.c.b16 %v2330, %v2326
          %v2683 = vpack.c.b16 %v2331, %v2327
          %v2684 = vpack.c.b16 %v2332, %v2328
          %v2685 = vpack.c.b16 %v2337, %v2333
          %v2686 = vpack.c.b16 %v2338, %v2334
          %v2687 = vpack.c.b16 %v2339, %v2335
          %v2688 = vpack.c.b16 %v2340, %v2336
          %v2689 = vpack.c.b16 %v2345, %v2341
          %v2690 = vpack.c.b16 %v2346, %v2342
          %v2691 = vpack.c.b16 %v2347, %v2343
          %v2692 = vpack.c.b16 %v2348, %v2344
          %v2693 = vpack.c.b16 %v2353, %v2349
          %v2694 = vpack.c.b16 %v2354, %v2350
          %v2695 = vpack.c.b16 %v2355, %v2351
          %v2696 = vpack.c.b16 %v2356, %v2352
          %v2697 = vpack.c.b16 %v2361, %v2357
          %v2698 = vpack.c.b16 %v2362, %v2358
          %v2699 = vpack.c.b16 %v2363, %v2359
          %v2700 = vpack.c.b16 %v2364, %v2360
          %v2701 = vpack.c.b16 %v2369, %v2365
          %v2702 = vpack.c.b16 %v2370, %v2366
          %v2703 = vpack.c.b16 %v2371, %v2367
          %v2704 = vpack.c.b16 %v2372, %v2368
          %v2705 = vpack.c.b16 %v2377, %v2373
          %v2706 = vpack.c.b16 %v2378, %v2374
          %v2707 = vpack.c.b16 %v2379, %v2375
          %v2708 = vpack.c.b16 %v2380, %v2376
          %v2709 = vpack.c.b16 %v2385, %v2381
          %v2710 = vpack.c.b16 %v2386, %v2382
          %v2711 = vpack.c.b16 %v2387, %v2383
          %v2712 = vpack.c.b16 %v2388, %v2384
          %v2713 = vpack.c.b16 %v2393, %v2389
          %v2714 = vpack.c.b16 %v2394, %v2390
          %v2715 = vpack.c.b16 %v2395, %v2391
          %v2716 = vpack.c.b16 %v2396, %v2392
          %v2717 = vpack.c.b16 %v2401, %v2397
          %v2718 = vpack.c.b16 %v2402, %v2398
          %v2719 = vpack.c.b16 %v2403, %v2399
          %v2720 = vpack.c.b16 %v2404, %v2400
          %v2721 = vpack.c.b16 %v2409, %v2405
          %v2722 = vpack.c.b16 %v2410, %v2406
          %v2723 = vpack.c.b16 %v2411, %v2407
          %v2724 = vpack.c.b16 %v2412, %v2408
          %v2725 = vpack.c.b16 %v2417, %v2413
          %v2726 = vpack.c.b16 %v2418, %v2414
          %v2727 = vpack.c.b16 %v2419, %v2415
          %v2728 = vpack.c.b16 %v2420, %v2416
          %v2729 = vpack.c.b16 %v2425, %v2421
          %v2730 = vpack.c.b16 %v2426, %v2422
          %v2731 = vpack.c.b16 %v2427, %v2423
          %v2732 = vpack.c.b16 %v2428, %v2424
          %v2733 = vpack.c.b16 %v2433, %v2429
          %v2734 = vpack.c.b16 %v2434, %v2430
          %v2735 = vpack.c.b16 %v2435, %v2431
          %v2736 = vpack.c.b16 %v2436, %v2432
          %v2737 = vpack.c.b16 %v2441, %v2437
          %v2738 = vpack.c.b16 %v2442, %v2438
          %v2739 = vpack.c.b16 %v2443, %v2439
          %v2740 = vpack.c.b16 %v2444, %v2440
          %v2741 = vpack.c.b16 %v2449, %v2445
          %v2742 = vpack.c.b16 %v2450, %v2446
          %v2743 = vpack.c.b16 %v2451, %v2447
          %v2744 = vpack.c.b16 %v2452, %v2448
          %v2745 = vpack.c.b16 %v2457, %v2453
          %v2746 = vpack.c.b16 %v2458, %v2454
          %v2747 = vpack.c.b16 %v2459, %v2455
          %v2748 = vpack.c.b16 %v2460, %v2456
          %v2749 = vpack.c.b16 %v2465, %v2461
          %v2750 = vpack.c.b16 %v2466, %v2462
          %v2751 = vpack.c.b16 %v2467, %v2463
          %v2752 = vpack.c.b16 %v2468, %v2464
          %v2753 = vpack.c.b16 %v2473, %v2469
          %v2754 = vpack.c.b16 %v2474, %v2470
          %v2755 = vpack.c.b16 %v2475, %v2471
          %v2756 = vpack.c.b16 %v2476, %v2472
          %v2757 = vpack.c.b16 %v2481, %v2477
          %v2758 = vpack.c.b16 %v2482, %v2478
          %v2759 = vpack.c.b16 %v2483, %v2479
          %v2760 = vpack.c.b16 %v2484, %v2480
          %v2761 = vpack.c.b16 %v2489, %v2485
          %v2762 = vpack.c.b16 %v2490, %v2486
          %v2763 = vpack.c.b16 %v2491, %v2487
          %v2764 = vpack.c.b16 %v2492, %v2488
          %v2765 = vpack.c.b16 %v2497, %v2493
          %v2766 = vpack.c.b16 %v2498, %v2494
          %v2767 = vpack.c.b16 %v2499, %v2495
          %v2768 = vpack.c.b16 %v2500, %v2496
          %v2769 = vpack.c.b16 %v2505, %v2501
          %v2770 = vpack.c.b16 %v2506, %v2502
          %v2771 = vpack.c.b16 %v2507, %v2503
          %v2772 = vpack.c.b16 %v2508, %v2504
          %v2773 = vpack.c.b16 %v2513, %v2509
          %v2774 = vpack.c.b16 %v2514, %v2510
          %v2775 = vpack.c.b16 %v2515, %v2511
          %v2776 = vpack.c.b16 %v2516, %v2512
          %v2777 = vpack.c.b16 %v2521, %v2517
          %v2778 = vpack.c.b16 %v2522, %v2518
          %v2779 = vpack.c.b16 %v2523, %v2519
          %v2780 = vpack.c.b16 %v2524, %v2520
          %v3038 = vlaneseq
          %v3039 = vshrl.u32 %v3038, 7
          %v3040 = vsub.s32 0, %v3039
          %v3041 = vrot.slane %v1756, %v3040
          %v3042 = vlaneseq
          %v3043 = vshrl.u32 %v3042, 7
          %v3044 = vsub.s32 1, %v3043
          %v3045 = vrot.slane %v1756, %v3044
          %v3046 = vlaneseq
          %v3047 = vshrl.u32 %v3046, 7
          %v3048 = vsub.s32 2, %v3047
          %v3049 = vrot.slane %v1756, %v3048
          %v3050 = vlaneseq
          %v3051 = vshrl.u32 %v3050, 7
          %v3052 = vsub.s32 3, %v3051
          %v3053 = vrot.slane %v1756, %v3052
          %3058 = vmatprep.subr.bf16.mxu0 %v2554
          %3059 = vmatpush1.bf16.msra.mxu0 %v2553
          %3060 = vmatprep.subr.bf16.mxu0 %v2550
          %3061 = vmatpush1.bf16.msra.mxu0 %v2549
          %3062 = vmatprep.subr.bf16.mxu0 %v2546
          %3063 = vmatpush1.bf16.msra.mxu0 %v2545
          %3064 = vmatprep.subr.bf16.mxu0 %v2542
          %3065 = vmatpush1.bf16.msra.mxu0 %v2541
          %3066 = vmatprep.subr.bf16.mxu0 %v2538
          %3067 = vmatpush1.bf16.msra.mxu0 %v2537
          %3068 = vmatprep.subr.bf16.mxu0 %v2534
          %3069 = vmatpush1.bf16.msra.mxu0 %v2533
          %3070 = vmatprep.subr.bf16.mxu0 %v2530
          %3071 = vmatpush1.bf16.msra.mxu0 %v2529
          %3072 = vmatprep.subr.bf16.mxu0 %v2526
          %3073 = vmatpush1.bf16.msra.mxu0 %v2525
          %3074 = vmatprep.subr.bf16.mxu0 %v2586
          %3075 = vmatpush2.bf16.msra.mxu0 %v2585
          %3076 = vmatprep.subr.bf16.mxu0 %v2582
          %3077 = vmatpush2.bf16.msra.mxu0 %v2581
          %3078 = vmatprep.subr.bf16.mxu0 %v2578
          %3079 = vmatpush2.bf16.msra.mxu0 %v2577
          %3080 = vmatprep.subr.bf16.mxu0 %v2574
          %3081 = vmatpush2.bf16.msra.mxu0 %v2573
          %3082 = vmatprep.subr.bf16.mxu0 %v2570
          %3083 = vmatpush2.bf16.msra.mxu0 %v2569
          %3084 = vmatprep.subr.bf16.mxu0 %v2566
          %3085 = vmatpush2.bf16.msra.mxu0 %v2565
          %3086 = vmatprep.subr.bf16.mxu0 %v2562
          %3087 = vmatpush2.bf16.msra.mxu0 %v2561
          %3088 = vmatprep.subr.bf16.mxu0 %v2558
          %3089 = vmatpush2.bf16.msra.mxu0 %v2557
          %3090 = vmatprep.mubr.bf16.mxu0 %v1493
          %3091 = vmatmul.mubr.bf16.gmra.mxu0 %v1492
          %v3092 = vpop.f32.mrf.mxu0
          %v3093 = vadd.f32 %v3041, %v3092
          %v3094 = vpop.f32.mrf.mxu0
          %v3095 = vadd.f32 %v3045, %v3094
          %v3096 = vpop.f32.mrf.mxu0
          %v3097 = vpop.f32.mrf.mxu0
          %3098 = vdwg.mxu0
          %3099 = vmatprep.subr.bf16.mxu0 %v2618
          %3100 = vmatpush1.bf16.msra.mxu0 %v2617
          %3101 = vmatprep.subr.bf16.mxu0 %v2614
          %3102 = vmatpush1.bf16.msra.mxu0 %v2613
          %3103 = vmatprep.subr.bf16.mxu0 %v2610
          %3104 = vmatpush1.bf16.msra.mxu0 %v2609
          %3105 = vmatprep.subr.bf16.mxu0 %v2606
          %3106 = vmatpush1.bf16.msra.mxu0 %v2605
          %3107 = vmatprep.subr.bf16.mxu0 %v2602
          %3108 = vmatpush1.bf16.msra.mxu0 %v2601
          %3109 = vmatprep.subr.bf16.mxu0 %v2598
          %3110 = vmatpush1.bf16.msra.mxu0 %v2597
          %3111 = vmatprep.subr.bf16.mxu0 %v2594
          %3112 = vmatpush1.bf16.msra.mxu0 %v2593
          %3113 = vmatprep.subr.bf16.mxu0 %v2590
          %3114 = vmatpush1.bf16.msra.mxu0 %v2589
          %3115 = vmatprep.subr.bf16.mxu0 %v2650
          %3116 = vmatpush2.bf16.msra.mxu0 %v2649
          %3117 = vmatprep.subr.bf16.mxu0 %v2646
          %3118 = vmatpush2.bf16.msra.mxu0 %v2645
          %3119 = vmatprep.subr.bf16.mxu0 %v2642
          %3120 = vmatpush2.bf16.msra.mxu0 %v2641
          %3121 = vmatprep.subr.bf16.mxu0 %v2638
          %3122 = vmatpush2.bf16.msra.mxu0 %v2637
          %3123 = vmatprep.subr.bf16.mxu0 %v2634
          %3124 = vmatpush2.bf16.msra.mxu0 %v2633
          %3125 = vmatprep.subr.bf16.mxu0 %v2630
          %3126 = vmatpush2.bf16.msra.mxu0 %v2629
          %3127 = vmatprep.subr.bf16.mxu0 %v2626
          %3128 = vmatpush2.bf16.msra.mxu0 %v2625
          %3129 = vmatprep.subr.bf16.mxu0 %v2622
          %3130 = vmatpush2.bf16.msra.mxu0 %v2621
          %3131 = vmatprep.mubr.bf16.mxu0 %v1495
          %3132 = vmatmul.mubr.bf16.gmra.mxu0 %v1494
          %v3133 = vpop.f32.mrf.mxu0
          %v3134 = vadd.f32 %v3093, %v3133
          %v3135 = vpop.f32.mrf.mxu0
          %v3136 = vadd.f32 %v3095, %v3135
          %v3137 = vpop.f32.mrf.mxu0
          %v3138 = vpop.f32.mrf.mxu0
          %3139 = vdwg.mxu0
          %3140 = vmatprep.subr.bf16.mxu0 %v2682
          %3141 = vmatpush1.bf16.msra.mxu0 %v2681
          %3142 = vmatprep.subr.bf16.mxu0 %v2678
          %3143 = vmatpush1.bf16.msra.mxu0 %v2677
          %3144 = vmatprep.subr.bf16.mxu0 %v2674
          %3145 = vmatpush1.bf16.msra.mxu0 %v2673
          %3146 = vmatprep.subr.bf16.mxu0 %v2670
          %3147 = vmatpush1.bf16.msra.mxu0 %v2669
          %3148 = vmatprep.subr.bf16.mxu0 %v2666
          %3149 = vmatpush1.bf16.msra.mxu0 %v2665
          %3150 = vmatprep.subr.bf16.mxu0 %v2662
          %3151 = vmatpush1.bf16.msra.mxu0 %v2661
          %3152 = vmatprep.subr.bf16.mxu0 %v2658
          %3153 = vmatpush1.bf16.msra.mxu0 %v2657
          %3154 = vmatprep.subr.bf16.mxu0 %v2654
          %3155 = vmatpush1.bf16.msra.mxu0 %v2653
          %3156 = vmatprep.subr.bf16.mxu0 %v2714
          %3157 = vmatpush2.bf16.msra.mxu0 %v2713
          %3158 = vmatprep.subr.bf16.mxu0 %v2710
          %3159 = vmatpush2.bf16.msra.mxu0 %v2709
          %3160 = vmatprep.subr.bf16.mxu0 %v2706
          %3161 = vmatpush2.bf16.msra.mxu0 %v2705
          %3162 = vmatprep.subr.bf16.mxu0 %v2702
          %3163 = vmatpush2.bf16.msra.mxu0 %v2701
          %3164 = vmatprep.subr.bf16.mxu0 %v2698
          %3165 = vmatpush2.bf16.msra.mxu0 %v2697
          %3166 = vmatprep.subr.bf16.mxu0 %v2694
          %3167 = vmatpush2.bf16.msra.mxu0 %v2693
          %3168 = vmatprep.subr.bf16.mxu0 %v2690
          %3169 = vmatpush2.bf16.msra.mxu0 %v2689
          %3170 = vmatprep.subr.bf16.mxu0 %v2686
          %3171 = vmatpush2.bf16.msra.mxu0 %v2685
          %3172 = vmatprep.mubr.bf16.mxu0 %v1497
          %3173 = vmatmul.mubr.bf16.gmra.mxu0 %v1496
          %v3174 = vpop.f32.mrf.mxu0
          %v3175 = vadd.f32 %v3134, %v3174
          %v3176 = vpop.f32.mrf.mxu0
          %v3177 = vadd.f32 %v3136, %v3176
          %v3178 = vpop.f32.mrf.mxu0
          %v3179 = vpop.f32.mrf.mxu0
          %3180 = vdwg.mxu0
          %3181 = vmatprep.subr.bf16.mxu0 %v2746
          %3182 = vmatpush1.bf16.msra.mxu0 %v2745
          %3183 = vmatprep.subr.bf16.mxu0 %v2742
          %3184 = vmatpush1.bf16.msra.mxu0 %v2741
          %3185 = vmatprep.subr.bf16.mxu0 %v2738
          %3186 = vmatpush1.bf16.msra.mxu0 %v2737
          %3187 = vmatprep.subr.bf16.mxu0 %v2734
          %3188 = vmatpush1.bf16.msra.mxu0 %v2733
          %3189 = vmatprep.subr.bf16.mxu0 %v2730
          %3190 = vmatpush1.bf16.msra.mxu0 %v2729
          %3191 = vmatprep.subr.bf16.mxu0 %v2726
          %3192 = vmatpush1.bf16.msra.mxu0 %v2725
          %3193 = vmatprep.subr.bf16.mxu0 %v2722
          %3194 = vmatpush1.bf16.msra.mxu0 %v2721
          %3195 = vmatprep.subr.bf16.mxu0 %v2718
          %3196 = vmatpush1.bf16.msra.mxu0 %v2717
          %3197 = vmatprep.subr.bf16.mxu0 %v2778
          %3198 = vmatpush2.bf16.msra.mxu0 %v2777
          %3199 = vmatprep.subr.bf16.mxu0 %v2774
          %3200 = vmatpush2.bf16.msra.mxu0 %v2773
          %3201 = vmatprep.subr.bf16.mxu0 %v2770
          %3202 = vmatpush2.bf16.msra.mxu0 %v2769
          %3203 = vmatprep.subr.bf16.mxu0 %v2766
          %3204 = vmatpush2.bf16.msra.mxu0 %v2765
          %3205 = vmatprep.subr.bf16.mxu0 %v2762
          %3206 = vmatpush2.bf16.msra.mxu0 %v2761
          %3207 = vmatprep.subr.bf16.mxu0 %v2758
          %3208 = vmatpush2.bf16.msra.mxu0 %v2757
          %3209 = vmatprep.subr.bf16.mxu0 %v2754
          %3210 = vmatpush2.bf16.msra.mxu0 %v2753
          %3211 = vmatprep.subr.bf16.mxu0 %v2750
          %3212 = vmatpush2.bf16.msra.mxu0 %v2749
          %3213 = vmatprep.mubr.bf16.mxu0 %v1499
          %3214 = vmatmul.mubr.bf16.gmra.mxu0 %v1498
          %v3215 = vpop.f32.mrf.mxu0
          %v3216 = vadd.f32 %v3175, %v3215
          %v3217 = vpop.f32.mrf.mxu0
          %v3218 = vadd.f32 %v3177, %v3217
          %v3219 = vpop.f32.mrf.mxu0
          %v3220 = vpop.f32.mrf.mxu0
          %3221 = vdwg.mxu0
          %3222 = vmatprep.subr.bf16.mxu0 %v2556
          %3223 = vmatpush1.bf16.msra.mxu0 %v2555
          %3224 = vmatprep.subr.bf16.mxu0 %v2552
          %3225 = vmatpush1.bf16.msra.mxu0 %v2551
          %3226 = vmatprep.subr.bf16.mxu0 %v2548
          %3227 = vmatpush1.bf16.msra.mxu0 %v2547
          %3228 = vmatprep.subr.bf16.mxu0 %v2544
          %3229 = vmatpush1.bf16.msra.mxu0 %v2543
          %3230 = vmatprep.subr.bf16.mxu0 %v2540
          %3231 = vmatpush1.bf16.msra.mxu0 %v2539
          %3232 = vmatprep.subr.bf16.mxu0 %v2536
          %3233 = vmatpush1.bf16.msra.mxu0 %v2535
          %3234 = vmatprep.subr.bf16.mxu0 %v2532
          %3235 = vmatpush1.bf16.msra.mxu0 %v2531
          %3236 = vmatprep.subr.bf16.mxu0 %v2528
          %3237 = vmatpush1.bf16.msra.mxu0 %v2527
          %3238 = vmatprep.subr.bf16.mxu0 %v2588
          %3239 = vmatpush2.bf16.msra.mxu0 %v2587
          %3240 = vmatprep.subr.bf16.mxu0 %v2584
          %3241 = vmatpush2.bf16.msra.mxu0 %v2583
          %3242 = vmatprep.subr.bf16.mxu0 %v2580
          %3243 = vmatpush2.bf16.msra.mxu0 %v2579
          %3244 = vmatprep.subr.bf16.mxu0 %v2576
          %3245 = vmatpush2.bf16.msra.mxu0 %v2575
          %3246 = vmatprep.subr.bf16.mxu0 %v2572
          %3247 = vmatpush2.bf16.msra.mxu0 %v2571
          %3248 = vmatprep.subr.bf16.mxu0 %v2568
          %3249 = vmatpush2.bf16.msra.mxu0 %v2567
          %3250 = vmatprep.subr.bf16.mxu0 %v2564
          %3251 = vmatpush2.bf16.msra.mxu0 %v2563
          %3252 = vmatprep.subr.bf16.mxu0 %v2560
          %3253 = vmatpush2.bf16.msra.mxu0 %v2559
          %3254 = vmatprep.mubr.bf16.mxu0 %v1493
          %3255 = vmatmul.mubr.bf16.gmra.mxu0 %v1492
          %v3256 = vpop.f32.mrf.mxu0
          %v3257 = vadd.f32 %v3049, %v3256
          %v3258 = vpop.f32.mrf.mxu0
          %v3259 = vadd.f32 %v3053, %v3258
          %v3260 = vpop.f32.mrf.mxu0
          %v3261 = vpop.f32.mrf.mxu0
          %3262 = vdwg.mxu0
          %3263 = vmatprep.subr.bf16.mxu0 %v2620
          %3264 = vmatpush1.bf16.msra.mxu0 %v2619
          %3265 = vmatprep.subr.bf16.mxu0 %v2616
          %3266 = vmatpush1.bf16.msra.mxu0 %v2615
          %3267 = vmatprep.subr.bf16.mxu0 %v2612
          %3268 = vmatpush1.bf16.msra.mxu0 %v2611
          %3269 = vmatprep.subr.bf16.mxu0 %v2608
          %3270 = vmatpush1.bf16.msra.mxu0 %v2607
          %3271 = vmatprep.subr.bf16.mxu0 %v2604
          %3272 = vmatpush1.bf16.msra.mxu0 %v2603
          %3273 = vmatprep.subr.bf16.mxu0 %v2600
          %3274 = vmatpush1.bf16.msra.mxu0 %v2599
          %3275 = vmatprep.subr.bf16.mxu0 %v2596
          %3276 = vmatpush1.bf16.msra.mxu0 %v2595
          %3277 = vmatprep.subr.bf16.mxu0 %v2592
          %3278 = vmatpush1.bf16.msra.mxu0 %v2591
          %3279 = vmatprep.subr.bf16.mxu0 %v2652
          %3280 = vmatpush2.bf16.msra.mxu0 %v2651
          %3281 = vmatprep.subr.bf16.mxu0 %v2648
          %3282 = vmatpush2.bf16.msra.mxu0 %v2647
          %3283 = vmatprep.subr.bf16.mxu0 %v2644
          %3284 = vmatpush2.bf16.msra.mxu0 %v2643
          %3285 = vmatprep.subr.bf16.mxu0 %v2640
          %3286 = vmatpush2.bf16.msra.mxu0 %v2639
          %3287 = vmatprep.subr.bf16.mxu0 %v2636
          %3288 = vmatpush2.bf16.msra.mxu0 %v2635
          %3289 = vmatprep.subr.bf16.mxu0 %v2632
          %3290 = vmatpush2.bf16.msra.mxu0 %v2631
          %3291 = vmatprep.subr.bf16.mxu0 %v2628
          %3292 = vmatpush2.bf16.msra.mxu0 %v2627
          %3293 = vmatprep.subr.bf16.mxu0 %v2624
          %3294 = vmatpush2.bf16.msra.mxu0 %v2623
          %3295 = vmatprep.mubr.bf16.mxu0 %v1495
          %3296 = vmatmul.mubr.bf16.gmra.mxu0 %v1494
          %v3297 = vpop.f32.mrf.mxu0
          %v3298 = vadd.f32 %v3257, %v3297
          %v3299 = vpop.f32.mrf.mxu0
          %v3300 = vadd.f32 %v3259, %v3299
          %v3301 = vpop.f32.mrf.mxu0
          %v3302 = vpop.f32.mrf.mxu0
          %3303 = vdwg.mxu0
          %3304 = vmatprep.subr.bf16.mxu0 %v2684
          %3305 = vmatpush1.bf16.msra.mxu0 %v2683
          %3306 = vmatprep.subr.bf16.mxu0 %v2680
          %3307 = vmatpush1.bf16.msra.mxu0 %v2679
          %3308 = vmatprep.subr.bf16.mxu0 %v2676
          %3309 = vmatpush1.bf16.msra.mxu0 %v2675
          %3310 = vmatprep.subr.bf16.mxu0 %v2672
          %3311 = vmatpush1.bf16.msra.mxu0 %v2671
          %3312 = vmatprep.subr.bf16.mxu0 %v2668
          %3313 = vmatpush1.bf16.msra.mxu0 %v2667
          %3314 = vmatprep.subr.bf16.mxu0 %v2664
          %3315 = vmatpush1.bf16.msra.mxu0 %v2663
          %3316 = vmatprep.subr.bf16.mxu0 %v2660
          %3317 = vmatpush1.bf16.msra.mxu0 %v2659
          %3318 = vmatprep.subr.bf16.mxu0 %v2656
          %3319 = vmatpush1.bf16.msra.mxu0 %v2655
          %3320 = vmatprep.subr.bf16.mxu0 %v2716
          %3321 = vmatpush2.bf16.msra.mxu0 %v2715
          %3322 = vmatprep.subr.bf16.mxu0 %v2712
          %3323 = vmatpush2.bf16.msra.mxu0 %v2711
          %3324 = vmatprep.subr.bf16.mxu0 %v2708
          %3325 = vmatpush2.bf16.msra.mxu0 %v2707
          %3326 = vmatprep.subr.bf16.mxu0 %v2704
          %3327 = vmatpush2.bf16.msra.mxu0 %v2703
          %3328 = vmatprep.subr.bf16.mxu0 %v2700
          %3329 = vmatpush2.bf16.msra.mxu0 %v2699
          %3330 = vmatprep.subr.bf16.mxu0 %v2696
          %3331 = vmatpush2.bf16.msra.mxu0 %v2695
          %3332 = vmatprep.subr.bf16.mxu0 %v2692
          %3333 = vmatpush2.bf16.msra.mxu0 %v2691
          %3334 = vmatprep.subr.bf16.mxu0 %v2688
          %3335 = vmatpush2.bf16.msra.mxu0 %v2687
          %3336 = vmatprep.mubr.bf16.mxu0 %v1497
          %3337 = vmatmul.mubr.bf16.gmra.mxu0 %v1496
          %v3338 = vpop.f32.mrf.mxu0
          %v3339 = vadd.f32 %v3298, %v3338
          %v3340 = vpop.f32.mrf.mxu0
          %v3341 = vadd.f32 %v3300, %v3340
          %v3342 = vpop.f32.mrf.mxu0
          %v3343 = vpop.f32.mrf.mxu0
          %3344 = vdwg.mxu0
          %3345 = vmatprep.subr.bf16.mxu0 %v2748
          %3346 = vmatpush1.bf16.msra.mxu0 %v2747
          %3347 = vmatprep.subr.bf16.mxu0 %v2744
          %3348 = vmatpush1.bf16.msra.mxu0 %v2743
          %3349 = vmatprep.subr.bf16.mxu0 %v2740
          %3350 = vmatpush1.bf16.msra.mxu0 %v2739
          %3351 = vmatprep.subr.bf16.mxu0 %v2736
          %3352 = vmatpush1.bf16.msra.mxu0 %v2735
          %3353 = vmatprep.subr.bf16.mxu0 %v2732
          %3354 = vmatpush1.bf16.msra.mxu0 %v2731
          %3355 = vmatprep.subr.bf16.mxu0 %v2728
          %3356 = vmatpush1.bf16.msra.mxu0 %v2727
          %3357 = vmatprep.subr.bf16.mxu0 %v2724
          %3358 = vmatpush1.bf16.msra.mxu0 %v2723
          %3359 = vmatprep.subr.bf16.mxu0 %v2720
          %3360 = vmatpush1.bf16.msra.mxu0 %v2719
          %3361 = vmatprep.subr.bf16.mxu0 %v2780
          %3362 = vmatpush2.bf16.msra.mxu0 %v2779
          %3363 = vmatprep.subr.bf16.mxu0 %v2776
          %3364 = vmatpush2.bf16.msra.mxu0 %v2775
          %3365 = vmatprep.subr.bf16.mxu0 %v2772
          %3366 = vmatpush2.bf16.msra.mxu0 %v2771
          %3367 = vmatprep.subr.bf16.mxu0 %v2768
          %3368 = vmatpush2.bf16.msra.mxu0 %v2767
          %3369 = vmatprep.subr.bf16.mxu0 %v2764
          %3370 = vmatpush2.bf16.msra.mxu0 %v2763
          %3371 = vmatprep.subr.bf16.mxu0 %v2760
          %3372 = vmatpush2.bf16.msra.mxu0 %v2759
          %3373 = vmatprep.subr.bf16.mxu0 %v2756
          %3374 = vmatpush2.bf16.msra.mxu0 %v2755
          %3375 = vmatprep.subr.bf16.mxu0 %v2752
          %3376 = vmatpush2.bf16.msra.mxu0 %v2751
          %3377 = vmatprep.mubr.bf16.mxu0 %v1499
          %3378 = vmatmul.mubr.bf16.gmra.mxu0 %v1498
          %v3379 = vpop.f32.mrf.mxu0
          %v3380 = vadd.f32 %v3339, %v3379
          %v3381 = vpop.f32.mrf.mxu0
          %v3382 = vadd.f32 %v3341, %v3381
          %v3383 = vpop.f32.mrf.mxu0
          %v3384 = vpop.f32.mrf.mxu0
          %3385 = vdwg.mxu0
          %v3386 = vmax.f32 %v3216, 0.0
          %v3387 = vmax.f32 %v3218, 0.0
          %v3388 = vmax.f32 %v3380, 0.0
          %v3389 = vmax.f32 %v3382, 0.0
          %v3390 = vpack.c.bf16 %v3386, %v3386
          %v3391 = vpack.c.bf16 %v3387, %v3387
          %v3392 = vpack.c.bf16 %v3388, %v3388
          %v3393 = vpack.c.bf16 %v3389, %v3389
          %v3394 = vld [vmem:[#allocation7] sm:$0xff]
          %v3395 = vld [vmem:[#allocation7 + $0x8] sm:$0xff]
          %v3396 = vld [vmem:[#allocation7 + $0x10] sm:$0xff]
          %v3397 = vld [vmem:[#allocation7 + $0x18] sm:$0xff]
          %v3398 = vld [vmem:[#allocation7 + $0x20] sm:$0xff]
          %v3399 = vld [vmem:[#allocation7 + $0x28] sm:$0xff]
          %v3400 = vld [vmem:[#allocation7 + $0x30] sm:$0xff]
          %v3401 = vld [vmem:[#allocation7 + $0x38] sm:$0xff]
          %v3402 = vld [vmem:[#allocation7 + $0x40] sm:$0xff]
          %v3403 = vld [vmem:[#allocation7 + $0x48] sm:$0xff]
          %v3404 = vld [vmem:[#allocation7 + $0x50] sm:$0xff]
          %v3405 = vld [vmem:[#allocation7 + $0x58] sm:$0xff]
          %v3406 = vld [vmem:[#allocation7 + $0x60] sm:$0xff]
          %v3407 = vld [vmem:[#allocation7 + $0x68] sm:$0xff]
          %v3408 = vld [vmem:[#allocation7 + $0x70] sm:$0xff]
          %v3409 = vld [vmem:[#allocation7 + $0x78] sm:$0xff]
          %v3410 = vld [vmem:[#allocation7 + $0x80] sm:$0xff]
          %v3411 = vld [vmem:[#allocation7 + $0x88] sm:$0xff]
          %v3412 = vld [vmem:[#allocation7 + $0x90] sm:$0xff]
          %v3413 = vld [vmem:[#allocation7 + $0x98] sm:$0xff]
          %v3414 = vld [vmem:[#allocation7 + $0xa0] sm:$0xff]
          %v3415 = vld [vmem:[#allocation7 + $0xa8] sm:$0xff]
          %v3416 = vld [vmem:[#allocation7 + $0xb0] sm:$0xff]
          %v3417 = vld [vmem:[#allocation7 + $0xb8] sm:$0xff]
          %v3418 = vld [vmem:[#allocation7 + $0xc0] sm:$0xff]
          %v3419 = vld [vmem:[#allocation7 + $0xc8] sm:$0xff]
          %v3420 = vld [vmem:[#allocation7 + $0xd0] sm:$0xff]
          %v3421 = vld [vmem:[#allocation7 + $0xd8] sm:$0xff]
          %v3422 = vld [vmem:[#allocation7 + $0xe0] sm:$0xff]
          %v3423 = vld [vmem:[#allocation7 + $0xe8] sm:$0xff]
          %v3424 = vld [vmem:[#allocation7 + $0xf0] sm:$0xff]
          %v3425 = vld [vmem:[#allocation7 + $0xf8] sm:$0xff]
          %v3426 = vld [vmem:[#allocation7 + $0x100] sm:$0xff]
          %v3427 = vld [vmem:[#allocation7 + $0x108] sm:$0xff]
          %v3428 = vld [vmem:[#allocation7 + $0x110] sm:$0xff]
          %v3429 = vld [vmem:[#allocation7 + $0x118] sm:$0xff]
          %v3430 = vld [vmem:[#allocation7 + $0x120] sm:$0xff]
          %v3431 = vld [vmem:[#allocation7 + $0x128] sm:$0xff]
          %v3432 = vld [vmem:[#allocation7 + $0x130] sm:$0xff]
          %v3433 = vld [vmem:[#allocation7 + $0x138] sm:$0xff]
          %v3434 = vld [vmem:[#allocation7 + $0x140] sm:$0xff]
          %v3435 = vld [vmem:[#allocation7 + $0x148] sm:$0xff]
          %v3436 = vld [vmem:[#allocation7 + $0x150] sm:$0xff]
          %v3437 = vld [vmem:[#allocation7 + $0x158] sm:$0xff]
          %v3438 = vld [vmem:[#allocation7 + $0x160] sm:$0xff]
          %v3439 = vld [vmem:[#allocation7 + $0x168] sm:$0xff]
          %v3440 = vld [vmem:[#allocation7 + $0x170] sm:$0xff]
          %v3441 = vld [vmem:[#allocation7 + $0x178] sm:$0xff]
          %v3442 = vld [vmem:[#allocation7 + $0x180] sm:$0xff]
          %v3443 = vld [vmem:[#allocation7 + $0x188] sm:$0xff]
          %v3444 = vld [vmem:[#allocation7 + $0x190] sm:$0xff]
          %v3445 = vld [vmem:[#allocation7 + $0x198] sm:$0xff]
          %v3446 = vld [vmem:[#allocation7 + $0x1a0] sm:$0xff]
          %v3447 = vld [vmem:[#allocation7 + $0x1a8] sm:$0xff]
          %v3448 = vld [vmem:[#allocation7 + $0x1b0] sm:$0xff]
          %v3449 = vld [vmem:[#allocation7 + $0x1b8] sm:$0xff]
          %v3450 = vld [vmem:[#allocation7 + $0x1c0] sm:$0xff]
          %v3451 = vld [vmem:[#allocation7 + $0x1c8] sm:$0xff]
          %v3452 = vld [vmem:[#allocation7 + $0x1d0] sm:$0xff]
          %v3453 = vld [vmem:[#allocation7 + $0x1d8] sm:$0xff]
          %v3454 = vld [vmem:[#allocation7 + $0x1e0] sm:$0xff]
          %v3455 = vld [vmem:[#allocation7 + $0x1e8] sm:$0xff]
          %v3456 = vld [vmem:[#allocation7 + $0x1f0] sm:$0xff]
          %v3457 = vld [vmem:[#allocation7 + $0x1f8] sm:$0xff]
          %v3458 = vld [vmem:[%s10] sm:$0x3]
          %v3523 = vunpack.c.l.b16 %v3394
          %v3524 = vunpack.c.h.b16 %v3394
          %v3525 = vunpack.c.l.b16 %v3395
          %v3526 = vunpack.c.h.b16 %v3395
          %v3527 = vunpack.c.l.b16 %v3396
          %v3528 = vunpack.c.h.b16 %v3396
          %v3529 = vunpack.c.l.b16 %v3397
          %v3530 = vunpack.c.h.b16 %v3397
          %v3531 = vunpack.c.l.b16 %v3398
          %v3532 = vunpack.c.h.b16 %v3398
          %v3533 = vunpack.c.l.b16 %v3399
          %v3534 = vunpack.c.h.b16 %v3399
          %v3535 = vunpack.c.l.b16 %v3400
          %v3536 = vunpack.c.h.b16 %v3400
          %v3537 = vunpack.c.l.b16 %v3401
          %v3538 = vunpack.c.h.b16 %v3401
          %v3539 = vunpack.c.l.b16 %v3402
          %v3540 = vunpack.c.h.b16 %v3402
          %v3541 = vunpack.c.l.b16 %v3403
          %v3542 = vunpack.c.h.b16 %v3403
          %v3543 = vunpack.c.l.b16 %v3404
          %v3544 = vunpack.c.h.b16 %v3404
          %v3545 = vunpack.c.l.b16 %v3405
          %v3546 = vunpack.c.h.b16 %v3405
          %v3547 = vunpack.c.l.b16 %v3406
          %v3548 = vunpack.c.h.b16 %v3406
          %v3549 = vunpack.c.l.b16 %v3407
          %v3550 = vunpack.c.h.b16 %v3407
          %v3551 = vunpack.c.l.b16 %v3408
          %v3552 = vunpack.c.h.b16 %v3408
          %v3553 = vunpack.c.l.b16 %v3409
          %v3554 = vunpack.c.h.b16 %v3409
          %v3555 = vunpack.c.l.b16 %v3410
          %v3556 = vunpack.c.h.b16 %v3410
          %v3557 = vunpack.c.l.b16 %v3411
          %v3558 = vunpack.c.h.b16 %v3411
          %v3559 = vunpack.c.l.b16 %v3412
          %v3560 = vunpack.c.h.b16 %v3412
          %v3561 = vunpack.c.l.b16 %v3413
          %v3562 = vunpack.c.h.b16 %v3413
          %v3563 = vunpack.c.l.b16 %v3414
          %v3564 = vunpack.c.h.b16 %v3414
          %v3565 = vunpack.c.l.b16 %v3415
          %v3566 = vunpack.c.h.b16 %v3415
          %v3567 = vunpack.c.l.b16 %v3416
          %v3568 = vunpack.c.h.b16 %v3416
          %v3569 = vunpack.c.l.b16 %v3417
          %v3570 = vunpack.c.h.b16 %v3417
          %v3571 = vunpack.c.l.b16 %v3418
          %v3572 = vunpack.c.h.b16 %v3418
          %v3573 = vunpack.c.l.b16 %v3419
          %v3574 = vunpack.c.h.b16 %v3419
          %v3575 = vunpack.c.l.b16 %v3420
          %v3576 = vunpack.c.h.b16 %v3420
          %v3577 = vunpack.c.l.b16 %v3421
          %v3578 = vunpack.c.h.b16 %v3421
          %v3579 = vunpack.c.l.b16 %v3422
          %v3580 = vunpack.c.h.b16 %v3422
          %v3581 = vunpack.c.l.b16 %v3423
          %v3582 = vunpack.c.h.b16 %v3423
          %v3583 = vunpack.c.l.b16 %v3424
          %v3584 = vunpack.c.h.b16 %v3424
          %v3585 = vunpack.c.l.b16 %v3425
          %v3586 = vunpack.c.h.b16 %v3425
          %v3587 = vunpack.c.l.b16 %v3426
          %v3588 = vunpack.c.h.b16 %v3426
          %v3589 = vunpack.c.l.b16 %v3427
          %v3590 = vunpack.c.h.b16 %v3427
          %v3591 = vunpack.c.l.b16 %v3428
          %v3592 = vunpack.c.h.b16 %v3428
          %v3593 = vunpack.c.l.b16 %v3429
          %v3594 = vunpack.c.h.b16 %v3429
          %v3595 = vunpack.c.l.b16 %v3430
          %v3596 = vunpack.c.h.b16 %v3430
          %v3597 = vunpack.c.l.b16 %v3431
          %v3598 = vunpack.c.h.b16 %v3431
          %v3599 = vunpack.c.l.b16 %v3432
          %v3600 = vunpack.c.h.b16 %v3432
          %v3601 = vunpack.c.l.b16 %v3433
          %v3602 = vunpack.c.h.b16 %v3433
          %v3603 = vunpack.c.l.b16 %v3434
          %v3604 = vunpack.c.h.b16 %v3434
          %v3605 = vunpack.c.l.b16 %v3435
          %v3606 = vunpack.c.h.b16 %v3435
          %v3607 = vunpack.c.l.b16 %v3436
          %v3608 = vunpack.c.h.b16 %v3436
          %v3609 = vunpack.c.l.b16 %v3437
          %v3610 = vunpack.c.h.b16 %v3437
          %v3611 = vunpack.c.l.b16 %v3438
          %v3612 = vunpack.c.h.b16 %v3438
          %v3613 = vunpack.c.l.b16 %v3439
          %v3614 = vunpack.c.h.b16 %v3439
          %v3615 = vunpack.c.l.b16 %v3440
          %v3616 = vunpack.c.h.b16 %v3440
          %v3617 = vunpack.c.l.b16 %v3441
          %v3618 = vunpack.c.h.b16 %v3441
          %v3619 = vunpack.c.l.b16 %v3442
          %v3620 = vunpack.c.h.b16 %v3442
          %v3621 = vunpack.c.l.b16 %v3443
          %v3622 = vunpack.c.h.b16 %v3443
          %v3623 = vunpack.c.l.b16 %v3444
          %v3624 = vunpack.c.h.b16 %v3444
          %v3625 = vunpack.c.l.b16 %v3445
          %v3626 = vunpack.c.h.b16 %v3445
          %v3627 = vunpack.c.l.b16 %v3446
          %v3628 = vunpack.c.h.b16 %v3446
          %v3629 = vunpack.c.l.b16 %v3447
          %v3630 = vunpack.c.h.b16 %v3447
          %v3631 = vunpack.c.l.b16 %v3448
          %v3632 = vunpack.c.h.b16 %v3448
          %v3633 = vunpack.c.l.b16 %v3449
          %v3634 = vunpack.c.h.b16 %v3449
          %v3635 = vunpack.c.l.b16 %v3450
          %v3636 = vunpack.c.h.b16 %v3450
          %v3637 = vunpack.c.l.b16 %v3451
          %v3638 = vunpack.c.h.b16 %v3451
          %v3639 = vunpack.c.l.b16 %v3452
          %v3640 = vunpack.c.h.b16 %v3452
          %v3641 = vunpack.c.l.b16 %v3453
          %v3642 = vunpack.c.h.b16 %v3453
          %v3643 = vunpack.c.l.b16 %v3454
          %v3644 = vunpack.c.h.b16 %v3454
          %v3645 = vunpack.c.l.b16 %v3455
          %v3646 = vunpack.c.h.b16 %v3455
          %v3647 = vunpack.c.l.b16 %v3456
          %v3648 = vunpack.c.h.b16 %v3456
          %v3649 = vunpack.c.l.b16 %v3457
          %v3650 = vunpack.c.h.b16 %v3457
          %v3651 = vpack.c.b16 %v3525, %v3523
          %v3652 = vpack.c.b16 %v3526, %v3524
          %v3653 = vpack.c.b16 %v3529, %v3527
          %v3654 = vpack.c.b16 %v3530, %v3528
          %v3655 = vpack.c.b16 %v3533, %v3531
          %v3656 = vpack.c.b16 %v3534, %v3532
          %v3657 = vpack.c.b16 %v3537, %v3535
          %v3658 = vpack.c.b16 %v3538, %v3536
          %v3659 = vpack.c.b16 %v3541, %v3539
          %v3660 = vpack.c.b16 %v3542, %v3540
          %v3661 = vpack.c.b16 %v3545, %v3543
          %v3662 = vpack.c.b16 %v3546, %v3544
          %v3663 = vpack.c.b16 %v3549, %v3547
          %v3664 = vpack.c.b16 %v3550, %v3548
          %v3665 = vpack.c.b16 %v3553, %v3551
          %v3666 = vpack.c.b16 %v3554, %v3552
          %v3667 = vpack.c.b16 %v3557, %v3555
          %v3668 = vpack.c.b16 %v3558, %v3556
          %v3669 = vpack.c.b16 %v3561, %v3559
          %v3670 = vpack.c.b16 %v3562, %v3560
          %v3671 = vpack.c.b16 %v3565, %v3563
          %v3672 = vpack.c.b16 %v3566, %v3564
          %v3673 = vpack.c.b16 %v3569, %v3567
          %v3674 = vpack.c.b16 %v3570, %v3568
          %v3675 = vpack.c.b16 %v3573, %v3571
          %v3676 = vpack.c.b16 %v3574, %v3572
          %v3677 = vpack.c.b16 %v3577, %v3575
          %v3678 = vpack.c.b16 %v3578, %v3576
          %v3679 = vpack.c.b16 %v3581, %v3579
          %v3680 = vpack.c.b16 %v3582, %v3580
          %v3681 = vpack.c.b16 %v3585, %v3583
          %v3682 = vpack.c.b16 %v3586, %v3584
          %v3683 = vpack.c.b16 %v3589, %v3587
          %v3684 = vpack.c.b16 %v3590, %v3588
          %v3685 = vpack.c.b16 %v3593, %v3591
          %v3686 = vpack.c.b16 %v3594, %v3592
          %v3687 = vpack.c.b16 %v3597, %v3595
          %v3688 = vpack.c.b16 %v3598, %v3596
          %v3689 = vpack.c.b16 %v3601, %v3599
          %v3690 = vpack.c.b16 %v3602, %v3600
          %v3691 = vpack.c.b16 %v3605, %v3603
          %v3692 = vpack.c.b16 %v3606, %v3604
          %v3693 = vpack.c.b16 %v3609, %v3607
          %v3694 = vpack.c.b16 %v3610, %v3608
          %v3695 = vpack.c.b16 %v3613, %v3611
          %v3696 = vpack.c.b16 %v3614, %v3612
          %v3697 = vpack.c.b16 %v3617, %v3615
          %v3698 = vpack.c.b16 %v3618, %v3616
          %v3699 = vpack.c.b16 %v3621, %v3619
          %v3700 = vpack.c.b16 %v3622, %v3620
          %v3701 = vpack.c.b16 %v3625, %v3623
          %v3702 = vpack.c.b16 %v3626, %v3624
          %v3703 = vpack.c.b16 %v3629, %v3627
          %v3704 = vpack.c.b16 %v3630, %v3628
          %v3705 = vpack.c.b16 %v3633, %v3631
          %v3706 = vpack.c.b16 %v3634, %v3632
          %v3707 = vpack.c.b16 %v3637, %v3635
          %v3708 = vpack.c.b16 %v3638, %v3636
          %v3709 = vpack.c.b16 %v3641, %v3639
          %v3710 = vpack.c.b16 %v3642, %v3640
          %v3711 = vpack.c.b16 %v3645, %v3643
          %v3712 = vpack.c.b16 %v3646, %v3644
          %v3713 = vpack.c.b16 %v3649, %v3647
          %v3714 = vpack.c.b16 %v3650, %v3648
          %v3780 = vlaneseq
          %v3781 = vshrl.u32 %v3780, 7
          %v3782 = vsub.s32 0, %v3781
          %v3783 = vrot.slane %v3458, %v3782
          %v3784 = vlaneseq
          %v3785 = vshrl.u32 %v3784, 7
          %v3786 = vsub.s32 1, %v3785
          %v3787 = vrot.slane %v3458, %v3786
          %3790 = vmatprep.subr.bf16.mxu0 %v3666
          %3791 = vmatpush1.bf16.msra.mxu0 %v3665
          %3792 = vmatprep.subr.bf16.mxu0 %v3664
          %3793 = vmatpush1.bf16.msra.mxu0 %v3663
          %3794 = vmatprep.subr.bf16.mxu0 %v3662
          %3795 = vmatpush1.bf16.msra.mxu0 %v3661
          %3796 = vmatprep.subr.bf16.mxu0 %v3660
          %3797 = vmatpush1.bf16.msra.mxu0 %v3659
          %3798 = vmatprep.subr.bf16.mxu0 %v3658
          %3799 = vmatpush1.bf16.msra.mxu0 %v3657
          %3800 = vmatprep.subr.bf16.mxu0 %v3656
          %3801 = vmatpush1.bf16.msra.mxu0 %v3655
          %3802 = vmatprep.subr.bf16.mxu0 %v3654
          %3803 = vmatpush1.bf16.msra.mxu0 %v3653
          %3804 = vmatprep.subr.bf16.mxu0 %v3652
          %3805 = vmatpush1.bf16.msra.mxu0 %v3651
          %3806 = vmatprep.subr.bf16.mxu0 %v3682
          %3807 = vmatpush2.bf16.msra.mxu0 %v3681
          %3808 = vmatprep.subr.bf16.mxu0 %v3680
          %3809 = vmatpush2.bf16.msra.mxu0 %v3679
          %3810 = vmatprep.subr.bf16.mxu0 %v3678
          %3811 = vmatpush2.bf16.msra.mxu0 %v3677
          %3812 = vmatprep.subr.bf16.mxu0 %v3676
          %3813 = vmatpush2.bf16.msra.mxu0 %v3675
          %3814 = vmatprep.subr.bf16.mxu0 %v3674
          %3815 = vmatpush2.bf16.msra.mxu0 %v3673
          %3816 = vmatprep.subr.bf16.mxu0 %v3672
          %3817 = vmatpush2.bf16.msra.mxu0 %v3671
          %3818 = vmatprep.subr.bf16.mxu0 %v3670
          %3819 = vmatpush2.bf16.msra.mxu0 %v3669
          %3820 = vmatprep.subr.bf16.mxu0 %v3668
          %3821 = vmatpush2.bf16.msra.mxu0 %v3667
          %3822 = vmatprep.mubr.bf16.mxu0 %v3391
          %3823 = vmatmul.mubr.bf16.gmra.mxu0 %v3390
          %v3824 = vpop.f32.mrf.mxu0
          %v3825 = vadd.f32 %v3783, %v3824
          %v3826 = vpop.f32.mrf.mxu0
          %v3827 = vadd.f32 %v3787, %v3826
          %v3828 = vpop.f32.mrf.mxu0
          %v3829 = vpop.f32.mrf.mxu0
          %3830 = vdwg.mxu0
          %3831 = vmatprep.subr.bf16.mxu0 %v3698
          %3832 = vmatpush1.bf16.msra.mxu0 %v3697
          %3833 = vmatprep.subr.bf16.mxu0 %v3696
          %3834 = vmatpush1.bf16.msra.mxu0 %v3695
          %3835 = vmatprep.subr.bf16.mxu0 %v3694
          %3836 = vmatpush1.bf16.msra.mxu0 %v3693
          %3837 = vmatprep.subr.bf16.mxu0 %v3692
          %3838 = vmatpush1.bf16.msra.mxu0 %v3691
          %3839 = vmatprep.subr.bf16.mxu0 %v3690
          %3840 = vmatpush1.bf16.msra.mxu0 %v3689
          %3841 = vmatprep.subr.bf16.mxu0 %v3688
          %3842 = vmatpush1.bf16.msra.mxu0 %v3687
          %3843 = vmatprep.subr.bf16.mxu0 %v3686
          %3844 = vmatpush1.bf16.msra.mxu0 %v3685
          %3845 = vmatprep.subr.bf16.mxu0 %v3684
          %3846 = vmatpush1.bf16.msra.mxu0 %v3683
          %3847 = vmatprep.subr.bf16.mxu0 %v3714
          %3848 = vmatpush2.bf16.msra.mxu0 %v3713
          %3849 = vmatprep.subr.bf16.mxu0 %v3712
          %3850 = vmatpush2.bf16.msra.mxu0 %v3711
          %3851 = vmatprep.subr.bf16.mxu0 %v3710
          %3852 = vmatpush2.bf16.msra.mxu0 %v3709
          %3853 = vmatprep.subr.bf16.mxu0 %v3708
          %3854 = vmatpush2.bf16.msra.mxu0 %v3707
          %3855 = vmatprep.subr.bf16.mxu0 %v3706
          %3856 = vmatpush2.bf16.msra.mxu0 %v3705
          %3857 = vmatprep.subr.bf16.mxu0 %v3704
          %3858 = vmatpush2.bf16.msra.mxu0 %v3703
          %3859 = vmatprep.subr.bf16.mxu0 %v3702
          %3860 = vmatpush2.bf16.msra.mxu0 %v3701
          %3861 = vmatprep.subr.bf16.mxu0 %v3700
          %3862 = vmatpush2.bf16.msra.mxu0 %v3699
          %3863 = vmatprep.mubr.bf16.mxu0 %v3393
          %3864 = vmatmul.mubr.bf16.gmra.mxu0 %v3392
          %v3865 = vpop.f32.mrf.mxu0
          %v3866 = vadd.f32 %v3825, %v3865
          %v3867 = vpop.f32.mrf.mxu0
          %v3868 = vadd.f32 %v3827, %v3867
          %v3869 = vpop.f32.mrf.mxu0
          %v3870 = vpop.f32.mrf.mxu0
          %3871 = vdwg.mxu0
          %v3872 = vmax.f32 %v3866, 0.0
          %v3873 = vmax.f32 %v3868, 0.0
          %v3874 = vpack.c.bf16 %v3872, %v3872
          %v3875 = vpack.c.bf16 %v3873, %v3873
          %v3876 = vld [vmem:[#allocation8] sm:$0xf]
          %v3877 = vld [vmem:[#allocation8 + $0x4] sm:$0xf]
          %v3878 = vld [vmem:[#allocation8 + $0x8] sm:$0xf]
          %v3879 = vld [vmem:[#allocation8 + $0xc] sm:$0xf]
          %v3880 = vld [vmem:[#allocation8 + $0x10] sm:$0xf]
          %v3881 = vld [vmem:[#allocation8 + $0x14] sm:$0xf]
          %v3882 = vld [vmem:[#allocation8 + $0x18] sm:$0xf]
          %v3883 = vld [vmem:[#allocation8 + $0x1c] sm:$0xf]
          %v3884 = vld [vmem:[#allocation8 + $0x20] sm:$0xf]
          %v3885 = vld [vmem:[#allocation8 + $0x24] sm:$0xf]
          %v3886 = vld [vmem:[#allocation8 + $0x28] sm:$0xf]
          %v3887 = vld [vmem:[#allocation8 + $0x2c] sm:$0xf]
          %v3888 = vld [vmem:[#allocation8 + $0x30] sm:$0xf]
          %v3889 = vld [vmem:[#allocation8 + $0x34] sm:$0xf]
          %v3890 = vld [vmem:[#allocation8 + $0x38] sm:$0xf]
          %v3891 = vld [vmem:[#allocation8 + $0x3c] sm:$0xf]
          %v3892 = vld [vmem:[#allocation8 + $0x40] sm:$0xf]
          %v3893 = vld [vmem:[#allocation8 + $0x44] sm:$0xf]
          %v3894 = vld [vmem:[#allocation8 + $0x48] sm:$0xf]
          %v3895 = vld [vmem:[#allocation8 + $0x4c] sm:$0xf]
          %v3896 = vld [vmem:[#allocation8 + $0x50] sm:$0xf]
          %v3897 = vld [vmem:[#allocation8 + $0x54] sm:$0xf]
          %v3898 = vld [vmem:[#allocation8 + $0x58] sm:$0xf]
          %v3899 = vld [vmem:[#allocation8 + $0x5c] sm:$0xf]
          %v3900 = vld [vmem:[#allocation8 + $0x60] sm:$0xf]
          %v3901 = vld [vmem:[#allocation8 + $0x64] sm:$0xf]
          %v3902 = vld [vmem:[#allocation8 + $0x68] sm:$0xf]
          %v3903 = vld [vmem:[#allocation8 + $0x6c] sm:$0xf]
          %v3904 = vld [vmem:[#allocation8 + $0x70] sm:$0xf]
          %v3905 = vld [vmem:[#allocation8 + $0x74] sm:$0xf]
          %v3906 = vld [vmem:[#allocation8 + $0x78] sm:$0xf]
          %v3907 = vld [vmem:[#allocation8 + $0x7c] sm:$0xf]
          %v3908 = vld [vmem:[%s12] sm:$0x1]
          %v3941 = vunpack.c.l.b16 %v3876
          %v3942 = vunpack.c.l.b16 %v3877
          %v3943 = vunpack.c.l.b16 %v3878
          %v3944 = vunpack.c.l.b16 %v3879
          %v3945 = vunpack.c.l.b16 %v3880
          %v3946 = vunpack.c.l.b16 %v3881
          %v3947 = vunpack.c.l.b16 %v3882
          %v3948 = vunpack.c.l.b16 %v3883
          %v3949 = vunpack.c.l.b16 %v3884
          %v3950 = vunpack.c.l.b16 %v3885
          %v3951 = vunpack.c.l.b16 %v3886
          %v3952 = vunpack.c.l.b16 %v3887
          %v3953 = vunpack.c.l.b16 %v3888
          %v3954 = vunpack.c.l.b16 %v3889
          %v3955 = vunpack.c.l.b16 %v3890
          %v3956 = vunpack.c.l.b16 %v3891
          %v3957 = vunpack.c.l.b16 %v3892
          %v3958 = vunpack.c.l.b16 %v3893
          %v3959 = vunpack.c.l.b16 %v3894
          %v3960 = vunpack.c.l.b16 %v3895
          %v3961 = vunpack.c.l.b16 %v3896
          %v3962 = vunpack.c.l.b16 %v3897
          %v3963 = vunpack.c.l.b16 %v3898
          %v3964 = vunpack.c.l.b16 %v3899
          %v3965 = vunpack.c.l.b16 %v3900
          %v3966 = vunpack.c.l.b16 %v3901
          %v3967 = vunpack.c.l.b16 %v3902
          %v3968 = vunpack.c.l.b16 %v3903
          %v3969 = vunpack.c.l.b16 %v3904
          %v3970 = vunpack.c.l.b16 %v3905
          %v3971 = vunpack.c.l.b16 %v3906
          %v3972 = vunpack.c.l.b16 %v3907
          %v3973 = vpack.c.b16 %v3942, %v3941
          %v3974 = vpack.c.b16 %v3944, %v3943
          %v3975 = vpack.c.b16 %v3946, %v3945
          %v3976 = vpack.c.b16 %v3948, %v3947
          %v3977 = vpack.c.b16 %v3950, %v3949
          %v3978 = vpack.c.b16 %v3952, %v3951
          %v3979 = vpack.c.b16 %v3954, %v3953
          %v3980 = vpack.c.b16 %v3956, %v3955
          %v3981 = vpack.c.b16 %v3958, %v3957
          %v3982 = vpack.c.b16 %v3960, %v3959
          %v3983 = vpack.c.b16 %v3962, %v3961
          %v3984 = vpack.c.b16 %v3964, %v3963
          %v3985 = vpack.c.b16 %v3966, %v3965
          %v3986 = vpack.c.b16 %v3968, %v3967
          %v3987 = vpack.c.b16 %v3970, %v3969
          %v3988 = vpack.c.b16 %v3972, %v3971
          %4005 = vmatprep.subr.bf16.mxu0 0
          %4006 = vmatpush1.bf16.msra.mxu0 %v3980
          %4007 = vmatprep.subr.bf16.mxu0 0
          %4008 = vmatpush1.bf16.msra.mxu0 %v3979
          %4009 = vmatprep.subr.bf16.mxu0 0
          %4010 = vmatpush1.bf16.msra.mxu0 %v3978
          %4011 = vmatprep.subr.bf16.mxu0 0
          %4012 = vmatpush1.bf16.msra.mxu0 %v3977
          %4013 = vmatprep.subr.bf16.mxu0 0
          %4014 = vmatpush1.bf16.msra.mxu0 %v3976
          %4015 = vmatprep.subr.bf16.mxu0 0
          %4016 = vmatpush1.bf16.msra.mxu0 %v3975
          %4017 = vmatprep.subr.bf16.mxu0 0
          %4018 = vmatpush1.bf16.msra.mxu0 %v3974
          %4019 = vmatprep.subr.bf16.mxu0 0
          %4020 = vmatpush1.bf16.msra.mxu0 %v3973
          %4021 = vmatprep.subr.bf16.mxu0 0
          %4022 = vmatpush2.bf16.msra.mxu0 %v3988
          %4023 = vmatprep.subr.bf16.mxu0 0
          %4024 = vmatpush2.bf16.msra.mxu0 %v3987
          %4025 = vmatprep.subr.bf16.mxu0 0
          %4026 = vmatpush2.bf16.msra.mxu0 %v3986
          %4027 = vmatprep.subr.bf16.mxu0 0
          %4028 = vmatpush2.bf16.msra.mxu0 %v3985
          %4029 = vmatprep.subr.bf16.mxu0 0
          %4030 = vmatpush2.bf16.msra.mxu0 %v3984
          %4031 = vmatprep.subr.bf16.mxu0 0
          %4032 = vmatpush2.bf16.msra.mxu0 %v3983
          %4033 = vmatprep.subr.bf16.mxu0 0
          %4034 = vmatpush2.bf16.msra.mxu0 %v3982
          %4035 = vmatprep.subr.bf16.mxu0 0
          %4036 = vmatpush2.bf16.msra.mxu0 %v3981
          %4037 = vmatprep.mubr.bf16.mxu0 %v3875
          %4038 = vmatmul.mubr.bf16.gmra.mxu0 %v3874
          %v4039 = vpop.f32.mrf.mxu0
          %v4040 = vadd.f32 %v3908, %v4039
          %v4041 = vpop.f32.mrf.mxu0
          %v4042 = vpop.f32.mrf.mxu0
          %v4043 = vpop.f32.mrf.mxu0
          %4044 = vdwg.mxu0
          %4045 = vst [vmem:[%s523] sm:$0x1] %v4040
        $region96: #{pointnet_forward.2} parent=71 // pred_fallthru
          _
        %p4046 = scmp.lt.s32.totalorder %s31, 1
        %s4047 = scalar_select %p4046, %s31, 1
        %s4048 = scalar_lea.vmem %s13, %s4047
        // Predicated region
        $region97: #{pointnet_forward.2} parent=71 // pred_check
          %p4049 = pneg %p337
        $region98: #{pointnet_forward.2} parent=71 // pred_check_branch
          %4051 = sbr.rel (%p4049) target = $region100
        $region99: #{pointnet_forward.2} parent=71 // pred_region
          _
        $region100: #{pointnet_forward.2} parent=71 // pred_fallthru
          _
      $region72: #{pointnet_forward.2} parent=5 // pred_fallthru
        _
      %p4052 = scmp.le.s32.totalorder 2, %s22
      // Predicated region
      $region101: #{pointnet_forward.2} parent=5 // pred_check
        %p4053 = pneg %p4052
      $region102: #{pointnet_forward.2} parent=5 // pred_check_branch
        %4055 = sbr.rel (%p4053) target = $region104
      $region103: #{pointnet_forward.2} parent=5 // pred_region
        %s4056 = ssub.s32 %s22, 2
        // Predicated region
        $region105: #{pointnet_forward.2} parent=103 // pred_check
          %p4057 = pneg %p343
        $region106: #{pointnet_forward.2} parent=103 // pred_check_branch
          %4059 = sbr.rel (%p4057) target = $region108
        $region107: #{pointnet_forward.2} parent=103 // pred_region
          %p4060 = scmp.lt.s32.totalorder %s33, 1
          %s4061 = scalar_select %p4060, %s33, 1
          %s4062 = scalar_lea.vmem %s13, %s4061
        $region108: #{pointnet_forward.2} parent=103 // pred_fallthru
          _
      $region104: #{pointnet_forward.2} parent=5 // pred_fallthru
        _
    $region6: #{pointnet_forward.2} parent=1 // loop_footer
      %s26 = sadd.s32 1, %s22
    $region7: #{pointnet_forward.2} parent=1 // loop_footer_branch
      %21 = sbr.rel target = $region3
    $region8: #{pointnet_forward.2} parent=1 // loop_exit
      _
    %4063 = vsyncpa [#allocation4], 1
    %s4064 = scalar_lea.sflag [#allocation4], 1
    %4065 = vsyncpa %s4064, 1
    %4066 = vsyncpa [#allocation6], 1
    %4067 = vsyncpa [#allocation9], 1

// kernel: pointnet_forward.3
$region0: #{pointnet_forward.3}
  #allocation0 [shape = 'u32[]', space=smem, size = 0x4, offset = 0x4, fixed_abs, tag = 'smem constant byte address 0x4 - core index']
  #allocation1 [shape = 'u32[144,128]{1,0:T(1,128)}', space=vmem, size = 0x12000, scoped, tag = 'internal scratch']
  #allocation2 [shape = 'f32[1,1024]{1,0:T(1,128)}', space=vmem, size = 0x1000, scoped, tag = 'scratch operand']
  %s0 = inlined_call_operand.vmem [shape: f32[2,16,3], index: 0, kind: input, shape index: {}]
  %s1 = inlined_call_operand.vmem [shape: f32[2,3,3], index: 1, kind: input, shape index: {}]
  %s2 = inlined_call_operand.vmem [shape: f32[3,64], index: 2, kind: input, shape index: {}]
  %s3 = inlined_call_operand.vmem [shape: f32[1,64], index: 3, kind: input, shape index: {}]
  %s4 = inlined_call_operand.vmem [shape: bf16[64,128], index: 4, kind: input, shape index: {}]
  %s5 = inlined_call_operand.vmem [shape: f32[1,128], index: 5, kind: input, shape index: {}]
  %s6 = inlined_call_operand.vmem [shape: bf16[128,1024], index: 6, kind: input, shape index: {}]
  %s7 = inlined_call_operand.vmem [shape: f32[1,1024], index: 7, kind: input, shape index: {}]
  %s8 = inlined_call_operand.vmem [shape: bf16[1024,512], index: 8, kind: input, shape index: {}]
  %s9 = inlined_call_operand.vmem [shape: f32[1,512], index: 9, kind: input, shape index: {}]
  %s10 = inlined_call_operand.vmem [shape: bf16[512,256], index: 10, kind: input, shape index: {}]
  %s11 = inlined_call_operand.vmem [shape: f32[1,256], index: 11, kind: input, shape index: {}]
  %s12 = inlined_call_operand.vmem [shape: bf16[256,128], index: 12, kind: input, shape index: {}]
  %s13 = inlined_call_operand.vmem [shape: f32[1,128], index: 13, kind: input, shape index: {}]
  %s14 = inlined_call_operand.hbm [shape: f32[2,1,128], index: 14, kind: output, shape index: {}]
  %s15 = sld [smem:[#allocation0]]
  $region97: #{pointnet_forward.3} parent=0
    _
  %s17 = ssub.s32 1, %s15
  %s18 = scalar_select 0, %s17, %s15
  $region1: #{pointnet_forward.3} parent=0
    #allocation3 [shape = 'u8[1024]{0}', space=vmem, size = 0x400, scoped, tag = 'output window, operand 0']
    #allocation4 [shape = 's32[2]{0}', space=sflag, size = 0x8, scoped, tag = 'scoped memory for pointnet_forward.3']
    %19 = vsyncpa [#allocation4], 0
    %s20 = scalar_lea.sflag [#allocation4], 1
    %21 = vsyncpa %s20, 0
    loop: start=0, step=1, limit=4
    $region2: #{pointnet_forward.3} parent=1 // loop_pre_header
      _
    $region3: #{pointnet_forward.3} parent=1 // loop_header
      %s23 = sphi 0, %s27
      %p24 = scmp.ge.s32.totalorder %s23, 4
      %s30 = sphi 0, %s42
      %s31 = sphi 0, %s38
      %s32 = sphi 0, %s30
      %s33 = sphi 0, %s31
      %s34 = sphi 0, %s32
      %s35 = sphi 0, %s33
      %s47 = sphi 0, %s49
      %s50 = sphi 0, %s47
      %s51 = sphi 0, %s50
      %s67 = sphi 0, %s51
      %s73 = sphi 0, %s75
      %s76 = sphi 0, %s73
      %s77 = sphi 0, %s76
      %s93 = sphi 0, %s77
      %s97 = sphi 0, %s97
      %s99 = sphi 0, %s97
      %s100 = sphi 0, %s99
      %s114 = sphi 0, %s100
      %s118 = sphi 0, %s118
      %s120 = sphi 0, %s118
      %s121 = sphi 0, %s120
      %s135 = sphi 0, %s121
      %s139 = sphi 0, %s139
      %s141 = sphi 0, %s139
      %s142 = sphi 0, %s141
      %s156 = sphi 0, %s142
      %s160 = sphi 0, %s160
      %s162 = sphi 0, %s160
      %s163 = sphi 0, %s162
      %s177 = sphi 0, %s163
      %s181 = sphi 0, %s181
      %s183 = sphi 0, %s181
      %s184 = sphi 0, %s183
      %s198 = sphi 0, %s184
      %s202 = sphi 0, %s202
      %s204 = sphi 0, %s202
      %s205 = sphi 0, %s204
      %s219 = sphi 0, %s205
      %s223 = sphi 0, %s223
      %s225 = sphi 0, %s223
      %s226 = sphi 0, %s225
      %s240 = sphi 0, %s226
      %s244 = sphi 0, %s244
      %s246 = sphi 0, %s244
      %s247 = sphi 0, %s246
      %s261 = sphi 0, %s247
      %s265 = sphi 0, %s265
      %s267 = sphi 0, %s265
      %s268 = sphi 0, %s267
      %s282 = sphi 0, %s268
      %s286 = sphi 0, %s286
      %s288 = sphi 0, %s286
      %s289 = sphi 0, %s288
      %s303 = sphi 0, %s289
      %s307 = sphi 0, %s307
      %s309 = sphi 0, %s307
      %s310 = sphi 0, %s309
      %s324 = sphi 0, %s310
      %s328 = sphi 0, %s328
      %s330 = sphi 0, %s328
      %s331 = sphi 0, %s330
      %s345 = sphi 0, %s331
      %s351 = sphi 0, %s353
      %s354 = sphi 0, %s351
      %s355 = sphi 0, %s354
      %s371 = sphi 0, %s355
    $region4: #{pointnet_forward.3} parent=1 // loop_header_branch
      %26 = sbr.rel (%p24) target = $region8
    $region5: #{pointnet_forward.3} parent=1 // loop_body
      %s28 = ssub.s32 %s23, 1
      %s29 = ssub.s32 %s23, 2
      %s36 = sadd.s32 1, %s31
      %p37 = scmp.ge.s32.totalorder %s36, 1
      %s38 = scalar_select %p37, 0, %s36
      %s39 = sadd.s32 1, %s30
      %s40 = scalar_select %p37, %s39, %s30
      %p41 = scmp.ge.s32.totalorder %s40, 2
      %s42 = scalar_select %p41, 0, %s40
      %s43 = ssub.s32 %s30, %s42
      %s44 = ssub.s32 %s31, %s38
      %s45 = sor.u32 %s43, %s44
      %p46 = scmp.eq.s32.totalorder %s45, 0
      %s48 = sadd.s32 %s47, 1
      %s49 = scalar_select %p46, %s47, %s48
      %p52 = pneg %p46
      %p53 = scmp.eq.s32.totalorder %s23, 1
      %p54 = por %p52, %p53
      %p55 = scmp.ne.s32.totalorder %s47, %s50
      %p56 = scmp.eq.s32.totalorder %s23, 0
      %p57 = por %p55, %p56
      %p58 = scmp.ne.s32.totalorder %s47, %s50
      %p59 = scmp.eq.s32.totalorder %s28, 1
      %p60 = por %p58, %p59
      %p61 = scmp.ne.s32.totalorder %s50, %s51
      %p62 = scmp.eq.s32.totalorder %s28, 0
      %p63 = por %p61, %p62
      %p64 = scmp.ne.s32.totalorder %s50, %s51
      %p65 = scmp.eq.s32.totalorder %s29, 1
      %p66 = por %p64, %p65
      %p68 = scmp.ne.s32.totalorder %s51, %s67
      %p69 = scmp.eq.s32.totalorder %s29, 0
      %p70 = por %p68, %p69
      %s71 = ssub.s32 %s30, %s42
      %p72 = scmp.eq.s32.totalorder %s71, 0
      %s74 = sadd.s32 %s73, 1
      %s75 = scalar_select %p72, %s73, %s74
      %p78 = pneg %p72
      %p79 = scmp.eq.s32.totalorder %s23, 1
      %p80 = por %p78, %p79
      %p81 = scmp.ne.s32.totalorder %s73, %s76
      %p82 = scmp.eq.s32.totalorder %s23, 0
      %p83 = por %p81, %p82
      %p84 = scmp.ne.s32.totalorder %s73, %s76
      %p85 = scmp.eq.s32.totalorder %s28, 1
      %p86 = por %p84, %p85
      %p87 = scmp.ne.s32.totalorder %s76, %s77
      %p88 = scmp.eq.s32.totalorder %s28, 0
      %p89 = por %p87, %p88
      %p90 = scmp.ne.s32.totalorder %s76, %s77
      %p91 = scmp.eq.s32.totalorder %s29, 1
      %p92 = por %p90, %p91
      %p94 = scmp.ne.s32.totalorder %s77, %s93
      %p95 = scmp.eq.s32.totalorder %s29, 0
      %p96 = por %p94, %p95
      %s98 = sadd.s32 %s97, 1
      %p101 = scmp.eq.s32.totalorder %s23, 1
      %p102 = scmp.ne.s32.totalorder %s97, %s99
      %p103 = scmp.eq.s32.totalorder %s23, 0
      %p104 = por %p102, %p103
      %p105 = scmp.ne.s32.totalorder %s97, %s99
      %p106 = scmp.eq.s32.totalorder %s28, 1
      %p107 = por %p105, %p106
      %p108 = scmp.ne.s32.totalorder %s99, %s100
      %p109 = scmp.eq.s32.totalorder %s28, 0
      %p110 = por %p108, %p109
      %p111 = scmp.ne.s32.totalorder %s99, %s100
      %p112 = scmp.eq.s32.totalorder %s29, 1
      %p113 = por %p111, %p112
      %p115 = scmp.ne.s32.totalorder %s100, %s114
      %p116 = scmp.eq.s32.totalorder %s29, 0
      %p117 = por %p115, %p116
      %s119 = sadd.s32 %s118, 1
      %p122 = scmp.eq.s32.totalorder %s23, 1
      %p123 = scmp.ne.s32.totalorder %s118, %s120
      %p124 = scmp.eq.s32.totalorder %s23, 0
      %p125 = por %p123, %p124
      %p126 = scmp.ne.s32.totalorder %s118, %s120
      %p127 = scmp.eq.s32.totalorder %s28, 1
      %p128 = por %p126, %p127
      %p129 = scmp.ne.s32.totalorder %s120, %s121
      %p130 = scmp.eq.s32.totalorder %s28, 0
      %p131 = por %p129, %p130
      %p132 = scmp.ne.s32.totalorder %s120, %s121
      %p133 = scmp.eq.s32.totalorder %s29, 1
      %p134 = por %p132, %p133
      %p136 = scmp.ne.s32.totalorder %s121, %s135
      %p137 = scmp.eq.s32.totalorder %s29, 0
      %p138 = por %p136, %p137
      %s140 = sadd.s32 %s139, 1
      %p143 = scmp.eq.s32.totalorder %s23, 1
      %p144 = scmp.ne.s32.totalorder %s139, %s141
      %p145 = scmp.eq.s32.totalorder %s23, 0
      %p146 = por %p144, %p145
      %p147 = scmp.ne.s32.totalorder %s139, %s141
      %p148 = scmp.eq.s32.totalorder %s28, 1
      %p149 = por %p147, %p148
      %p150 = scmp.ne.s32.totalorder %s141, %s142
      %p151 = scmp.eq.s32.totalorder %s28, 0
      %p152 = por %p150, %p151
      %p153 = scmp.ne.s32.totalorder %s141, %s142
      %p154 = scmp.eq.s32.totalorder %s29, 1
      %p155 = por %p153, %p154
      %p157 = scmp.ne.s32.totalorder %s142, %s156
      %p158 = scmp.eq.s32.totalorder %s29, 0
      %p159 = por %p157, %p158
      %s161 = sadd.s32 %s160, 1
      %p164 = scmp.eq.s32.totalorder %s23, 1
      %p165 = scmp.ne.s32.totalorder %s160, %s162
      %p166 = scmp.eq.s32.totalorder %s23, 0
      %p167 = por %p165, %p166
      %p168 = scmp.ne.s32.totalorder %s160, %s162
      %p169 = scmp.eq.s32.totalorder %s28, 1
      %p170 = por %p168, %p169
      %p171 = scmp.ne.s32.totalorder %s162, %s163
      %p172 = scmp.eq.s32.totalorder %s28, 0
      %p173 = por %p171, %p172
      %p174 = scmp.ne.s32.totalorder %s162, %s163
      %p175 = scmp.eq.s32.totalorder %s29, 1
      %p176 = por %p174, %p175
      %p178 = scmp.ne.s32.totalorder %s163, %s177
      %p179 = scmp.eq.s32.totalorder %s29, 0
      %p180 = por %p178, %p179
      %s182 = sadd.s32 %s181, 1
      %p185 = scmp.eq.s32.totalorder %s23, 1
      %p186 = scmp.ne.s32.totalorder %s181, %s183
      %p187 = scmp.eq.s32.totalorder %s23, 0
      %p188 = por %p186, %p187
      %p189 = scmp.ne.s32.totalorder %s181, %s183
      %p190 = scmp.eq.s32.totalorder %s28, 1
      %p191 = por %p189, %p190
      %p192 = scmp.ne.s32.totalorder %s183, %s184
      %p193 = scmp.eq.s32.totalorder %s28, 0
      %p194 = por %p192, %p193
      %p195 = scmp.ne.s32.totalorder %s183, %s184
      %p196 = scmp.eq.s32.totalorder %s29, 1
      %p197 = por %p195, %p196
      %p199 = scmp.ne.s32.totalorder %s184, %s198
      %p200 = scmp.eq.s32.totalorder %s29, 0
      %p201 = por %p199, %p200
      %s203 = sadd.s32 %s202, 1
      %p206 = scmp.eq.s32.totalorder %s23, 1
      %p207 = scmp.ne.s32.totalorder %s202, %s204
      %p208 = scmp.eq.s32.totalorder %s23, 0
      %p209 = por %p207, %p208
      %p210 = scmp.ne.s32.totalorder %s202, %s204
      %p211 = scmp.eq.s32.totalorder %s28, 1
      %p212 = por %p210, %p211
      %p213 = scmp.ne.s32.totalorder %s204, %s205
      %p214 = scmp.eq.s32.totalorder %s28, 0
      %p215 = por %p213, %p214
      %p216 = scmp.ne.s32.totalorder %s204, %s205
      %p217 = scmp.eq.s32.totalorder %s29, 1
      %p218 = por %p216, %p217
      %p220 = scmp.ne.s32.totalorder %s205, %s219
      %p221 = scmp.eq.s32.totalorder %s29, 0
      %p222 = por %p220, %p221
      %s224 = sadd.s32 %s223, 1
      %p227 = scmp.eq.s32.totalorder %s23, 1
      %p228 = scmp.ne.s32.totalorder %s223, %s225
      %p229 = scmp.eq.s32.totalorder %s23, 0
      %p230 = por %p228, %p229
      %p231 = scmp.ne.s32.totalorder %s223, %s225
      %p232 = scmp.eq.s32.totalorder %s28, 1
      %p233 = por %p231, %p232
      %p234 = scmp.ne.s32.totalorder %s225, %s226
      %p235 = scmp.eq.s32.totalorder %s28, 0
      %p236 = por %p234, %p235
      %p237 = scmp.ne.s32.totalorder %s225, %s226
      %p238 = scmp.eq.s32.totalorder %s29, 1
      %p239 = por %p237, %p238
      %p241 = scmp.ne.s32.totalorder %s226, %s240
      %p242 = scmp.eq.s32.totalorder %s29, 0
      %p243 = por %p241, %p242
      %s245 = sadd.s32 %s244, 1
      %p248 = scmp.eq.s32.totalorder %s23, 1
      %p249 = scmp.ne.s32.totalorder %s244, %s246
      %p250 = scmp.eq.s32.totalorder %s23, 0
      %p251 = por %p249, %p250
      %p252 = scmp.ne.s32.totalorder %s244, %s246
      %p253 = scmp.eq.s32.totalorder %s28, 1
      %p254 = por %p252, %p253
      %p255 = scmp.ne.s32.totalorder %s246, %s247
      %p256 = scmp.eq.s32.totalorder %s28, 0
      %p257 = por %p255, %p256
      %p258 = scmp.ne.s32.totalorder %s246, %s247
      %p259 = scmp.eq.s32.totalorder %s29, 1
      %p260 = por %p258, %p259
      %p262 = scmp.ne.s32.totalorder %s247, %s261
      %p263 = scmp.eq.s32.totalorder %s29, 0
      %p264 = por %p262, %p263
      %s266 = sadd.s32 %s265, 1
      %p269 = scmp.eq.s32.totalorder %s23, 1
      %p270 = scmp.ne.s32.totalorder %s265, %s267
      %p271 = scmp.eq.s32.totalorder %s23, 0
      %p272 = por %p270, %p271
      %p273 = scmp.ne.s32.totalorder %s265, %s267
      %p274 = scmp.eq.s32.totalorder %s28, 1
      %p275 = por %p273, %p274
      %p276 = scmp.ne.s32.totalorder %s267, %s268
      %p277 = scmp.eq.s32.totalorder %s28, 0
      %p278 = por %p276, %p277
      %p279 = scmp.ne.s32.totalorder %s267, %s268
      %p280 = scmp.eq.s32.totalorder %s29, 1
      %p281 = por %p279, %p280
      %p283 = scmp.ne.s32.totalorder %s268, %s282
      %p284 = scmp.eq.s32.totalorder %s29, 0
      %p285 = por %p283, %p284
      %s287 = sadd.s32 %s286, 1
      %p290 = scmp.eq.s32.totalorder %s23, 1
      %p291 = scmp.ne.s32.totalorder %s286, %s288
      %p292 = scmp.eq.s32.totalorder %s23, 0
      %p293 = por %p291, %p292
      %p294 = scmp.ne.s32.totalorder %s286, %s288
      %p295 = scmp.eq.s32.totalorder %s28, 1
      %p296 = por %p294, %p295
      %p297 = scmp.ne.s32.totalorder %s288, %s289
      %p298 = scmp.eq.s32.totalorder %s28, 0
      %p299 = por %p297, %p298
      %p300 = scmp.ne.s32.totalorder %s288, %s289
      %p301 = scmp.eq.s32.totalorder %s29, 1
      %p302 = por %p300, %p301
      %p304 = scmp.ne.s32.totalorder %s289, %s303
      %p305 = scmp.eq.s32.totalorder %s29, 0
      %p306 = por %p304, %p305
      %s308 = sadd.s32 %s307, 1
      %p311 = scmp.eq.s32.totalorder %s23, 1
      %p312 = scmp.ne.s32.totalorder %s307, %s309
      %p313 = scmp.eq.s32.totalorder %s23, 0
      %p314 = por %p312, %p313
      %p315 = scmp.ne.s32.totalorder %s307, %s309
      %p316 = scmp.eq.s32.totalorder %s28, 1
      %p317 = por %p315, %p316
      %p318 = scmp.ne.s32.totalorder %s309, %s310
      %p319 = scmp.eq.s32.totalorder %s28, 0
      %p320 = por %p318, %p319
      %p321 = scmp.ne.s32.totalorder %s309, %s310
      %p322 = scmp.eq.s32.totalorder %s29, 1
      %p323 = por %p321, %p322
      %p325 = scmp.ne.s32.totalorder %s310, %s324
      %p326 = scmp.eq.s32.totalorder %s29, 0
      %p327 = por %p325, %p326
      %s329 = sadd.s32 %s328, 1
      %p332 = scmp.eq.s32.totalorder %s23, 1
      %p333 = scmp.ne.s32.totalorder %s328, %s330
      %p334 = scmp.eq.s32.totalorder %s23, 0
      %p335 = por %p333, %p334
      %p336 = scmp.ne.s32.totalorder %s328, %s330
      %p337 = scmp.eq.s32.totalorder %s28, 1
      %p338 = por %p336, %p337
      %p339 = scmp.ne.s32.totalorder %s330, %s331
      %p340 = scmp.eq.s32.totalorder %s28, 0
      %p341 = por %p339, %p340
      %p342 = scmp.ne.s32.totalorder %s330, %s331
      %p343 = scmp.eq.s32.totalorder %s29, 1
      %p344 = por %p342, %p343
      %p346 = scmp.ne.s32.totalorder %s331, %s345
      %p347 = scmp.eq.s32.totalorder %s29, 0
      %p348 = por %p346, %p347
      %s349 = ssub.s32 %s30, %s42
      %p350 = scmp.eq.s32.totalorder %s349, 0
      %s352 = sadd.s32 %s351, 1
      %s353 = scalar_select %p350, %s351, %s352
      %p356 = pneg %p350
      %p357 = scmp.eq.s32.totalorder %s23, 1
      %p358 = por %p356, %p357
      %p359 = scmp.ne.s32.totalorder %s351, %s354
      %p360 = scmp.eq.s32.totalorder %s23, 0
      %p361 = por %p359, %p360
      %p362 = scmp.ne.s32.totalorder %s351, %s354
      %p363 = scmp.eq.s32.totalorder %s28, 1
      %p364 = por %p362, %p363
      %p365 = scmp.ne.s32.totalorder %s354, %s355
      %p366 = scmp.eq.s32.totalorder %s28, 0
      %p367 = por %p365, %p366
      %p368 = scmp.ne.s32.totalorder %s354, %s355
      %p369 = scmp.eq.s32.totalorder %s29, 1
      %p370 = por %p368, %p369
      %p372 = scmp.ne.s32.totalorder %s355, %s371
      %p373 = scmp.eq.s32.totalorder %s29, 0
      %p374 = por %p372, %p373
      %p375 = scmp.le.s32.totalorder 1, %s23
      %p376 = scmp.lt.s32.totalorder %s23, 3
      %p377 = pnand %p375, %p376
      %p378 = pneg %p377
      // Predicated region
      $region9: #{pointnet_forward.3} parent=5 // pred_check
        _
      $region10: #{pointnet_forward.3} parent=5 // pred_check_branch
        %380 = sbr.rel (%p377) target = $region12
      $region11: #{pointnet_forward.3} parent=5 // pred_region
        %s381 = ssub.s32 %s23, 1
        // Predicated region
        $region13: #{pointnet_forward.3} parent=11 // pred_check
          %p382 = pneg %p110
        $region14: #{pointnet_forward.3} parent=11 // pred_check_branch
          %384 = sbr.rel (%p382) target = $region16
        $region15: #{pointnet_forward.3} parent=11 // pred_region
          _
        $region16: #{pointnet_forward.3} parent=11 // pred_fallthru
          _
        // Predicated region
        $region17: #{pointnet_forward.3} parent=11 // pred_check
          %p385 = pneg %p131
        $region18: #{pointnet_forward.3} parent=11 // pred_check_branch
          %387 = sbr.rel (%p385) target = $region20
        $region19: #{pointnet_forward.3} parent=11 // pred_region
          _
        $region20: #{pointnet_forward.3} parent=11 // pred_fallthru
          _
        // Predicated region
        $region21: #{pointnet_forward.3} parent=11 // pred_check
          %p388 = pneg %p152
        $region22: #{pointnet_forward.3} parent=11 // pred_check_branch
          %390 = sbr.rel (%p388) target = $region24
        $region23: #{pointnet_forward.3} parent=11 // pred_region
          _
        $region24: #{pointnet_forward.3} parent=11 // pred_fallthru
          _
        // Predicated region
        $region25: #{pointnet_forward.3} parent=11 // pred_check
          %p391 = pneg %p173
        $region26: #{pointnet_forward.3} parent=11 // pred_check_branch
          %393 = sbr.rel (%p391) target = $region28
        $region27: #{pointnet_forward.3} parent=11 // pred_region
          _
        $region28: #{pointnet_forward.3} parent=11 // pred_fallthru
          _
        // Predicated region
        $region29: #{pointnet_forward.3} parent=11 // pred_check
          %p394 = pneg %p194
        $region30: #{pointnet_forward.3} parent=11 // pred_check_branch
          %396 = sbr.rel (%p394) target = $region32
        $region31: #{pointnet_forward.3} parent=11 // pred_region
          _
        $region32: #{pointnet_forward.3} parent=11 // pred_fallthru
          _
        // Predicated region
        $region33: #{pointnet_forward.3} parent=11 // pred_check
          %p397 = pneg %p215
        $region34: #{pointnet_forward.3} parent=11 // pred_check_branch
          %399 = sbr.rel (%p397) target = $region36
        $region35: #{pointnet_forward.3} parent=11 // pred_region
          _
        $region36: #{pointnet_forward.3} parent=11 // pred_fallthru
          _
        // Predicated region
        $region37: #{pointnet_forward.3} parent=11 // pred_check
          %p400 = pneg %p236
        $region38: #{pointnet_forward.3} parent=11 // pred_check_branch
          %402 = sbr.rel (%p400) target = $region40
        $region39: #{pointnet_forward.3} parent=11 // pred_region
          _
        $region40: #{pointnet_forward.3} parent=11 // pred_fallthru
          _
        // Predicated region
        $region41: #{pointnet_forward.3} parent=11 // pred_check
          %p403 = pneg %p257
        $region42: #{pointnet_forward.3} parent=11 // pred_check_branch
          %405 = sbr.rel (%p403) target = $region44
        $region43: #{pointnet_forward.3} parent=11 // pred_region
          _
        $region44: #{pointnet_forward.3} parent=11 // pred_fallthru
          _
        // Predicated region
        $region45: #{pointnet_forward.3} parent=11 // pred_check
          %p406 = pneg %p278
        $region46: #{pointnet_forward.3} parent=11 // pred_check_branch
          %408 = sbr.rel (%p406) target = $region48
        $region47: #{pointnet_forward.3} parent=11 // pred_region
          _
        $region48: #{pointnet_forward.3} parent=11 // pred_fallthru
          _
        // Predicated region
        $region49: #{pointnet_forward.3} parent=11 // pred_check
          %p409 = pneg %p299
        $region50: #{pointnet_forward.3} parent=11 // pred_check_branch
          %411 = sbr.rel (%p409) target = $region52
        $region51: #{pointnet_forward.3} parent=11 // pred_region
          _
        $region52: #{pointnet_forward.3} parent=11 // pred_fallthru
          _
        // Predicated region
        $region53: #{pointnet_forward.3} parent=11 // pred_check
          %p412 = pneg %p320
        $region54: #{pointnet_forward.3} parent=11 // pred_check_branch
          %414 = sbr.rel (%p412) target = $region56
        $region55: #{pointnet_forward.3} parent=11 // pred_region
          _
        $region56: #{pointnet_forward.3} parent=11 // pred_fallthru
          _
        // Predicated region
        $region57: #{pointnet_forward.3} parent=11 // pred_check
          %p415 = pneg %p341
        $region58: #{pointnet_forward.3} parent=11 // pred_check_branch
          %417 = sbr.rel (%p415) target = $region60
        $region59: #{pointnet_forward.3} parent=11 // pred_region
          _
        $region60: #{pointnet_forward.3} parent=11 // pred_fallthru
          _
      $region12: #{pointnet_forward.3} parent=5 // pred_fallthru
        _
      %p418 = scmp.lt.s32.totalorder %s23, 2
      // Predicated region
      $region61: #{pointnet_forward.3} parent=5 // pred_check
        %p419 = pneg %p418
      $region62: #{pointnet_forward.3} parent=5 // pred_check_branch
        %421 = sbr.rel (%p419) target = $region64
      $region63: #{pointnet_forward.3} parent=5 // pred_region
        // Predicated region
        $region65: #{pointnet_forward.3} parent=63 // pred_check
          %p422 = pneg %p57
        $region66: #{pointnet_forward.3} parent=63 // pred_check_branch
          %424 = sbr.rel (%p422) target = $region68
        $region67: #{pointnet_forward.3} parent=63 // pred_region
          %s425 = smul.u32 2, %s31
          %p426 = scmp.lt.s32.totalorder %s30, 1
          %s427 = scalar_select %p426, %s30, 1
          %p428 = scmp.lt.s32.totalorder %s425, 1
          %s429 = scalar_select %p428, %s425, 1
          %s430 = smul.addr %s427, 2
          %s431 = sadd.s32 %s429, %s430
          %s432 = smul.addr %s431, 8
          %s433 = scalar_lea.vmem %s0, %s432
          %s434 = smul.u32 2, %s31
        $region68: #{pointnet_forward.3} parent=63 // pred_fallthru
          _
        // Predicated region
        $region69: #{pointnet_forward.3} parent=63 // pred_check
          %p435 = pneg %p83
        $region70: #{pointnet_forward.3} parent=63 // pred_check_branch
          %437 = sbr.rel (%p435) target = $region72
        $region71: #{pointnet_forward.3} parent=63 // pred_region
          %p438 = scmp.lt.s32.totalorder %s30, 1
          %s439 = scalar_select %p438, %s30, 1
          %s440 = smul.addr %s439, 4
          %s441 = scalar_lea.vmem %s1, %s440
        $region72: #{pointnet_forward.3} parent=63 // pred_fallthru
          _
      $region64: #{pointnet_forward.3} parent=5 // pred_fallthru
        _
      %p442 = scmp.le.s32.totalorder 1, %s23
      %p443 = scmp.lt.s32.totalorder %s23, 3
      %p444 = pnand %p442, %p443
      %p445 = pneg %p444
      // Predicated region
      $region73: #{pointnet_forward.3} parent=5 // pred_check
        _
      $region74: #{pointnet_forward.3} parent=5 // pred_check_branch
        %447 = sbr.rel (%p444) target = $region76
      $region75: #{pointnet_forward.3} parent=5 // pred_region
        %s448 = ssub.s32 %s23, 1
        %s449 = smul.u32 2, %s33
        %p450 = scmp.lt.s32.totalorder %s32, 1
        %s451 = scalar_select %p450, %s32, 1
        %p452 = scmp.lt.s32.totalorder %s449, 1
        %s453 = scalar_select %p452, %s449, 1
        %s454 = smul.addr %s451, 2
        %s455 = sadd.s32 %s453, %s454
        %s456 = smul.addr %s455, 8
        %s457 = scalar_lea.vmem %s0, %s456
        %p458 = pneg %p63
        %p459 = pneg %p60
        %p460 = scmp.lt.s32.totalorder %s32, 1
        %s461 = scalar_select %p460, %s32, 1
        %s462 = smul.addr %s461, 4
        %s463 = scalar_lea.vmem %s1, %s462
        %p464 = pneg %p89
        %p465 = pneg %p86
        %p466 = pneg %p110
        %p467 = pneg %p107
        %p468 = pneg %p131
        %p469 = pneg %p128
        %p470 = pneg %p152
        %p471 = pneg %p149
        %p472 = pneg %p173
        %p473 = pneg %p170
        %p474 = pneg %p194
        %p475 = pneg %p191
        %p476 = pneg %p215
        %p477 = pneg %p212
        %p478 = pneg %p236
        %p479 = pneg %p233
        %p480 = pneg %p257
        %p481 = pneg %p254
        %p482 = pneg %p278
        %p483 = pneg %p275
        %p484 = pneg %p299
        %p485 = pneg %p296
        %p486 = pneg %p320
        %p487 = pneg %p317
        %p488 = pneg %p341
        %p489 = pneg %p338
        %p490 = pneg %p367
        %p491 = pneg %p364
        %s492 = sand.u32 %s354, 1
        %s493 = scalar_lea.sflag [#allocation4], %s492
        %s494 = sand.u32 %s354, 1
        %s495 = scalar_lea.vmem [#allocation3], %s494
        %s496 = smul.u32 2, %s33
        %p497 = scmp.lt.s32.totalorder %s32, 1
        %s498 = scalar_select %p497, %s32, 1
        %p499 = scmp.lt.s32.totalorder %s496, 1
        %s500 = scalar_select %p499, %s496, 1
        %s501 = smul.addr %s498, 2
        %s502 = sadd.s32 %s500, %s501
        %s503 = smul.addr %s502, 8
        %s504 = scalar_lea.vmem %s0, %s503
        %s505 = smul.u32 2, %s33
        %p506 = scmp.lt.s32.totalorder %s32, 1
        %s507 = scalar_select %p506, %s32, 1
        %s508 = smul.addr %s507, 4
        %s509 = scalar_lea.vmem %s1, %s508
        %v511 = vld [vmem:[%s509] sm:$0x7]
        %v512 = vld [vmem:[%s2] sm:$0x7]
        %vm513 = vcmask 23552
        %v515 = vsel %vm513, %v511, 0
        %vm517 = vcmask 1042432
        %v519 = vsel %vm517, %v512, 0
        %521 = vmatprep.subr.mxu0 0.0
        %522 = vmatpush1.msra.mxu0 0.0
        %523 = vmatprep.subr.mxu0 0.0
        %524 = vmatpush1.msra.mxu0 0.0
        %525 = vmatprep.subr.mxu0 0.0
        %526 = vmatpush1.msra.mxu0 0.0
        %527 = vmatprep.subr.mxu0 0.0
        %528 = vmatpush1.msra.mxu0 0.0
        %529 = vmatprep.subr.mxu0 0.0
        %530 = vmatpush1.msra.mxu0 0.0
        %531 = vmatprep.subr.mxu0 0.0
        %532 = vmatpush1.msra.mxu0 0.0
        %533 = vmatprep.subr.mxu0 0.0
        %534 = vmatpush1.msra.mxu0 0.0
        %535 = vmatprep.subr.mxu0 0.0
        %536 = vmatpush1.msra.mxu0 0.0
        %537 = vmatprep.subr.mxu0 0.0
        %538 = vmatpush1.msra.mxu0 0.0
        %539 = vmatprep.subr.mxu0 0.0
        %540 = vmatpush1.msra.mxu0 0.0
        %541 = vmatprep.subr.mxu0 0.0
        %542 = vmatpush1.msra.mxu0 0.0
        %543 = vmatprep.subr.mxu0 0.0
        %544 = vmatpush1.msra.mxu0 0.0
        %545 = vmatprep.subr.mxu0 0.0
        %546 = vmatpush1.msra.mxu0 0.0
        %547 = vmatprep.subr.mxu0 0.0
        %548 = vmatpush1.msra.mxu0 0.0
        %549 = vmatprep.subr.mxu0 0.0
        %550 = vmatpush1.msra.mxu0 0.0
        %551 = vmatprep.subr.mxu0 0.0
        %552 = vmatpush1.msra.mxu0 %v519
        %553 = vmatprep.subr.mxu0 0.0
        %554 = vmatpush2.msra.mxu0 0.0
        %555 = vmatprep.subr.mxu0 0.0
        %556 = vmatpush2.msra.mxu0 0.0
        %557 = vmatprep.subr.mxu0 0.0
        %558 = vmatpush2.msra.mxu0 0.0
        %559 = vmatprep.subr.mxu0 0.0
        %560 = vmatpush2.msra.mxu0 0.0
        %561 = vmatprep.subr.mxu0 0.0
        %562 = vmatpush2.msra.mxu0 0.0
        %563 = vmatprep.subr.mxu0 0.0
        %564 = vmatpush2.msra.mxu0 0.0
        %565 = vmatprep.subr.mxu0 0.0
        %566 = vmatpush2.msra.mxu0 0.0
        %567 = vmatprep.subr.mxu0 0.0
        %568 = vmatpush2.msra.mxu0 0.0
        %569 = vmatprep.subr.mxu0 0.0
        %570 = vmatpush2.msra.mxu0 0.0
        %571 = vmatprep.subr.mxu0 0.0
        %572 = vmatpush2.msra.mxu0 0.0
        %573 = vmatprep.subr.mxu0 0.0
        %574 = vmatpush2.msra.mxu0 0.0
        %575 = vmatprep.subr.mxu0 0.0
        %576 = vmatpush2.msra.mxu0 0.0
        %577 = vmatprep.subr.mxu0 0.0
        %578 = vmatpush2.msra.mxu0 0.0
        %579 = vmatprep.subr.mxu0 0.0
        %580 = vmatpush2.msra.mxu0 0.0
        %581 = vmatprep.subr.mxu0 0.0
        %582 = vmatpush2.msra.mxu0 0.0
        %583 = vmatprep.subr.mxu0 0.0
        %584 = vmatpush2.msra.mxu0 0.0
        %585 = vmatprep.mubr.f32.mxu0 0.0
        %586 = vmatmul.mubr.f32.gmra.mxu0 %v515
        %v587 = vpop.f32.mrf.mxu0
        %v588 = vadd.f32 0.0, %v587
        %v589 = vpop.f32.mrf.mxu0
        %590 = vdwg.mxu0
        %v591 = vld [vmem:[%s504] sm:$0xff]
        %v592 = vld [vmem:[%s504 + $0x8] sm:$0xff]
        %p593 = scmp.eq.s32.totalorder %s33, 0
        // Predicated region
        $region77: #{pointnet_forward.3} parent=75 // pred_check
          %p594 = pneg %p593
        $region78: #{pointnet_forward.3} parent=75 // pred_check_branch
          %596 = sbr.rel (%p594) target = $region80
        $region79: #{pointnet_forward.3} parent=75 // pred_region
          %597 = vst [vmem:[#allocation2] sm:$0xff] -inf
        $region80: #{pointnet_forward.3} parent=75 // pred_fallthru
          _
        %v598 = vld [vmem:[%s3] sm:$0x1]
        %v600 = vlaneseq
        %v601 = vshrl.u32 %v600, 7
        %v602 = vsub.s32 0, %v601
        %v603 = vrot.slane %v598, %v602
        %v606 = vsel %vm513, %v591, 0
        %v609 = vsel %vm513, %v592, 0
        %v612 = vsel %vm517, %v588, 0
        %614 = vmatprep.subr.mxu0 0.0
        %615 = vmatpush1.msra.mxu0 0.0
        %616 = vmatprep.subr.mxu0 0.0
        %617 = vmatpush1.msra.mxu0 0.0
        %618 = vmatprep.subr.mxu0 0.0
        %619 = vmatpush1.msra.mxu0 0.0
        %620 = vmatprep.subr.mxu0 0.0
        %621 = vmatpush1.msra.mxu0 0.0
        %622 = vmatprep.subr.mxu0 0.0
        %623 = vmatpush1.msra.mxu0 0.0
        %624 = vmatprep.subr.mxu0 0.0
        %625 = vmatpush1.msra.mxu0 0.0
        %626 = vmatprep.subr.mxu0 0.0
        %627 = vmatpush1.msra.mxu0 0.0
        %628 = vmatprep.subr.mxu0 0.0
        %629 = vmatpush1.msra.mxu0 0.0
        %630 = vmatprep.subr.mxu0 0.0
        %631 = vmatpush1.msra.mxu0 0.0
        %632 = vmatprep.subr.mxu0 0.0
        %633 = vmatpush1.msra.mxu0 0.0
        %634 = vmatprep.subr.mxu0 0.0
        %635 = vmatpush1.msra.mxu0 0.0
        %636 = vmatprep.subr.mxu0 0.0
        %637 = vmatpush1.msra.mxu0 0.0
        %638 = vmatprep.subr.mxu0 0.0
        %639 = vmatpush1.msra.mxu0 0.0
        %640 = vmatprep.subr.mxu0 0.0
        %641 = vmatpush1.msra.mxu0 0.0
        %642 = vmatprep.subr.mxu0 0.0
        %643 = vmatpush1.msra.mxu0 0.0
        %644 = vmatprep.subr.mxu0 0.0
        %645 = vmatpush1.msra.mxu0 %v612
        %646 = vmatprep.subr.mxu0 0.0
        %647 = vmatpush2.msra.mxu0 0.0
        %648 = vmatprep.subr.mxu0 0.0
        %649 = vmatpush2.msra.mxu0 0.0
        %650 = vmatprep.subr.mxu0 0.0
        %651 = vmatpush2.msra.mxu0 0.0
        %652 = vmatprep.subr.mxu0 0.0
        %653 = vmatpush2.msra.mxu0 0.0
        %654 = vmatprep.subr.mxu0 0.0
        %655 = vmatpush2.msra.mxu0 0.0
        %656 = vmatprep.subr.mxu0 0.0
        %657 = vmatpush2.msra.mxu0 0.0
        %658 = vmatprep.subr.mxu0 0.0
        %659 = vmatpush2.msra.mxu0 0.0
        %660 = vmatprep.subr.mxu0 0.0
        %661 = vmatpush2.msra.mxu0 0.0
        %662 = vmatprep.subr.mxu0 0.0
        %663 = vmatpush2.msra.mxu0 0.0
        %664 = vmatprep.subr.mxu0 0.0
        %665 = vmatpush2.msra.mxu0 0.0
        %666 = vmatprep.subr.mxu0 0.0
        %667 = vmatpush2.msra.mxu0 0.0
        %668 = vmatprep.subr.mxu0 0.0
        %669 = vmatpush2.msra.mxu0 0.0
        %670 = vmatprep.subr.mxu0 0.0
        %671 = vmatpush2.msra.mxu0 0.0
        %672 = vmatprep.subr.mxu0 0.0
        %673 = vmatpush2.msra.mxu0 0.0
        %674 = vmatprep.subr.mxu0 0.0
        %675 = vmatpush2.msra.mxu0 0.0
        %676 = vmatprep.subr.mxu0 0.0
        %677 = vmatpush2.msra.mxu0 0.0
        %678 = vmatprep.mubr.f32.mxu0 0.0
        %679 = vmatmul.mubr.f32.gmra.mxu0 %v606
        %v680 = vpop.f32.mrf.mxu0
        %v681 = vadd.f32 %v603, %v680
        %v682 = vpop.f32.mrf.mxu0
        %683 = vmatprep.mubr.f32.mxu0 0.0
        %684 = vmatmul.mubr.f32.gmra.mxu0 %v609
        %v685 = vpop.f32.mrf.mxu0
        %v686 = vadd.f32 %v603, %v685
        %v687 = vpop.f32.mrf.mxu0
        %688 = vdwg.mxu0
        %v689 = vmax.f32 %v681, 0.0
        %v690 = vmax.f32 %v686, 0.0
        %v691 = vpack.c.bf16 %v690, %v689
        %v692 = vld [vmem:[%s4] sm:$0xf]
        %v693 = vld [vmem:[%s4 + $0x4] sm:$0xf]
        %v694 = vld [vmem:[%s4 + $0x8] sm:$0xf]
        %v695 = vld [vmem:[%s4 + $0xc] sm:$0xf]
        %v696 = vld [vmem:[%s4 + $0x10] sm:$0xf]
        %v697 = vld [vmem:[%s4 + $0x14] sm:$0xf]
        %v698 = vld [vmem:[%s4 + $0x18] sm:$0xf]
        %v699 = vld [vmem:[%s4 + $0x1c] sm:$0xf]
        %v700 = vld [vmem:[%s5] sm:$0x1]
        %v702 = vlaneseq
        %v703 = vshrl.u32 %v702, 7
        %v704 = vsub.s32 0, %v703
        %v705 = vrot.slane %v700, %v704
        %v715 = vunpack.c.l.b16 %v692
        %v716 = vunpack.c.l.b16 %v693
        %v717 = vunpack.c.l.b16 %v694
        %v718 = vunpack.c.l.b16 %v695
        %v719 = vunpack.c.l.b16 %v696
        %v720 = vunpack.c.l.b16 %v697
        %v721 = vunpack.c.l.b16 %v698
        %v722 = vunpack.c.l.b16 %v699
        %v723 = vpack.c.b16 %v716, %v715
        %v724 = vpack.c.b16 %v718, %v717
        %v725 = vpack.c.b16 %v720, %v719
        %v726 = vpack.c.b16 %v722, %v721
        %vm731 = vcmask 523264
        %v733 = vsel %vm731, %v691, 0
        %735 = vmatprep.subr.bf16.mxu0 0
        %736 = vmatpush1.bf16.msra.mxu0 0
        %737 = vmatprep.subr.bf16.mxu0 0
        %738 = vmatpush1.bf16.msra.mxu0 0
        %739 = vmatprep.subr.bf16.mxu0 0
        %740 = vmatpush1.bf16.msra.mxu0 0
        %741 = vmatprep.subr.bf16.mxu0 0
        %742 = vmatpush1.bf16.msra.mxu0 0
        %743 = vmatprep.subr.bf16.mxu0 0
        %744 = vmatpush1.bf16.msra.mxu0 %v726
        %745 = vmatprep.subr.bf16.mxu0 0
        %746 = vmatpush1.bf16.msra.mxu0 %v725
        %747 = vmatprep.subr.bf16.mxu0 0
        %748 = vmatpush1.bf16.msra.mxu0 %v724
        %749 = vmatprep.subr.bf16.mxu0 0
        %750 = vmatpush1.bf16.msra.mxu0 %v723
        %751 = vmatprep.subr.bf16.mxu0 0
        %752 = vmatpush2.bf16.msra.mxu0 0
        %753 = vmatprep.subr.bf16.mxu0 0
        %754 = vmatpush2.bf16.msra.mxu0 0
        %755 = vmatprep.subr.bf16.mxu0 0
        %756 = vmatpush2.bf16.msra.mxu0 0
        %757 = vmatprep.subr.bf16.mxu0 0
        %758 = vmatpush2.bf16.msra.mxu0 0
        %759 = vmatprep.subr.bf16.mxu0 0
        %760 = vmatpush2.bf16.msra.mxu0 0
        %761 = vmatprep.subr.bf16.mxu0 0
        %762 = vmatpush2.bf16.msra.mxu0 0
        %763 = vmatprep.subr.bf16.mxu0 0
        %764 = vmatpush2.bf16.msra.mxu0 0
        %765 = vmatprep.subr.bf16.mxu0 0
        %766 = vmatpush2.bf16.msra.mxu0 0
        %767 = vmatprep.mubr.bf16.mxu0 0
        %768 = vmatmul.mubr.bf16.gmra.mxu0 %v733
        %v769 = vpop.f32.mrf.mxu0
        %v770 = vadd.f32 %v705, %v769
        %v771 = vpop.f32.mrf.mxu0
        %v772 = vpop.f32.mrf.mxu0
        %v773 = vadd.f32 %v705, %v772
        %v774 = vpop.f32.mrf.mxu0
        %775 = vdwg.mxu0
        %v776 = vmax.f32 %v770, 0.0
        %v777 = vmax.f32 %v773, 0.0
        %v778 = vpack.c.bf16 %v777, %v776
        %v779 = vld [vmem:[%s6] sm:$0xff]
        %v780 = vld [vmem:[%s6 + $0x8] sm:$0xff]
        %v781 = vld [vmem:[%s6 + $0x10] sm:$0xff]
        %v782 = vld [vmem:[%s6 + $0x18] sm:$0xff]
        %v783 = vld [vmem:[%s6 + $0x20] sm:$0xff]
        %v784 = vld [vmem:[%s6 + $0x28] sm:$0xff]
        %v785 = vld [vmem:[%s6 + $0x30] sm:$0xff]
        %v786 = vld [vmem:[%s6 + $0x38] sm:$0xff]
        %v787 = vld [vmem:[%s6 + $0x40] sm:$0xff]
        %v788 = vld [vmem:[%s6 + $0x48] sm:$0xff]
        %v789 = vld [vmem:[%s6 + $0x50] sm:$0xff]
        %v790 = vld [vmem:[%s6 + $0x58] sm:$0xff]
        %v791 = vld [vmem:[%s6 + $0x60] sm:$0xff]
        %v792 = vld [vmem:[%s6 + $0x68] sm:$0xff]
        %v793 = vld [vmem:[%s6 + $0x70] sm:$0xff]
        %v794 = vld [vmem:[%s6 + $0x78] sm:$0xff]
        %v795 = vld [vmem:[%s6 + $0x80] sm:$0xff]
        %v796 = vld [vmem:[%s6 + $0x88] sm:$0xff]
        %v797 = vld [vmem:[%s6 + $0x90] sm:$0xff]
        %v798 = vld [vmem:[%s6 + $0x98] sm:$0xff]
        %v799 = vld [vmem:[%s6 + $0xa0] sm:$0xff]
        %v800 = vld [vmem:[%s6 + $0xa8] sm:$0xff]
        %v801 = vld [vmem:[%s6 + $0xb0] sm:$0xff]
        %v802 = vld [vmem:[%s6 + $0xb8] sm:$0xff]
        %v803 = vld [vmem:[%s6 + $0xc0] sm:$0xff]
        %v804 = vld [vmem:[%s6 + $0xc8] sm:$0xff]
        %v805 = vld [vmem:[%s6 + $0xd0] sm:$0xff]
        %v806 = vld [vmem:[%s6 + $0xd8] sm:$0xff]
        %v807 = vld [vmem:[%s6 + $0xe0] sm:$0xff]
        %v808 = vld [vmem:[%s6 + $0xe8] sm:$0xff]
        %v809 = vld [vmem:[%s6 + $0xf0] sm:$0xff]
        %v810 = vld [vmem:[%s6 + $0xf8] sm:$0xff]
        %v811 = vld [vmem:[%s6 + $0x100] sm:$0xff]
        %v812 = vld [vmem:[%s6 + $0x108] sm:$0xff]
        %v813 = vld [vmem:[%s6 + $0x110] sm:$0xff]
        %v814 = vld [vmem:[%s6 + $0x118] sm:$0xff]
        %v815 = vld [vmem:[%s6 + $0x120] sm:$0xff]
        %v816 = vld [vmem:[%s6 + $0x128] sm:$0xff]
        %v817 = vld [vmem:[%s6 + $0x130] sm:$0xff]
        %v818 = vld [vmem:[%s6 + $0x138] sm:$0xff]
        %v819 = vld [vmem:[%s6 + $0x140] sm:$0xff]
        %v820 = vld [vmem:[%s6 + $0x148] sm:$0xff]
        %v821 = vld [vmem:[%s6 + $0x150] sm:$0xff]
        %v822 = vld [vmem:[%s6 + $0x158] sm:$0xff]
        %v823 = vld [vmem:[%s6 + $0x160] sm:$0xff]
        %v824 = vld [vmem:[%s6 + $0x168] sm:$0xff]
        %v825 = vld [vmem:[%s6 + $0x170] sm:$0xff]
        %v826 = vld [vmem:[%s6 + $0x178] sm:$0xff]
        %v827 = vld [vmem:[%s6 + $0x180] sm:$0xff]
        %v828 = vld [vmem:[%s6 + $0x188] sm:$0xff]
        %v829 = vld [vmem:[%s6 + $0x190] sm:$0xff]
        %v830 = vld [vmem:[%s6 + $0x198] sm:$0xff]
        %v831 = vld [vmem:[%s6 + $0x1a0] sm:$0xff]
        %v832 = vld [vmem:[%s6 + $0x1a8] sm:$0xff]
        %v833 = vld [vmem:[%s6 + $0x1b0] sm:$0xff]
        %v834 = vld [vmem:[%s6 + $0x1b8] sm:$0xff]
        %v835 = vld [vmem:[%s6 + $0x1c0] sm:$0xff]
        %v836 = vld [vmem:[%s6 + $0x1c8] sm:$0xff]
        %v837 = vld [vmem:[%s6 + $0x1d0] sm:$0xff]
        %v838 = vld [vmem:[%s6 + $0x1d8] sm:$0xff]
        %v839 = vld [vmem:[%s6 + $0x1e0] sm:$0xff]
        %v840 = vld [vmem:[%s6 + $0x1e8] sm:$0xff]
        %v841 = vld [vmem:[%s6 + $0x1f0] sm:$0xff]
        %v842 = vld [vmem:[%s6 + $0x1f8] sm:$0xff]
        %v843 = vld [vmem:[%s7] sm:$0xff]
        %v845 = vlaneseq
        %v846 = vshrl.u32 %v845, 7
        %v847 = vsub.s32 0, %v846
        %v848 = vrot.slane %v843, %v847
        %v849 = vlaneseq
        %v850 = vshrl.u32 %v849, 7
        %v851 = vsub.s32 1, %v850
        %v852 = vrot.slane %v843, %v851
        %v853 = vlaneseq
        %v854 = vshrl.u32 %v853, 7
        %v855 = vsub.s32 2, %v854
        %v856 = vrot.slane %v843, %v855
        %v857 = vlaneseq
        %v858 = vshrl.u32 %v857, 7
        %v859 = vsub.s32 3, %v858
        %v860 = vrot.slane %v843, %v859
        %v861 = vlaneseq
        %v862 = vshrl.u32 %v861, 7
        %v863 = vsub.s32 4, %v862
        %v864 = vrot.slane %v843, %v863
        %v865 = vlaneseq
        %v866 = vshrl.u32 %v865, 7
        %v867 = vsub.s32 5, %v866
        %v868 = vrot.slane %v843, %v867
        %v869 = vlaneseq
        %v870 = vshrl.u32 %v869, 7
        %v871 = vsub.s32 6, %v870
        %v872 = vrot.slane %v843, %v871
        %v873 = vlaneseq
        %v874 = vshrl.u32 %v873, 7
        %v875 = vsub.s32 7, %v874
        %v876 = vrot.slane %v843, %v875
        %v949 = vunpack.c.l.b16 %v779
        %v950 = vunpack.c.h.b16 %v779
        %v951 = vunpack.c.l.b16 %v780
        %v952 = vunpack.c.h.b16 %v780
        %v953 = vunpack.c.l.b16 %v781
        %v954 = vunpack.c.h.b16 %v781
        %v955 = vunpack.c.l.b16 %v782
        %v956 = vunpack.c.h.b16 %v782
        %v957 = vunpack.c.l.b16 %v783
        %v958 = vunpack.c.h.b16 %v783
        %v959 = vunpack.c.l.b16 %v784
        %v960 = vunpack.c.h.b16 %v784
        %v961 = vunpack.c.l.b16 %v785
        %v962 = vunpack.c.h.b16 %v785
        %v963 = vunpack.c.l.b16 %v786
        %v964 = vunpack.c.h.b16 %v786
        %v965 = vunpack.c.l.b16 %v787
        %v966 = vunpack.c.h.b16 %v787
        %v967 = vunpack.c.l.b16 %v788
        %v968 = vunpack.c.h.b16 %v788
        %v969 = vunpack.c.l.b16 %v789
        %v970 = vunpack.c.h.b16 %v789
        %v971 = vunpack.c.l.b16 %v790
        %v972 = vunpack.c.h.b16 %v790
        %v973 = vunpack.c.l.b16 %v791
        %v974 = vunpack.c.h.b16 %v791
        %v975 = vunpack.c.l.b16 %v792
        %v976 = vunpack.c.h.b16 %v792
        %v977 = vunpack.c.l.b16 %v793
        %v978 = vunpack.c.h.b16 %v793
        %v979 = vunpack.c.l.b16 %v794
        %v980 = vunpack.c.h.b16 %v794
        %v981 = vunpack.c.l.b16 %v795
        %v982 = vunpack.c.h.b16 %v795
        %v983 = vunpack.c.l.b16 %v796
        %v984 = vunpack.c.h.b16 %v796
        %v985 = vunpack.c.l.b16 %v797
        %v986 = vunpack.c.h.b16 %v797
        %v987 = vunpack.c.l.b16 %v798
        %v988 = vunpack.c.h.b16 %v798
        %v989 = vunpack.c.l.b16 %v799
        %v990 = vunpack.c.h.b16 %v799
        %v991 = vunpack.c.l.b16 %v800
        %v992 = vunpack.c.h.b16 %v800
        %v993 = vunpack.c.l.b16 %v801
        %v994 = vunpack.c.h.b16 %v801
        %v995 = vunpack.c.l.b16 %v802
        %v996 = vunpack.c.h.b16 %v802
        %v997 = vunpack.c.l.b16 %v803
        %v998 = vunpack.c.h.b16 %v803
        %v999 = vunpack.c.l.b16 %v804
        %v1000 = vunpack.c.h.b16 %v804
        %v1001 = vunpack.c.l.b16 %v805
        %v1002 = vunpack.c.h.b16 %v805
        %v1003 = vunpack.c.l.b16 %v806
        %v1004 = vunpack.c.h.b16 %v806
        %v1005 = vunpack.c.l.b16 %v807
        %v1006 = vunpack.c.h.b16 %v807
        %v1007 = vunpack.c.l.b16 %v808
        %v1008 = vunpack.c.h.b16 %v808
        %v1009 = vunpack.c.l.b16 %v809
        %v1010 = vunpack.c.h.b16 %v809
        %v1011 = vunpack.c.l.b16 %v810
        %v1012 = vunpack.c.h.b16 %v810
        %v1013 = vunpack.c.l.b16 %v811
        %v1014 = vunpack.c.h.b16 %v811
        %v1015 = vunpack.c.l.b16 %v812
        %v1016 = vunpack.c.h.b16 %v812
        %v1017 = vunpack.c.l.b16 %v813
        %v1018 = vunpack.c.h.b16 %v813
        %v1019 = vunpack.c.l.b16 %v814
        %v1020 = vunpack.c.h.b16 %v814
        %v1021 = vunpack.c.l.b16 %v815
        %v1022 = vunpack.c.h.b16 %v815
        %v1023 = vunpack.c.l.b16 %v816
        %v1024 = vunpack.c.h.b16 %v816
        %v1025 = vunpack.c.l.b16 %v817
        %v1026 = vunpack.c.h.b16 %v817
        %v1027 = vunpack.c.l.b16 %v818
        %v1028 = vunpack.c.h.b16 %v818
        %v1029 = vunpack.c.l.b16 %v819
        %v1030 = vunpack.c.h.b16 %v819
        %v1031 = vunpack.c.l.b16 %v820
        %v1032 = vunpack.c.h.b16 %v820
        %v1033 = vunpack.c.l.b16 %v821
        %v1034 = vunpack.c.h.b16 %v821
        %v1035 = vunpack.c.l.b16 %v822
        %v1036 = vunpack.c.h.b16 %v822
        %v1037 = vunpack.c.l.b16 %v823
        %v1038 = vunpack.c.h.b16 %v823
        %v1039 = vunpack.c.l.b16 %v824
        %v1040 = vunpack.c.h.b16 %v824
        %v1041 = vunpack.c.l.b16 %v825
        %v1042 = vunpack.c.h.b16 %v825
        %v1043 = vunpack.c.l.b16 %v826
        %v1044 = vunpack.c.h.b16 %v826
        %v1045 = vunpack.c.l.b16 %v827
        %v1046 = vunpack.c.h.b16 %v827
        %v1047 = vunpack.c.l.b16 %v828
        %v1048 = vunpack.c.h.b16 %v828
        %v1049 = vunpack.c.l.b16 %v829
        %v1050 = vunpack.c.h.b16 %v829
        %v1051 = vunpack.c.l.b16 %v830
        %v1052 = vunpack.c.h.b16 %v830
        %v1053 = vunpack.c.l.b16 %v831
        %v1054 = vunpack.c.h.b16 %v831
        %v1055 = vunpack.c.l.b16 %v832
        %v1056 = vunpack.c.h.b16 %v832
        %v1057 = vunpack.c.l.b16 %v833
        %v1058 = vunpack.c.h.b16 %v833
        %v1059 = vunpack.c.l.b16 %v834
        %v1060 = vunpack.c.h.b16 %v834
        %v1061 = vunpack.c.l.b16 %v835
        %v1062 = vunpack.c.h.b16 %v835
        %v1063 = vunpack.c.l.b16 %v836
        %v1064 = vunpack.c.h.b16 %v836
        %v1065 = vunpack.c.l.b16 %v837
        %v1066 = vunpack.c.h.b16 %v837
        %v1067 = vunpack.c.l.b16 %v838
        %v1068 = vunpack.c.h.b16 %v838
        %v1069 = vunpack.c.l.b16 %v839
        %v1070 = vunpack.c.h.b16 %v839
        %v1071 = vunpack.c.l.b16 %v840
        %v1072 = vunpack.c.h.b16 %v840
        %v1073 = vunpack.c.l.b16 %v841
        %v1074 = vunpack.c.h.b16 %v841
        %v1075 = vunpack.c.l.b16 %v842
        %v1076 = vunpack.c.h.b16 %v842
        %v1077 = vpack.c.b16 %v957, %v949
        %v1078 = vpack.c.b16 %v958, %v950
        %v1079 = vpack.c.b16 %v959, %v951
        %v1080 = vpack.c.b16 %v960, %v952
        %v1081 = vpack.c.b16 %v961, %v953
        %v1082 = vpack.c.b16 %v962, %v954
        %v1083 = vpack.c.b16 %v963, %v955
        %v1084 = vpack.c.b16 %v964, %v956
        %v1085 = vpack.c.b16 %v973, %v965
        %v1086 = vpack.c.b16 %v974, %v966
        %v1087 = vpack.c.b16 %v975, %v967
        %v1088 = vpack.c.b16 %v976, %v968
        %v1089 = vpack.c.b16 %v977, %v969
        %v1090 = vpack.c.b16 %v978, %v970
        %v1091 = vpack.c.b16 %v979, %v971
        %v1092 = vpack.c.b16 %v980, %v972
        %v1093 = vpack.c.b16 %v989, %v981
        %v1094 = vpack.c.b16 %v990, %v982
        %v1095 = vpack.c.b16 %v991, %v983
        %v1096 = vpack.c.b16 %v992, %v984
        %v1097 = vpack.c.b16 %v993, %v985
        %v1098 = vpack.c.b16 %v994, %v986
        %v1099 = vpack.c.b16 %v995, %v987
        %v1100 = vpack.c.b16 %v996, %v988
        %v1101 = vpack.c.b16 %v1005, %v997
        %v1102 = vpack.c.b16 %v1006, %v998
        %v1103 = vpack.c.b16 %v1007, %v999
        %v1104 = vpack.c.b16 %v1008, %v1000
        %v1105 = vpack.c.b16 %v1009, %v1001
        %v1106 = vpack.c.b16 %v1010, %v1002
        %v1107 = vpack.c.b16 %v1011, %v1003
        %v1108 = vpack.c.b16 %v1012, %v1004
        %v1109 = vpack.c.b16 %v1021, %v1013
        %v1110 = vpack.c.b16 %v1022, %v1014
        %v1111 = vpack.c.b16 %v1023, %v1015
        %v1112 = vpack.c.b16 %v1024, %v1016
        %v1113 = vpack.c.b16 %v1025, %v1017
        %v1114 = vpack.c.b16 %v1026, %v1018
        %v1115 = vpack.c.b16 %v1027, %v1019
        %v1116 = vpack.c.b16 %v1028, %v1020
        %v1117 = vpack.c.b16 %v1037, %v1029
        %v1118 = vpack.c.b16 %v1038, %v1030
        %v1119 = vpack.c.b16 %v1039, %v1031
        %v1120 = vpack.c.b16 %v1040, %v1032
        %v1121 = vpack.c.b16 %v1041, %v1033
        %v1122 = vpack.c.b16 %v1042, %v1034
        %v1123 = vpack.c.b16 %v1043, %v1035
        %v1124 = vpack.c.b16 %v1044, %v1036
        %v1125 = vpack.c.b16 %v1053, %v1045
        %v1126 = vpack.c.b16 %v1054, %v1046
        %v1127 = vpack.c.b16 %v1055, %v1047
        %v1128 = vpack.c.b16 %v1056, %v1048
        %v1129 = vpack.c.b16 %v1057, %v1049
        %v1130 = vpack.c.b16 %v1058, %v1050
        %v1131 = vpack.c.b16 %v1059, %v1051
        %v1132 = vpack.c.b16 %v1060, %v1052
        %v1133 = vpack.c.b16 %v1069, %v1061
        %v1134 = vpack.c.b16 %v1070, %v1062
        %v1135 = vpack.c.b16 %v1071, %v1063
        %v1136 = vpack.c.b16 %v1072, %v1064
        %v1137 = vpack.c.b16 %v1073, %v1065
        %v1138 = vpack.c.b16 %v1074, %v1066
        %v1139 = vpack.c.b16 %v1075, %v1067
        %v1140 = vpack.c.b16 %v1076, %v1068
        %1205 = vmatprep.subr.bf16.mxu0 %v1134
        %1206 = vmatpush1.bf16.msra.mxu0 %v1133
        %1207 = vmatprep.subr.bf16.mxu0 %v1126
        %1208 = vmatpush1.bf16.msra.mxu0 %v1125
        %1209 = vmatprep.subr.bf16.mxu0 %v1118
        %1210 = vmatpush1.bf16.msra.mxu0 %v1117
        %1211 = vmatprep.subr.bf16.mxu0 %v1110
        %1212 = vmatpush1.bf16.msra.mxu0 %v1109
        %1213 = vmatprep.subr.bf16.mxu0 %v1102
        %1214 = vmatpush1.bf16.msra.mxu0 %v1101
        %1215 = vmatprep.subr.bf16.mxu0 %v1094
        %1216 = vmatpush1.bf16.msra.mxu0 %v1093
        %1217 = vmatprep.subr.bf16.mxu0 %v1086
        %1218 = vmatpush1.bf16.msra.mxu0 %v1085
        %1219 = vmatprep.subr.bf16.mxu0 %v1078
        %1220 = vmatpush1.bf16.msra.mxu0 %v1077
        %1221 = vmatprep.subr.bf16.mxu0 0
        %1222 = vmatpush2.bf16.msra.mxu0 0
        %1223 = vmatprep.subr.bf16.mxu0 0
        %1224 = vmatpush2.bf16.msra.mxu0 0
        %1225 = vmatprep.subr.bf16.mxu0 0
        %1226 = vmatpush2.bf16.msra.mxu0 0
        %1227 = vmatprep.subr.bf16.mxu0 0
        %1228 = vmatpush2.bf16.msra.mxu0 0
        %1229 = vmatprep.subr.bf16.mxu0 0
        %1230 = vmatpush2.bf16.msra.mxu0 0
        %1231 = vmatprep.subr.bf16.mxu0 0
        %1232 = vmatpush2.bf16.msra.mxu0 0
        %1233 = vmatprep.subr.bf16.mxu0 0
        %1234 = vmatpush2.bf16.msra.mxu0 0
        %1235 = vmatprep.subr.bf16.mxu0 0
        %1236 = vmatpush2.bf16.msra.mxu0 0
        %1237 = vmatprep.mubr.bf16.mxu0 0
        %1238 = vmatmul.mubr.bf16.gmra.mxu0 %v778
        %v1239 = vpop.f32.mrf.mxu0
        %v1240 = vadd.f32 %v848, %v1239
        %v1241 = vpop.f32.mrf.mxu0
        %v1242 = vadd.f32 %v852, %v1241
        %v1243 = vpop.f32.mrf.mxu0
        %v1244 = vadd.f32 %v848, %v1243
        %v1245 = vpop.f32.mrf.mxu0
        %v1246 = vadd.f32 %v852, %v1245
        %1247 = vdwg.mxu0
        %1248 = vmatprep.subr.bf16.mxu0 %v1136
        %1249 = vmatpush1.bf16.msra.mxu0 %v1135
        %1250 = vmatprep.subr.bf16.mxu0 %v1128
        %1251 = vmatpush1.bf16.msra.mxu0 %v1127
        %1252 = vmatprep.subr.bf16.mxu0 %v1120
        %1253 = vmatpush1.bf16.msra.mxu0 %v1119
        %1254 = vmatprep.subr.bf16.mxu0 %v1112
        %1255 = vmatpush1.bf16.msra.mxu0 %v1111
        %1256 = vmatprep.subr.bf16.mxu0 %v1104
        %1257 = vmatpush1.bf16.msra.mxu0 %v1103
        %1258 = vmatprep.subr.bf16.mxu0 %v1096
        %1259 = vmatpush1.bf16.msra.mxu0 %v1095
        %1260 = vmatprep.subr.bf16.mxu0 %v1088
        %1261 = vmatpush1.bf16.msra.mxu0 %v1087
        %1262 = vmatprep.subr.bf16.mxu0 %v1080
        %1263 = vmatpush1.bf16.msra.mxu0 %v1079
        %1264 = vmatprep.subr.bf16.mxu0 0
        %1265 = vmatpush2.bf16.msra.mxu0 0
        %1266 = vmatprep.subr.bf16.mxu0 0
        %1267 = vmatpush2.bf16.msra.mxu0 0
        %1268 = vmatprep.subr.bf16.mxu0 0
        %1269 = vmatpush2.bf16.msra.mxu0 0
        %1270 = vmatprep.subr.bf16.mxu0 0
        %1271 = vmatpush2.bf16.msra.mxu0 0
        %1272 = vmatprep.subr.bf16.mxu0 0
        %1273 = vmatpush2.bf16.msra.mxu0 0
        %1274 = vmatprep.subr.bf16.mxu0 0
        %1275 = vmatpush2.bf16.msra.mxu0 0
        %1276 = vmatprep.subr.bf16.mxu0 0
        %1277 = vmatpush2.bf16.msra.mxu0 0
        %1278 = vmatprep.subr.bf16.mxu0 0
        %1279 = vmatpush2.bf16.msra.mxu0 0
        %1280 = vmatprep.mubr.bf16.mxu0 0
        %1281 = vmatmul.mubr.bf16.gmra.mxu0 %v778
        %v1282 = vpop.f32.mrf.mxu0
        %v1283 = vadd.f32 %v856, %v1282
        %v1284 = vpop.f32.mrf.mxu0
        %v1285 = vadd.f32 %v860, %v1284
        %v1286 = vpop.f32.mrf.mxu0
        %v1287 = vadd.f32 %v856, %v1286
        %v1288 = vpop.f32.mrf.mxu0
        %v1289 = vadd.f32 %v860, %v1288
        %1290 = vdwg.mxu0
        %1291 = vmatprep.subr.bf16.mxu0 %v1138
        %1292 = vmatpush1.bf16.msra.mxu0 %v1137
        %1293 = vmatprep.subr.bf16.mxu0 %v1130
        %1294 = vmatpush1.bf16.msra.mxu0 %v1129
        %1295 = vmatprep.subr.bf16.mxu0 %v1122
        %1296 = vmatpush1.bf16.msra.mxu0 %v1121
        %1297 = vmatprep.subr.bf16.mxu0 %v1114
        %1298 = vmatpush1.bf16.msra.mxu0 %v1113
        %1299 = vmatprep.subr.bf16.mxu0 %v1106
        %1300 = vmatpush1.bf16.msra.mxu0 %v1105
        %1301 = vmatprep.subr.bf16.mxu0 %v1098
        %1302 = vmatpush1.bf16.msra.mxu0 %v1097
        %1303 = vmatprep.subr.bf16.mxu0 %v1090
        %1304 = vmatpush1.bf16.msra.mxu0 %v1089
        %1305 = vmatprep.subr.bf16.mxu0 %v1082
        %1306 = vmatpush1.bf16.msra.mxu0 %v1081
        %1307 = vmatprep.subr.bf16.mxu0 0
        %1308 = vmatpush2.bf16.msra.mxu0 0
        %1309 = vmatprep.subr.bf16.mxu0 0
        %1310 = vmatpush2.bf16.msra.mxu0 0
        %1311 = vmatprep.subr.bf16.mxu0 0
        %1312 = vmatpush2.bf16.msra.mxu0 0
        %1313 = vmatprep.subr.bf16.mxu0 0
        %1314 = vmatpush2.bf16.msra.mxu0 0
        %1315 = vmatprep.subr.bf16.mxu0 0
        %1316 = vmatpush2.bf16.msra.mxu0 0
        %1317 = vmatprep.subr.bf16.mxu0 0
        %1318 = vmatpush2.bf16.msra.mxu0 0
        %1319 = vmatprep.subr.bf16.mxu0 0
        %1320 = vmatpush2.bf16.msra.mxu0 0
        %1321 = vmatprep.subr.bf16.mxu0 0
        %1322 = vmatpush2.bf16.msra.mxu0 0
        %1323 = vmatprep.mubr.bf16.mxu0 0
        %1324 = vmatmul.mubr.bf16.gmra.mxu0 %v778
        %v1325 = vpop.f32.mrf.mxu0
        %v1326 = vadd.f32 %v864, %v1325
        %v1327 = vpop.f32.mrf.mxu0
        %v1328 = vadd.f32 %v868, %v1327
        %v1329 = vpop.f32.mrf.mxu0
        %v1330 = vadd.f32 %v864, %v1329
        %v1331 = vpop.f32.mrf.mxu0
        %v1332 = vadd.f32 %v868, %v1331
        %1333 = vdwg.mxu0
        %1334 = vmatprep.subr.bf16.mxu0 %v1140
        %1335 = vmatpush1.bf16.msra.mxu0 %v1139
        %1336 = vmatprep.subr.bf16.mxu0 %v1132
        %1337 = vmatpush1.bf16.msra.mxu0 %v1131
        %1338 = vmatprep.subr.bf16.mxu0 %v1124
        %1339 = vmatpush1.bf16.msra.mxu0 %v1123
        %1340 = vmatprep.subr.bf16.mxu0 %v1116
        %1341 = vmatpush1.bf16.msra.mxu0 %v1115
        %1342 = vmatprep.subr.bf16.mxu0 %v1108
        %1343 = vmatpush1.bf16.msra.mxu0 %v1107
        %1344 = vmatprep.subr.bf16.mxu0 %v1100
        %1345 = vmatpush1.bf16.msra.mxu0 %v1099
        %1346 = vmatprep.subr.bf16.mxu0 %v1092
        %1347 = vmatpush1.bf16.msra.mxu0 %v1091
        %1348 = vmatprep.subr.bf16.mxu0 %v1084
        %1349 = vmatpush1.bf16.msra.mxu0 %v1083
        %1350 = vmatprep.subr.bf16.mxu0 0
        %1351 = vmatpush2.bf16.msra.mxu0 0
        %1352 = vmatprep.subr.bf16.mxu0 0
        %1353 = vmatpush2.bf16.msra.mxu0 0
        %1354 = vmatprep.subr.bf16.mxu0 0
        %1355 = vmatpush2.bf16.msra.mxu0 0
        %1356 = vmatprep.subr.bf16.mxu0 0
        %1357 = vmatpush2.bf16.msra.mxu0 0
        %1358 = vmatprep.subr.bf16.mxu0 0
        %1359 = vmatpush2.bf16.msra.mxu0 0
        %1360 = vmatprep.subr.bf16.mxu0 0
        %1361 = vmatpush2.bf16.msra.mxu0 0
        %1362 = vmatprep.subr.bf16.mxu0 0
        %1363 = vmatpush2.bf16.msra.mxu0 0
        %1364 = vmatprep.subr.bf16.mxu0 0
        %1365 = vmatpush2.bf16.msra.mxu0 0
        %1366 = vmatprep.mubr.bf16.mxu0 0
        %1367 = vmatmul.mubr.bf16.gmra.mxu0 %v778
        %v1368 = vpop.f32.mrf.mxu0
        %v1369 = vadd.f32 %v872, %v1368
        %v1370 = vpop.f32.mrf.mxu0
        %v1371 = vadd.f32 %v876, %v1370
        %v1372 = vpop.f32.mrf.mxu0
        %v1373 = vadd.f32 %v872, %v1372
        %v1374 = vpop.f32.mrf.mxu0
        %v1375 = vadd.f32 %v876, %v1374
        %1376 = vdwg.mxu0
        %v1377 = vmax.f32 %v1240, 0.0
        %v1378 = vmax.f32 %v1242, 0.0
        %v1379 = vmax.f32 %v1283, 0.0
        %v1380 = vmax.f32 %v1285, 0.0
        %v1381 = vmax.f32 %v1326, 0.0
        %v1382 = vmax.f32 %v1328, 0.0
        %v1383 = vmax.f32 %v1369, 0.0
        %v1384 = vmax.f32 %v1371, 0.0
        %v1385 = vmax.f32 %v1244, 0.0
        %v1386 = vmax.f32 %v1246, 0.0
        %v1387 = vmax.f32 %v1287, 0.0
        %v1388 = vmax.f32 %v1289, 0.0
        %v1389 = vmax.f32 %v1330, 0.0
        %v1390 = vmax.f32 %v1332, 0.0
        %v1391 = vmax.f32 %v1373, 0.0
        %v1392 = vmax.f32 %v1375, 0.0
        %v1393 = vld [vmem:[#allocation2] sm:$0xff]
        %v1394 = vmax.f32 %v1377, %v1385
        %v1395 = vrot.slane %v1394, 4
        %v1396 = vmax.f32 %v1394, %v1395
        %v1397 = vrot.slane %v1396, 2
        %v1398 = vmax.f32 %v1396, %v1397
        %v1399 = vrot.slane %v1398, 1
        %v1400 = vmax.f32 %v1398, %v1399
        %v1401 = vmax.f32 %v1378, %v1386
        %v1402 = vrot.slane %v1401, 4
        %v1403 = vmax.f32 %v1401, %v1402
        %v1404 = vrot.slane %v1403, 2
        %v1405 = vmax.f32 %v1403, %v1404
        %v1406 = vrot.slane %v1405, 1
        %v1407 = vmax.f32 %v1405, %v1406
        %v1408 = vmax.f32 %v1379, %v1387
        %v1409 = vrot.slane %v1408, 4
        %v1410 = vmax.f32 %v1408, %v1409
        %v1411 = vrot.slane %v1410, 2
        %v1412 = vmax.f32 %v1410, %v1411
        %v1413 = vrot.slane %v1412, 1
        %v1414 = vmax.f32 %v1412, %v1413
        %v1415 = vmax.f32 %v1380, %v1388
        %v1416 = vrot.slane %v1415, 4
        %v1417 = vmax.f32 %v1415, %v1416
        %v1418 = vrot.slane %v1417, 2
        %v1419 = vmax.f32 %v1417, %v1418
        %v1420 = vrot.slane %v1419, 1
        %v1421 = vmax.f32 %v1419, %v1420
        %v1422 = vmax.f32 %v1381, %v1389
        %v1423 = vrot.slane %v1422, 4
        %v1424 = vmax.f32 %v1422, %v1423
        %v1425 = vrot.slane %v1424, 2
        %v1426 = vmax.f32 %v1424, %v1425
        %v1427 = vrot.slane %v1426, 1
        %v1428 = vmax.f32 %v1426, %v1427
        %v1429 = vmax.f32 %v1382, %v1390
        %v1430 = vrot.slane %v1429, 4
        %v1431 = vmax.f32 %v1429, %v1430
        %v1432 = vrot.slane %v1431, 2
        %v1433 = vmax.f32 %v1431, %v1432
        %v1434 = vrot.slane %v1433, 1
        %v1435 = vmax.f32 %v1433, %v1434
        %v1436 = vmax.f32 %v1383, %v1391
        %v1437 = vrot.slane %v1436, 4
        %v1438 = vmax.f32 %v1436, %v1437
        %v1439 = vrot.slane %v1438, 2
        %v1440 = vmax.f32 %v1438, %v1439
        %v1441 = vrot.slane %v1440, 1
        %v1442 = vmax.f32 %v1440, %v1441
        %v1443 = vmax.f32 %v1384, %v1392
        %v1444 = vrot.slane %v1443, 4
        %v1445 = vmax.f32 %v1443, %v1444
        %v1446 = vrot.slane %v1445, 2
        %v1447 = vmax.f32 %v1445, %v1446
        %v1448 = vrot.slane %v1447, 1
        %v1449 = vmax.f32 %v1447, %v1448
        %v1458 = vcombine.low %v1400, %v1407
        %v1459 = vcombine.low %v1414, %v1421
        %v1460 = vcombine.low %v1428, %v1435
        %v1461 = vcombine.low %v1442, %v1449
        %v1463 = vunpack.c.l.s4 1966171168
        %v1464 = vunpack.c.0.s8 %v1463
        %v1465 = vlaneseq
        %v1466 = vshrl.u32 %v1465, 7
        %v1467 = vsub.s32 %v1464, %v1466
        %v1468 = vrot.slane %v1458, %v1467
        %v1470 = vunpack.c.l.s4 1966171168
        %v1471 = vunpack.c.0.s8 %v1470
        %v1472 = vlaneseq
        %v1473 = vshrl.u32 %v1472, 7
        %v1474 = vsub.s32 %v1471, %v1473
        %v1475 = vrot.slane %v1459, %v1474
        %v1477 = vunpack.c.l.s4 1966171168
        %v1478 = vunpack.c.0.s8 %v1477
        %v1479 = vlaneseq
        %v1480 = vshrl.u32 %v1479, 7
        %v1481 = vsub.s32 %v1478, %v1480
        %v1482 = vrot.slane %v1460, %v1481
        %v1484 = vunpack.c.l.s4 1966171168
        %v1485 = vunpack.c.0.s8 %v1484
        %v1486 = vlaneseq
        %v1487 = vshrl.u32 %v1486, 7
        %v1488 = vsub.s32 %v1485, %v1487
        %v1489 = vrot.slane %v1461, %v1488
        %v1490 = vcombine.low %v1468, %v1475
        %v1491 = vcombine.low %v1482, %v1489
        %v1493 = vunpack.c.l.s4 1966171168
        %v1494 = vunpack.c.0.s8 %v1493
        %v1495 = vlaneseq
        %v1496 = vshrl.u32 %v1495, 7
        %v1497 = vsub.s32 %v1494, %v1496
        %v1498 = vrot.slane %v1490, %v1497
        %v1500 = vunpack.c.l.s4 1966171168
        %v1501 = vunpack.c.0.s8 %v1500
        %v1502 = vlaneseq
        %v1503 = vshrl.u32 %v1502, 7
        %v1504 = vsub.s32 %v1501, %v1503
        %v1505 = vrot.slane %v1491, %v1504
        %v1506 = vcombine.low %v1498, %v1505
        %v1508 = vmax.f32 %v1393, %v1506
        %1509 = vst [vmem:[#allocation2] sm:$0xff] %v1508
        // Predicated region
        $region81: #{pointnet_forward.3} parent=75 // pred_check
          %p1510 = pneg %p593
        $region82: #{pointnet_forward.3} parent=75 // pred_check_branch
          %1512 = sbr.rel (%p1510) target = $region84
        $region83: #{pointnet_forward.3} parent=75 // pred_region
          %v1513 = vld [vmem:[#allocation2] sm:$0xff]
          %v1515 = vlaneseq
          %v1516 = vshrl.u32 %v1515, 7
          %v1517 = vsub.s32 0, %v1516
          %v1518 = vrot.slane %v1513, %v1517
          %v1519 = vlaneseq
          %v1520 = vshrl.u32 %v1519, 7
          %v1521 = vsub.s32 1, %v1520
          %v1522 = vrot.slane %v1513, %v1521
          %v1523 = vlaneseq
          %v1524 = vshrl.u32 %v1523, 7
          %v1525 = vsub.s32 2, %v1524
          %v1526 = vrot.slane %v1513, %v1525
          %v1527 = vlaneseq
          %v1528 = vshrl.u32 %v1527, 7
          %v1529 = vsub.s32 3, %v1528
          %v1530 = vrot.slane %v1513, %v1529
          %v1531 = vlaneseq
          %v1532 = vshrl.u32 %v1531, 7
          %v1533 = vsub.s32 4, %v1532
          %v1534 = vrot.slane %v1513, %v1533
          %v1535 = vlaneseq
          %v1536 = vshrl.u32 %v1535, 7
          %v1537 = vsub.s32 5, %v1536
          %v1538 = vrot.slane %v1513, %v1537
          %v1539 = vlaneseq
          %v1540 = vshrl.u32 %v1539, 7
          %v1541 = vsub.s32 6, %v1540
          %v1542 = vrot.slane %v1513, %v1541
          %v1543 = vlaneseq
          %v1544 = vshrl.u32 %v1543, 7
          %v1545 = vsub.s32 7, %v1544
          %v1546 = vrot.slane %v1513, %v1545
          %v1555 = vpack.c.bf16 %v1518, %v1518
          %v1556 = vpack.c.bf16 %v1522, %v1522
          %v1557 = vpack.c.bf16 %v1526, %v1526
          %v1558 = vpack.c.bf16 %v1530, %v1530
          %v1559 = vpack.c.bf16 %v1534, %v1534
          %v1560 = vpack.c.bf16 %v1538, %v1538
          %v1561 = vpack.c.bf16 %v1542, %v1542
          %v1562 = vpack.c.bf16 %v1546, %v1546
          %v1563 = vld [vmem:[%s8] sm:$0xff]
          %v1564 = vld [vmem:[%s8 + $0x8] sm:$0xff]
          %v1565 = vld [vmem:[%s8 + $0x10] sm:$0xff]
          %v1566 = vld [vmem:[%s8 + $0x18] sm:$0xff]
          %v1567 = vld [vmem:[%s8 + $0x20] sm:$0xff]
          %v1568 = vld [vmem:[%s8 + $0x28] sm:$0xff]
          %v1569 = vld [vmem:[%s8 + $0x30] sm:$0xff]
          %v1570 = vld [vmem:[%s8 + $0x38] sm:$0xff]
          %v1571 = vld [vmem:[%s8 + $0x40] sm:$0xff]
          %v1572 = vld [vmem:[%s8 + $0x48] sm:$0xff]
          %v1573 = vld [vmem:[%s8 + $0x50] sm:$0xff]
          %v1574 = vld [vmem:[%s8 + $0x58] sm:$0xff]
          %v1575 = vld [vmem:[%s8 + $0x60] sm:$0xff]
          %v1576 = vld [vmem:[%s8 + $0x68] sm:$0xff]
          %v1577 = vld [vmem:[%s8 + $0x70] sm:$0xff]
          %v1578 = vld [vmem:[%s8 + $0x78] sm:$0xff]
          %v1579 = vld [vmem:[%s8 + $0x80] sm:$0xff]
          %v1580 = vld [vmem:[%s8 + $0x88] sm:$0xff]
          %v1581 = vld [vmem:[%s8 + $0x90] sm:$0xff]
          %v1582 = vld [vmem:[%s8 + $0x98] sm:$0xff]
          %v1583 = vld [vmem:[%s8 + $0xa0] sm:$0xff]
          %v1584 = vld [vmem:[%s8 + $0xa8] sm:$0xff]
          %v1585 = vld [vmem:[%s8 + $0xb0] sm:$0xff]
          %v1586 = vld [vmem:[%s8 + $0xb8] sm:$0xff]
          %v1587 = vld [vmem:[%s8 + $0xc0] sm:$0xff]
          %v1588 = vld [vmem:[%s8 + $0xc8] sm:$0xff]
          %v1589 = vld [vmem:[%s8 + $0xd0] sm:$0xff]
          %v1590 = vld [vmem:[%s8 + $0xd8] sm:$0xff]
          %v1591 = vld [vmem:[%s8 + $0xe0] sm:$0xff]
          %v1592 = vld [vmem:[%s8 + $0xe8] sm:$0xff]
          %v1593 = vld [vmem:[%s8 + $0xf0] sm:$0xff]
          %v1594 = vld [vmem:[%s8 + $0xf8] sm:$0xff]
          %v1595 = vld [vmem:[%s8 + $0x100] sm:$0xff]
          %v1596 = vld [vmem:[%s8 + $0x108] sm:$0xff]
          %v1597 = vld [vmem:[%s8 + $0x110] sm:$0xff]
          %v1598 = vld [vmem:[%s8 + $0x118] sm:$0xff]
          %v1599 = vld [vmem:[%s8 + $0x120] sm:$0xff]
          %v1600 = vld [vmem:[%s8 + $0x128] sm:$0xff]
          %v1601 = vld [vmem:[%s8 + $0x130] sm:$0xff]
          %v1602 = vld [vmem:[%s8 + $0x138] sm:$0xff]
          %v1603 = vld [vmem:[%s8 + $0x140] sm:$0xff]
          %v1604 = vld [vmem:[%s8 + $0x148] sm:$0xff]
          %v1605 = vld [vmem:[%s8 + $0x150] sm:$0xff]
          %v1606 = vld [vmem:[%s8 + $0x158] sm:$0xff]
          %v1607 = vld [vmem:[%s8 + $0x160] sm:$0xff]
          %v1608 = vld [vmem:[%s8 + $0x168] sm:$0xff]
          %v1609 = vld [vmem:[%s8 + $0x170] sm:$0xff]
          %v1610 = vld [vmem:[%s8 + $0x178] sm:$0xff]
          %v1611 = vld [vmem:[%s8 + $0x180] sm:$0xff]
          %v1612 = vld [vmem:[%s8 + $0x188] sm:$0xff]
          %v1613 = vld [vmem:[%s8 + $0x190] sm:$0xff]
          %v1614 = vld [vmem:[%s8 + $0x198] sm:$0xff]
          %v1615 = vld [vmem:[%s8 + $0x1a0] sm:$0xff]
          %v1616 = vld [vmem:[%s8 + $0x1a8] sm:$0xff]
          %v1617 = vld [vmem:[%s8 + $0x1b0] sm:$0xff]
          %v1618 = vld [vmem:[%s8 + $0x1b8] sm:$0xff]
          %v1619 = vld [vmem:[%s8 + $0x1c0] sm:$0xff]
          %v1620 = vld [vmem:[%s8 + $0x1c8] sm:$0xff]
          %v1621 = vld [vmem:[%s8 + $0x1d0] sm:$0xff]
          %v1622 = vld [vmem:[%s8 + $0x1d8] sm:$0xff]
          %v1623 = vld [vmem:[%s8 + $0x1e0] sm:$0xff]
          %v1624 = vld [vmem:[%s8 + $0x1e8] sm:$0xff]
          %v1625 = vld [vmem:[%s8 + $0x1f0] sm:$0xff]
          %v1626 = vld [vmem:[%s8 + $0x1f8] sm:$0xff]
          %v1627 = vld [vmem:[%s8 + $0x200] sm:$0xff]
          %v1628 = vld [vmem:[%s8 + $0x208] sm:$0xff]
          %v1629 = vld [vmem:[%s8 + $0x210] sm:$0xff]
          %v1630 = vld [vmem:[%s8 + $0x218] sm:$0xff]
          %v1631 = vld [vmem:[%s8 + $0x220] sm:$0xff]
          %v1632 = vld [vmem:[%s8 + $0x228] sm:$0xff]
          %v1633 = vld [vmem:[%s8 + $0x230] sm:$0xff]
          %v1634 = vld [vmem:[%s8 + $0x238] sm:$0xff]
          %v1635 = vld [vmem:[%s8 + $0x240] sm:$0xff]
          %v1636 = vld [vmem:[%s8 + $0x248] sm:$0xff]
          %v1637 = vld [vmem:[%s8 + $0x250] sm:$0xff]
          %v1638 = vld [vmem:[%s8 + $0x258] sm:$0xff]
          %v1639 = vld [vmem:[%s8 + $0x260] sm:$0xff]
          %v1640 = vld [vmem:[%s8 + $0x268] sm:$0xff]
          %v1641 = vld [vmem:[%s8 + $0x270] sm:$0xff]
          %v1642 = vld [vmem:[%s8 + $0x278] sm:$0xff]
          %v1643 = vld [vmem:[%s8 + $0x280] sm:$0xff]
          %v1644 = vld [vmem:[%s8 + $0x288] sm:$0xff]
          %v1645 = vld [vmem:[%s8 + $0x290] sm:$0xff]
          %v1646 = vld [vmem:[%s8 + $0x298] sm:$0xff]
          %v1647 = vld [vmem:[%s8 + $0x2a0] sm:$0xff]
          %v1648 = vld [vmem:[%s8 + $0x2a8] sm:$0xff]
          %v1649 = vld [vmem:[%s8 + $0x2b0] sm:$0xff]
          %v1650 = vld [vmem:[%s8 + $0x2b8] sm:$0xff]
          %v1651 = vld [vmem:[%s8 + $0x2c0] sm:$0xff]
          %v1652 = vld [vmem:[%s8 + $0x2c8] sm:$0xff]
          %v1653 = vld [vmem:[%s8 + $0x2d0] sm:$0xff]
          %v1654 = vld [vmem:[%s8 + $0x2d8] sm:$0xff]
          %v1655 = vld [vmem:[%s8 + $0x2e0] sm:$0xff]
          %v1656 = vld [vmem:[%s8 + $0x2e8] sm:$0xff]
          %v1657 = vld [vmem:[%s8 + $0x2f0] sm:$0xff]
          %v1658 = vld [vmem:[%s8 + $0x2f8] sm:$0xff]
          %v1659 = vld [vmem:[%s8 + $0x300] sm:$0xff]
          %v1660 = vld [vmem:[%s8 + $0x308] sm:$0xff]
          %v1661 = vld [vmem:[%s8 + $0x310] sm:$0xff]
          %v1662 = vld [vmem:[%s8 + $0x318] sm:$0xff]
          %v1663 = vld [vmem:[%s8 + $0x320] sm:$0xff]
          %v1664 = vld [vmem:[%s8 + $0x328] sm:$0xff]
          %v1665 = vld [vmem:[%s8 + $0x330] sm:$0xff]
          %v1666 = vld [vmem:[%s8 + $0x338] sm:$0xff]
          %v1667 = vld [vmem:[%s8 + $0x340] sm:$0xff]
          %v1668 = vld [vmem:[%s8 + $0x348] sm:$0xff]
          %v1669 = vld [vmem:[%s8 + $0x350] sm:$0xff]
          %v1670 = vld [vmem:[%s8 + $0x358] sm:$0xff]
          %v1671 = vld [vmem:[%s8 + $0x360] sm:$0xff]
          %v1672 = vld [vmem:[%s8 + $0x368] sm:$0xff]
          %v1673 = vld [vmem:[%s8 + $0x370] sm:$0xff]
          %v1674 = vld [vmem:[%s8 + $0x378] sm:$0xff]
          %v1675 = vld [vmem:[%s8 + $0x380] sm:$0xff]
          %v1676 = vld [vmem:[%s8 + $0x388] sm:$0xff]
          %v1677 = vld [vmem:[%s8 + $0x390] sm:$0xff]
          %v1678 = vld [vmem:[%s8 + $0x398] sm:$0xff]
          %v1679 = vld [vmem:[%s8 + $0x3a0] sm:$0xff]
          %v1680 = vld [vmem:[%s8 + $0x3a8] sm:$0xff]
          %v1681 = vld [vmem:[%s8 + $0x3b0] sm:$0xff]
          %v1682 = vld [vmem:[%s8 + $0x3b8] sm:$0xff]
          %v1683 = vld [vmem:[%s8 + $0x3c0] sm:$0xff]
          %v1684 = vld [vmem:[%s8 + $0x3c8] sm:$0xff]
          %v1685 = vld [vmem:[%s8 + $0x3d0] sm:$0xff]
          %v1686 = vld [vmem:[%s8 + $0x3d8] sm:$0xff]
          %v1687 = vld [vmem:[%s8 + $0x3e0] sm:$0xff]
          %v1688 = vld [vmem:[%s8 + $0x3e8] sm:$0xff]
          %v1689 = vld [vmem:[%s8 + $0x3f0] sm:$0xff]
          %v1690 = vld [vmem:[%s8 + $0x3f8] sm:$0xff]
          %v1691 = vld [vmem:[%s8 + $0x400] sm:$0xff]
          %v1692 = vld [vmem:[%s8 + $0x408] sm:$0xff]
          %v1693 = vld [vmem:[%s8 + $0x410] sm:$0xff]
          %v1694 = vld [vmem:[%s8 + $0x418] sm:$0xff]
          %v1695 = vld [vmem:[%s8 + $0x420] sm:$0xff]
          %v1696 = vld [vmem:[%s8 + $0x428] sm:$0xff]
          %v1697 = vld [vmem:[%s8 + $0x430] sm:$0xff]
          %v1698 = vld [vmem:[%s8 + $0x438] sm:$0xff]
          %v1699 = vld [vmem:[%s8 + $0x440] sm:$0xff]
          %v1700 = vld [vmem:[%s8 + $0x448] sm:$0xff]
          %v1701 = vld [vmem:[%s8 + $0x450] sm:$0xff]
          %v1702 = vld [vmem:[%s8 + $0x458] sm:$0xff]
          %v1703 = vld [vmem:[%s8 + $0x460] sm:$0xff]
          %v1704 = vld [vmem:[%s8 + $0x468] sm:$0xff]
          %v1705 = vld [vmem:[%s8 + $0x470] sm:$0xff]
          %v1706 = vld [vmem:[%s8 + $0x478] sm:$0xff]
          %v1707 = vld [vmem:[%s8 + $0x480] sm:$0xff]
          %v1708 = vld [vmem:[%s8 + $0x488] sm:$0xff]
          %v1709 = vld [vmem:[%s8 + $0x490] sm:$0xff]
          %v1710 = vld [vmem:[%s8 + $0x498] sm:$0xff]
          %v1711 = vld [vmem:[%s8 + $0x4a0] sm:$0xff]
          %v1712 = vld [vmem:[%s8 + $0x4a8] sm:$0xff]
          %v1713 = vld [vmem:[%s8 + $0x4b0] sm:$0xff]
          %v1714 = vld [vmem:[%s8 + $0x4b8] sm:$0xff]
          %v1715 = vld [vmem:[%s8 + $0x4c0] sm:$0xff]
          %v1716 = vld [vmem:[%s8 + $0x4c8] sm:$0xff]
          %v1717 = vld [vmem:[%s8 + $0x4d0] sm:$0xff]
          %v1718 = vld [vmem:[%s8 + $0x4d8] sm:$0xff]
          %v1719 = vld [vmem:[%s8 + $0x4e0] sm:$0xff]
          %v1720 = vld [vmem:[%s8 + $0x4e8] sm:$0xff]
          %v1721 = vld [vmem:[%s8 + $0x4f0] sm:$0xff]
          %v1722 = vld [vmem:[%s8 + $0x4f8] sm:$0xff]
          %v1723 = vld [vmem:[%s8 + $0x500] sm:$0xff]
          %v1724 = vld [vmem:[%s8 + $0x508] sm:$0xff]
          %v1725 = vld [vmem:[%s8 + $0x510] sm:$0xff]
          %v1726 = vld [vmem:[%s8 + $0x518] sm:$0xff]
          %v1727 = vld [vmem:[%s8 + $0x520] sm:$0xff]
          %v1728 = vld [vmem:[%s8 + $0x528] sm:$0xff]
          %v1729 = vld [vmem:[%s8 + $0x530] sm:$0xff]
          %v1730 = vld [vmem:[%s8 + $0x538] sm:$0xff]
          %v1731 = vld [vmem:[%s8 + $0x540] sm:$0xff]
          %v1732 = vld [vmem:[%s8 + $0x548] sm:$0xff]
          %v1733 = vld [vmem:[%s8 + $0x550] sm:$0xff]
          %v1734 = vld [vmem:[%s8 + $0x558] sm:$0xff]
          %v1735 = vld [vmem:[%s8 + $0x560] sm:$0xff]
          %v1736 = vld [vmem:[%s8 + $0x568] sm:$0xff]
          %v1737 = vld [vmem:[%s8 + $0x570] sm:$0xff]
          %v1738 = vld [vmem:[%s8 + $0x578] sm:$0xff]
          %v1739 = vld [vmem:[%s8 + $0x580] sm:$0xff]
          %v1740 = vld [vmem:[%s8 + $0x588] sm:$0xff]
          %v1741 = vld [vmem:[%s8 + $0x590] sm:$0xff]
          %v1742 = vld [vmem:[%s8 + $0x598] sm:$0xff]
          %v1743 = vld [vmem:[%s8 + $0x5a0] sm:$0xff]
          %v1744 = vld [vmem:[%s8 + $0x5a8] sm:$0xff]
          %v1745 = vld [vmem:[%s8 + $0x5b0] sm:$0xff]
          %v1746 = vld [vmem:[%s8 + $0x5b8] sm:$0xff]
          %v1747 = vld [vmem:[%s8 + $0x5c0] sm:$0xff]
          %v1748 = vld [vmem:[%s8 + $0x5c8] sm:$0xff]
          %v1749 = vld [vmem:[%s8 + $0x5d0] sm:$0xff]
          %v1750 = vld [vmem:[%s8 + $0x5d8] sm:$0xff]
          %v1751 = vld [vmem:[%s8 + $0x5e0] sm:$0xff]
          %v1752 = vld [vmem:[%s8 + $0x5e8] sm:$0xff]
          %v1753 = vld [vmem:[%s8 + $0x5f0] sm:$0xff]
          %v1754 = vld [vmem:[%s8 + $0x5f8] sm:$0xff]
          %v1755 = vld [vmem:[%s8 + $0x600] sm:$0xff]
          %v1756 = vld [vmem:[%s8 + $0x608] sm:$0xff]
          %v1757 = vld [vmem:[%s8 + $0x610] sm:$0xff]
          %v1758 = vld [vmem:[%s8 + $0x618] sm:$0xff]
          %v1759 = vld [vmem:[%s8 + $0x620] sm:$0xff]
          %v1760 = vld [vmem:[%s8 + $0x628] sm:$0xff]
          %v1761 = vld [vmem:[%s8 + $0x630] sm:$0xff]
          %v1762 = vld [vmem:[%s8 + $0x638] sm:$0xff]
          %v1763 = vld [vmem:[%s8 + $0x640] sm:$0xff]
          %v1764 = vld [vmem:[%s8 + $0x648] sm:$0xff]
          %v1765 = vld [vmem:[%s8 + $0x650] sm:$0xff]
          %v1766 = vld [vmem:[%s8 + $0x658] sm:$0xff]
          %v1767 = vld [vmem:[%s8 + $0x660] sm:$0xff]
          %v1768 = vld [vmem:[%s8 + $0x668] sm:$0xff]
          %v1769 = vld [vmem:[%s8 + $0x670] sm:$0xff]
          %v1770 = vld [vmem:[%s8 + $0x678] sm:$0xff]
          %v1771 = vld [vmem:[%s8 + $0x680] sm:$0xff]
          %v1772 = vld [vmem:[%s8 + $0x688] sm:$0xff]
          %v1773 = vld [vmem:[%s8 + $0x690] sm:$0xff]
          %v1774 = vld [vmem:[%s8 + $0x698] sm:$0xff]
          %v1775 = vld [vmem:[%s8 + $0x6a0] sm:$0xff]
          %v1776 = vld [vmem:[%s8 + $0x6a8] sm:$0xff]
          %v1777 = vld [vmem:[%s8 + $0x6b0] sm:$0xff]
          %v1778 = vld [vmem:[%s8 + $0x6b8] sm:$0xff]
          %v1779 = vld [vmem:[%s8 + $0x6c0] sm:$0xff]
          %v1780 = vld [vmem:[%s8 + $0x6c8] sm:$0xff]
          %v1781 = vld [vmem:[%s8 + $0x6d0] sm:$0xff]
          %v1782 = vld [vmem:[%s8 + $0x6d8] sm:$0xff]
          %v1783 = vld [vmem:[%s8 + $0x6e0] sm:$0xff]
          %v1784 = vld [vmem:[%s8 + $0x6e8] sm:$0xff]
          %v1785 = vld [vmem:[%s8 + $0x6f0] sm:$0xff]
          %v1786 = vld [vmem:[%s8 + $0x6f8] sm:$0xff]
          %v1787 = vld [vmem:[%s8 + $0x700] sm:$0xff]
          %v1788 = vld [vmem:[%s8 + $0x708] sm:$0xff]
          %v1789 = vld [vmem:[%s8 + $0x710] sm:$0xff]
          %v1790 = vld [vmem:[%s8 + $0x718] sm:$0xff]
          %v1791 = vld [vmem:[%s8 + $0x720] sm:$0xff]
          %v1792 = vld [vmem:[%s8 + $0x728] sm:$0xff]
          %v1793 = vld [vmem:[%s8 + $0x730] sm:$0xff]
          %v1794 = vld [vmem:[%s8 + $0x738] sm:$0xff]
          %v1795 = vld [vmem:[%s8 + $0x740] sm:$0xff]
          %v1796 = vld [vmem:[%s8 + $0x748] sm:$0xff]
          %v1797 = vld [vmem:[%s8 + $0x750] sm:$0xff]
          %v1798 = vld [vmem:[%s8 + $0x758] sm:$0xff]
          %v1799 = vld [vmem:[%s8 + $0x760] sm:$0xff]
          %v1800 = vld [vmem:[%s8 + $0x768] sm:$0xff]
          %v1801 = vld [vmem:[%s8 + $0x770] sm:$0xff]
          %v1802 = vld [vmem:[%s8 + $0x778] sm:$0xff]
          %v1803 = vld [vmem:[%s8 + $0x780] sm:$0xff]
          %v1804 = vld [vmem:[%s8 + $0x788] sm:$0xff]
          %v1805 = vld [vmem:[%s8 + $0x790] sm:$0xff]
          %v1806 = vld [vmem:[%s8 + $0x798] sm:$0xff]
          %v1807 = vld [vmem:[%s8 + $0x7a0] sm:$0xff]
          %v1808 = vld [vmem:[%s8 + $0x7a8] sm:$0xff]
          %v1809 = vld [vmem:[%s8 + $0x7b0] sm:$0xff]
          %v1810 = vld [vmem:[%s8 + $0x7b8] sm:$0xff]
          %v1811 = vld [vmem:[%s8 + $0x7c0] sm:$0xff]
          %v1812 = vld [vmem:[%s8 + $0x7c8] sm:$0xff]
          %v1813 = vld [vmem:[%s8 + $0x7d0] sm:$0xff]
          %v1814 = vld [vmem:[%s8 + $0x7d8] sm:$0xff]
          %v1815 = vld [vmem:[%s8 + $0x7e0] sm:$0xff]
          %v1816 = vld [vmem:[%s8 + $0x7e8] sm:$0xff]
          %v1817 = vld [vmem:[%s8 + $0x7f0] sm:$0xff]
          %v1818 = vld [vmem:[%s8 + $0x7f8] sm:$0xff]
          %v1819 = vld [vmem:[%s9] sm:$0xf]
          %v2076 = vunpack.c.l.b16 %v1563
          %v2077 = vunpack.c.h.b16 %v1563
          %v2078 = vunpack.c.l.b16 %v1564
          %v2079 = vunpack.c.h.b16 %v1564
          %v2080 = vunpack.c.l.b16 %v1565
          %v2081 = vunpack.c.h.b16 %v1565
          %v2082 = vunpack.c.l.b16 %v1566
          %v2083 = vunpack.c.h.b16 %v1566
          %v2084 = vunpack.c.l.b16 %v1567
          %v2085 = vunpack.c.h.b16 %v1567
          %v2086 = vunpack.c.l.b16 %v1568
          %v2087 = vunpack.c.h.b16 %v1568
          %v2088 = vunpack.c.l.b16 %v1569
          %v2089 = vunpack.c.h.b16 %v1569
          %v2090 = vunpack.c.l.b16 %v1570
          %v2091 = vunpack.c.h.b16 %v1570
          %v2092 = vunpack.c.l.b16 %v1571
          %v2093 = vunpack.c.h.b16 %v1571
          %v2094 = vunpack.c.l.b16 %v1572
          %v2095 = vunpack.c.h.b16 %v1572
          %v2096 = vunpack.c.l.b16 %v1573
          %v2097 = vunpack.c.h.b16 %v1573
          %v2098 = vunpack.c.l.b16 %v1574
          %v2099 = vunpack.c.h.b16 %v1574
          %v2100 = vunpack.c.l.b16 %v1575
          %v2101 = vunpack.c.h.b16 %v1575
          %v2102 = vunpack.c.l.b16 %v1576
          %v2103 = vunpack.c.h.b16 %v1576
          %v2104 = vunpack.c.l.b16 %v1577
          %v2105 = vunpack.c.h.b16 %v1577
          %v2106 = vunpack.c.l.b16 %v1578
          %v2107 = vunpack.c.h.b16 %v1578
          %v2108 = vunpack.c.l.b16 %v1579
          %v2109 = vunpack.c.h.b16 %v1579
          %v2110 = vunpack.c.l.b16 %v1580
          %v2111 = vunpack.c.h.b16 %v1580
          %v2112 = vunpack.c.l.b16 %v1581
          %v2113 = vunpack.c.h.b16 %v1581
          %v2114 = vunpack.c.l.b16 %v1582
          %v2115 = vunpack.c.h.b16 %v1582
          %v2116 = vunpack.c.l.b16 %v1583
          %v2117 = vunpack.c.h.b16 %v1583
          %v2118 = vunpack.c.l.b16 %v1584
          %v2119 = vunpack.c.h.b16 %v1584
          %v2120 = vunpack.c.l.b16 %v1585
          %v2121 = vunpack.c.h.b16 %v1585
          %v2122 = vunpack.c.l.b16 %v1586
          %v2123 = vunpack.c.h.b16 %v1586
          %v2124 = vunpack.c.l.b16 %v1587
          %v2125 = vunpack.c.h.b16 %v1587
          %v2126 = vunpack.c.l.b16 %v1588
          %v2127 = vunpack.c.h.b16 %v1588
          %v2128 = vunpack.c.l.b16 %v1589
          %v2129 = vunpack.c.h.b16 %v1589
          %v2130 = vunpack.c.l.b16 %v1590
          %v2131 = vunpack.c.h.b16 %v1590
          %v2132 = vunpack.c.l.b16 %v1591
          %v2133 = vunpack.c.h.b16 %v1591
          %v2134 = vunpack.c.l.b16 %v1592
          %v2135 = vunpack.c.h.b16 %v1592
          %v2136 = vunpack.c.l.b16 %v1593
          %v2137 = vunpack.c.h.b16 %v1593
          %v2138 = vunpack.c.l.b16 %v1594
          %v2139 = vunpack.c.h.b16 %v1594
          %v2140 = vunpack.c.l.b16 %v1595
          %v2141 = vunpack.c.h.b16 %v1595
          %v2142 = vunpack.c.l.b16 %v1596
          %v2143 = vunpack.c.h.b16 %v1596
          %v2144 = vunpack.c.l.b16 %v1597
          %v2145 = vunpack.c.h.b16 %v1597
          %v2146 = vunpack.c.l.b16 %v1598
          %v2147 = vunpack.c.h.b16 %v1598
          %v2148 = vunpack.c.l.b16 %v1599
          %v2149 = vunpack.c.h.b16 %v1599
          %v2150 = vunpack.c.l.b16 %v1600
          %v2151 = vunpack.c.h.b16 %v1600
          %v2152 = vunpack.c.l.b16 %v1601
          %v2153 = vunpack.c.h.b16 %v1601
          %v2154 = vunpack.c.l.b16 %v1602
          %v2155 = vunpack.c.h.b16 %v1602
          %v2156 = vunpack.c.l.b16 %v1603
          %v2157 = vunpack.c.h.b16 %v1603
          %v2158 = vunpack.c.l.b16 %v1604
          %v2159 = vunpack.c.h.b16 %v1604
          %v2160 = vunpack.c.l.b16 %v1605
          %v2161 = vunpack.c.h.b16 %v1605
          %v2162 = vunpack.c.l.b16 %v1606
          %v2163 = vunpack.c.h.b16 %v1606
          %v2164 = vunpack.c.l.b16 %v1607
          %v2165 = vunpack.c.h.b16 %v1607
          %v2166 = vunpack.c.l.b16 %v1608
          %v2167 = vunpack.c.h.b16 %v1608
          %v2168 = vunpack.c.l.b16 %v1609
          %v2169 = vunpack.c.h.b16 %v1609
          %v2170 = vunpack.c.l.b16 %v1610
          %v2171 = vunpack.c.h.b16 %v1610
          %v2172 = vunpack.c.l.b16 %v1611
          %v2173 = vunpack.c.h.b16 %v1611
          %v2174 = vunpack.c.l.b16 %v1612
          %v2175 = vunpack.c.h.b16 %v1612
          %v2176 = vunpack.c.l.b16 %v1613
          %v2177 = vunpack.c.h.b16 %v1613
          %v2178 = vunpack.c.l.b16 %v1614
          %v2179 = vunpack.c.h.b16 %v1614
          %v2180 = vunpack.c.l.b16 %v1615
          %v2181 = vunpack.c.h.b16 %v1615
          %v2182 = vunpack.c.l.b16 %v1616
          %v2183 = vunpack.c.h.b16 %v1616
          %v2184 = vunpack.c.l.b16 %v1617
          %v2185 = vunpack.c.h.b16 %v1617
          %v2186 = vunpack.c.l.b16 %v1618
          %v2187 = vunpack.c.h.b16 %v1618
          %v2188 = vunpack.c.l.b16 %v1619
          %v2189 = vunpack.c.h.b16 %v1619
          %v2190 = vunpack.c.l.b16 %v1620
          %v2191 = vunpack.c.h.b16 %v1620
          %v2192 = vunpack.c.l.b16 %v1621
          %v2193 = vunpack.c.h.b16 %v1621
          %v2194 = vunpack.c.l.b16 %v1622
          %v2195 = vunpack.c.h.b16 %v1622
          %v2196 = vunpack.c.l.b16 %v1623
          %v2197 = vunpack.c.h.b16 %v1623
          %v2198 = vunpack.c.l.b16 %v1624
          %v2199 = vunpack.c.h.b16 %v1624
          %v2200 = vunpack.c.l.b16 %v1625
          %v2201 = vunpack.c.h.b16 %v1625
          %v2202 = vunpack.c.l.b16 %v1626
          %v2203 = vunpack.c.h.b16 %v1626
          %v2204 = vunpack.c.l.b16 %v1627
          %v2205 = vunpack.c.h.b16 %v1627
          %v2206 = vunpack.c.l.b16 %v1628
          %v2207 = vunpack.c.h.b16 %v1628
          %v2208 = vunpack.c.l.b16 %v1629
          %v2209 = vunpack.c.h.b16 %v1629
          %v2210 = vunpack.c.l.b16 %v1630
          %v2211 = vunpack.c.h.b16 %v1630
          %v2212 = vunpack.c.l.b16 %v1631
          %v2213 = vunpack.c.h.b16 %v1631
          %v2214 = vunpack.c.l.b16 %v1632
          %v2215 = vunpack.c.h.b16 %v1632
          %v2216 = vunpack.c.l.b16 %v1633
          %v2217 = vunpack.c.h.b16 %v1633
          %v2218 = vunpack.c.l.b16 %v1634
          %v2219 = vunpack.c.h.b16 %v1634
          %v2220 = vunpack.c.l.b16 %v1635
          %v2221 = vunpack.c.h.b16 %v1635
          %v2222 = vunpack.c.l.b16 %v1636
          %v2223 = vunpack.c.h.b16 %v1636
          %v2224 = vunpack.c.l.b16 %v1637
          %v2225 = vunpack.c.h.b16 %v1637
          %v2226 = vunpack.c.l.b16 %v1638
          %v2227 = vunpack.c.h.b16 %v1638
          %v2228 = vunpack.c.l.b16 %v1639
          %v2229 = vunpack.c.h.b16 %v1639
          %v2230 = vunpack.c.l.b16 %v1640
          %v2231 = vunpack.c.h.b16 %v1640
          %v2232 = vunpack.c.l.b16 %v1641
          %v2233 = vunpack.c.h.b16 %v1641
          %v2234 = vunpack.c.l.b16 %v1642
          %v2235 = vunpack.c.h.b16 %v1642
          %v2236 = vunpack.c.l.b16 %v1643
          %v2237 = vunpack.c.h.b16 %v1643
          %v2238 = vunpack.c.l.b16 %v1644
          %v2239 = vunpack.c.h.b16 %v1644
          %v2240 = vunpack.c.l.b16 %v1645
          %v2241 = vunpack.c.h.b16 %v1645
          %v2242 = vunpack.c.l.b16 %v1646
          %v2243 = vunpack.c.h.b16 %v1646
          %v2244 = vunpack.c.l.b16 %v1647
          %v2245 = vunpack.c.h.b16 %v1647
          %v2246 = vunpack.c.l.b16 %v1648
          %v2247 = vunpack.c.h.b16 %v1648
          %v2248 = vunpack.c.l.b16 %v1649
          %v2249 = vunpack.c.h.b16 %v1649
          %v2250 = vunpack.c.l.b16 %v1650
          %v2251 = vunpack.c.h.b16 %v1650
          %v2252 = vunpack.c.l.b16 %v1651
          %v2253 = vunpack.c.h.b16 %v1651
          %v2254 = vunpack.c.l.b16 %v1652
          %v2255 = vunpack.c.h.b16 %v1652
          %v2256 = vunpack.c.l.b16 %v1653
          %v2257 = vunpack.c.h.b16 %v1653
          %v2258 = vunpack.c.l.b16 %v1654
          %v2259 = vunpack.c.h.b16 %v1654
          %v2260 = vunpack.c.l.b16 %v1655
          %v2261 = vunpack.c.h.b16 %v1655
          %v2262 = vunpack.c.l.b16 %v1656
          %v2263 = vunpack.c.h.b16 %v1656
          %v2264 = vunpack.c.l.b16 %v1657
          %v2265 = vunpack.c.h.b16 %v1657
          %v2266 = vunpack.c.l.b16 %v1658
          %v2267 = vunpack.c.h.b16 %v1658
          %v2268 = vunpack.c.l.b16 %v1659
          %v2269 = vunpack.c.h.b16 %v1659
          %v2270 = vunpack.c.l.b16 %v1660
          %v2271 = vunpack.c.h.b16 %v1660
          %v2272 = vunpack.c.l.b16 %v1661
          %v2273 = vunpack.c.h.b16 %v1661
          %v2274 = vunpack.c.l.b16 %v1662
          %v2275 = vunpack.c.h.b16 %v1662
          %v2276 = vunpack.c.l.b16 %v1663
          %v2277 = vunpack.c.h.b16 %v1663
          %v2278 = vunpack.c.l.b16 %v1664
          %v2279 = vunpack.c.h.b16 %v1664
          %v2280 = vunpack.c.l.b16 %v1665
          %v2281 = vunpack.c.h.b16 %v1665
          %v2282 = vunpack.c.l.b16 %v1666
          %v2283 = vunpack.c.h.b16 %v1666
          %v2284 = vunpack.c.l.b16 %v1667
          %v2285 = vunpack.c.h.b16 %v1667
          %v2286 = vunpack.c.l.b16 %v1668
          %v2287 = vunpack.c.h.b16 %v1668
          %v2288 = vunpack.c.l.b16 %v1669
          %v2289 = vunpack.c.h.b16 %v1669
          %v2290 = vunpack.c.l.b16 %v1670
          %v2291 = vunpack.c.h.b16 %v1670
          %v2292 = vunpack.c.l.b16 %v1671
          %v2293 = vunpack.c.h.b16 %v1671
          %v2294 = vunpack.c.l.b16 %v1672
          %v2295 = vunpack.c.h.b16 %v1672
          %v2296 = vunpack.c.l.b16 %v1673
          %v2297 = vunpack.c.h.b16 %v1673
          %v2298 = vunpack.c.l.b16 %v1674
          %v2299 = vunpack.c.h.b16 %v1674
          %v2300 = vunpack.c.l.b16 %v1675
          %v2301 = vunpack.c.h.b16 %v1675
          %v2302 = vunpack.c.l.b16 %v1676
          %v2303 = vunpack.c.h.b16 %v1676
          %v2304 = vunpack.c.l.b16 %v1677
          %v2305 = vunpack.c.h.b16 %v1677
          %v2306 = vunpack.c.l.b16 %v1678
          %v2307 = vunpack.c.h.b16 %v1678
          %v2308 = vunpack.c.l.b16 %v1679
          %v2309 = vunpack.c.h.b16 %v1679
          %v2310 = vunpack.c.l.b16 %v1680
          %v2311 = vunpack.c.h.b16 %v1680
          %v2312 = vunpack.c.l.b16 %v1681
          %v2313 = vunpack.c.h.b16 %v1681
          %v2314 = vunpack.c.l.b16 %v1682
          %v2315 = vunpack.c.h.b16 %v1682
          %v2316 = vunpack.c.l.b16 %v1683
          %v2317 = vunpack.c.h.b16 %v1683
          %v2318 = vunpack.c.l.b16 %v1684
          %v2319 = vunpack.c.h.b16 %v1684
          %v2320 = vunpack.c.l.b16 %v1685
          %v2321 = vunpack.c.h.b16 %v1685
          %v2322 = vunpack.c.l.b16 %v1686
          %v2323 = vunpack.c.h.b16 %v1686
          %v2324 = vunpack.c.l.b16 %v1687
          %v2325 = vunpack.c.h.b16 %v1687
          %v2326 = vunpack.c.l.b16 %v1688
          %v2327 = vunpack.c.h.b16 %v1688
          %v2328 = vunpack.c.l.b16 %v1689
          %v2329 = vunpack.c.h.b16 %v1689
          %v2330 = vunpack.c.l.b16 %v1690
          %v2331 = vunpack.c.h.b16 %v1690
          %v2332 = vunpack.c.l.b16 %v1691
          %v2333 = vunpack.c.h.b16 %v1691
          %v2334 = vunpack.c.l.b16 %v1692
          %v2335 = vunpack.c.h.b16 %v1692
          %v2336 = vunpack.c.l.b16 %v1693
          %v2337 = vunpack.c.h.b16 %v1693
          %v2338 = vunpack.c.l.b16 %v1694
          %v2339 = vunpack.c.h.b16 %v1694
          %v2340 = vunpack.c.l.b16 %v1695
          %v2341 = vunpack.c.h.b16 %v1695
          %v2342 = vunpack.c.l.b16 %v1696
          %v2343 = vunpack.c.h.b16 %v1696
          %v2344 = vunpack.c.l.b16 %v1697
          %v2345 = vunpack.c.h.b16 %v1697
          %v2346 = vunpack.c.l.b16 %v1698
          %v2347 = vunpack.c.h.b16 %v1698
          %v2348 = vunpack.c.l.b16 %v1699
          %v2349 = vunpack.c.h.b16 %v1699
          %v2350 = vunpack.c.l.b16 %v1700
          %v2351 = vunpack.c.h.b16 %v1700
          %v2352 = vunpack.c.l.b16 %v1701
          %v2353 = vunpack.c.h.b16 %v1701
          %v2354 = vunpack.c.l.b16 %v1702
          %v2355 = vunpack.c.h.b16 %v1702
          %v2356 = vunpack.c.l.b16 %v1703
          %v2357 = vunpack.c.h.b16 %v1703
          %v2358 = vunpack.c.l.b16 %v1704
          %v2359 = vunpack.c.h.b16 %v1704
          %v2360 = vunpack.c.l.b16 %v1705
          %v2361 = vunpack.c.h.b16 %v1705
          %v2362 = vunpack.c.l.b16 %v1706
          %v2363 = vunpack.c.h.b16 %v1706
          %v2364 = vunpack.c.l.b16 %v1707
          %v2365 = vunpack.c.h.b16 %v1707
          %v2366 = vunpack.c.l.b16 %v1708
          %v2367 = vunpack.c.h.b16 %v1708
          %v2368 = vunpack.c.l.b16 %v1709
          %v2369 = vunpack.c.h.b16 %v1709
          %v2370 = vunpack.c.l.b16 %v1710
          %v2371 = vunpack.c.h.b16 %v1710
          %v2372 = vunpack.c.l.b16 %v1711
          %v2373 = vunpack.c.h.b16 %v1711
          %v2374 = vunpack.c.l.b16 %v1712
          %v2375 = vunpack.c.h.b16 %v1712
          %v2376 = vunpack.c.l.b16 %v1713
          %v2377 = vunpack.c.h.b16 %v1713
          %v2378 = vunpack.c.l.b16 %v1714
          %v2379 = vunpack.c.h.b16 %v1714
          %v2380 = vunpack.c.l.b16 %v1715
          %v2381 = vunpack.c.h.b16 %v1715
          %v2382 = vunpack.c.l.b16 %v1716
          %v2383 = vunpack.c.h.b16 %v1716
          %v2384 = vunpack.c.l.b16 %v1717
          %v2385 = vunpack.c.h.b16 %v1717
          %v2386 = vunpack.c.l.b16 %v1718
          %v2387 = vunpack.c.h.b16 %v1718
          %v2388 = vunpack.c.l.b16 %v1719
          %v2389 = vunpack.c.h.b16 %v1719
          %v2390 = vunpack.c.l.b16 %v1720
          %v2391 = vunpack.c.h.b16 %v1720
          %v2392 = vunpack.c.l.b16 %v1721
          %v2393 = vunpack.c.h.b16 %v1721
          %v2394 = vunpack.c.l.b16 %v1722
          %v2395 = vunpack.c.h.b16 %v1722
          %v2396 = vunpack.c.l.b16 %v1723
          %v2397 = vunpack.c.h.b16 %v1723
          %v2398 = vunpack.c.l.b16 %v1724
          %v2399 = vunpack.c.h.b16 %v1724
          %v2400 = vunpack.c.l.b16 %v1725
          %v2401 = vunpack.c.h.b16 %v1725
          %v2402 = vunpack.c.l.b16 %v1726
          %v2403 = vunpack.c.h.b16 %v1726
          %v2404 = vunpack.c.l.b16 %v1727
          %v2405 = vunpack.c.h.b16 %v1727
          %v2406 = vunpack.c.l.b16 %v1728
          %v2407 = vunpack.c.h.b16 %v1728
          %v2408 = vunpack.c.l.b16 %v1729
          %v2409 = vunpack.c.h.b16 %v1729
          %v2410 = vunpack.c.l.b16 %v1730
          %v2411 = vunpack.c.h.b16 %v1730
          %v2412 = vunpack.c.l.b16 %v1731
          %v2413 = vunpack.c.h.b16 %v1731
          %v2414 = vunpack.c.l.b16 %v1732
          %v2415 = vunpack.c.h.b16 %v1732
          %v2416 = vunpack.c.l.b16 %v1733
          %v2417 = vunpack.c.h.b16 %v1733
          %v2418 = vunpack.c.l.b16 %v1734
          %v2419 = vunpack.c.h.b16 %v1734
          %v2420 = vunpack.c.l.b16 %v1735
          %v2421 = vunpack.c.h.b16 %v1735
          %v2422 = vunpack.c.l.b16 %v1736
          %v2423 = vunpack.c.h.b16 %v1736
          %v2424 = vunpack.c.l.b16 %v1737
          %v2425 = vunpack.c.h.b16 %v1737
          %v2426 = vunpack.c.l.b16 %v1738
          %v2427 = vunpack.c.h.b16 %v1738
          %v2428 = vunpack.c.l.b16 %v1739
          %v2429 = vunpack.c.h.b16 %v1739
          %v2430 = vunpack.c.l.b16 %v1740
          %v2431 = vunpack.c.h.b16 %v1740
          %v2432 = vunpack.c.l.b16 %v1741
          %v2433 = vunpack.c.h.b16 %v1741
          %v2434 = vunpack.c.l.b16 %v1742
          %v2435 = vunpack.c.h.b16 %v1742
          %v2436 = vunpack.c.l.b16 %v1743
          %v2437 = vunpack.c.h.b16 %v1743
          %v2438 = vunpack.c.l.b16 %v1744
          %v2439 = vunpack.c.h.b16 %v1744
          %v2440 = vunpack.c.l.b16 %v1745
          %v2441 = vunpack.c.h.b16 %v1745
          %v2442 = vunpack.c.l.b16 %v1746
          %v2443 = vunpack.c.h.b16 %v1746
          %v2444 = vunpack.c.l.b16 %v1747
          %v2445 = vunpack.c.h.b16 %v1747
          %v2446 = vunpack.c.l.b16 %v1748
          %v2447 = vunpack.c.h.b16 %v1748
          %v2448 = vunpack.c.l.b16 %v1749
          %v2449 = vunpack.c.h.b16 %v1749
          %v2450 = vunpack.c.l.b16 %v1750
          %v2451 = vunpack.c.h.b16 %v1750
          %v2452 = vunpack.c.l.b16 %v1751
          %v2453 = vunpack.c.h.b16 %v1751
          %v2454 = vunpack.c.l.b16 %v1752
          %v2455 = vunpack.c.h.b16 %v1752
          %v2456 = vunpack.c.l.b16 %v1753
          %v2457 = vunpack.c.h.b16 %v1753
          %v2458 = vunpack.c.l.b16 %v1754
          %v2459 = vunpack.c.h.b16 %v1754
          %v2460 = vunpack.c.l.b16 %v1755
          %v2461 = vunpack.c.h.b16 %v1755
          %v2462 = vunpack.c.l.b16 %v1756
          %v2463 = vunpack.c.h.b16 %v1756
          %v2464 = vunpack.c.l.b16 %v1757
          %v2465 = vunpack.c.h.b16 %v1757
          %v2466 = vunpack.c.l.b16 %v1758
          %v2467 = vunpack.c.h.b16 %v1758
          %v2468 = vunpack.c.l.b16 %v1759
          %v2469 = vunpack.c.h.b16 %v1759
          %v2470 = vunpack.c.l.b16 %v1760
          %v2471 = vunpack.c.h.b16 %v1760
          %v2472 = vunpack.c.l.b16 %v1761
          %v2473 = vunpack.c.h.b16 %v1761
          %v2474 = vunpack.c.l.b16 %v1762
          %v2475 = vunpack.c.h.b16 %v1762
          %v2476 = vunpack.c.l.b16 %v1763
          %v2477 = vunpack.c.h.b16 %v1763
          %v2478 = vunpack.c.l.b16 %v1764
          %v2479 = vunpack.c.h.b16 %v1764
          %v2480 = vunpack.c.l.b16 %v1765
          %v2481 = vunpack.c.h.b16 %v1765
          %v2482 = vunpack.c.l.b16 %v1766
          %v2483 = vunpack.c.h.b16 %v1766
          %v2484 = vunpack.c.l.b16 %v1767
          %v2485 = vunpack.c.h.b16 %v1767
          %v2486 = vunpack.c.l.b16 %v1768
          %v2487 = vunpack.c.h.b16 %v1768
          %v2488 = vunpack.c.l.b16 %v1769
          %v2489 = vunpack.c.h.b16 %v1769
          %v2490 = vunpack.c.l.b16 %v1770
          %v2491 = vunpack.c.h.b16 %v1770
          %v2492 = vunpack.c.l.b16 %v1771
          %v2493 = vunpack.c.h.b16 %v1771
          %v2494 = vunpack.c.l.b16 %v1772
          %v2495 = vunpack.c.h.b16 %v1772
          %v2496 = vunpack.c.l.b16 %v1773
          %v2497 = vunpack.c.h.b16 %v1773
          %v2498 = vunpack.c.l.b16 %v1774
          %v2499 = vunpack.c.h.b16 %v1774
          %v2500 = vunpack.c.l.b16 %v1775
          %v2501 = vunpack.c.h.b16 %v1775
          %v2502 = vunpack.c.l.b16 %v1776
          %v2503 = vunpack.c.h.b16 %v1776
          %v2504 = vunpack.c.l.b16 %v1777
          %v2505 = vunpack.c.h.b16 %v1777
          %v2506 = vunpack.c.l.b16 %v1778
          %v2507 = vunpack.c.h.b16 %v1778
          %v2508 = vunpack.c.l.b16 %v1779
          %v2509 = vunpack.c.h.b16 %v1779
          %v2510 = vunpack.c.l.b16 %v1780
          %v2511 = vunpack.c.h.b16 %v1780
          %v2512 = vunpack.c.l.b16 %v1781
          %v2513 = vunpack.c.h.b16 %v1781
          %v2514 = vunpack.c.l.b16 %v1782
          %v2515 = vunpack.c.h.b16 %v1782
          %v2516 = vunpack.c.l.b16 %v1783
          %v2517 = vunpack.c.h.b16 %v1783
          %v2518 = vunpack.c.l.b16 %v1784
          %v2519 = vunpack.c.h.b16 %v1784
          %v2520 = vunpack.c.l.b16 %v1785
          %v2521 = vunpack.c.h.b16 %v1785
          %v2522 = vunpack.c.l.b16 %v1786
          %v2523 = vunpack.c.h.b16 %v1786
          %v2524 = vunpack.c.l.b16 %v1787
          %v2525 = vunpack.c.h.b16 %v1787
          %v2526 = vunpack.c.l.b16 %v1788
          %v2527 = vunpack.c.h.b16 %v1788
          %v2528 = vunpack.c.l.b16 %v1789
          %v2529 = vunpack.c.h.b16 %v1789
          %v2530 = vunpack.c.l.b16 %v1790
          %v2531 = vunpack.c.h.b16 %v1790
          %v2532 = vunpack.c.l.b16 %v1791
          %v2533 = vunpack.c.h.b16 %v1791
          %v2534 = vunpack.c.l.b16 %v1792
          %v2535 = vunpack.c.h.b16 %v1792
          %v2536 = vunpack.c.l.b16 %v1793
          %v2537 = vunpack.c.h.b16 %v1793
          %v2538 = vunpack.c.l.b16 %v1794
          %v2539 = vunpack.c.h.b16 %v1794
          %v2540 = vunpack.c.l.b16 %v1795
          %v2541 = vunpack.c.h.b16 %v1795
          %v2542 = vunpack.c.l.b16 %v1796
          %v2543 = vunpack.c.h.b16 %v1796
          %v2544 = vunpack.c.l.b16 %v1797
          %v2545 = vunpack.c.h.b16 %v1797
          %v2546 = vunpack.c.l.b16 %v1798
          %v2547 = vunpack.c.h.b16 %v1798
          %v2548 = vunpack.c.l.b16 %v1799
          %v2549 = vunpack.c.h.b16 %v1799
          %v2550 = vunpack.c.l.b16 %v1800
          %v2551 = vunpack.c.h.b16 %v1800
          %v2552 = vunpack.c.l.b16 %v1801
          %v2553 = vunpack.c.h.b16 %v1801
          %v2554 = vunpack.c.l.b16 %v1802
          %v2555 = vunpack.c.h.b16 %v1802
          %v2556 = vunpack.c.l.b16 %v1803
          %v2557 = vunpack.c.h.b16 %v1803
          %v2558 = vunpack.c.l.b16 %v1804
          %v2559 = vunpack.c.h.b16 %v1804
          %v2560 = vunpack.c.l.b16 %v1805
          %v2561 = vunpack.c.h.b16 %v1805
          %v2562 = vunpack.c.l.b16 %v1806
          %v2563 = vunpack.c.h.b16 %v1806
          %v2564 = vunpack.c.l.b16 %v1807
          %v2565 = vunpack.c.h.b16 %v1807
          %v2566 = vunpack.c.l.b16 %v1808
          %v2567 = vunpack.c.h.b16 %v1808
          %v2568 = vunpack.c.l.b16 %v1809
          %v2569 = vunpack.c.h.b16 %v1809
          %v2570 = vunpack.c.l.b16 %v1810
          %v2571 = vunpack.c.h.b16 %v1810
          %v2572 = vunpack.c.l.b16 %v1811
          %v2573 = vunpack.c.h.b16 %v1811
          %v2574 = vunpack.c.l.b16 %v1812
          %v2575 = vunpack.c.h.b16 %v1812
          %v2576 = vunpack.c.l.b16 %v1813
          %v2577 = vunpack.c.h.b16 %v1813
          %v2578 = vunpack.c.l.b16 %v1814
          %v2579 = vunpack.c.h.b16 %v1814
          %v2580 = vunpack.c.l.b16 %v1815
          %v2581 = vunpack.c.h.b16 %v1815
          %v2582 = vunpack.c.l.b16 %v1816
          %v2583 = vunpack.c.h.b16 %v1816
          %v2584 = vunpack.c.l.b16 %v1817
          %v2585 = vunpack.c.h.b16 %v1817
          %v2586 = vunpack.c.l.b16 %v1818
          %v2587 = vunpack.c.h.b16 %v1818
          %v2588 = vpack.c.b16 %v2080, %v2076
          %v2589 = vpack.c.b16 %v2081, %v2077
          %v2590 = vpack.c.b16 %v2082, %v2078
          %v2591 = vpack.c.b16 %v2083, %v2079
          %v2592 = vpack.c.b16 %v2088, %v2084
          %v2593 = vpack.c.b16 %v2089, %v2085
          %v2594 = vpack.c.b16 %v2090, %v2086
          %v2595 = vpack.c.b16 %v2091, %v2087
          %v2596 = vpack.c.b16 %v2096, %v2092
          %v2597 = vpack.c.b16 %v2097, %v2093
          %v2598 = vpack.c.b16 %v2098, %v2094
          %v2599 = vpack.c.b16 %v2099, %v2095
          %v2600 = vpack.c.b16 %v2104, %v2100
          %v2601 = vpack.c.b16 %v2105, %v2101
          %v2602 = vpack.c.b16 %v2106, %v2102
          %v2603 = vpack.c.b16 %v2107, %v2103
          %v2604 = vpack.c.b16 %v2112, %v2108
          %v2605 = vpack.c.b16 %v2113, %v2109
          %v2606 = vpack.c.b16 %v2114, %v2110
          %v2607 = vpack.c.b16 %v2115, %v2111
          %v2608 = vpack.c.b16 %v2120, %v2116
          %v2609 = vpack.c.b16 %v2121, %v2117
          %v2610 = vpack.c.b16 %v2122, %v2118
          %v2611 = vpack.c.b16 %v2123, %v2119
          %v2612 = vpack.c.b16 %v2128, %v2124
          %v2613 = vpack.c.b16 %v2129, %v2125
          %v2614 = vpack.c.b16 %v2130, %v2126
          %v2615 = vpack.c.b16 %v2131, %v2127
          %v2616 = vpack.c.b16 %v2136, %v2132
          %v2617 = vpack.c.b16 %v2137, %v2133
          %v2618 = vpack.c.b16 %v2138, %v2134
          %v2619 = vpack.c.b16 %v2139, %v2135
          %v2620 = vpack.c.b16 %v2144, %v2140
          %v2621 = vpack.c.b16 %v2145, %v2141
          %v2622 = vpack.c.b16 %v2146, %v2142
          %v2623 = vpack.c.b16 %v2147, %v2143
          %v2624 = vpack.c.b16 %v2152, %v2148
          %v2625 = vpack.c.b16 %v2153, %v2149
          %v2626 = vpack.c.b16 %v2154, %v2150
          %v2627 = vpack.c.b16 %v2155, %v2151
          %v2628 = vpack.c.b16 %v2160, %v2156
          %v2629 = vpack.c.b16 %v2161, %v2157
          %v2630 = vpack.c.b16 %v2162, %v2158
          %v2631 = vpack.c.b16 %v2163, %v2159
          %v2632 = vpack.c.b16 %v2168, %v2164
          %v2633 = vpack.c.b16 %v2169, %v2165
          %v2634 = vpack.c.b16 %v2170, %v2166
          %v2635 = vpack.c.b16 %v2171, %v2167
          %v2636 = vpack.c.b16 %v2176, %v2172
          %v2637 = vpack.c.b16 %v2177, %v2173
          %v2638 = vpack.c.b16 %v2178, %v2174
          %v2639 = vpack.c.b16 %v2179, %v2175
          %v2640 = vpack.c.b16 %v2184, %v2180
          %v2641 = vpack.c.b16 %v2185, %v2181
          %v2642 = vpack.c.b16 %v2186, %v2182
          %v2643 = vpack.c.b16 %v2187, %v2183
          %v2644 = vpack.c.b16 %v2192, %v2188
          %v2645 = vpack.c.b16 %v2193, %v2189
          %v2646 = vpack.c.b16 %v2194, %v2190
          %v2647 = vpack.c.b16 %v2195, %v2191
          %v2648 = vpack.c.b16 %v2200, %v2196
          %v2649 = vpack.c.b16 %v2201, %v2197
          %v2650 = vpack.c.b16 %v2202, %v2198
          %v2651 = vpack.c.b16 %v2203, %v2199
          %v2652 = vpack.c.b16 %v2208, %v2204
          %v2653 = vpack.c.b16 %v2209, %v2205
          %v2654 = vpack.c.b16 %v2210, %v2206
          %v2655 = vpack.c.b16 %v2211, %v2207
          %v2656 = vpack.c.b16 %v2216, %v2212
          %v2657 = vpack.c.b16 %v2217, %v2213
          %v2658 = vpack.c.b16 %v2218, %v2214
          %v2659 = vpack.c.b16 %v2219, %v2215
          %v2660 = vpack.c.b16 %v2224, %v2220
          %v2661 = vpack.c.b16 %v2225, %v2221
          %v2662 = vpack.c.b16 %v2226, %v2222
          %v2663 = vpack.c.b16 %v2227, %v2223
          %v2664 = vpack.c.b16 %v2232, %v2228
          %v2665 = vpack.c.b16 %v2233, %v2229
          %v2666 = vpack.c.b16 %v2234, %v2230
          %v2667 = vpack.c.b16 %v2235, %v2231
          %v2668 = vpack.c.b16 %v2240, %v2236
          %v2669 = vpack.c.b16 %v2241, %v2237
          %v2670 = vpack.c.b16 %v2242, %v2238
          %v2671 = vpack.c.b16 %v2243, %v2239
          %v2672 = vpack.c.b16 %v2248, %v2244
          %v2673 = vpack.c.b16 %v2249, %v2245
          %v2674 = vpack.c.b16 %v2250, %v2246
          %v2675 = vpack.c.b16 %v2251, %v2247
          %v2676 = vpack.c.b16 %v2256, %v2252
          %v2677 = vpack.c.b16 %v2257, %v2253
          %v2678 = vpack.c.b16 %v2258, %v2254
          %v2679 = vpack.c.b16 %v2259, %v2255
          %v2680 = vpack.c.b16 %v2264, %v2260
          %v2681 = vpack.c.b16 %v2265, %v2261
          %v2682 = vpack.c.b16 %v2266, %v2262
          %v2683 = vpack.c.b16 %v2267, %v2263
          %v2684 = vpack.c.b16 %v2272, %v2268
          %v2685 = vpack.c.b16 %v2273, %v2269
          %v2686 = vpack.c.b16 %v2274, %v2270
          %v2687 = vpack.c.b16 %v2275, %v2271
          %v2688 = vpack.c.b16 %v2280, %v2276
          %v2689 = vpack.c.b16 %v2281, %v2277
          %v2690 = vpack.c.b16 %v2282, %v2278
          %v2691 = vpack.c.b16 %v2283, %v2279
          %v2692 = vpack.c.b16 %v2288, %v2284
          %v2693 = vpack.c.b16 %v2289, %v2285
          %v2694 = vpack.c.b16 %v2290, %v2286
          %v2695 = vpack.c.b16 %v2291, %v2287
          %v2696 = vpack.c.b16 %v2296, %v2292
          %v2697 = vpack.c.b16 %v2297, %v2293
          %v2698 = vpack.c.b16 %v2298, %v2294
          %v2699 = vpack.c.b16 %v2299, %v2295
          %v2700 = vpack.c.b16 %v2304, %v2300
          %v2701 = vpack.c.b16 %v2305, %v2301
          %v2702 = vpack.c.b16 %v2306, %v2302
          %v2703 = vpack.c.b16 %v2307, %v2303
          %v2704 = vpack.c.b16 %v2312, %v2308
          %v2705 = vpack.c.b16 %v2313, %v2309
          %v2706 = vpack.c.b16 %v2314, %v2310
          %v2707 = vpack.c.b16 %v2315, %v2311
          %v2708 = vpack.c.b16 %v2320, %v2316
          %v2709 = vpack.c.b16 %v2321, %v2317
          %v2710 = vpack.c.b16 %v2322, %v2318
          %v2711 = vpack.c.b16 %v2323, %v2319
          %v2712 = vpack.c.b16 %v2328, %v2324
          %v2713 = vpack.c.b16 %v2329, %v2325
          %v2714 = vpack.c.b16 %v2330, %v2326
          %v2715 = vpack.c.b16 %v2331, %v2327
          %v2716 = vpack.c.b16 %v2336, %v2332
          %v2717 = vpack.c.b16 %v2337, %v2333
          %v2718 = vpack.c.b16 %v2338, %v2334
          %v2719 = vpack.c.b16 %v2339, %v2335
          %v2720 = vpack.c.b16 %v2344, %v2340
          %v2721 = vpack.c.b16 %v2345, %v2341
          %v2722 = vpack.c.b16 %v2346, %v2342
          %v2723 = vpack.c.b16 %v2347, %v2343
          %v2724 = vpack.c.b16 %v2352, %v2348
          %v2725 = vpack.c.b16 %v2353, %v2349
          %v2726 = vpack.c.b16 %v2354, %v2350
          %v2727 = vpack.c.b16 %v2355, %v2351
          %v2728 = vpack.c.b16 %v2360, %v2356
          %v2729 = vpack.c.b16 %v2361, %v2357
          %v2730 = vpack.c.b16 %v2362, %v2358
          %v2731 = vpack.c.b16 %v2363, %v2359
          %v2732 = vpack.c.b16 %v2368, %v2364
          %v2733 = vpack.c.b16 %v2369, %v2365
          %v2734 = vpack.c.b16 %v2370, %v2366
          %v2735 = vpack.c.b16 %v2371, %v2367
          %v2736 = vpack.c.b16 %v2376, %v2372
          %v2737 = vpack.c.b16 %v2377, %v2373
          %v2738 = vpack.c.b16 %v2378, %v2374
          %v2739 = vpack.c.b16 %v2379, %v2375
          %v2740 = vpack.c.b16 %v2384, %v2380
          %v2741 = vpack.c.b16 %v2385, %v2381
          %v2742 = vpack.c.b16 %v2386, %v2382
          %v2743 = vpack.c.b16 %v2387, %v2383
          %v2744 = vpack.c.b16 %v2392, %v2388
          %v2745 = vpack.c.b16 %v2393, %v2389
          %v2746 = vpack.c.b16 %v2394, %v2390
          %v2747 = vpack.c.b16 %v2395, %v2391
          %v2748 = vpack.c.b16 %v2400, %v2396
          %v2749 = vpack.c.b16 %v2401, %v2397
          %v2750 = vpack.c.b16 %v2402, %v2398
          %v2751 = vpack.c.b16 %v2403, %v2399
          %v2752 = vpack.c.b16 %v2408, %v2404
          %v2753 = vpack.c.b16 %v2409, %v2405
          %v2754 = vpack.c.b16 %v2410, %v2406
          %v2755 = vpack.c.b16 %v2411, %v2407
          %v2756 = vpack.c.b16 %v2416, %v2412
          %v2757 = vpack.c.b16 %v2417, %v2413
          %v2758 = vpack.c.b16 %v2418, %v2414
          %v2759 = vpack.c.b16 %v2419, %v2415
          %v2760 = vpack.c.b16 %v2424, %v2420
          %v2761 = vpack.c.b16 %v2425, %v2421
          %v2762 = vpack.c.b16 %v2426, %v2422
          %v2763 = vpack.c.b16 %v2427, %v2423
          %v2764 = vpack.c.b16 %v2432, %v2428
          %v2765 = vpack.c.b16 %v2433, %v2429
          %v2766 = vpack.c.b16 %v2434, %v2430
          %v2767 = vpack.c.b16 %v2435, %v2431
          %v2768 = vpack.c.b16 %v2440, %v2436
          %v2769 = vpack.c.b16 %v2441, %v2437
          %v2770 = vpack.c.b16 %v2442, %v2438
          %v2771 = vpack.c.b16 %v2443, %v2439
          %v2772 = vpack.c.b16 %v2448, %v2444
          %v2773 = vpack.c.b16 %v2449, %v2445
          %v2774 = vpack.c.b16 %v2450, %v2446
          %v2775 = vpack.c.b16 %v2451, %v2447
          %v2776 = vpack.c.b16 %v2456, %v2452
          %v2777 = vpack.c.b16 %v2457, %v2453
          %v2778 = vpack.c.b16 %v2458, %v2454
          %v2779 = vpack.c.b16 %v2459, %v2455
          %v2780 = vpack.c.b16 %v2464, %v2460
          %v2781 = vpack.c.b16 %v2465, %v2461
          %v2782 = vpack.c.b16 %v2466, %v2462
          %v2783 = vpack.c.b16 %v2467, %v2463
          %v2784 = vpack.c.b16 %v2472, %v2468
          %v2785 = vpack.c.b16 %v2473, %v2469
          %v2786 = vpack.c.b16 %v2474, %v2470
          %v2787 = vpack.c.b16 %v2475, %v2471
          %v2788 = vpack.c.b16 %v2480, %v2476
          %v2789 = vpack.c.b16 %v2481, %v2477
          %v2790 = vpack.c.b16 %v2482, %v2478
          %v2791 = vpack.c.b16 %v2483, %v2479
          %v2792 = vpack.c.b16 %v2488, %v2484
          %v2793 = vpack.c.b16 %v2489, %v2485
          %v2794 = vpack.c.b16 %v2490, %v2486
          %v2795 = vpack.c.b16 %v2491, %v2487
          %v2796 = vpack.c.b16 %v2496, %v2492
          %v2797 = vpack.c.b16 %v2497, %v2493
          %v2798 = vpack.c.b16 %v2498, %v2494
          %v2799 = vpack.c.b16 %v2499, %v2495
          %v2800 = vpack.c.b16 %v2504, %v2500
          %v2801 = vpack.c.b16 %v2505, %v2501
          %v2802 = vpack.c.b16 %v2506, %v2502
          %v2803 = vpack.c.b16 %v2507, %v2503
          %v2804 = vpack.c.b16 %v2512, %v2508
          %v2805 = vpack.c.b16 %v2513, %v2509
          %v2806 = vpack.c.b16 %v2514, %v2510
          %v2807 = vpack.c.b16 %v2515, %v2511
          %v2808 = vpack.c.b16 %v2520, %v2516
          %v2809 = vpack.c.b16 %v2521, %v2517
          %v2810 = vpack.c.b16 %v2522, %v2518
          %v2811 = vpack.c.b16 %v2523, %v2519
          %v2812 = vpack.c.b16 %v2528, %v2524
          %v2813 = vpack.c.b16 %v2529, %v2525
          %v2814 = vpack.c.b16 %v2530, %v2526
          %v2815 = vpack.c.b16 %v2531, %v2527
          %v2816 = vpack.c.b16 %v2536, %v2532
          %v2817 = vpack.c.b16 %v2537, %v2533
          %v2818 = vpack.c.b16 %v2538, %v2534
          %v2819 = vpack.c.b16 %v2539, %v2535
          %v2820 = vpack.c.b16 %v2544, %v2540
          %v2821 = vpack.c.b16 %v2545, %v2541
          %v2822 = vpack.c.b16 %v2546, %v2542
          %v2823 = vpack.c.b16 %v2547, %v2543
          %v2824 = vpack.c.b16 %v2552, %v2548
          %v2825 = vpack.c.b16 %v2553, %v2549
          %v2826 = vpack.c.b16 %v2554, %v2550
          %v2827 = vpack.c.b16 %v2555, %v2551
          %v2828 = vpack.c.b16 %v2560, %v2556
          %v2829 = vpack.c.b16 %v2561, %v2557
          %v2830 = vpack.c.b16 %v2562, %v2558
          %v2831 = vpack.c.b16 %v2563, %v2559
          %v2832 = vpack.c.b16 %v2568, %v2564
          %v2833 = vpack.c.b16 %v2569, %v2565
          %v2834 = vpack.c.b16 %v2570, %v2566
          %v2835 = vpack.c.b16 %v2571, %v2567
          %v2836 = vpack.c.b16 %v2576, %v2572
          %v2837 = vpack.c.b16 %v2577, %v2573
          %v2838 = vpack.c.b16 %v2578, %v2574
          %v2839 = vpack.c.b16 %v2579, %v2575
          %v2840 = vpack.c.b16 %v2584, %v2580
          %v2841 = vpack.c.b16 %v2585, %v2581
          %v2842 = vpack.c.b16 %v2586, %v2582
          %v2843 = vpack.c.b16 %v2587, %v2583
          %v3101 = vlaneseq
          %v3102 = vshrl.u32 %v3101, 7
          %v3103 = vsub.s32 0, %v3102
          %v3104 = vrot.slane %v1819, %v3103
          %v3105 = vlaneseq
          %v3106 = vshrl.u32 %v3105, 7
          %v3107 = vsub.s32 1, %v3106
          %v3108 = vrot.slane %v1819, %v3107
          %v3109 = vlaneseq
          %v3110 = vshrl.u32 %v3109, 7
          %v3111 = vsub.s32 2, %v3110
          %v3112 = vrot.slane %v1819, %v3111
          %v3113 = vlaneseq
          %v3114 = vshrl.u32 %v3113, 7
          %v3115 = vsub.s32 3, %v3114
          %v3116 = vrot.slane %v1819, %v3115
          %3121 = vmatprep.subr.bf16.mxu0 %v2617
          %3122 = vmatpush1.bf16.msra.mxu0 %v2616
          %3123 = vmatprep.subr.bf16.mxu0 %v2613
          %3124 = vmatpush1.bf16.msra.mxu0 %v2612
          %3125 = vmatprep.subr.bf16.mxu0 %v2609
          %3126 = vmatpush1.bf16.msra.mxu0 %v2608
          %3127 = vmatprep.subr.bf16.mxu0 %v2605
          %3128 = vmatpush1.bf16.msra.mxu0 %v2604
          %3129 = vmatprep.subr.bf16.mxu0 %v2601
          %3130 = vmatpush1.bf16.msra.mxu0 %v2600
          %3131 = vmatprep.subr.bf16.mxu0 %v2597
          %3132 = vmatpush1.bf16.msra.mxu0 %v2596
          %3133 = vmatprep.subr.bf16.mxu0 %v2593
          %3134 = vmatpush1.bf16.msra.mxu0 %v2592
          %3135 = vmatprep.subr.bf16.mxu0 %v2589
          %3136 = vmatpush1.bf16.msra.mxu0 %v2588
          %3137 = vmatprep.subr.bf16.mxu0 %v2649
          %3138 = vmatpush2.bf16.msra.mxu0 %v2648
          %3139 = vmatprep.subr.bf16.mxu0 %v2645
          %3140 = vmatpush2.bf16.msra.mxu0 %v2644
          %3141 = vmatprep.subr.bf16.mxu0 %v2641
          %3142 = vmatpush2.bf16.msra.mxu0 %v2640
          %3143 = vmatprep.subr.bf16.mxu0 %v2637
          %3144 = vmatpush2.bf16.msra.mxu0 %v2636
          %3145 = vmatprep.subr.bf16.mxu0 %v2633
          %3146 = vmatpush2.bf16.msra.mxu0 %v2632
          %3147 = vmatprep.subr.bf16.mxu0 %v2629
          %3148 = vmatpush2.bf16.msra.mxu0 %v2628
          %3149 = vmatprep.subr.bf16.mxu0 %v2625
          %3150 = vmatpush2.bf16.msra.mxu0 %v2624
          %3151 = vmatprep.subr.bf16.mxu0 %v2621
          %3152 = vmatpush2.bf16.msra.mxu0 %v2620
          %3153 = vmatprep.mubr.bf16.mxu0 %v1556
          %3154 = vmatmul.mubr.bf16.gmra.mxu0 %v1555
          %v3155 = vpop.f32.mrf.mxu0
          %v3156 = vadd.f32 %v3104, %v3155
          %v3157 = vpop.f32.mrf.mxu0
          %v3158 = vadd.f32 %v3108, %v3157
          %v3159 = vpop.f32.mrf.mxu0
          %v3160 = vpop.f32.mrf.mxu0
          %3161 = vdwg.mxu0
          %3162 = vmatprep.subr.bf16.mxu0 %v2681
          %3163 = vmatpush1.bf16.msra.mxu0 %v2680
          %3164 = vmatprep.subr.bf16.mxu0 %v2677
          %3165 = vmatpush1.bf16.msra.mxu0 %v2676
          %3166 = vmatprep.subr.bf16.mxu0 %v2673
          %3167 = vmatpush1.bf16.msra.mxu0 %v2672
          %3168 = vmatprep.subr.bf16.mxu0 %v2669
          %3169 = vmatpush1.bf16.msra.mxu0 %v2668
          %3170 = vmatprep.subr.bf16.mxu0 %v2665
          %3171 = vmatpush1.bf16.msra.mxu0 %v2664
          %3172 = vmatprep.subr.bf16.mxu0 %v2661
          %3173 = vmatpush1.bf16.msra.mxu0 %v2660
          %3174 = vmatprep.subr.bf16.mxu0 %v2657
          %3175 = vmatpush1.bf16.msra.mxu0 %v2656
          %3176 = vmatprep.subr.bf16.mxu0 %v2653
          %3177 = vmatpush1.bf16.msra.mxu0 %v2652
          %3178 = vmatprep.subr.bf16.mxu0 %v2713
          %3179 = vmatpush2.bf16.msra.mxu0 %v2712
          %3180 = vmatprep.subr.bf16.mxu0 %v2709
          %3181 = vmatpush2.bf16.msra.mxu0 %v2708
          %3182 = vmatprep.subr.bf16.mxu0 %v2705
          %3183 = vmatpush2.bf16.msra.mxu0 %v2704
          %3184 = vmatprep.subr.bf16.mxu0 %v2701
          %3185 = vmatpush2.bf16.msra.mxu0 %v2700
          %3186 = vmatprep.subr.bf16.mxu0 %v2697
          %3187 = vmatpush2.bf16.msra.mxu0 %v2696
          %3188 = vmatprep.subr.bf16.mxu0 %v2693
          %3189 = vmatpush2.bf16.msra.mxu0 %v2692
          %3190 = vmatprep.subr.bf16.mxu0 %v2689
          %3191 = vmatpush2.bf16.msra.mxu0 %v2688
          %3192 = vmatprep.subr.bf16.mxu0 %v2685
          %3193 = vmatpush2.bf16.msra.mxu0 %v2684
          %3194 = vmatprep.mubr.bf16.mxu0 %v1558
          %3195 = vmatmul.mubr.bf16.gmra.mxu0 %v1557
          %v3196 = vpop.f32.mrf.mxu0
          %v3197 = vadd.f32 %v3156, %v3196
          %v3198 = vpop.f32.mrf.mxu0
          %v3199 = vadd.f32 %v3158, %v3198
          %v3200 = vpop.f32.mrf.mxu0
          %v3201 = vpop.f32.mrf.mxu0
          %3202 = vdwg.mxu0
          %3203 = vmatprep.subr.bf16.mxu0 %v2745
          %3204 = vmatpush1.bf16.msra.mxu0 %v2744
          %3205 = vmatprep.subr.bf16.mxu0 %v2741
          %3206 = vmatpush1.bf16.msra.mxu0 %v2740
          %3207 = vmatprep.subr.bf16.mxu0 %v2737
          %3208 = vmatpush1.bf16.msra.mxu0 %v2736
          %3209 = vmatprep.subr.bf16.mxu0 %v2733
          %3210 = vmatpush1.bf16.msra.mxu0 %v2732
          %3211 = vmatprep.subr.bf16.mxu0 %v2729
          %3212 = vmatpush1.bf16.msra.mxu0 %v2728
          %3213 = vmatprep.subr.bf16.mxu0 %v2725
          %3214 = vmatpush1.bf16.msra.mxu0 %v2724
          %3215 = vmatprep.subr.bf16.mxu0 %v2721
          %3216 = vmatpush1.bf16.msra.mxu0 %v2720
          %3217 = vmatprep.subr.bf16.mxu0 %v2717
          %3218 = vmatpush1.bf16.msra.mxu0 %v2716
          %3219 = vmatprep.subr.bf16.mxu0 %v2777
          %3220 = vmatpush2.bf16.msra.mxu0 %v2776
          %3221 = vmatprep.subr.bf16.mxu0 %v2773
          %3222 = vmatpush2.bf16.msra.mxu0 %v2772
          %3223 = vmatprep.subr.bf16.mxu0 %v2769
          %3224 = vmatpush2.bf16.msra.mxu0 %v2768
          %3225 = vmatprep.subr.bf16.mxu0 %v2765
          %3226 = vmatpush2.bf16.msra.mxu0 %v2764
          %3227 = vmatprep.subr.bf16.mxu0 %v2761
          %3228 = vmatpush2.bf16.msra.mxu0 %v2760
          %3229 = vmatprep.subr.bf16.mxu0 %v2757
          %3230 = vmatpush2.bf16.msra.mxu0 %v2756
          %3231 = vmatprep.subr.bf16.mxu0 %v2753
          %3232 = vmatpush2.bf16.msra.mxu0 %v2752
          %3233 = vmatprep.subr.bf16.mxu0 %v2749
          %3234 = vmatpush2.bf16.msra.mxu0 %v2748
          %3235 = vmatprep.mubr.bf16.mxu0 %v1560
          %3236 = vmatmul.mubr.bf16.gmra.mxu0 %v1559
          %v3237 = vpop.f32.mrf.mxu0
          %v3238 = vadd.f32 %v3197, %v3237
          %v3239 = vpop.f32.mrf.mxu0
          %v3240 = vadd.f32 %v3199, %v3239
          %v3241 = vpop.f32.mrf.mxu0
          %v3242 = vpop.f32.mrf.mxu0
          %3243 = vdwg.mxu0
          %3244 = vmatprep.subr.bf16.mxu0 %v2809
          %3245 = vmatpush1.bf16.msra.mxu0 %v2808
          %3246 = vmatprep.subr.bf16.mxu0 %v2805
          %3247 = vmatpush1.bf16.msra.mxu0 %v2804
          %3248 = vmatprep.subr.bf16.mxu0 %v2801
          %3249 = vmatpush1.bf16.msra.mxu0 %v2800
          %3250 = vmatprep.subr.bf16.mxu0 %v2797
          %3251 = vmatpush1.bf16.msra.mxu0 %v2796
          %3252 = vmatprep.subr.bf16.mxu0 %v2793
          %3253 = vmatpush1.bf16.msra.mxu0 %v2792
          %3254 = vmatprep.subr.bf16.mxu0 %v2789
          %3255 = vmatpush1.bf16.msra.mxu0 %v2788
          %3256 = vmatprep.subr.bf16.mxu0 %v2785
          %3257 = vmatpush1.bf16.msra.mxu0 %v2784
          %3258 = vmatprep.subr.bf16.mxu0 %v2781
          %3259 = vmatpush1.bf16.msra.mxu0 %v2780
          %3260 = vmatprep.subr.bf16.mxu0 %v2841
          %3261 = vmatpush2.bf16.msra.mxu0 %v2840
          %3262 = vmatprep.subr.bf16.mxu0 %v2837
          %3263 = vmatpush2.bf16.msra.mxu0 %v2836
          %3264 = vmatprep.subr.bf16.mxu0 %v2833
          %3265 = vmatpush2.bf16.msra.mxu0 %v2832
          %3266 = vmatprep.subr.bf16.mxu0 %v2829
          %3267 = vmatpush2.bf16.msra.mxu0 %v2828
          %3268 = vmatprep.subr.bf16.mxu0 %v2825
          %3269 = vmatpush2.bf16.msra.mxu0 %v2824
          %3270 = vmatprep.subr.bf16.mxu0 %v2821
          %3271 = vmatpush2.bf16.msra.mxu0 %v2820
          %3272 = vmatprep.subr.bf16.mxu0 %v2817
          %3273 = vmatpush2.bf16.msra.mxu0 %v2816
          %3274 = vmatprep.subr.bf16.mxu0 %v2813
          %3275 = vmatpush2.bf16.msra.mxu0 %v2812
          %3276 = vmatprep.mubr.bf16.mxu0 %v1562
          %3277 = vmatmul.mubr.bf16.gmra.mxu0 %v1561
          %v3278 = vpop.f32.mrf.mxu0
          %v3279 = vadd.f32 %v3238, %v3278
          %v3280 = vpop.f32.mrf.mxu0
          %v3281 = vadd.f32 %v3240, %v3280
          %v3282 = vpop.f32.mrf.mxu0
          %v3283 = vpop.f32.mrf.mxu0
          %3284 = vdwg.mxu0
          %3285 = vmatprep.subr.bf16.mxu0 %v2619
          %3286 = vmatpush1.bf16.msra.mxu0 %v2618
          %3287 = vmatprep.subr.bf16.mxu0 %v2615
          %3288 = vmatpush1.bf16.msra.mxu0 %v2614
          %3289 = vmatprep.subr.bf16.mxu0 %v2611
          %3290 = vmatpush1.bf16.msra.mxu0 %v2610
          %3291 = vmatprep.subr.bf16.mxu0 %v2607
          %3292 = vmatpush1.bf16.msra.mxu0 %v2606
          %3293 = vmatprep.subr.bf16.mxu0 %v2603
          %3294 = vmatpush1.bf16.msra.mxu0 %v2602
          %3295 = vmatprep.subr.bf16.mxu0 %v2599
          %3296 = vmatpush1.bf16.msra.mxu0 %v2598
          %3297 = vmatprep.subr.bf16.mxu0 %v2595
          %3298 = vmatpush1.bf16.msra.mxu0 %v2594
          %3299 = vmatprep.subr.bf16.mxu0 %v2591
          %3300 = vmatpush1.bf16.msra.mxu0 %v2590
          %3301 = vmatprep.subr.bf16.mxu0 %v2651
          %3302 = vmatpush2.bf16.msra.mxu0 %v2650
          %3303 = vmatprep.subr.bf16.mxu0 %v2647
          %3304 = vmatpush2.bf16.msra.mxu0 %v2646
          %3305 = vmatprep.subr.bf16.mxu0 %v2643
          %3306 = vmatpush2.bf16.msra.mxu0 %v2642
          %3307 = vmatprep.subr.bf16.mxu0 %v2639
          %3308 = vmatpush2.bf16.msra.mxu0 %v2638
          %3309 = vmatprep.subr.bf16.mxu0 %v2635
          %3310 = vmatpush2.bf16.msra.mxu0 %v2634
          %3311 = vmatprep.subr.bf16.mxu0 %v2631
          %3312 = vmatpush2.bf16.msra.mxu0 %v2630
          %3313 = vmatprep.subr.bf16.mxu0 %v2627
          %3314 = vmatpush2.bf16.msra.mxu0 %v2626
          %3315 = vmatprep.subr.bf16.mxu0 %v2623
          %3316 = vmatpush2.bf16.msra.mxu0 %v2622
          %3317 = vmatprep.mubr.bf16.mxu0 %v1556
          %3318 = vmatmul.mubr.bf16.gmra.mxu0 %v1555
          %v3319 = vpop.f32.mrf.mxu0
          %v3320 = vadd.f32 %v3112, %v3319
          %v3321 = vpop.f32.mrf.mxu0
          %v3322 = vadd.f32 %v3116, %v3321
          %v3323 = vpop.f32.mrf.mxu0
          %v3324 = vpop.f32.mrf.mxu0
          %3325 = vdwg.mxu0
          %3326 = vmatprep.subr.bf16.mxu0 %v2683
          %3327 = vmatpush1.bf16.msra.mxu0 %v2682
          %3328 = vmatprep.subr.bf16.mxu0 %v2679
          %3329 = vmatpush1.bf16.msra.mxu0 %v2678
          %3330 = vmatprep.subr.bf16.mxu0 %v2675
          %3331 = vmatpush1.bf16.msra.mxu0 %v2674
          %3332 = vmatprep.subr.bf16.mxu0 %v2671
          %3333 = vmatpush1.bf16.msra.mxu0 %v2670
          %3334 = vmatprep.subr.bf16.mxu0 %v2667
          %3335 = vmatpush1.bf16.msra.mxu0 %v2666
          %3336 = vmatprep.subr.bf16.mxu0 %v2663
          %3337 = vmatpush1.bf16.msra.mxu0 %v2662
          %3338 = vmatprep.subr.bf16.mxu0 %v2659
          %3339 = vmatpush1.bf16.msra.mxu0 %v2658
          %3340 = vmatprep.subr.bf16.mxu0 %v2655
          %3341 = vmatpush1.bf16.msra.mxu0 %v2654
          %3342 = vmatprep.subr.bf16.mxu0 %v2715
          %3343 = vmatpush2.bf16.msra.mxu0 %v2714
          %3344 = vmatprep.subr.bf16.mxu0 %v2711
          %3345 = vmatpush2.bf16.msra.mxu0 %v2710
          %3346 = vmatprep.subr.bf16.mxu0 %v2707
          %3347 = vmatpush2.bf16.msra.mxu0 %v2706
          %3348 = vmatprep.subr.bf16.mxu0 %v2703
          %3349 = vmatpush2.bf16.msra.mxu0 %v2702
          %3350 = vmatprep.subr.bf16.mxu0 %v2699
          %3351 = vmatpush2.bf16.msra.mxu0 %v2698
          %3352 = vmatprep.subr.bf16.mxu0 %v2695
          %3353 = vmatpush2.bf16.msra.mxu0 %v2694
          %3354 = vmatprep.subr.bf16.mxu0 %v2691
          %3355 = vmatpush2.bf16.msra.mxu0 %v2690
          %3356 = vmatprep.subr.bf16.mxu0 %v2687
          %3357 = vmatpush2.bf16.msra.mxu0 %v2686
          %3358 = vmatprep.mubr.bf16.mxu0 %v1558
          %3359 = vmatmul.mubr.bf16.gmra.mxu0 %v1557
          %v3360 = vpop.f32.mrf.mxu0
          %v3361 = vadd.f32 %v3320, %v3360
          %v3362 = vpop.f32.mrf.mxu0
          %v3363 = vadd.f32 %v3322, %v3362
          %v3364 = vpop.f32.mrf.mxu0
          %v3365 = vpop.f32.mrf.mxu0
          %3366 = vdwg.mxu0
          %3367 = vmatprep.subr.bf16.mxu0 %v2747
          %3368 = vmatpush1.bf16.msra.mxu0 %v2746
          %3369 = vmatprep.subr.bf16.mxu0 %v2743
          %3370 = vmatpush1.bf16.msra.mxu0 %v2742
          %3371 = vmatprep.subr.bf16.mxu0 %v2739
          %3372 = vmatpush1.bf16.msra.mxu0 %v2738
          %3373 = vmatprep.subr.bf16.mxu0 %v2735
          %3374 = vmatpush1.bf16.msra.mxu0 %v2734
          %3375 = vmatprep.subr.bf16.mxu0 %v2731
          %3376 = vmatpush1.bf16.msra.mxu0 %v2730
          %3377 = vmatprep.subr.bf16.mxu0 %v2727
          %3378 = vmatpush1.bf16.msra.mxu0 %v2726
          %3379 = vmatprep.subr.bf16.mxu0 %v2723
          %3380 = vmatpush1.bf16.msra.mxu0 %v2722
          %3381 = vmatprep.subr.bf16.mxu0 %v2719
          %3382 = vmatpush1.bf16.msra.mxu0 %v2718
          %3383 = vmatprep.subr.bf16.mxu0 %v2779
          %3384 = vmatpush2.bf16.msra.mxu0 %v2778
          %3385 = vmatprep.subr.bf16.mxu0 %v2775
          %3386 = vmatpush2.bf16.msra.mxu0 %v2774
          %3387 = vmatprep.subr.bf16.mxu0 %v2771
          %3388 = vmatpush2.bf16.msra.mxu0 %v2770
          %3389 = vmatprep.subr.bf16.mxu0 %v2767
          %3390 = vmatpush2.bf16.msra.mxu0 %v2766
          %3391 = vmatprep.subr.bf16.mxu0 %v2763
          %3392 = vmatpush2.bf16.msra.mxu0 %v2762
          %3393 = vmatprep.subr.bf16.mxu0 %v2759
          %3394 = vmatpush2.bf16.msra.mxu0 %v2758
          %3395 = vmatprep.subr.bf16.mxu0 %v2755
          %3396 = vmatpush2.bf16.msra.mxu0 %v2754
          %3397 = vmatprep.subr.bf16.mxu0 %v2751
          %3398 = vmatpush2.bf16.msra.mxu0 %v2750
          %3399 = vmatprep.mubr.bf16.mxu0 %v1560
          %3400 = vmatmul.mubr.bf16.gmra.mxu0 %v1559
          %v3401 = vpop.f32.mrf.mxu0
          %v3402 = vadd.f32 %v3361, %v3401
          %v3403 = vpop.f32.mrf.mxu0
          %v3404 = vadd.f32 %v3363, %v3403
          %v3405 = vpop.f32.mrf.mxu0
          %v3406 = vpop.f32.mrf.mxu0
          %3407 = vdwg.mxu0
          %3408 = vmatprep.subr.bf16.mxu0 %v2811
          %3409 = vmatpush1.bf16.msra.mxu0 %v2810
          %3410 = vmatprep.subr.bf16.mxu0 %v2807
          %3411 = vmatpush1.bf16.msra.mxu0 %v2806
          %3412 = vmatprep.subr.bf16.mxu0 %v2803
          %3413 = vmatpush1.bf16.msra.mxu0 %v2802
          %3414 = vmatprep.subr.bf16.mxu0 %v2799
          %3415 = vmatpush1.bf16.msra.mxu0 %v2798
          %3416 = vmatprep.subr.bf16.mxu0 %v2795
          %3417 = vmatpush1.bf16.msra.mxu0 %v2794
          %3418 = vmatprep.subr.bf16.mxu0 %v2791
          %3419 = vmatpush1.bf16.msra.mxu0 %v2790
          %3420 = vmatprep.subr.bf16.mxu0 %v2787
          %3421 = vmatpush1.bf16.msra.mxu0 %v2786
          %3422 = vmatprep.subr.bf16.mxu0 %v2783
          %3423 = vmatpush1.bf16.msra.mxu0 %v2782
          %3424 = vmatprep.subr.bf16.mxu0 %v2843
          %3425 = vmatpush2.bf16.msra.mxu0 %v2842
          %3426 = vmatprep.subr.bf16.mxu0 %v2839
          %3427 = vmatpush2.bf16.msra.mxu0 %v2838
          %3428 = vmatprep.subr.bf16.mxu0 %v2835
          %3429 = vmatpush2.bf16.msra.mxu0 %v2834
          %3430 = vmatprep.subr.bf16.mxu0 %v2831
          %3431 = vmatpush2.bf16.msra.mxu0 %v2830
          %3432 = vmatprep.subr.bf16.mxu0 %v2827
          %3433 = vmatpush2.bf16.msra.mxu0 %v2826
          %3434 = vmatprep.subr.bf16.mxu0 %v2823
          %3435 = vmatpush2.bf16.msra.mxu0 %v2822
          %3436 = vmatprep.subr.bf16.mxu0 %v2819
          %3437 = vmatpush2.bf16.msra.mxu0 %v2818
          %3438 = vmatprep.subr.bf16.mxu0 %v2815
          %3439 = vmatpush2.bf16.msra.mxu0 %v2814
          %3440 = vmatprep.mubr.bf16.mxu0 %v1562
          %3441 = vmatmul.mubr.bf16.gmra.mxu0 %v1561
          %v3442 = vpop.f32.mrf.mxu0
          %v3443 = vadd.f32 %v3402, %v3442
          %v3444 = vpop.f32.mrf.mxu0
          %v3445 = vadd.f32 %v3404, %v3444
          %v3446 = vpop.f32.mrf.mxu0
          %v3447 = vpop.f32.mrf.mxu0
          %3448 = vdwg.mxu0
          %v3449 = vmax.f32 %v3279, 0.0
          %v3450 = vmax.f32 %v3281, 0.0
          %v3451 = vmax.f32 %v3443, 0.0
          %v3452 = vmax.f32 %v3445, 0.0
          %v3453 = vpack.c.bf16 %v3449, %v3449
          %v3454 = vpack.c.bf16 %v3450, %v3450
          %v3455 = vpack.c.bf16 %v3451, %v3451
          %v3456 = vpack.c.bf16 %v3452, %v3452
          %v3457 = vld [vmem:[%s10] sm:$0xff]
          %v3458 = vld [vmem:[%s10 + $0x8] sm:$0xff]
          %v3459 = vld [vmem:[%s10 + $0x10] sm:$0xff]
          %v3460 = vld [vmem:[%s10 + $0x18] sm:$0xff]
          %v3461 = vld [vmem:[%s10 + $0x20] sm:$0xff]
          %v3462 = vld [vmem:[%s10 + $0x28] sm:$0xff]
          %v3463 = vld [vmem:[%s10 + $0x30] sm:$0xff]
          %v3464 = vld [vmem:[%s10 + $0x38] sm:$0xff]
          %v3465 = vld [vmem:[%s10 + $0x40] sm:$0xff]
          %v3466 = vld [vmem:[%s10 + $0x48] sm:$0xff]
          %v3467 = vld [vmem:[%s10 + $0x50] sm:$0xff]
          %v3468 = vld [vmem:[%s10 + $0x58] sm:$0xff]
          %v3469 = vld [vmem:[%s10 + $0x60] sm:$0xff]
          %v3470 = vld [vmem:[%s10 + $0x68] sm:$0xff]
          %v3471 = vld [vmem:[%s10 + $0x70] sm:$0xff]
          %v3472 = vld [vmem:[%s10 + $0x78] sm:$0xff]
          %v3473 = vld [vmem:[%s10 + $0x80] sm:$0xff]
          %v3474 = vld [vmem:[%s10 + $0x88] sm:$0xff]
          %v3475 = vld [vmem:[%s10 + $0x90] sm:$0xff]
          %v3476 = vld [vmem:[%s10 + $0x98] sm:$0xff]
          %v3477 = vld [vmem:[%s10 + $0xa0] sm:$0xff]
          %v3478 = vld [vmem:[%s10 + $0xa8] sm:$0xff]
          %v3479 = vld [vmem:[%s10 + $0xb0] sm:$0xff]
          %v3480 = vld [vmem:[%s10 + $0xb8] sm:$0xff]
          %v3481 = vld [vmem:[%s10 + $0xc0] sm:$0xff]
          %v3482 = vld [vmem:[%s10 + $0xc8] sm:$0xff]
          %v3483 = vld [vmem:[%s10 + $0xd0] sm:$0xff]
          %v3484 = vld [vmem:[%s10 + $0xd8] sm:$0xff]
          %v3485 = vld [vmem:[%s10 + $0xe0] sm:$0xff]
          %v3486 = vld [vmem:[%s10 + $0xe8] sm:$0xff]
          %v3487 = vld [vmem:[%s10 + $0xf0] sm:$0xff]
          %v3488 = vld [vmem:[%s10 + $0xf8] sm:$0xff]
          %v3489 = vld [vmem:[%s10 + $0x100] sm:$0xff]
          %v3490 = vld [vmem:[%s10 + $0x108] sm:$0xff]
          %v3491 = vld [vmem:[%s10 + $0x110] sm:$0xff]
          %v3492 = vld [vmem:[%s10 + $0x118] sm:$0xff]
          %v3493 = vld [vmem:[%s10 + $0x120] sm:$0xff]
          %v3494 = vld [vmem:[%s10 + $0x128] sm:$0xff]
          %v3495 = vld [vmem:[%s10 + $0x130] sm:$0xff]
          %v3496 = vld [vmem:[%s10 + $0x138] sm:$0xff]
          %v3497 = vld [vmem:[%s10 + $0x140] sm:$0xff]
          %v3498 = vld [vmem:[%s10 + $0x148] sm:$0xff]
          %v3499 = vld [vmem:[%s10 + $0x150] sm:$0xff]
          %v3500 = vld [vmem:[%s10 + $0x158] sm:$0xff]
          %v3501 = vld [vmem:[%s10 + $0x160] sm:$0xff]
          %v3502 = vld [vmem:[%s10 + $0x168] sm:$0xff]
          %v3503 = vld [vmem:[%s10 + $0x170] sm:$0xff]
          %v3504 = vld [vmem:[%s10 + $0x178] sm:$0xff]
          %v3505 = vld [vmem:[%s10 + $0x180] sm:$0xff]
          %v3506 = vld [vmem:[%s10 + $0x188] sm:$0xff]
          %v3507 = vld [vmem:[%s10 + $0x190] sm:$0xff]
          %v3508 = vld [vmem:[%s10 + $0x198] sm:$0xff]
          %v3509 = vld [vmem:[%s10 + $0x1a0] sm:$0xff]
          %v3510 = vld [vmem:[%s10 + $0x1a8] sm:$0xff]
          %v3511 = vld [vmem:[%s10 + $0x1b0] sm:$0xff]
          %v3512 = vld [vmem:[%s10 + $0x1b8] sm:$0xff]
          %v3513 = vld [vmem:[%s10 + $0x1c0] sm:$0xff]
          %v3514 = vld [vmem:[%s10 + $0x1c8] sm:$0xff]
          %v3515 = vld [vmem:[%s10 + $0x1d0] sm:$0xff]
          %v3516 = vld [vmem:[%s10 + $0x1d8] sm:$0xff]
          %v3517 = vld [vmem:[%s10 + $0x1e0] sm:$0xff]
          %v3518 = vld [vmem:[%s10 + $0x1e8] sm:$0xff]
          %v3519 = vld [vmem:[%s10 + $0x1f0] sm:$0xff]
          %v3520 = vld [vmem:[%s10 + $0x1f8] sm:$0xff]
          %v3521 = vld [vmem:[%s11] sm:$0x3]
          %v3586 = vunpack.c.l.b16 %v3457
          %v3587 = vunpack.c.h.b16 %v3457
          %v3588 = vunpack.c.l.b16 %v3458
          %v3589 = vunpack.c.h.b16 %v3458
          %v3590 = vunpack.c.l.b16 %v3459
          %v3591 = vunpack.c.h.b16 %v3459
          %v3592 = vunpack.c.l.b16 %v3460
          %v3593 = vunpack.c.h.b16 %v3460
          %v3594 = vunpack.c.l.b16 %v3461
          %v3595 = vunpack.c.h.b16 %v3461
          %v3596 = vunpack.c.l.b16 %v3462
          %v3597 = vunpack.c.h.b16 %v3462
          %v3598 = vunpack.c.l.b16 %v3463
          %v3599 = vunpack.c.h.b16 %v3463
          %v3600 = vunpack.c.l.b16 %v3464
          %v3601 = vunpack.c.h.b16 %v3464
          %v3602 = vunpack.c.l.b16 %v3465
          %v3603 = vunpack.c.h.b16 %v3465
          %v3604 = vunpack.c.l.b16 %v3466
          %v3605 = vunpack.c.h.b16 %v3466
          %v3606 = vunpack.c.l.b16 %v3467
          %v3607 = vunpack.c.h.b16 %v3467
          %v3608 = vunpack.c.l.b16 %v3468
          %v3609 = vunpack.c.h.b16 %v3468
          %v3610 = vunpack.c.l.b16 %v3469
          %v3611 = vunpack.c.h.b16 %v3469
          %v3612 = vunpack.c.l.b16 %v3470
          %v3613 = vunpack.c.h.b16 %v3470
          %v3614 = vunpack.c.l.b16 %v3471
          %v3615 = vunpack.c.h.b16 %v3471
          %v3616 = vunpack.c.l.b16 %v3472
          %v3617 = vunpack.c.h.b16 %v3472
          %v3618 = vunpack.c.l.b16 %v3473
          %v3619 = vunpack.c.h.b16 %v3473
          %v3620 = vunpack.c.l.b16 %v3474
          %v3621 = vunpack.c.h.b16 %v3474
          %v3622 = vunpack.c.l.b16 %v3475
          %v3623 = vunpack.c.h.b16 %v3475
          %v3624 = vunpack.c.l.b16 %v3476
          %v3625 = vunpack.c.h.b16 %v3476
          %v3626 = vunpack.c.l.b16 %v3477
          %v3627 = vunpack.c.h.b16 %v3477
          %v3628 = vunpack.c.l.b16 %v3478
          %v3629 = vunpack.c.h.b16 %v3478
          %v3630 = vunpack.c.l.b16 %v3479
          %v3631 = vunpack.c.h.b16 %v3479
          %v3632 = vunpack.c.l.b16 %v3480
          %v3633 = vunpack.c.h.b16 %v3480
          %v3634 = vunpack.c.l.b16 %v3481
          %v3635 = vunpack.c.h.b16 %v3481
          %v3636 = vunpack.c.l.b16 %v3482
          %v3637 = vunpack.c.h.b16 %v3482
          %v3638 = vunpack.c.l.b16 %v3483
          %v3639 = vunpack.c.h.b16 %v3483
          %v3640 = vunpack.c.l.b16 %v3484
          %v3641 = vunpack.c.h.b16 %v3484
          %v3642 = vunpack.c.l.b16 %v3485
          %v3643 = vunpack.c.h.b16 %v3485
          %v3644 = vunpack.c.l.b16 %v3486
          %v3645 = vunpack.c.h.b16 %v3486
          %v3646 = vunpack.c.l.b16 %v3487
          %v3647 = vunpack.c.h.b16 %v3487
          %v3648 = vunpack.c.l.b16 %v3488
          %v3649 = vunpack.c.h.b16 %v3488
          %v3650 = vunpack.c.l.b16 %v3489
          %v3651 = vunpack.c.h.b16 %v3489
          %v3652 = vunpack.c.l.b16 %v3490
          %v3653 = vunpack.c.h.b16 %v3490
          %v3654 = vunpack.c.l.b16 %v3491
          %v3655 = vunpack.c.h.b16 %v3491
          %v3656 = vunpack.c.l.b16 %v3492
          %v3657 = vunpack.c.h.b16 %v3492
          %v3658 = vunpack.c.l.b16 %v3493
          %v3659 = vunpack.c.h.b16 %v3493
          %v3660 = vunpack.c.l.b16 %v3494
          %v3661 = vunpack.c.h.b16 %v3494
          %v3662 = vunpack.c.l.b16 %v3495
          %v3663 = vunpack.c.h.b16 %v3495
          %v3664 = vunpack.c.l.b16 %v3496
          %v3665 = vunpack.c.h.b16 %v3496
          %v3666 = vunpack.c.l.b16 %v3497
          %v3667 = vunpack.c.h.b16 %v3497
          %v3668 = vunpack.c.l.b16 %v3498
          %v3669 = vunpack.c.h.b16 %v3498
          %v3670 = vunpack.c.l.b16 %v3499
          %v3671 = vunpack.c.h.b16 %v3499
          %v3672 = vunpack.c.l.b16 %v3500
          %v3673 = vunpack.c.h.b16 %v3500
          %v3674 = vunpack.c.l.b16 %v3501
          %v3675 = vunpack.c.h.b16 %v3501
          %v3676 = vunpack.c.l.b16 %v3502
          %v3677 = vunpack.c.h.b16 %v3502
          %v3678 = vunpack.c.l.b16 %v3503
          %v3679 = vunpack.c.h.b16 %v3503
          %v3680 = vunpack.c.l.b16 %v3504
          %v3681 = vunpack.c.h.b16 %v3504
          %v3682 = vunpack.c.l.b16 %v3505
          %v3683 = vunpack.c.h.b16 %v3505
          %v3684 = vunpack.c.l.b16 %v3506
          %v3685 = vunpack.c.h.b16 %v3506
          %v3686 = vunpack.c.l.b16 %v3507
          %v3687 = vunpack.c.h.b16 %v3507
          %v3688 = vunpack.c.l.b16 %v3508
          %v3689 = vunpack.c.h.b16 %v3508
          %v3690 = vunpack.c.l.b16 %v3509
          %v3691 = vunpack.c.h.b16 %v3509
          %v3692 = vunpack.c.l.b16 %v3510
          %v3693 = vunpack.c.h.b16 %v3510
          %v3694 = vunpack.c.l.b16 %v3511
          %v3695 = vunpack.c.h.b16 %v3511
          %v3696 = vunpack.c.l.b16 %v3512
          %v3697 = vunpack.c.h.b16 %v3512
          %v3698 = vunpack.c.l.b16 %v3513
          %v3699 = vunpack.c.h.b16 %v3513
          %v3700 = vunpack.c.l.b16 %v3514
          %v3701 = vunpack.c.h.b16 %v3514
          %v3702 = vunpack.c.l.b16 %v3515
          %v3703 = vunpack.c.h.b16 %v3515
          %v3704 = vunpack.c.l.b16 %v3516
          %v3705 = vunpack.c.h.b16 %v3516
          %v3706 = vunpack.c.l.b16 %v3517
          %v3707 = vunpack.c.h.b16 %v3517
          %v3708 = vunpack.c.l.b16 %v3518
          %v3709 = vunpack.c.h.b16 %v3518
          %v3710 = vunpack.c.l.b16 %v3519
          %v3711 = vunpack.c.h.b16 %v3519
          %v3712 = vunpack.c.l.b16 %v3520
          %v3713 = vunpack.c.h.b16 %v3520
          %v3714 = vpack.c.b16 %v3588, %v3586
          %v3715 = vpack.c.b16 %v3589, %v3587
          %v3716 = vpack.c.b16 %v3592, %v3590
          %v3717 = vpack.c.b16 %v3593, %v3591
          %v3718 = vpack.c.b16 %v3596, %v3594
          %v3719 = vpack.c.b16 %v3597, %v3595
          %v3720 = vpack.c.b16 %v3600, %v3598
          %v3721 = vpack.c.b16 %v3601, %v3599
          %v3722 = vpack.c.b16 %v3604, %v3602
          %v3723 = vpack.c.b16 %v3605, %v3603
          %v3724 = vpack.c.b16 %v3608, %v3606
          %v3725 = vpack.c.b16 %v3609, %v3607
          %v3726 = vpack.c.b16 %v3612, %v3610
          %v3727 = vpack.c.b16 %v3613, %v3611
          %v3728 = vpack.c.b16 %v3616, %v3614
          %v3729 = vpack.c.b16 %v3617, %v3615
          %v3730 = vpack.c.b16 %v3620, %v3618
          %v3731 = vpack.c.b16 %v3621, %v3619
          %v3732 = vpack.c.b16 %v3624, %v3622
          %v3733 = vpack.c.b16 %v3625, %v3623
          %v3734 = vpack.c.b16 %v3628, %v3626
          %v3735 = vpack.c.b16 %v3629, %v3627
          %v3736 = vpack.c.b16 %v3632, %v3630
          %v3737 = vpack.c.b16 %v3633, %v3631
          %v3738 = vpack.c.b16 %v3636, %v3634
          %v3739 = vpack.c.b16 %v3637, %v3635
          %v3740 = vpack.c.b16 %v3640, %v3638
          %v3741 = vpack.c.b16 %v3641, %v3639
          %v3742 = vpack.c.b16 %v3644, %v3642
          %v3743 = vpack.c.b16 %v3645, %v3643
          %v3744 = vpack.c.b16 %v3648, %v3646
          %v3745 = vpack.c.b16 %v3649, %v3647
          %v3746 = vpack.c.b16 %v3652, %v3650
          %v3747 = vpack.c.b16 %v3653, %v3651
          %v3748 = vpack.c.b16 %v3656, %v3654
          %v3749 = vpack.c.b16 %v3657, %v3655
          %v3750 = vpack.c.b16 %v3660, %v3658
          %v3751 = vpack.c.b16 %v3661, %v3659
          %v3752 = vpack.c.b16 %v3664, %v3662
          %v3753 = vpack.c.b16 %v3665, %v3663
          %v3754 = vpack.c.b16 %v3668, %v3666
          %v3755 = vpack.c.b16 %v3669, %v3667
          %v3756 = vpack.c.b16 %v3672, %v3670
          %v3757 = vpack.c.b16 %v3673, %v3671
          %v3758 = vpack.c.b16 %v3676, %v3674
          %v3759 = vpack.c.b16 %v3677, %v3675
          %v3760 = vpack.c.b16 %v3680, %v3678
          %v3761 = vpack.c.b16 %v3681, %v3679
          %v3762 = vpack.c.b16 %v3684, %v3682
          %v3763 = vpack.c.b16 %v3685, %v3683
          %v3764 = vpack.c.b16 %v3688, %v3686
          %v3765 = vpack.c.b16 %v3689, %v3687
          %v3766 = vpack.c.b16 %v3692, %v3690
          %v3767 = vpack.c.b16 %v3693, %v3691
          %v3768 = vpack.c.b16 %v3696, %v3694
          %v3769 = vpack.c.b16 %v3697, %v3695
          %v3770 = vpack.c.b16 %v3700, %v3698
          %v3771 = vpack.c.b16 %v3701, %v3699
          %v3772 = vpack.c.b16 %v3704, %v3702
          %v3773 = vpack.c.b16 %v3705, %v3703
          %v3774 = vpack.c.b16 %v3708, %v3706
          %v3775 = vpack.c.b16 %v3709, %v3707
          %v3776 = vpack.c.b16 %v3712, %v3710
          %v3777 = vpack.c.b16 %v3713, %v3711
          %v3843 = vlaneseq
          %v3844 = vshrl.u32 %v3843, 7
          %v3845 = vsub.s32 0, %v3844
          %v3846 = vrot.slane %v3521, %v3845
          %v3847 = vlaneseq
          %v3848 = vshrl.u32 %v3847, 7
          %v3849 = vsub.s32 1, %v3848
          %v3850 = vrot.slane %v3521, %v3849
          %3853 = vmatprep.subr.bf16.mxu0 %v3729
          %3854 = vmatpush1.bf16.msra.mxu0 %v3728
          %3855 = vmatprep.subr.bf16.mxu0 %v3727
          %3856 = vmatpush1.bf16.msra.mxu0 %v3726
          %3857 = vmatprep.subr.bf16.mxu0 %v3725
          %3858 = vmatpush1.bf16.msra.mxu0 %v3724
          %3859 = vmatprep.subr.bf16.mxu0 %v3723
          %3860 = vmatpush1.bf16.msra.mxu0 %v3722
          %3861 = vmatprep.subr.bf16.mxu0 %v3721
          %3862 = vmatpush1.bf16.msra.mxu0 %v3720
          %3863 = vmatprep.subr.bf16.mxu0 %v3719
          %3864 = vmatpush1.bf16.msra.mxu0 %v3718
          %3865 = vmatprep.subr.bf16.mxu0 %v3717
          %3866 = vmatpush1.bf16.msra.mxu0 %v3716
          %3867 = vmatprep.subr.bf16.mxu0 %v3715
          %3868 = vmatpush1.bf16.msra.mxu0 %v3714
          %3869 = vmatprep.subr.bf16.mxu0 %v3745
          %3870 = vmatpush2.bf16.msra.mxu0 %v3744
          %3871 = vmatprep.subr.bf16.mxu0 %v3743
          %3872 = vmatpush2.bf16.msra.mxu0 %v3742
          %3873 = vmatprep.subr.bf16.mxu0 %v3741
          %3874 = vmatpush2.bf16.msra.mxu0 %v3740
          %3875 = vmatprep.subr.bf16.mxu0 %v3739
          %3876 = vmatpush2.bf16.msra.mxu0 %v3738
          %3877 = vmatprep.subr.bf16.mxu0 %v3737
          %3878 = vmatpush2.bf16.msra.mxu0 %v3736
          %3879 = vmatprep.subr.bf16.mxu0 %v3735
          %3880 = vmatpush2.bf16.msra.mxu0 %v3734
          %3881 = vmatprep.subr.bf16.mxu0 %v3733
          %3882 = vmatpush2.bf16.msra.mxu0 %v3732
          %3883 = vmatprep.subr.bf16.mxu0 %v3731
          %3884 = vmatpush2.bf16.msra.mxu0 %v3730
          %3885 = vmatprep.mubr.bf16.mxu0 %v3454
          %3886 = vmatmul.mubr.bf16.gmra.mxu0 %v3453
          %v3887 = vpop.f32.mrf.mxu0
          %v3888 = vadd.f32 %v3846, %v3887
          %v3889 = vpop.f32.mrf.mxu0
          %v3890 = vadd.f32 %v3850, %v3889
          %v3891 = vpop.f32.mrf.mxu0
          %v3892 = vpop.f32.mrf.mxu0
          %3893 = vdwg.mxu0
          %3894 = vmatprep.subr.bf16.mxu0 %v3761
          %3895 = vmatpush1.bf16.msra.mxu0 %v3760
          %3896 = vmatprep.subr.bf16.mxu0 %v3759
          %3897 = vmatpush1.bf16.msra.mxu0 %v3758
          %3898 = vmatprep.subr.bf16.mxu0 %v3757
          %3899 = vmatpush1.bf16.msra.mxu0 %v3756
          %3900 = vmatprep.subr.bf16.mxu0 %v3755
          %3901 = vmatpush1.bf16.msra.mxu0 %v3754
          %3902 = vmatprep.subr.bf16.mxu0 %v3753
          %3903 = vmatpush1.bf16.msra.mxu0 %v3752
          %3904 = vmatprep.subr.bf16.mxu0 %v3751
          %3905 = vmatpush1.bf16.msra.mxu0 %v3750
          %3906 = vmatprep.subr.bf16.mxu0 %v3749
          %3907 = vmatpush1.bf16.msra.mxu0 %v3748
          %3908 = vmatprep.subr.bf16.mxu0 %v3747
          %3909 = vmatpush1.bf16.msra.mxu0 %v3746
          %3910 = vmatprep.subr.bf16.mxu0 %v3777
          %3911 = vmatpush2.bf16.msra.mxu0 %v3776
          %3912 = vmatprep.subr.bf16.mxu0 %v3775
          %3913 = vmatpush2.bf16.msra.mxu0 %v3774
          %3914 = vmatprep.subr.bf16.mxu0 %v3773
          %3915 = vmatpush2.bf16.msra.mxu0 %v3772
          %3916 = vmatprep.subr.bf16.mxu0 %v3771
          %3917 = vmatpush2.bf16.msra.mxu0 %v3770
          %3918 = vmatprep.subr.bf16.mxu0 %v3769
          %3919 = vmatpush2.bf16.msra.mxu0 %v3768
          %3920 = vmatprep.subr.bf16.mxu0 %v3767
          %3921 = vmatpush2.bf16.msra.mxu0 %v3766
          %3922 = vmatprep.subr.bf16.mxu0 %v3765
          %3923 = vmatpush2.bf16.msra.mxu0 %v3764
          %3924 = vmatprep.subr.bf16.mxu0 %v3763
          %3925 = vmatpush2.bf16.msra.mxu0 %v3762
          %3926 = vmatprep.mubr.bf16.mxu0 %v3456
          %3927 = vmatmul.mubr.bf16.gmra.mxu0 %v3455
          %v3928 = vpop.f32.mrf.mxu0
          %v3929 = vadd.f32 %v3888, %v3928
          %v3930 = vpop.f32.mrf.mxu0
          %v3931 = vadd.f32 %v3890, %v3930
          %v3932 = vpop.f32.mrf.mxu0
          %v3933 = vpop.f32.mrf.mxu0
          %3934 = vdwg.mxu0
          %v3935 = vmax.f32 %v3929, 0.0
          %v3936 = vmax.f32 %v3931, 0.0
          %v3937 = vpack.c.bf16 %v3935, %v3935
          %v3938 = vpack.c.bf16 %v3936, %v3936
          %v3939 = vld [vmem:[%s12] sm:$0xf]
          %v3940 = vld [vmem:[%s12 + $0x4] sm:$0xf]
          %v3941 = vld [vmem:[%s12 + $0x8] sm:$0xf]
          %v3942 = vld [vmem:[%s12 + $0xc] sm:$0xf]
          %v3943 = vld [vmem:[%s12 + $0x10] sm:$0xf]
          %v3944 = vld [vmem:[%s12 + $0x14] sm:$0xf]
          %v3945 = vld [vmem:[%s12 + $0x18] sm:$0xf]
          %v3946 = vld [vmem:[%s12 + $0x1c] sm:$0xf]
          %v3947 = vld [vmem:[%s12 + $0x20] sm:$0xf]
          %v3948 = vld [vmem:[%s12 + $0x24] sm:$0xf]
          %v3949 = vld [vmem:[%s12 + $0x28] sm:$0xf]
          %v3950 = vld [vmem:[%s12 + $0x2c] sm:$0xf]
          %v3951 = vld [vmem:[%s12 + $0x30] sm:$0xf]
          %v3952 = vld [vmem:[%s12 + $0x34] sm:$0xf]
          %v3953 = vld [vmem:[%s12 + $0x38] sm:$0xf]
          %v3954 = vld [vmem:[%s12 + $0x3c] sm:$0xf]
          %v3955 = vld [vmem:[%s12 + $0x40] sm:$0xf]
          %v3956 = vld [vmem:[%s12 + $0x44] sm:$0xf]
          %v3957 = vld [vmem:[%s12 + $0x48] sm:$0xf]
          %v3958 = vld [vmem:[%s12 + $0x4c] sm:$0xf]
          %v3959 = vld [vmem:[%s12 + $0x50] sm:$0xf]
          %v3960 = vld [vmem:[%s12 + $0x54] sm:$0xf]
          %v3961 = vld [vmem:[%s12 + $0x58] sm:$0xf]
          %v3962 = vld [vmem:[%s12 + $0x5c] sm:$0xf]
          %v3963 = vld [vmem:[%s12 + $0x60] sm:$0xf]
          %v3964 = vld [vmem:[%s12 + $0x64] sm:$0xf]
          %v3965 = vld [vmem:[%s12 + $0x68] sm:$0xf]
          %v3966 = vld [vmem:[%s12 + $0x6c] sm:$0xf]
          %v3967 = vld [vmem:[%s12 + $0x70] sm:$0xf]
          %v3968 = vld [vmem:[%s12 + $0x74] sm:$0xf]
          %v3969 = vld [vmem:[%s12 + $0x78] sm:$0xf]
          %v3970 = vld [vmem:[%s12 + $0x7c] sm:$0xf]
          %v3971 = vld [vmem:[%s13] sm:$0x1]
          %v4004 = vunpack.c.l.b16 %v3939
          %v4005 = vunpack.c.l.b16 %v3940
          %v4006 = vunpack.c.l.b16 %v3941
          %v4007 = vunpack.c.l.b16 %v3942
          %v4008 = vunpack.c.l.b16 %v3943
          %v4009 = vunpack.c.l.b16 %v3944
          %v4010 = vunpack.c.l.b16 %v3945
          %v4011 = vunpack.c.l.b16 %v3946
          %v4012 = vunpack.c.l.b16 %v3947
          %v4013 = vunpack.c.l.b16 %v3948
          %v4014 = vunpack.c.l.b16 %v3949
          %v4015 = vunpack.c.l.b16 %v3950
          %v4016 = vunpack.c.l.b16 %v3951
          %v4017 = vunpack.c.l.b16 %v3952
          %v4018 = vunpack.c.l.b16 %v3953
          %v4019 = vunpack.c.l.b16 %v3954
          %v4020 = vunpack.c.l.b16 %v3955
          %v4021 = vunpack.c.l.b16 %v3956
          %v4022 = vunpack.c.l.b16 %v3957
          %v4023 = vunpack.c.l.b16 %v3958
          %v4024 = vunpack.c.l.b16 %v3959
          %v4025 = vunpack.c.l.b16 %v3960
          %v4026 = vunpack.c.l.b16 %v3961
          %v4027 = vunpack.c.l.b16 %v3962
          %v4028 = vunpack.c.l.b16 %v3963
          %v4029 = vunpack.c.l.b16 %v3964
          %v4030 = vunpack.c.l.b16 %v3965
          %v4031 = vunpack.c.l.b16 %v3966
          %v4032 = vunpack.c.l.b16 %v3967
          %v4033 = vunpack.c.l.b16 %v3968
          %v4034 = vunpack.c.l.b16 %v3969
          %v4035 = vunpack.c.l.b16 %v3970
          %v4036 = vpack.c.b16 %v4005, %v4004
          %v4037 = vpack.c.b16 %v4007, %v4006
          %v4038 = vpack.c.b16 %v4009, %v4008
          %v4039 = vpack.c.b16 %v4011, %v4010
          %v4040 = vpack.c.b16 %v4013, %v4012
          %v4041 = vpack.c.b16 %v4015, %v4014
          %v4042 = vpack.c.b16 %v4017, %v4016
          %v4043 = vpack.c.b16 %v4019, %v4018
          %v4044 = vpack.c.b16 %v4021, %v4020
          %v4045 = vpack.c.b16 %v4023, %v4022
          %v4046 = vpack.c.b16 %v4025, %v4024
          %v4047 = vpack.c.b16 %v4027, %v4026
          %v4048 = vpack.c.b16 %v4029, %v4028
          %v4049 = vpack.c.b16 %v4031, %v4030
          %v4050 = vpack.c.b16 %v4033, %v4032
          %v4051 = vpack.c.b16 %v4035, %v4034
          %4068 = vmatprep.subr.bf16.mxu0 0
          %4069 = vmatpush1.bf16.msra.mxu0 %v4043
          %4070 = vmatprep.subr.bf16.mxu0 0
          %4071 = vmatpush1.bf16.msra.mxu0 %v4042
          %4072 = vmatprep.subr.bf16.mxu0 0
          %4073 = vmatpush1.bf16.msra.mxu0 %v4041
          %4074 = vmatprep.subr.bf16.mxu0 0
          %4075 = vmatpush1.bf16.msra.mxu0 %v4040
          %4076 = vmatprep.subr.bf16.mxu0 0
          %4077 = vmatpush1.bf16.msra.mxu0 %v4039
          %4078 = vmatprep.subr.bf16.mxu0 0
          %4079 = vmatpush1.bf16.msra.mxu0 %v4038
          %4080 = vmatprep.subr.bf16.mxu0 0
          %4081 = vmatpush1.bf16.msra.mxu0 %v4037
          %4082 = vmatprep.subr.bf16.mxu0 0
          %4083 = vmatpush1.bf16.msra.mxu0 %v4036
          %4084 = vmatprep.subr.bf16.mxu0 0
          %4085 = vmatpush2.bf16.msra.mxu0 %v4051
          %4086 = vmatprep.subr.bf16.mxu0 0
          %4087 = vmatpush2.bf16.msra.mxu0 %v4050
          %4088 = vmatprep.subr.bf16.mxu0 0
          %4089 = vmatpush2.bf16.msra.mxu0 %v4049
          %4090 = vmatprep.subr.bf16.mxu0 0
          %4091 = vmatpush2.bf16.msra.mxu0 %v4048
          %4092 = vmatprep.subr.bf16.mxu0 0
          %4093 = vmatpush2.bf16.msra.mxu0 %v4047
          %4094 = vmatprep.subr.bf16.mxu0 0
          %4095 = vmatpush2.bf16.msra.mxu0 %v4046
          %4096 = vmatprep.subr.bf16.mxu0 0
          %4097 = vmatpush2.bf16.msra.mxu0 %v4045
          %4098 = vmatprep.subr.bf16.mxu0 0
          %4099 = vmatpush2.bf16.msra.mxu0 %v4044
          %4100 = vmatprep.mubr.bf16.mxu0 %v3938
          %4101 = vmatmul.mubr.bf16.gmra.mxu0 %v3937
          %v4102 = vpop.f32.mrf.mxu0
          %v4103 = vadd.f32 %v3971, %v4102
          %v4104 = vpop.f32.mrf.mxu0
          %v4105 = vpop.f32.mrf.mxu0
          %v4106 = vpop.f32.mrf.mxu0
          %4107 = vdwg.mxu0
          %4108 = vst [vmem:[%s495] sm:$0x1] %v4103
        $region84: #{pointnet_forward.3} parent=75 // pred_fallthru
          _
        %s4109 = sand.u32 %s354, 1
        %s4110 = scalar_lea.sflag [#allocation4], %s4109
        %s4111 = sand.u32 %s354, 1
        %s4112 = scalar_lea.vmem [#allocation3], %s4111
        // Predicated region
        $region85: #{pointnet_forward.3} parent=75 // pred_check
          %p4113 = pneg %p364
        $region86: #{pointnet_forward.3} parent=75 // pred_check_branch
          %4115 = sbr.rel (%p4113) target = $region88
        $region87: #{pointnet_forward.3} parent=75 // pred_region
          %s4117 = ssub.s32 16, 16
          %4118 = vsyncadd %s4110, %s4117
          %s4119 = smul.addr %s32, 16
          %s4120 = scalar_lea.hbm %s14, %s4119
          %s4122 = sshll.u32 %s4112, 4
          %s4123 = int_to_ptr.vmem [resolvable:$true] %s4122
          %4125 = dma.vmem_to_hbm [thread:$0]  %s4123, 16, %s4120, %s4110
        $region88: #{pointnet_forward.3} parent=75 // pred_fallthru
          _
      $region76: #{pointnet_forward.3} parent=5 // pred_fallthru
        _
      %p4126 = scmp.le.s32.totalorder 2, %s23
      // Predicated region
      $region89: #{pointnet_forward.3} parent=5 // pred_check
        %p4127 = pneg %p4126
      $region90: #{pointnet_forward.3} parent=5 // pred_check_branch
        %4129 = sbr.rel (%p4127) target = $region92
      $region91: #{pointnet_forward.3} parent=5 // pred_region
        %s4130 = ssub.s32 %s23, 2
        // Predicated region
        $region93: #{pointnet_forward.3} parent=91 // pred_check
          %p4131 = pneg %p370
        $region94: #{pointnet_forward.3} parent=91 // pred_check_branch
          %4133 = sbr.rel (%p4131) target = $region96
        $region95: #{pointnet_forward.3} parent=91 // pred_region
          %s4134 = sand.u32 %s355, 1
          %s4135 = scalar_lea.sflag [#allocation4], %s4134
          %s4136 = sand.u32 %s355, 1
          %s4137 = scalar_lea.vmem [#allocation3], %s4136
          %4138 = dma.done %s4135, 16
        $region96: #{pointnet_forward.3} parent=91 // pred_fallthru
          _
      $region92: #{pointnet_forward.3} parent=5 // pred_fallthru
        _
    $region6: #{pointnet_forward.3} parent=1 // loop_footer
      %s27 = sadd.s32 1, %s23
    $region7: #{pointnet_forward.3} parent=1 // loop_footer_branch
      %22 = sbr.rel target = $region3
    $region8: #{pointnet_forward.3} parent=1 // loop_exit
      _
    %4139 = vsyncpa [#allocation4], 1
    %s4140 = scalar_lea.sflag [#allocation4], 1
    %4141 = vsyncpa %s4140, 1

</llo_original>
